<compile_context>
chip_gen: v5e
topology: v5e:2x2
jax: 0.10.0
libtpu: 0.0.40
codegen_flags: <defaults>
</compile_context>

<pallas_src>
import jax
import jax.numpy as jnp
from jax.experimental import pallas as pl
from jax.experimental.pallas import tpu as pltpu


def _round_up(x, m):
    return ((x + m - 1) // m) * m


# ----------------------------------------------------------------------------
# Kernels
# ----------------------------------------------------------------------------
def _make_conv_kernel(V, L, Cp):
    """Fused 3x3 conv (pad=1, stride=1) + bias + ReLU + 2x2/stride-2 max-pool.

    Per grid step (one sample x one Cout block):
      x_ref    (4, Cp, Spad) bf16 : phase-split padded input,
                                    x_ref[2p+q, c, u*V+v] = x_pad[c, 2u+p, 2v+q]
      w_ref    (Cb, 9*Cp)    bf16 : folded weights, k = (dy*3+dx)*Cp + c
      b_ref    (Cb, 1)       f32  : bias
      o_ref    (Cb, L)       bf16 : pooled output, flat index i*V + j
                                    (column j == Wh is junk, never consumed)
      xcol_ref (9*Cp, L)     bf16 : VMEM scratch for the in-kernel tap gather
    """
    def kernel(x_ref, w_ref, b_ref, o_ref, xcol_ref):
        w = w_ref[...]
        res = None
        for pa in range(2):              # pooling-phase row offset a
            for pb in range(2):          # pooling-phase col offset b
                # Gather the 9 taps of this phase into the K-folded scratch
                # (VMEM-only traffic; zero extra HBM).
                for dy in range(3):
                    for dx in range(3):
                        p, du = (pa + dy) % 2, (pa + dy) // 2
                        q, dv = (pb + dx) % 2, (pb + dx) // 2
                        t = dy * 3 + dx
                        off = du * V + dv
                        xcol_ref[t * Cp:(t + 1) * Cp, :] = (
                            x_ref[2 * p + q, :, off:off + L])
                # One K-folded MXU dot per phase; running max over phases
                # (bias/ReLU commute with max, applied once at the end).
                acc = jnp.dot(w, xcol_ref[...],
                              preferred_element_type=jnp.float32)
                res = acc if res is None else jnp.maximum(res, acc)
        o_ref[...] = jnp.maximum(res + b_ref[...], 0.0).astype(o_ref.dtype)

    return kernel


def head_kernel(x_ref, w_ref, b_ref, o_ref):
    """Linear(F -> 1) + numerically stable sigmoid, single grid step.

    Lane-dense: x (N, F) * w (1, F) on the VPU, lane-sum on the XLU; the only
    narrow store is the final (N, 1) result.
    """
    x = x_ref[...].astype(jnp.float32)
    w = w_ref[...].astype(jnp.float32)
    z = jnp.sum(x * w, axis=-1, keepdims=True) + b_ref[...]
    pos = z >= 0.0
    ez = jnp.exp(jnp.where(pos, -z, z))          # exp of a non-positive arg
    o_ref[...] = jnp.where(pos, 1.0 / (1.0 + ez), ez / (1.0 + ez))


# ----------------------------------------------------------------------------
# Layout helpers (wrapper side, ~1x-input-size traffic)
# ----------------------------------------------------------------------------
def _phase_split(x_nchw):
    """(N, C, H, W) -> ((N, 4, Cp, Spad) bf16, (Hh, Wh)).

    x_split[n, 2p+q, c, u*(Wh+1)+v] = x_pad[n, c, 2u+p, 2v+q]  (zero pad=1),
    Cp = C rounded up to 8, Spad = (Hh+1)*(Wh+1)+1 rounded up to 128.
    """
    N, C, H, W = x_nchw.shape
    assert H % 2 == 0 and W % 2 == 0
    Hh, Wh = H // 2, W // 2
    U, V = Hh + 1, Wh + 1
    S = U * V
    Cp = _round_up(C, 8)
    Spad = _round_up(S + 1, 128)
    xp = jnp.pad(x_nchw.astype(jnp.bfloat16),
                 ((0, 0), (0, Cp - C), (1, 1), (1, 1)))
    parts = [xp[:, :, p::2, q::2].reshape(N, Cp, S)
             for p in (0, 1) for q in (0, 1)]
    sp = jnp.stack(parts, axis=1)                          # (N, 4, Cp, S)
    sp = jnp.pad(sp, ((0, 0), (0, 0), (0, 0), (0, Spad - S)))
    return sp, (Hh, Wh)


def _unflatten(y_flat, Hh, Wh):
    """(N, C, Hh*(Wh+1)) padded-flat conv output -> (N, C, Hh, Wh)."""
    N, C, _ = y_flat.shape
    return y_flat.reshape(N, C, Hh, Wh + 1)[:, :, :, :Wh]


# ----------------------------------------------------------------------------
# Pallas wrappers
# ----------------------------------------------------------------------------
def conv_relu_pool(x_split, w, b, Hh, Wh):
    """x_split: (N, 4, Cp, Spad) bf16; w: (Cout, 9*Cin) bf16; b: (Cout, 1) f32
    -> (N, Cout, Hh*(Wh+1)) bf16 pooled output in padded-flat layout."""
    N, _, Cp, Spad = x_split.shape
    Cout = w.shape[0]
    Cin = w.shape[1] // 9
    V = Wh + 1
    L = Hh * V

    # Pad the per-tap channel dim of the weights to Cp (zero columns -> no-ops).
    wp = jnp.pad(w.reshape(Cout, 9, Cin), ((0, 0), (0, 0), (0, Cp - Cin)))
    wp = wp.reshape(Cout, 9 * Cp).astype(jnp.bfloat16)

    # Split Cout in two for >=64-channel layers so the grid always has >=2
    # parallel steps per sample (keeps both v7x TensorCores busy at batch 1).
    ncb = 2 if Cout >= 64 else 1
    Cb = Cout // ncb

    # TODO(synk): very large images (>~1k x 1k) would need row-block tiling of
    # the phase-split slab (overlapping halo windows); not needed at 224x224.
    return pl.pallas_call(
        _make_conv_kernel(V=V, L=L, Cp=Cp),
        out_shape=jax.ShapeDtypeStruct((N, Cout, L), jnp.bfloat16),
        grid_spec=pltpu.PrefetchScalarGridSpec(
            num_scalar_prefetch=0,
            grid=(N, ncb),
            in_specs=[
                pl.BlockSpec((None, 4, Cp, Spad), lambda n, c: (n, 0, 0, 0)),
                pl.BlockSpec((Cb, 9 * Cp), lambda n, c: (c, 0)),
                pl.BlockSpec((Cb, 1), lambda n, c: (c, 0)),
            ],
            out_specs=pl.BlockSpec((None, Cb, L), lambda n, c: (n, c, 0)),
            scratch_shapes=[pltpu.VMEM((9 * Cp, L), jnp.bfloat16)],
        ),
        compiler_params=pltpu.CompilerParams(
            dimension_semantics=("parallel", "parallel"),
            vmem_limit_bytes=32 * 1024 * 1024),
    )(x_split, wp, b)


def fc_sigmoid(feat, w_row, b):
    """feat: (N, F) bf16; w_row: (1, F) bf16; b: (1, 1) f32 -> (N, 1) f32."""
    N, F = feat.shape
    # TODO(synk): tile over rows if N*F ever outgrows VMEM; for this model the
    # whole head is a few hundred KB, so a single grid step is fastest.
    return pl.pallas_call(
        head_kernel,
        out_shape=jax.ShapeDtypeStruct((N, 1), jnp.float32),
        grid_spec=pltpu.PrefetchScalarGridSpec(
            num_scalar_prefetch=0,
            grid=(1,),
            in_specs=[
                pl.BlockSpec((N, F), lambda i: (0, 0)),
                pl.BlockSpec((1, F), lambda i: (0, 0)),
                pl.BlockSpec((1, 1), lambda i: (0, 0)),
            ],
            out_specs=pl.BlockSpec((N, 1), lambda i: (0, 0)),
        ),
        compiler_params=pltpu.CompilerParams(
            dimension_semantics=("arbitrary",),
            vmem_limit_bytes=32 * 1024 * 1024),
    )(feat, w_row, b)


# ----------------------------------------------------------------------------
# Parameters (deterministic, synthetic; shapes follow the module __init__,
# except fc2 which is sized to the actual flattened feature count, see TODO)
# ----------------------------------------------------------------------------
def _conv_params(key, cout, cin):
    kw, kb = jax.random.split(key)
    w = jax.random.normal(kw, (cout, cin, 3, 3), jnp.float32) * (
        1.0 / jnp.sqrt(cin * 9.0))
    b = jax.random.normal(kb, (cout,), jnp.float32) * 0.01
    # (Cout, Cin, 3, 3) -> (Cout, 3, 3, Cin) -> (Cout, 9*Cin);
    # K index = (dy*3+dx)*Cin + c, matching the in-kernel tap gather.
    wk = jnp.transpose(w, (0, 2, 3, 1)).reshape(cout, 9 * cin).astype(jnp.bfloat16)
    return wk, b.reshape(cout, 1)


def init_params(key, H, W):
    k1, k2, k3, k4 = jax.random.split(key, 4)
    w1, b1 = _conv_params(k1, 32, 3)
    w2, b2 = _conv_params(k2, 64, 32)
    w3, b3 = _conv_params(k3, 128, 64)
    F = 128 * (H // 8) * (W // 8)   # analogue of 128*28*28 for 224x224 input
    kw, kb = jax.random.split(k4)
    # fc2 rows follow PyTorch's (C, H, W) flatten order of the conv3 output.
    w_fc2 = (jax.random.normal(kw, (F,), jnp.float32)
             * (1.0 / jnp.sqrt(F))).astype(jnp.bfloat16)
    b_fc2 = jax.random.normal(kb, (1, 1), jnp.float32) * 0.01
    # NOTE: bn1 and fc1 are declared in __init__ but never validly used in forward.
    return dict(w1=w1, b1=b1, w2=w2, b2=b2, w3=w3, b3=b3,
                w_fc2=w_fc2, b_fc2=b_fc2)


# ----------------------------------------------------------------------------
# Forward
# ----------------------------------------------------------------------------
def blur_detection_forward(x_nchw, params):
    N, Cin, H, W = x_nchw.shape
    assert H % 8 == 0 and W % 8 == 0, (
        "three stride-2 pools require H and W divisible by 8")

    # conv1 + ReLU + pool
    sp, (hh, ww) = _phase_split(x_nchw)
    y = conv_relu_pool(sp, params["w1"], params["b1"], hh, ww)   # (N, 32, L1)

    # conv2 + ReLU + pool
    sp, (hh, ww) = _phase_split(_unflatten(y, hh, ww))
    y = conv_relu_pool(sp, params["w2"], params["b2"], hh, ww)   # (N, 64, L2)

    # conv3 + ReLU + pool
    sp, (hh, ww) = _phase_split(_unflatten(y, hh, ww))
    y = conv_relu_pool(sp, params["w3"], params["b3"], hh, ww)   # (N, 128, L3)

    # FC head: conv3's padded-flat layout feeds the head directly; the FC
    # weight is zero-embedded at the junk (j == Wh) positions, so the result
    # equals Linear(128*hh*ww, 1) on the true (C, H, W)-flattened features
    # with no activation transpose / extra HBM pass.
    V = ww + 1
    feat = y.reshape(N, 128 * hh * V)
    wfc = params["w_fc2"].reshape(128, hh, ww)
    wfc = jnp.pad(wfc, ((0, 0), (0, 0), (0, V - ww))).reshape(1, 128 * hh * V)

    # TODO(synk): the literal forward re-applies pool(relu(bn1(conv1(x)))) to the
    # flattened 2-D tensor, which raises in PyTorch (conv2d needs 4-D input); skipped.
    # Dropout(0.5): eval-mode identity (no stochastic mask applied here).
    # TODO(synk): fc2 is declared Linear(128, 1) but the forward feeds it 128*hh*ww
    # features (would raise in PyTorch); fc2 is sized to the flattened dim instead.
    return fc_sigmoid(feat, wfc, params["b_fc2"])                # (N, 1) f32


if __name__ == "__main__":
    fwd = jax.jit(blur_detection_forward)

    # Small square case, batch 2.
    N, C, H, W = 2, 3, 16, 16
    x = jax.random.normal(jax.random.PRNGKey(0), (N, C, H, W), jnp.float32)
    params = init_params(jax.random.PRNGKey(42), H, W)
    out = jax.block_until_ready(fwd(x, params))
    assert out.shape == (N, 1), out.shape
    assert bool(jnp.all(jnp.isfinite(out)))
    assert bool(jnp.all((out >= 0.0) & (out <= 1.0)))

    # Batch-1 non-square case: exercises ragged lane widths, the junk-column
    # flat layout, and the Cout-split grid (>=2 parallel steps at batch 1).
    N2, H2, W2 = 1, 24, 32
    x2 = jax.random.normal(jax.random.PRNGKey(1), (N2, C, H2, W2), jnp.float32)
    params2 = init_params(jax.random.PRNGKey(7), H2, W2)
    out2 = jax.block_until_ready(fwd(x2, params2))
    assert out2.shape == (N2, 1), out2.shape
    assert bool(jnp.all(jnp.isfinite(out2)))
    assert bool(jnp.all((out2 >= 0.0) & (out2 <= 1.0)))

    print("KERNEL_OK")
</pallas_src>

<mosaic_0001>
module attributes {stable_mosaic.version = 11 : i64} {
  func.func @kernel(%arg0: i32, %arg1: i32, %arg2: memref<1x4x8x128xbf16, #tpu.memory_space<vmem>>, %arg3: memref<32x72xbf16, #tpu.memory_space<vmem>>, %arg4: memref<32x1xf32, #tpu.memory_space<vmem>>, %arg5: memref<1x32x72xbf16, #tpu.memory_space<vmem>>, %arg6: memref<72x72xbf16, #tpu.memory_space<vmem>>) attributes {dimension_semantics = [#tpu.dimension_semantics<parallel>, #tpu.dimension_semantics<parallel>], iteration_bounds = array<i64: 2, 1>, scalar_prefetch = 0 : i64, scratch_operands = 1 : i64, tpu.core_type = #tpu.core_type<tc>, window_params = [{transform_indices = @transform_0, window_bounds = array<i64: 1, 4, 8, 128>}, {transform_indices = @transform_1, window_bounds = array<i64: 32, 72>}, {transform_indices = @transform_2, window_bounds = array<i64: 32, 1>}, {transform_indices = @transform_3, window_bounds = array<i64: 1, 32, 72>}]} {
    %c0 = arith.constant 0 : index
    %c0_0 = arith.constant 0 : index
    %0 = vector.load %arg3[%c0, %c0_0] : memref<32x72xbf16, #tpu.memory_space<vmem>>, vector<32x72xbf16>
    %c0_1 = arith.constant 0 : index
    %c0_2 = arith.constant 0 : index
    %c0_3 = arith.constant 0 : index
    %c0_4 = arith.constant 0 : index
    %1 = vector.load %arg2[%c0_1, %c0_2, %c0_3, %c0_4] : memref<1x4x8x128xbf16, #tpu.memory_space<vmem>>, vector<1x1x8x72xbf16>
    %2 = vector.shape_cast %1 : vector<1x1x8x72xbf16> to vector<8x72xbf16>
    %c0_5 = arith.constant 0 : index
    %c0_6 = arith.constant 0 : index
    %3 = vector.load %arg6[%c0_5, %c0_6] : memref<72x72xbf16, #tpu.memory_space<vmem>>, vector<8x72xbf16>
    tpu.vector_store %arg6[%c0_5, %c0_6], %2 {strides = array<i32>} : memref<72x72xbf16, #tpu.memory_space<vmem>>, vector<8x72xbf16>,
    %c0_7 = arith.constant 0 : index
    %c1 = arith.constant 1 : index
    %c0_8 = arith.constant 0 : index
    %c0_9 = arith.constant 0 : index
    %4 = vector.load %arg2[%c0_7, %c1, %c0_8, %c0_9] : memref<1x4x8x128xbf16, #tpu.memory_space<vmem>>, vector<1x1x8x72xbf16>
    %5 = vector.shape_cast %4 : vector<1x1x8x72xbf16> to vector<8x72xbf16>
    %c8 = arith.constant 8 : index
    %c0_10 = arith.constant 0 : index
    %6 = vector.load %arg6[%c8, %c0_10] : memref<72x72xbf16, #tpu.memory_space<vmem>>, vector<8x72xbf16>
    tpu.vector_store %arg6[%c8, %c0_10], %5 {strides = array<i32>} : memref<72x72xbf16, #tpu.memory_space<vmem>>, vector<8x72xbf16>,
    %c0_11 = arith.constant 0 : index
    %c0_12 = arith.constant 0 : index
    %c0_13 = arith.constant 0 : index
    %c1_14 = arith.constant 1 : index
    %7 = vector.load %arg2[%c0_11, %c0_12, %c0_13, %c1_14] : memref<1x4x8x128xbf16, #tpu.memory_space<vmem>>, vector<1x1x8x72xbf16>
    %8 = vector.shape_cast %7 : vector<1x1x8x72xbf16> to vector<8x72xbf16>
    %c16 = arith.constant 16 : index
    %c0_15 = arith.constant 0 : index
    %9 = vector.load %arg6[%c16, %c0_15] : memref<72x72xbf16, #tpu.memory_space<vmem>>, vector<8x72xbf16>
    tpu.vector_store %arg6[%c16, %c0_15], %8 {strides = array<i32>} : memref<72x72xbf16, #tpu.memory_space<vmem>>, vector<8x72xbf16>,
    %c0_16 = arith.constant 0 : index
    %c2 = arith.constant 2 : index
    %c0_17 = arith.constant 0 : index
    %c0_18 = arith.constant 0 : index
    %10 = vector.load %arg2[%c0_16, %c2, %c0_17, %c0_18] : memref<1x4x8x128xbf16, #tpu.memory_space<vmem>>, vector<1x1x8x72xbf16>
    %11 = vector.shape_cast %10 : vector<1x1x8x72xbf16> to vector<8x72xbf16>
    %c24 = arith.constant 24 : index
    %c0_19 = arith.constant 0 : index
    %12 = vector.load %arg6[%c24, %c0_19] : memref<72x72xbf16, #tpu.memory_space<vmem>>, vector<8x72xbf16>
    tpu.vector_store %arg6[%c24, %c0_19], %11 {strides = array<i32>} : memref<72x72xbf16, #tpu.memory_space<vmem>>, vector<8x72xbf16>,
    %c0_20 = arith.constant 0 : index
    %c3 = arith.constant 3 : index
    %c0_21 = arith.constant 0 : index
    %c0_22 = arith.constant 0 : index
    %13 = vector.load %arg2[%c0_20, %c3, %c0_21, %c0_22] : memref<1x4x8x128xbf16, #tpu.memory_space<vmem>>, vector<1x1x8x72xbf16>
    %14 = vector.shape_cast %13 : vector<1x1x8x72xbf16> to vector<8x72xbf16>
    %c32 = arith.constant 32 : index
    %c0_23 = arith.constant 0 : index
    %15 = vector.load %arg6[%c32, %c0_23] : memref<72x72xbf16, #tpu.memory_space<vmem>>, vector<8x72xbf16>
    tpu.vector_store %arg6[%c32, %c0_23], %14 {strides = array<i32>} : memref<72x72xbf16, #tpu.memory_space<vmem>>, vector<8x72xbf16>,
    %c0_24 = arith.constant 0 : index
    %c2_25 = arith.constant 2 : index
    %c0_26 = arith.constant 0 : index
    %c1_27 = arith.constant 1 : index
    %16 = vector.load %arg2[%c0_24, %c2_25, %c0_26, %c1_27] : memref<1x4x8x128xbf16, #tpu.memory_space<vmem>>, vector<1x1x8x72xbf16>
    %17 = vector.shape_cast %16 : vector<1x1x8x72xbf16> to vector<8x72xbf16>
    %c40 = arith.constant 40 : index
    %c0_28 = arith.constant 0 : index
    %18 = vector.load %arg6[%c40, %c0_28] : memref<72x72xbf16, #tpu.memory_space<vmem>>, vector<8x72xbf16>
    tpu.vector_store %arg6[%c40, %c0_28], %17 {strides = array<i32>} : memref<72x72xbf16, #tpu.memory_space<vmem>>, vector<8x72xbf16>,
    %c0_29 = arith.constant 0 : index
    %c0_30 = arith.constant 0 : index
    %c0_31 = arith.constant 0 : index
    %c9 = arith.constant 9 : index
    %19 = vector.load %arg2[%c0_29, %c0_30, %c0_31, %c9] : memref<1x4x8x128xbf16, #tpu.memory_space<vmem>>, vector<1x1x8x72xbf16>
    %20 = vector.shape_cast %19 : vector<1x1x8x72xbf16> to vector<8x72xbf16>
    %c48 = arith.constant 48 : index
    %c0_32 = arith.constant 0 : index
    %21 = vector.load %arg6[%c48, %c0_32] : memref<72x72xbf16, #tpu.memory_space<vmem>>, vector<8x72xbf16>
    tpu.vector_store %arg6[%c48, %c0_32], %20 {strides = array<i32>} : memref<72x72xbf16, #tpu.memory_space<vmem>>, vector<8x72xbf16>,
    %c0_33 = arith.constant 0 : index
    %c1_34 = arith.constant 1 : index
    %c0_35 = arith.constant 0 : index
    %c9_36 = arith.constant 9 : index
    %22 = vector.load %arg2[%c0_33, %c1_34, %c0_35, %c9_36] : memref<1x4x8x128xbf16, #tpu.memory_space<vmem>>, vector<1x1x8x72xbf16>
    %23 = vector.shape_cast %22 : vector<1x1x8x72xbf16> to vector<8x72xbf16>
    %c56 = arith.constant 56 : index
    %c0_37 = arith.constant 0 : index
    %24 = vector.load %arg6[%c56, %c0_37] : memref<72x72xbf16, #tpu.memory_space<vmem>>, vector<8x72xbf16>
    tpu.vector_store %arg6[%c56, %c0_37], %23 {strides = array<i32>} : memref<72x72xbf16, #tpu.memory_space<vmem>>, vector<8x72xbf16>,
    %c0_38 = arith.constant 0 : index
    %c0_39 = arith.constant 0 : index
    %c0_40 = arith.constant 0 : index
    %c10 = arith.constant 10 : index
    %25 = vector.load %arg2[%c0_38, %c0_39, %c0_40, %c10] : memref<1x4x8x128xbf16, #tpu.memory_space<vmem>>, vector<1x1x8x72xbf16>
    %26 = vector.shape_cast %25 : vector<1x1x8x72xbf16> to vector<8x72xbf16>
    %c64 = arith.constant 64 : index
    %c0_41 = arith.constant 0 : index
    %27 = vector.load %arg6[%c64, %c0_41] : memref<72x72xbf16, #tpu.memory_space<vmem>>, vector<8x72xbf16>
    tpu.vector_store %arg6[%c64, %c0_41], %26 {strides = array<i32>} : memref<72x72xbf16, #tpu.memory_space<vmem>>, vector<8x72xbf16>,
    %c0_42 = arith.constant 0 : index
    %c0_43 = arith.constant 0 : index
    %28 = vector.load %arg6[%c0_42, %c0_43] : memref<72x72xbf16, #tpu.memory_space<vmem>>, vector<72x72xbf16>
    %cst = arith.constant dense<0.000000e+00> : vector<32x72xf32>
    %29 = tpu.matmul %0, %28, %cst {dimension_numbers = #tpu.dot_dimension_numbers<[1], [0], [0], [1], [0, 0, 1, 1], [], []>} : vector<32x72xbf16>, vector<72x72xbf16>, vector<32x72xf32> -> vector<32x72xf32>
    %c0_44 = arith.constant 0 : index
    %c1_45 = arith.constant 1 : index
    %c0_46 = arith.constant 0 : index
    %c0_47 = arith.constant 0 : index
    %30 = vector.load %arg2[%c0_44, %c1_45, %c0_46, %c0_47] : memref<1x4x8x128xbf16, #tpu.memory_space<vmem>>, vector<1x1x8x72xbf16>
    %31 = vector.shape_cast %30 : vector<1x1x8x72xbf16> to vector<8x72xbf16>
    %c0_48 = arith.constant 0 : index
    %c0_49 = arith.constant 0 : index
    %32 = vector.load %arg6[%c0_48, %c0_49] : memref<72x72xbf16, #tpu.memory_space<vmem>>, vector<8x72xbf16>
    tpu.vector_store %arg6[%c0_48, %c0_49], %31 {strides = array<i32>} : memref<72x72xbf16, #tpu.memory_space<vmem>>, vector<8x72xbf16>,
    %c0_50 = arith.constant 0 : index
    %c0_51 = arith.constant 0 : index
    %c0_52 = arith.constant 0 : index
    %c1_53 = arith.constant 1 : index
    %33 = vector.load %arg2[%c0_50, %c0_51, %c0_52, %c1_53] : memref<1x4x8x128xbf16, #tpu.memory_space<vmem>>, vector<1x1x8x72xbf16>
    %34 = vector.shape_cast %33 : vector<1x1x8x72xbf16> to vector<8x72xbf16>
    %c8_54 = arith.constant 8 : index
    %c0_55 = arith.constant 0 : index
    %35 = vector.load %arg6[%c8_54, %c0_55] : memref<72x72xbf16, #tpu.memory_space<vmem>>, vector<8x72xbf16>
    tpu.vector_store %arg6[%c8_54, %c0_55], %34 {strides = array<i32>} : memref<72x72xbf16, #tpu.memory_space<vmem>>, vector<8x72xbf16>,
    %c0_56 = arith.constant 0 : index
    %c1_57 = arith.constant 1 : index
    %c0_58 = arith.constant 0 : index
    %c1_59 = arith.constant 1 : index
    %36 = vector.load %arg2[%c0_56, %c1_57, %c0_58, %c1_59] : memref<1x4x8x128xbf16, #tpu.memory_space<vmem>>, vector<1x1x8x72xbf16>
    %37 = vector.shape_cast %36 : vector<1x1x8x72xbf16> to vector<8x72xbf16>
    %c16_60 = arith.constant 16 : index
    %c0_61 = arith.constant 0 : index
    %38 = vector.load %arg6[%c16_60, %c0_61] : memref<72x72xbf16, #tpu.memory_space<vmem>>, vector<8x72xbf16>
    tpu.vector_store %arg6[%c16_60, %c0_61], %37 {strides = array<i32>} : memref<72x72xbf16, #tpu.memory_space<vmem>>, vector<8x72xbf16>,
    %c0_62 = arith.constant 0 : index
    %c3_63 = arith.constant 3 : index
    %c0_64 = arith.constant 0 : index
    %c0_65 = arith.constant 0 : index
    %39 = vector.load %arg2[%c0_62, %c3_63, %c0_64, %c0_65] : memref<1x4x8x128xbf16, #tpu.memory_space<vmem>>, vector<1x1x8x72xbf16>
    %40 = vector.shape_cast %39 : vector<1x1x8x72xbf16> to vector<8x72xbf16>
    %c24_66 = arith.constant 24 : index
    %c0_67 = arith.constant 0 : index
    %41 = vector.load %arg6[%c24_66, %c0_67] : memref<72x72xbf16, #tpu.memory_space<vmem>>, vector<8x72xbf16>
    tpu.vector_store %arg6[%c24_66, %c0_67], %40 {strides = array<i32>} : memref<72x72xbf16, #tpu.memory_space<vmem>>, vector<8x72xbf16>,
    %c0_68 = arith.constant 0 : index
    %c2_69 = arith.constant 2 : index
    %c0_70 = arith.constant 0 : index
    %c1_71 = arith.constant 1 : index
    %42 = vector.load %arg2[%c0_68, %c2_69, %c0_70, %c1_71] : memref<1x4x8x128xbf16, #tpu.memory_space<vmem>>, vector<1x1x8x72xbf16>
    %43 = vector.shape_cast %42 : vector<1x1x8x72xbf16> to vector<8x72xbf16>
    %c32_72 = arith.constant 32 : index
    %c0_73 = arith.constant 0 : index
    %44 = vector.load %arg6[%c32_72, %c0_73] : memref<72x72xbf16, #tpu.memory_space<vmem>>, vector<8x72xbf16>
    tpu.vector_store %arg6[%c32_72, %c0_73], %43 {strides = array<i32>} : memref<72x72xbf16, #tpu.memory_space<vmem>>, vector<8x72xbf16>,
    %c0_74 = arith.constant 0 : index
    %c3_75 = arith.constant 3 : index
    %c0_76 = arith.constant 0 : index
    %c1_77 = arith.constant 1 : index
    %45 = vector.load %arg2[%c0_74, %c3_75, %c0_76, %c1_77] : memref<1x4x8x128xbf16, #tpu.memory_space<vmem>>, vector<1x1x8x72xbf16>
    %46 = vector.shape_cast %45 : vector<1x1x8x72xbf16> to vector<8x72xbf16>
    %c40_78 = arith.constant 40 : index
    %c0_79 = arith.constant 0 : index
    %47 = vector.load %arg6[%c40_78, %c0_79] : memref<72x72xbf16, #tpu.memory_space<vmem>>, vector<8x72xbf16>
    tpu.vector_store %arg6[%c40_78, %c0_79], %46 {strides = array<i32>} : memref<72x72xbf16, #tpu.memory_space<vmem>>, vector<8x72xbf16>,
    %c0_80 = arith.constant 0 : index
    %c1_81 = arith.constant 1 : index
    %c0_82 = arith.constant 0 : index
    %c9_83 = arith.constant 9 : index
    %48 = vector.load %arg2[%c0_80, %c1_81, %c0_82, %c9_83] : memref<1x4x8x128xbf16, #tpu.memory_space<vmem>>, vector<1x1x8x72xbf16>
    %49 = vector.shape_cast %48 : vector<1x1x8x72xbf16> to vector<8x72xbf16>
    %c48_84 = arith.constant 48 : index
    %c0_85 = arith.constant 0 : index
    %50 = vector.load %arg6[%c48_84, %c0_85] : memref<72x72xbf16, #tpu.memory_space<vmem>>, vector<8x72xbf16>
    tpu.vector_store %arg6[%c48_84, %c0_85], %49 {strides = array<i32>} : memref<72x72xbf16, #tpu.memory_space<vmem>>, vector<8x72xbf16>,
    %c0_86 = arith.constant 0 : index
    %c0_87 = arith.constant 0 : index
    %c0_88 = arith.constant 0 : index
    %c10_89 = arith.constant 10 : index
    %51 = vector.load %arg2[%c0_86, %c0_87, %c0_88, %c10_89] : memref<1x4x8x128xbf16, #tpu.memory_space<vmem>>, vector<1x1x8x72xbf16>
    %52 = vector.shape_cast %51 : vector<1x1x8x72xbf16> to vector<8x72xbf16>
    %c56_90 = arith.constant 56 : index
    %c0_91 = arith.constant 0 : index
    %53 = vector.load %arg6[%c56_90, %c0_91] : memref<72x72xbf16, #tpu.memory_space<vmem>>, vector<8x72xbf16>
    tpu.vector_store %arg6[%c56_90, %c0_91], %52 {strides = array<i32>} : memref<72x72xbf16, #tpu.memory_space<vmem>>, vector<8x72xbf16>,
    %c0_92 = arith.constant 0 : index
    %c1_93 = arith.constant 1 : index
    %c0_94 = arith.constant 0 : index
    %c10_95 = arith.constant 10 : index
    %54 = vector.load %arg2[%c0_92, %c1_93, %c0_94, %c10_95] : memref<1x4x8x128xbf16, #tpu.memory_space<vmem>>, vector<1x1x8x72xbf16>
    %55 = vector.shape_cast %54 : vector<1x1x8x72xbf16> to vector<8x72xbf16>
    %c64_96 = arith.constant 64 : index
    %c0_97 = arith.constant 0 : index
    %56 = vector.load %arg6[%c64_96, %c0_97] : memref<72x72xbf16, #tpu.memory_space<vmem>>, vector<8x72xbf16>
    tpu.vector_store %arg6[%c64_96, %c0_97], %55 {strides = array<i32>} : memref<72x72xbf16, #tpu.memory_space<vmem>>, vector<8x72xbf16>,
    %c0_98 = arith.constant 0 : index
    %c0_99 = arith.constant 0 : index
    %57 = vector.load %arg6[%c0_98, %c0_99] : memref<72x72xbf16, #tpu.memory_space<vmem>>, vector<72x72xbf16>
    %cst_100 = arith.constant dense<0.000000e+00> : vector<32x72xf32>
    %58 = tpu.matmul %0, %57, %cst_100 {dimension_numbers = #tpu.dot_dimension_numbers<[1], [0], [0], [1], [0, 0, 1, 1], [], []>} : vector<32x72xbf16>, vector<72x72xbf16>, vector<32x72xf32> -> vector<32x72xf32>
    %59 = arith.maximumf %29, %58 : vector<32x72xf32>
    %c0_101 = arith.constant 0 : index
    %c2_102 = arith.constant 2 : index
    %c0_103 = arith.constant 0 : index
    %c0_104 = arith.constant 0 : index
    %60 = vector.load %arg2[%c0_101, %c2_102, %c0_103, %c0_104] : memref<1x4x8x128xbf16, #tpu.memory_space<vmem>>, vector<1x1x8x72xbf16>
    %61 = vector.shape_cast %60 : vector<1x1x8x72xbf16> to vector<8x72xbf16>
    %c0_105 = arith.constant 0 : index
    %c0_106 = arith.constant 0 : index
    %62 = vector.load %arg6[%c0_105, %c0_106] : memref<72x72xbf16, #tpu.memory_space<vmem>>, vector<8x72xbf16>
    tpu.vector_store %arg6[%c0_105, %c0_106], %61 {strides = array<i32>} : memref<72x72xbf16, #tpu.memory_space<vmem>>, vector<8x72xbf16>,
    %c0_107 = arith.constant 0 : index
    %c3_108 = arith.constant 3 : index
    %c0_109 = arith.constant 0 : index
    %c0_110 = arith.constant 0 : index
    %63 = vector.load %arg2[%c0_107, %c3_108, %c0_109, %c0_110] : memref<1x4x8x128xbf16, #tpu.memory_space<vmem>>, vector<1x1x8x72xbf16>
    %64 = vector.shape_cast %63 : vector<1x1x8x72xbf16> to vector<8x72xbf16>
    %c8_111 = arith.constant 8 : index
    %c0_112 = arith.constant 0 : index
    %65 = vector.load %arg6[%c8_111, %c0_112] : memref<72x72xbf16, #tpu.memory_space<vmem>>, vector<8x72xbf16>
    tpu.vector_store %arg6[%c8_111, %c0_112], %64 {strides = array<i32>} : memref<72x72xbf16, #tpu.memory_space<vmem>>, vector<8x72xbf16>,
    %c0_113 = arith.constant 0 : index
    %c2_114 = arith.constant 2 : index
    %c0_115 = arith.constant 0 : index
    %c1_116 = arith.constant 1 : index
    %66 = vector.load %arg2[%c0_113, %c2_114, %c0_115, %c1_116] : memref<1x4x8x128xbf16, #tpu.memory_space<vmem>>, vector<1x1x8x72xbf16>
    %67 = vector.shape_cast %66 : vector<1x1x8x72xbf16> to vector<8x72xbf16>
    %c16_117 = arith.constant 16 : index
    %c0_118 = arith.constant 0 : index
    %68 = vector.load %arg6[%c16_117, %c0_118] : memref<72x72xbf16, #tpu.memory_space<vmem>>, vector<8x72xbf16>
    tpu.vector_store %arg6[%c16_117, %c0_118], %67 {strides = array<i32>} : memref<72x72xbf16, #tpu.memory_space<vmem>>, vector<8x72xbf16>,
    %c0_119 = arith.constant 0 : index
    %c0_120 = arith.constant 0 : index
    %c0_121 = arith.constant 0 : index
    %c9_122 = arith.constant 9 : index
    %69 = vector.load %arg2[%c0_119, %c0_120, %c0_121, %c9_122] : memref<1x4x8x128xbf16, #tpu.memory_space<vmem>>, vector<1x1x8x72xbf16>
    %70 = vector.shape_cast %69 : vector<1x1x8x72xbf16> to vector<8x72xbf16>
    %c24_123 = arith.constant 24 : index
    %c0_124 = arith.constant 0 : index
    %71 = vector.load %arg6[%c24_123, %c0_124] : memref<72x72xbf16, #tpu.memory_space<vmem>>, vector<8x72xbf16>
    tpu.vector_store %arg6[%c24_123, %c0_124], %70 {strides = array<i32>} : memref<72x72xbf16, #tpu.memory_space<vmem>>, vector<8x72xbf16>,
    %c0_125 = arith.constant 0 : index
    %c1_126 = arith.constant 1 : index
    %c0_127 = arith.constant 0 : index
    %c9_128 = arith.constant 9 : index
    %72 = vector.load %arg2[%c0_125, %c1_126, %c0_127, %c9_128] : memref<1x4x8x128xbf16, #tpu.memory_space<vmem>>, vector<1x1x8x72xbf16>
    %73 = vector.shape_cast %72 : vector<1x1x8x72xbf16> to vector<8x72xbf16>
    %c32_129 = arith.constant 32 : index
    %c0_130 = arith.constant 0 : index
    %74 = vector.load %arg6[%c32_129, %c0_130] : memref<72x72xbf16, #tpu.memory_space<vmem>>, vector<8x72xbf16>
    tpu.vector_store %arg6[%c32_129, %c0_130], %73 {strides = array<i32>} : memref<72x72xbf16, #tpu.memory_space<vmem>>, vector<8x72xbf16>,
    %c0_131 = arith.constant 0 : index
    %c0_132 = arith.constant 0 : index
    %c0_133 = arith.constant 0 : index
    %c10_134 = arith.constant 10 : index
    %75 = vector.load %arg2[%c0_131, %c0_132, %c0_133, %c10_134] : memref<1x4x8x128xbf16, #tpu.memory_space<vmem>>, vector<1x1x8x72xbf16>
    %76 = vector.shape_cast %75 : vector<1x1x8x72xbf16> to vector<8x72xbf16>
    %c40_135 = arith.constant 40 : index
    %c0_136 = arith.constant 0 : index
    %77 = vector.load %arg6[%c40_135, %c0_136] : memref<72x72xbf16, #tpu.memory_space<vmem>>, vector<8x72xbf16>
    tpu.vector_store %arg6[%c40_135, %c0_136], %76 {strides = array<i32>} : memref<72x72xbf16, #tpu.memory_space<vmem>>, vector<8x72xbf16>,
    %c0_137 = arith.constant 0 : index
    %c2_138 = arith.constant 2 : index
    %c0_139 = arith.constant 0 : index
    %c9_140 = arith.constant 9 : index
    %78 = vector.load %arg2[%c0_137, %c2_138, %c0_139, %c9_140] : memref<1x4x8x128xbf16, #tpu.memory_space<vmem>>, vector<1x1x8x72xbf16>
    %79 = vector.shape_cast %78 : vector<1x1x8x72xbf16> to vector<8x72xbf16>
    %c48_141 = arith.constant 48 : index
    %c0_142 = arith.constant 0 : index
    %80 = vector.load %arg6[%c48_141, %c0_142] : memref<72x72xbf16, #tpu.memory_space<vmem>>, vector<8x72xbf16>
    tpu.vector_store %arg6[%c48_141, %c0_142], %79 {strides = array<i32>} : memref<72x72xbf16, #tpu.memory_space<vmem>>, vector<8x72xbf16>,
    %c0_143 = arith.constant 0 : index
    %c3_144 = arith.constant 3 : index
    %c0_145 = arith.constant 0 : index
    %c9_146 = arith.constant 9 : index
    %81 = vector.load %arg2[%c0_143, %c3_144, %c0_145, %c9_146] : memref<1x4x8x128xbf16, #tpu.memory_space<vmem>>, vector<1x1x8x72xbf16>
    %82 = vector.shape_cast %81 : vector<1x1x8x72xbf16> to vector<8x72xbf16>
    %c56_147 = arith.constant 56 : index
    %c0_148 = arith.constant 0 : index
    %83 = vector.load %arg6[%c56_147, %c0_148] : memref<72x72xbf16, #tpu.memory_space<vmem>>, vector<8x72xbf16>
    tpu.vector_store %arg6[%c56_147, %c0_148], %82 {strides = array<i32>} : memref<72x72xbf16, #tpu.memory_space<vmem>>, vector<8x72xbf16>,
    %c0_149 = arith.constant 0 : index
    %c2_150 = arith.constant 2 : index
    %c0_151 = arith.constant 0 : index
    %c10_152 = arith.constant 10 : index
    %84 = vector.load %arg2[%c0_149, %c2_150, %c0_151, %c10_152] : memref<1x4x8x128xbf16, #tpu.memory_space<vmem>>, vector<1x1x8x72xbf16>
    %85 = vector.shape_cast %84 : vector<1x1x8x72xbf16> to vector<8x72xbf16>
    %c64_153 = arith.constant 64 : index
    %c0_154 = arith.constant 0 : index
    %86 = vector.load %arg6[%c64_153, %c0_154] : memref<72x72xbf16, #tpu.memory_space<vmem>>, vector<8x72xbf16>
    tpu.vector_store %arg6[%c64_153, %c0_154], %85 {strides = array<i32>} : memref<72x72xbf16, #tpu.memory_space<vmem>>, vector<8x72xbf16>,
    %c0_155 = arith.constant 0 : index
    %c0_156 = arith.constant 0 : index
    %87 = vector.load %arg6[%c0_155, %c0_156] : memref<72x72xbf16, #tpu.memory_space<vmem>>, vector<72x72xbf16>
    %cst_157 = arith.constant dense<0.000000e+00> : vector<32x72xf32>
    %88 = tpu.matmul %0, %87, %cst_157 {dimension_numbers = #tpu.dot_dimension_numbers<[1], [0], [0], [1], [0, 0, 1, 1], [], []>} : vector<32x72xbf16>, vector<72x72xbf16>, vector<32x72xf32> -> vector<32x72xf32>
    %89 = arith.maximumf %59, %88 : vector<32x72xf32>
    %c0_158 = arith.constant 0 : index
    %c3_159 = arith.constant 3 : index
    %c0_160 = arith.constant 0 : index
    %c0_161 = arith.constant 0 : index
    %90 = vector.load %arg2[%c0_158, %c3_159, %c0_160, %c0_161] : memref<1x4x8x128xbf16, #tpu.memory_space<vmem>>, vector<1x1x8x72xbf16>
    %91 = vector.shape_cast %90 : vector<1x1x8x72xbf16> to vector<8x72xbf16>
    %c0_162 = arith.constant 0 : index
    %c0_163 = arith.constant 0 : index
    %92 = vector.load %arg6[%c0_162, %c0_163] : memref<72x72xbf16, #tpu.memory_space<vmem>>, vector<8x72xbf16>
    tpu.vector_store %arg6[%c0_162, %c0_163], %91 {strides = array<i32>} : memref<72x72xbf16, #tpu.memory_space<vmem>>, vector<8x72xbf16>,
    %c0_164 = arith.constant 0 : index
    %c2_165 = arith.constant 2 : index
    %c0_166 = arith.constant 0 : index
    %c1_167 = arith.constant 1 : index
    %93 = vector.load %arg2[%c0_164, %c2_165, %c0_166, %c1_167] : memref<1x4x8x128xbf16, #tpu.memory_space<vmem>>, vector<1x1x8x72xbf16>
    %94 = vector.shape_cast %93 : vector<1x1x8x72xbf16> to vector<8x72xbf16>
    %c8_168 = arith.constant 8 : index
    %c0_169 = arith.constant 0 : index
    %95 = vector.load %arg6[%c8_168, %c0_169] : memref<72x72xbf16, #tpu.memory_space<vmem>>, vector<8x72xbf16>
    tpu.vector_store %arg6[%c8_168, %c0_169], %94 {strides = array<i32>} : memref<72x72xbf16, #tpu.memory_space<vmem>>, vector<8x72xbf16>,
    %c0_170 = arith.constant 0 : index
    %c3_171 = arith.constant 3 : index
    %c0_172 = arith.constant 0 : index
    %c1_173 = arith.constant 1 : index
    %96 = vector.load %arg2[%c0_170, %c3_171, %c0_172, %c1_173] : memref<1x4x8x128xbf16, #tpu.memory_space<vmem>>, vector<1x1x8x72xbf16>
    %97 = vector.shape_cast %96 : vector<1x1x8x72xbf16> to vector<8x72xbf16>
    %c16_174 = arith.constant 16 : index
    %c0_175 = arith.constant 0 : index
    %98 = vector.load %arg6[%c16_174, %c0_175] : memref<72x72xbf16, #tpu.memory_space<vmem>>, vector<8x72xbf16>
    tpu.vector_store %arg6[%c16_174, %c0_175], %97 {strides = array<i32>} : memref<72x72xbf16, #tpu.memory_space<vmem>>, vector<8x72xbf16>,
    %c0_176 = arith.constant 0 : index
    %c1_177 = arith.constant 1 : index
    %c0_178 = arith.constant 0 : index
    %c9_179 = arith.constant 9 : index
    %99 = vector.load %arg2[%c0_176, %c1_177, %c0_178, %c9_179] : memref<1x4x8x128xbf16, #tpu.memory_space<vmem>>, vector<1x1x8x72xbf16>
    %100 = vector.shape_cast %99 : vector<1x1x8x72xbf16> to vector<8x72xbf16>
    %c24_180 = arith.constant 24 : index
    %c0_181 = arith.constant 0 : index
    %101 = vector.load %arg6[%c24_180, %c0_181] : memref<72x72xbf16, #tpu.memory_space<vmem>>, vector<8x72xbf16>
    tpu.vector_store %arg6[%c24_180, %c0_181], %100 {strides = array<i32>} : memref<72x72xbf16, #tpu.memory_space<vmem>>, vector<8x72xbf16>,
    %c0_182 = arith.constant 0 : index
    %c0_183 = arith.constant 0 : index
    %c0_184 = arith.constant 0 : index
    %c10_185 = arith.constant 10 : index
    %102 = vector.load %arg2[%c0_182, %c0_183, %c0_184, %c10_185] : memref<1x4x8x128xbf16, #tpu.memory_space<vmem>>, vector<1x1x8x72xbf16>
    %103 = vector.shape_cast %102 : vector<1x1x8x72xbf16> to vector<8x72xbf16>
    %c32_186 = arith.constant 32 : index
    %c0_187 = arith.constant 0 : index
    %104 = vector.load %arg6[%c32_186, %c0_187] : memref<72x72xbf16, #tpu.memory_space<vmem>>, vector<8x72xbf16>
    tpu.vector_store %arg6[%c32_186, %c0_187], %103 {strides = array<i32>} : memref<72x72xbf16, #tpu.memory_space<vmem>>, vector<8x72xbf16>,
    %c0_188 = arith.constant 0 : index
    %c1_189 = arith.constant 1 : index
    %c0_190 = arith.constant 0 : index
    %c10_191 = arith.constant 10 : index
    %105 = vector.load %arg2[%c0_188, %c1_189, %c0_190, %c10_191] : memref<1x4x8x128xbf16, #tpu.memory_space<vmem>>, vector<1x1x8x72xbf16>
    %106 = vector.shape_cast %105 : vector<1x1x8x72xbf16> to vector<8x72xbf16>
    %c40_192 = arith.constant 40 : index
    %c0_193 = arith.constant 0 : index
    %107 = vector.load %arg6[%c40_192, %c0_193] : memref<72x72xbf16, #tpu.memory_space<vmem>>, vector<8x72xbf16>
    tpu.vector_store %arg6[%c40_192, %c0_193], %106 {strides = array<i32>} : memref<72x72xbf16, #tpu.memory_space<vmem>>, vector<8x72xbf16>,
    %c0_194 = arith.constant 0 : index
    %c3_195 = arith.constant 3 : index
    %c0_196 = arith.constant 0 : index
    %c9_197 = arith.constant 9 : index
    %108 = vector.load %arg2[%c0_194, %c3_195, %c0_196, %c9_197] : memref<1x4x8x128xbf16, #tpu.memory_space<vmem>>, vector<1x1x8x72xbf16>
    %109 = vector.shape_cast %108 : vector<1x1x8x72xbf16> to vector<8x72xbf16>
    %c48_198 = arith.constant 48 : index
    %c0_199 = arith.constant 0 : index
    %110 = vector.load %arg6[%c48_198, %c0_199] : memref<72x72xbf16, #tpu.memory_space<vmem>>, vector<8x72xbf16>
    tpu.vector_store %arg6[%c48_198, %c0_199], %109 {strides = array<i32>} : memref<72x72xbf16, #tpu.memory_space<vmem>>, vector<8x72xbf16>,
    %c0_200 = arith.constant 0 : index
    %c2_201 = arith.constant 2 : index
    %c0_202 = arith.constant 0 : index
    %c10_203 = arith.constant 10 : index
    %111 = vector.load %arg2[%c0_200, %c2_201, %c0_202, %c10_203] : memref<1x4x8x128xbf16, #tpu.memory_space<vmem>>, vector<1x1x8x72xbf16>
    %112 = vector.shape_cast %111 : vector<1x1x8x72xbf16> to vector<8x72xbf16>
    %c56_204 = arith.constant 56 : index
    %c0_205 = arith.constant 0 : index
    %113 = vector.load %arg6[%c56_204, %c0_205] : memref<72x72xbf16, #tpu.memory_space<vmem>>, vector<8x72xbf16>
    tpu.vector_store %arg6[%c56_204, %c0_205], %112 {strides = array<i32>} : memref<72x72xbf16, #tpu.memory_space<vmem>>, vector<8x72xbf16>,
    %c0_206 = arith.constant 0 : index
    %c3_207 = arith.constant 3 : index
    %c0_208 = arith.constant 0 : index
    %c10_209 = arith.constant 10 : index
    %114 = vector.load %arg2[%c0_206, %c3_207, %c0_208, %c10_209] : memref<1x4x8x128xbf16, #tpu.memory_space<vmem>>, vector<1x1x8x72xbf16>
    %115 = vector.shape_cast %114 : vector<1x1x8x72xbf16> to vector<8x72xbf16>
    %c64_210 = arith.constant 64 : index
    %c0_211 = arith.constant 0 : index
    %116 = vector.load %arg6[%c64_210, %c0_211] : memref<72x72xbf16, #tpu.memory_space<vmem>>, vector<8x72xbf16>
    tpu.vector_store %arg6[%c64_210, %c0_211], %115 {strides = array<i32>} : memref<72x72xbf16, #tpu.memory_space<vmem>>, vector<8x72xbf16>,
    %c0_212 = arith.constant 0 : index
    %c0_213 = arith.constant 0 : index
    %117 = vector.load %arg6[%c0_212, %c0_213] : memref<72x72xbf16, #tpu.memory_space<vmem>>, vector<72x72xbf16>
    %cst_214 = arith.constant dense<0.000000e+00> : vector<32x72xf32>
    %118 = tpu.matmul %0, %117, %cst_214 {dimension_numbers = #tpu.dot_dimension_numbers<[1], [0], [0], [1], [0, 0, 1, 1], [], []>} : vector<32x72xbf16>, vector<72x72xbf16>, vector<32x72xf32> -> vector<32x72xf32>
    %119 = arith.maximumf %89, %118 : vector<32x72xf32>
    %c0_215 = arith.constant 0 : index
    %c0_216 = arith.constant 0 : index
    %120 = vector.load %arg4[%c0_215, %c0_216] : memref<32x1xf32, #tpu.memory_space<vmem>>, vector<32x1xf32>
    %121 = vector.broadcast %120 : vector<32x1xf32> to vector<32x72xf32>
    %122 = arith.addf %119, %121 : vector<32x72xf32>
    %cst_217 = arith.constant 0.000000e+00 : f32
    %123 = vector.broadcast %cst_217 : f32 to vector<32x72xf32>
    %124 = arith.maximumf %122, %123 : vector<32x72xf32>
    %125 = arith.truncf %124 : vector<32x72xf32> to vector<32x72xbf16>
    %c0_218 = arith.constant 0 : index
    %c0_219 = arith.constant 0 : index
    %c0_220 = arith.constant 0 : index
    %126 = vector.load %arg5[%c0_218, %c0_219, %c0_220] : memref<1x32x72xbf16, #tpu.memory_space<vmem>>, vector<1x32x72xbf16>
    %127 = vector.shape_cast %126 : vector<1x32x72xbf16> to vector<32x72xbf16>
    %128 = vector.shape_cast %125 : vector<32x72xbf16> to vector<1x32x72xbf16>
    tpu.vector_store %arg5[%c0_218, %c0_219, %c0_220], %128 {strides = array<i32>} : memref<1x32x72xbf16, #tpu.memory_space<vmem>>, vector<1x32x72xbf16>,
    return
  }
  func.func @transform_0(%arg0: i32, %arg1: i32) -> (i32, i32, i32, i32) {
    %c0_i32 = arith.constant 0 : i32
    %c0_i32_0 = arith.constant 0 : i32
    %c0_i32_1 = arith.constant 0 : i32
    %c0_i32_2 = arith.constant 0 : i32
    return %arg0, %c0_i32, %c0_i32_0, %c0_i32_1 : i32, i32, i32, i32
  }
  func.func @transform_1(%arg0: i32, %arg1: i32) -> (i32, i32) {
    %c0_i32 = arith.constant 0 : i32
    %c0_i32_0 = arith.constant 0 : i32
    return %arg1, %c0_i32 : i32, i32
  }
  func.func @transform_2(%arg0: i32, %arg1: i32) -> (i32, i32) {
    %c0_i32 = arith.constant 0 : i32
    %c0_i32_0 = arith.constant 0 : i32
    return %arg1, %c0_i32 : i32, i32
  }
  func.func @transform_3(%arg0: i32, %arg1: i32) -> (i32, i32, i32) {
    %c0_i32 = arith.constant 0 : i32
    %c0_i32_0 = arith.constant 0 : i32
    return %arg0, %arg1, %c0_i32 : i32, i32, i32
  }
}

module attributes {stable_mosaic.version = 11 : i64} {
  func.func @kernel(%arg0: i32, %arg1: i32, %arg2: memref<1x4x32x128xbf16, #tpu.memory_space<vmem>>, %arg3: memref<32x288xbf16, #tpu.memory_space<vmem>>, %arg4: memref<32x1xf32, #tpu.memory_space<vmem>>, %arg5: memref<1x32x20xbf16, #tpu.memory_space<vmem>>, %arg6: memref<288x20xbf16, #tpu.memory_space<vmem>>) attributes {dimension_semantics = [#tpu.dimension_semantics<parallel>, #tpu.dimension_semantics<parallel>], iteration_bounds = array<i64: 2, 2>, scalar_prefetch = 0 : i64, scratch_operands = 1 : i64, tpu.core_type = #tpu.core_type<tc>, window_params = [{transform_indices = @transform_0, window_bounds = array<i64: 1, 4, 32, 128>}, {transform_indices = @transform_1, window_bounds = array<i64: 32, 288>}, {transform_indices = @transform_2, window_bounds = array<i64: 32, 1>}, {transform_indices = @transform_3, window_bounds = array<i64: 1, 32, 20>}]} {
    %c0 = arith.constant 0 : index
    %c0_0 = arith.constant 0 : index
    %0 = vector.load %arg3[%c0, %c0_0] : memref<32x288xbf16, #tpu.memory_space<vmem>>, vector<32x288xbf16>
    %c0_1 = arith.constant 0 : index
    %c0_2 = arith.constant 0 : index
    %c0_3 = arith.constant 0 : index
    %c0_4 = arith.constant 0 : index
    %1 = vector.load %arg2[%c0_1, %c0_2, %c0_3, %c0_4] : memref<1x4x32x128xbf16, #tpu.memory_space<vmem>>, vector<1x1x32x20xbf16>
    %2 = vector.shape_cast %1 : vector<1x1x32x20xbf16> to vector<32x20xbf16>
    %c0_5 = arith.constant 0 : index
    %c0_6 = arith.constant 0 : index
    %3 = vector.load %arg6[%c0_5, %c0_6] : memref<288x20xbf16, #tpu.memory_space<vmem>>, vector<32x20xbf16>
    tpu.vector_store %arg6[%c0_5, %c0_6], %2 {strides = array<i32>} : memref<288x20xbf16, #tpu.memory_space<vmem>>, vector<32x20xbf16>,
    %c0_7 = arith.constant 0 : index
    %c1 = arith.constant 1 : index
    %c0_8 = arith.constant 0 : index
    %c0_9 = arith.constant 0 : index
    %4 = vector.load %arg2[%c0_7, %c1, %c0_8, %c0_9] : memref<1x4x32x128xbf16, #tpu.memory_space<vmem>>, vector<1x1x32x20xbf16>
    %5 = vector.shape_cast %4 : vector<1x1x32x20xbf16> to vector<32x20xbf16>
    %c32 = arith.constant 32 : index
    %c0_10 = arith.constant 0 : index
    %6 = vector.load %arg6[%c32, %c0_10] : memref<288x20xbf16, #tpu.memory_space<vmem>>, vector<32x20xbf16>
    tpu.vector_store %arg6[%c32, %c0_10], %5 {strides = array<i32>} : memref<288x20xbf16, #tpu.memory_space<vmem>>, vector<32x20xbf16>,
    %c0_11 = arith.constant 0 : index
    %c0_12 = arith.constant 0 : index
    %c0_13 = arith.constant 0 : index
    %c1_14 = arith.constant 1 : index
    %7 = vector.load %arg2[%c0_11, %c0_12, %c0_13, %c1_14] : memref<1x4x32x128xbf16, #tpu.memory_space<vmem>>, vector<1x1x32x20xbf16>
    %8 = vector.shape_cast %7 : vector<1x1x32x20xbf16> to vector<32x20xbf16>
    %c64 = arith.constant 64 : index
    %c0_15 = arith.constant 0 : index
    %9 = vector.load %arg6[%c64, %c0_15] : memref<288x20xbf16, #tpu.memory_space<vmem>>, vector<32x20xbf16>
    tpu.vector_store %arg6[%c64, %c0_15], %8 {strides = array<i32>} : memref<288x20xbf16, #tpu.memory_space<vmem>>, vector<32x20xbf16>,
    %c0_16 = arith.constant 0 : index
    %c2 = arith.constant 2 : index
    %c0_17 = arith.constant 0 : index
    %c0_18 = arith.constant 0 : index
    %10 = vector.load %arg2[%c0_16, %c2, %c0_17, %c0_18] : memref<1x4x32x128xbf16, #tpu.memory_space<vmem>>, vector<1x1x32x20xbf16>
    %11 = vector.shape_cast %10 : vector<1x1x32x20xbf16> to vector<32x20xbf16>
    %c96 = arith.constant 96 : index
    %c0_19 = arith.constant 0 : index
    %12 = vector.load %arg6[%c96, %c0_19] : memref<288x20xbf16, #tpu.memory_space<vmem>>, vector<32x20xbf16>
    tpu.vector_store %arg6[%c96, %c0_19], %11 {strides = array<i32>} : memref<288x20xbf16, #tpu.memory_space<vmem>>, vector<32x20xbf16>,
    %c0_20 = arith.constant 0 : index
    %c3 = arith.constant 3 : index
    %c0_21 = arith.constant 0 : index
    %c0_22 = arith.constant 0 : index
    %13 = vector.load %arg2[%c0_20, %c3, %c0_21, %c0_22] : memref<1x4x32x128xbf16, #tpu.memory_space<vmem>>, vector<1x1x32x20xbf16>
    %14 = vector.shape_cast %13 : vector<1x1x32x20xbf16> to vector<32x20xbf16>
    %c128 = arith.constant 128 : index
    %c0_23 = arith.constant 0 : index
    %15 = vector.load %arg6[%c128, %c0_23] : memref<288x20xbf16, #tpu.memory_space<vmem>>, vector<32x20xbf16>
    tpu.vector_store %arg6[%c128, %c0_23], %14 {strides = array<i32>} : memref<288x20xbf16, #tpu.memory_space<vmem>>, vector<32x20xbf16>,
    %c0_24 = arith.constant 0 : index
    %c2_25 = arith.constant 2 : index
    %c0_26 = arith.constant 0 : index
    %c1_27 = arith.constant 1 : index
    %16 = vector.load %arg2[%c0_24, %c2_25, %c0_26, %c1_27] : memref<1x4x32x128xbf16, #tpu.memory_space<vmem>>, vector<1x1x32x20xbf16>
    %17 = vector.shape_cast %16 : vector<1x1x32x20xbf16> to vector<32x20xbf16>
    %c160 = arith.constant 160 : index
    %c0_28 = arith.constant 0 : index
    %18 = vector.load %arg6[%c160, %c0_28] : memref<288x20xbf16, #tpu.memory_space<vmem>>, vector<32x20xbf16>
    tpu.vector_store %arg6[%c160, %c0_28], %17 {strides = array<i32>} : memref<288x20xbf16, #tpu.memory_space<vmem>>, vector<32x20xbf16>,
    %c0_29 = arith.constant 0 : index
    %c0_30 = arith.constant 0 : index
    %c0_31 = arith.constant 0 : index
    %c5 = arith.constant 5 : index
    %19 = vector.load %arg2[%c0_29, %c0_30, %c0_31, %c5] : memref<1x4x32x128xbf16, #tpu.memory_space<vmem>>, vector<1x1x32x20xbf16>
    %20 = vector.shape_cast %19 : vector<1x1x32x20xbf16> to vector<32x20xbf16>
    %c192 = arith.constant 192 : index
    %c0_32 = arith.constant 0 : index
    %21 = vector.load %arg6[%c192, %c0_32] : memref<288x20xbf16, #tpu.memory_space<vmem>>, vector<32x20xbf16>
    tpu.vector_store %arg6[%c192, %c0_32], %20 {strides = array<i32>} : memref<288x20xbf16, #tpu.memory_space<vmem>>, vector<32x20xbf16>,
    %c0_33 = arith.constant 0 : index
    %c1_34 = arith.constant 1 : index
    %c0_35 = arith.constant 0 : index
    %c5_36 = arith.constant 5 : index
    %22 = vector.load %arg2[%c0_33, %c1_34, %c0_35, %c5_36] : memref<1x4x32x128xbf16, #tpu.memory_space<vmem>>, vector<1x1x32x20xbf16>
    %23 = vector.shape_cast %22 : vector<1x1x32x20xbf16> to vector<32x20xbf16>
    %c224 = arith.constant 224 : index
    %c0_37 = arith.constant 0 : index
    %24 = vector.load %arg6[%c224, %c0_37] : memref<288x20xbf16, #tpu.memory_space<vmem>>, vector<32x20xbf16>
    tpu.vector_store %arg6[%c224, %c0_37], %23 {strides = array<i32>} : memref<288x20xbf16, #tpu.memory_space<vmem>>, vector<32x20xbf16>,
    %c0_38 = arith.constant 0 : index
    %c0_39 = arith.constant 0 : index
    %c0_40 = arith.constant 0 : index
    %c6 = arith.constant 6 : index
    %25 = vector.load %arg2[%c0_38, %c0_39, %c0_40, %c6] : memref<1x4x32x128xbf16, #tpu.memory_space<vmem>>, vector<1x1x32x20xbf16>
    %26 = vector.shape_cast %25 : vector<1x1x32x20xbf16> to vector<32x20xbf16>
    %c256 = arith.constant 256 : index
    %c0_41 = arith.constant 0 : index
    %27 = vector.load %arg6[%c256, %c0_41] : memref<288x20xbf16, #tpu.memory_space<vmem>>, vector<32x20xbf16>
    tpu.vector_store %arg6[%c256, %c0_41], %26 {strides = array<i32>} : memref<288x20xbf16, #tpu.memory_space<vmem>>, vector<32x20xbf16>,
    %c0_42 = arith.constant 0 : index
    %c0_43 = arith.constant 0 : index
    %28 = vector.load %arg6[%c0_42, %c0_43] : memref<288x20xbf16, #tpu.memory_space<vmem>>, vector<288x20xbf16>
    %cst = arith.constant dense<0.000000e+00> : vector<32x20xf32>
    %29 = tpu.matmul %0, %28, %cst {dimension_numbers = #tpu.dot_dimension_numbers<[1], [0], [0], [1], [0, 0, 1, 1], [], []>} : vector<32x288xbf16>, vector<288x20xbf16>, vector<32x20xf32> -> vector<32x20xf32>
    %c0_44 = arith.constant 0 : index
    %c1_45 = arith.constant 1 : index
    %c0_46 = arith.constant 0 : index
    %c0_47 = arith.constant 0 : index
    %30 = vector.load %arg2[%c0_44, %c1_45, %c0_46, %c0_47] : memref<1x4x32x128xbf16, #tpu.memory_space<vmem>>, vector<1x1x32x20xbf16>
    %31 = vector.shape_cast %30 : vector<1x1x32x20xbf16> to vector<32x20xbf16>
    %c0_48 = arith.constant 0 : index
    %c0_49 = arith.constant 0 : index
    %32 = vector.load %arg6[%c0_48, %c0_49] : memref<288x20xbf16, #tpu.memory_space<vmem>>, vector<32x20xbf16>
    tpu.vector_store %arg6[%c0_48, %c0_49], %31 {strides = array<i32>} : memref<288x20xbf16, #tpu.memory_space<vmem>>, vector<32x20xbf16>,
    %c0_50 = arith.constant 0 : index
    %c0_51 = arith.constant 0 : index
    %c0_52 = arith.constant 0 : index
    %c1_53 = arith.constant 1 : index
    %33 = vector.load %arg2[%c0_50, %c0_51, %c0_52, %c1_53] : memref<1x4x32x128xbf16, #tpu.memory_space<vmem>>, vector<1x1x32x20xbf16>
    %34 = vector.shape_cast %33 : vector<1x1x32x20xbf16> to vector<32x20xbf16>
    %c32_54 = arith.constant 32 : index
    %c0_55 = arith.constant 0 : index
    %35 = vector.load %arg6[%c32_54, %c0_55] : memref<288x20xbf16, #tpu.memory_space<vmem>>, vector<32x20xbf16>
    tpu.vector_store %arg6[%c32_54, %c0_55], %34 {strides = array<i32>} : memref<288x20xbf16, #tpu.memory_space<vmem>>, vector<32x20xbf16>,
    %c0_56 = arith.constant 0 : index
    %c1_57 = arith.constant 1 : index
    %c0_58 = arith.constant 0 : index
    %c1_59 = arith.constant 1 : index
    %36 = vector.load %arg2[%c0_56, %c1_57, %c0_58, %c1_59] : memref<1x4x32x128xbf16, #tpu.memory_space<vmem>>, vector<1x1x32x20xbf16>
    %37 = vector.shape_cast %36 : vector<1x1x32x20xbf16> to vector<32x20xbf16>
    %c64_60 = arith.constant 64 : index
    %c0_61 = arith.constant 0 : index
    %38 = vector.load %arg6[%c64_60, %c0_61] : memref<288x20xbf16, #tpu.memory_space<vmem>>, vector<32x20xbf16>
    tpu.vector_store %arg6[%c64_60, %c0_61], %37 {strides = array<i32>} : memref<288x20xbf16, #tpu.memory_space<vmem>>, vector<32x20xbf16>,
    %c0_62 = arith.constant 0 : index
    %c3_63 = arith.constant 3 : index
    %c0_64 = arith.constant 0 : index
    %c0_65 = arith.constant 0 : index
    %39 = vector.load %arg2[%c0_62, %c3_63, %c0_64, %c0_65] : memref<1x4x32x128xbf16, #tpu.memory_space<vmem>>, vector<1x1x32x20xbf16>
    %40 = vector.shape_cast %39 : vector<1x1x32x20xbf16> to vector<32x20xbf16>
    %c96_66 = arith.constant 96 : index
    %c0_67 = arith.constant 0 : index
    %41 = vector.load %arg6[%c96_66, %c0_67] : memref<288x20xbf16, #tpu.memory_space<vmem>>, vector<32x20xbf16>
    tpu.vector_store %arg6[%c96_66, %c0_67], %40 {strides = array<i32>} : memref<288x20xbf16, #tpu.memory_space<vmem>>, vector<32x20xbf16>,
    %c0_68 = arith.constant 0 : index
    %c2_69 = arith.constant 2 : index
    %c0_70 = arith.constant 0 : index
    %c1_71 = arith.constant 1 : index
    %42 = vector.load %arg2[%c0_68, %c2_69, %c0_70, %c1_71] : memref<1x4x32x128xbf16, #tpu.memory_space<vmem>>, vector<1x1x32x20xbf16>
    %43 = vector.shape_cast %42 : vector<1x1x32x20xbf16> to vector<32x20xbf16>
    %c128_72 = arith.constant 128 : index
    %c0_73 = arith.constant 0 : index
    %44 = vector.load %arg6[%c128_72, %c0_73] : memref<288x20xbf16, #tpu.memory_space<vmem>>, vector<32x20xbf16>
    tpu.vector_store %arg6[%c128_72, %c0_73], %43 {strides = array<i32>} : memref<288x20xbf16, #tpu.memory_space<vmem>>, vector<32x20xbf16>,
    %c0_74 = arith.constant 0 : index
    %c3_75 = arith.constant 3 : index
    %c0_76 = arith.constant 0 : index
    %c1_77 = arith.constant 1 : index
    %45 = vector.load %arg2[%c0_74, %c3_75, %c0_76, %c1_77] : memref<1x4x32x128xbf16, #tpu.memory_space<vmem>>, vector<1x1x32x20xbf16>
    %46 = vector.shape_cast %45 : vector<1x1x32x20xbf16> to vector<32x20xbf16>
    %c160_78 = arith.constant 160 : index
    %c0_79 = arith.constant 0 : index
    %47 = vector.load %arg6[%c160_78, %c0_79] : memref<288x20xbf16, #tpu.memory_space<vmem>>, vector<32x20xbf16>
    tpu.vector_store %arg6[%c160_78, %c0_79], %46 {strides = array<i32>} : memref<288x20xbf16, #tpu.memory_space<vmem>>, vector<32x20xbf16>,
    %c0_80 = arith.constant 0 : index
    %c1_81 = arith.constant 1 : index
    %c0_82 = arith.constant 0 : index
    %c5_83 = arith.constant 5 : index
    %48 = vector.load %arg2[%c0_80, %c1_81, %c0_82, %c5_83] : memref<1x4x32x128xbf16, #tpu.memory_space<vmem>>, vector<1x1x32x20xbf16>
    %49 = vector.shape_cast %48 : vector<1x1x32x20xbf16> to vector<32x20xbf16>
    %c192_84 = arith.constant 192 : index
    %c0_85 = arith.constant 0 : index
    %50 = vector.load %arg6[%c192_84, %c0_85] : memref<288x20xbf16, #tpu.memory_space<vmem>>, vector<32x20xbf16>
    tpu.vector_store %arg6[%c192_84, %c0_85], %49 {strides = array<i32>} : memref<288x20xbf16, #tpu.memory_space<vmem>>, vector<32x20xbf16>,
    %c0_86 = arith.constant 0 : index
    %c0_87 = arith.constant 0 : index
    %c0_88 = arith.constant 0 : index
    %c6_89 = arith.constant 6 : index
    %51 = vector.load %arg2[%c0_86, %c0_87, %c0_88, %c6_89] : memref<1x4x32x128xbf16, #tpu.memory_space<vmem>>, vector<1x1x32x20xbf16>
    %52 = vector.shape_cast %51 : vector<1x1x32x20xbf16> to vector<32x20xbf16>
    %c224_90 = arith.constant 224 : index
    %c0_91 = arith.constant 0 : index
    %53 = vector.load %arg6[%c224_90, %c0_91] : memref<288x20xbf16, #tpu.memory_space<vmem>>, vector<32x20xbf16>
    tpu.vector_store %arg6[%c224_90, %c0_91], %52 {strides = array<i32>} : memref<288x20xbf16, #tpu.memory_space<vmem>>, vector<32x20xbf16>,
    %c0_92 = arith.constant 0 : index
    %c1_93 = arith.constant 1 : index
    %c0_94 = arith.constant 0 : index
    %c6_95 = arith.constant 6 : index
    %54 = vector.load %arg2[%c0_92, %c1_93, %c0_94, %c6_95] : memref<1x4x32x128xbf16, #tpu.memory_space<vmem>>, vector<1x1x32x20xbf16>
    %55 = vector.shape_cast %54 : vector<1x1x32x20xbf16> to vector<32x20xbf16>
    %c256_96 = arith.constant 256 : index
    %c0_97 = arith.constant 0 : index
    %56 = vector.load %arg6[%c256_96, %c0_97] : memref<288x20xbf16, #tpu.memory_space<vmem>>, vector<32x20xbf16>
    tpu.vector_store %arg6[%c256_96, %c0_97], %55 {strides = array<i32>} : memref<288x20xbf16, #tpu.memory_space<vmem>>, vector<32x20xbf16>,
    %c0_98 = arith.constant 0 : index
    %c0_99 = arith.constant 0 : index
    %57 = vector.load %arg6[%c0_98, %c0_99] : memref<288x20xbf16, #tpu.memory_space<vmem>>, vector<288x20xbf16>
    %cst_100 = arith.constant dense<0.000000e+00> : vector<32x20xf32>
    %58 = tpu.matmul %0, %57, %cst_100 {dimension_numbers = #tpu.dot_dimension_numbers<[1], [0], [0], [1], [0, 0, 1, 1], [], []>} : vector<32x288xbf16>, vector<288x20xbf16>, vector<32x20xf32> -> vector<32x20xf32>
    %59 = arith.maximumf %29, %58 : vector<32x20xf32>
    %c0_101 = arith.constant 0 : index
    %c2_102 = arith.constant 2 : index
    %c0_103 = arith.constant 0 : index
    %c0_104 = arith.constant 0 : index
    %60 = vector.load %arg2[%c0_101, %c2_102, %c0_103, %c0_104] : memref<1x4x32x128xbf16, #tpu.memory_space<vmem>>, vector<1x1x32x20xbf16>
    %61 = vector.shape_cast %60 : vector<1x1x32x20xbf16> to vector<32x20xbf16>
    %c0_105 = arith.constant 0 : index
    %c0_106 = arith.constant 0 : index
    %62 = vector.load %arg6[%c0_105, %c0_106] : memref<288x20xbf16, #tpu.memory_space<vmem>>, vector<32x20xbf16>
    tpu.vector_store %arg6[%c0_105, %c0_106], %61 {strides = array<i32>} : memref<288x20xbf16, #tpu.memory_space<vmem>>, vector<32x20xbf16>,
    %c0_107 = arith.constant 0 : index
    %c3_108 = arith.constant 3 : index
    %c0_109 = arith.constant 0 : index
    %c0_110 = arith.constant 0 : index
    %63 = vector.load %arg2[%c0_107, %c3_108, %c0_109, %c0_110] : memref<1x4x32x128xbf16, #tpu.memory_space<vmem>>, vector<1x1x32x20xbf16>
    %64 = vector.shape_cast %63 : vector<1x1x32x20xbf16> to vector<32x20xbf16>
    %c32_111 = arith.constant 32 : index
    %c0_112 = arith.constant 0 : index
    %65 = vector.load %arg6[%c32_111, %c0_112] : memref<288x20xbf16, #tpu.memory_space<vmem>>, vector<32x20xbf16>
    tpu.vector_store %arg6[%c32_111, %c0_112], %64 {strides = array<i32>} : memref<288x20xbf16, #tpu.memory_space<vmem>>, vector<32x20xbf16>,
    %c0_113 = arith.constant 0 : index
    %c2_114 = arith.constant 2 : index
    %c0_115 = arith.constant 0 : index
    %c1_116 = arith.constant 1 : index
    %66 = vector.load %arg2[%c0_113, %c2_114, %c0_115, %c1_116] : memref<1x4x32x128xbf16, #tpu.memory_space<vmem>>, vector<1x1x32x20xbf16>
    %67 = vector.shape_cast %66 : vector<1x1x32x20xbf16> to vector<32x20xbf16>
    %c64_117 = arith.constant 64 : index
    %c0_118 = arith.constant 0 : index
    %68 = vector.load %arg6[%c64_117, %c0_118] : memref<288x20xbf16, #tpu.memory_space<vmem>>, vector<32x20xbf16>
    tpu.vector_store %arg6[%c64_117, %c0_118], %67 {strides = array<i32>} : memref<288x20xbf16, #tpu.memory_space<vmem>>, vector<32x20xbf16>,
    %c0_119 = arith.constant 0 : index
    %c0_120 = arith.constant 0 : index
    %c0_121 = arith.constant 0 : index
    %c5_122 = arith.constant 5 : index
    %69 = vector.load %arg2[%c0_119, %c0_120, %c0_121, %c5_122] : memref<1x4x32x128xbf16, #tpu.memory_space<vmem>>, vector<1x1x32x20xbf16>
    %70 = vector.shape_cast %69 : vector<1x1x32x20xbf16> to vector<32x20xbf16>
    %c96_123 = arith.constant 96 : index
    %c0_124 = arith.constant 0 : index
    %71 = vector.load %arg6[%c96_123, %c0_124] : memref<288x20xbf16, #tpu.memory_space<vmem>>, vector<32x20xbf16>
    tpu.vector_store %arg6[%c96_123, %c0_124], %70 {strides = array<i32>} : memref<288x20xbf16, #tpu.memory_space<vmem>>, vector<32x20xbf16>,
    %c0_125 = arith.constant 0 : index
    %c1_126 = arith.constant 1 : index
    %c0_127 = arith.constant 0 : index
    %c5_128 = arith.constant 5 : index
    %72 = vector.load %arg2[%c0_125, %c1_126, %c0_127, %c5_128] : memref<1x4x32x128xbf16, #tpu.memory_space<vmem>>, vector<1x1x32x20xbf16>
    %73 = vector.shape_cast %72 : vector<1x1x32x20xbf16> to vector<32x20xbf16>
    %c128_129 = arith.constant 128 : index
    %c0_130 = arith.constant 0 : index
    %74 = vector.load %arg6[%c128_129, %c0_130] : memref<288x20xbf16, #tpu.memory_space<vmem>>, vector<32x20xbf16>
    tpu.vector_store %arg6[%c128_129, %c0_130], %73 {strides = array<i32>} : memref<288x20xbf16, #tpu.memory_space<vmem>>, vector<32x20xbf16>,
    %c0_131 = arith.constant 0 : index
    %c0_132 = arith.constant 0 : index
    %c0_133 = arith.constant 0 : index
    %c6_134 = arith.constant 6 : index
    %75 = vector.load %arg2[%c0_131, %c0_132, %c0_133, %c6_134] : memref<1x4x32x128xbf16, #tpu.memory_space<vmem>>, vector<1x1x32x20xbf16>
    %76 = vector.shape_cast %75 : vector<1x1x32x20xbf16> to vector<32x20xbf16>
    %c160_135 = arith.constant 160 : index
    %c0_136 = arith.constant 0 : index
    %77 = vector.load %arg6[%c160_135, %c0_136] : memref<288x20xbf16, #tpu.memory_space<vmem>>, vector<32x20xbf16>
    tpu.vector_store %arg6[%c160_135, %c0_136], %76 {strides = array<i32>} : memref<288x20xbf16, #tpu.memory_space<vmem>>, vector<32x20xbf16>,
    %c0_137 = arith.constant 0 : index
    %c2_138 = arith.constant 2 : index
    %c0_139 = arith.constant 0 : index
    %c5_140 = arith.constant 5 : index
    %78 = vector.load %arg2[%c0_137, %c2_138, %c0_139, %c5_140] : memref<1x4x32x128xbf16, #tpu.memory_space<vmem>>, vector<1x1x32x20xbf16>
    %79 = vector.shape_cast %78 : vector<1x1x32x20xbf16> to vector<32x20xbf16>
    %c192_141 = arith.constant 192 : index
    %c0_142 = arith.constant 0 : index
    %80 = vector.load %arg6[%c192_141, %c0_142] : memref<288x20xbf16, #tpu.memory_space<vmem>>, vector<32x20xbf16>
    tpu.vector_store %arg6[%c192_141, %c0_142], %79 {strides = array<i32>} : memref<288x20xbf16, #tpu.memory_space<vmem>>, vector<32x20xbf16>,
    %c0_143 = arith.constant 0 : index
    %c3_144 = arith.constant 3 : index
    %c0_145 = arith.constant 0 : index
    %c5_146 = arith.constant 5 : index
    %81 = vector.load %arg2[%c0_143, %c3_144, %c0_145, %c5_146] : memref<1x4x32x128xbf16, #tpu.memory_space<vmem>>, vector<1x1x32x20xbf16>
    %82 = vector.shape_cast %81 : vector<1x1x32x20xbf16> to vector<32x20xbf16>
    %c224_147 = arith.constant 224 : index
    %c0_148 = arith.constant 0 : index
    %83 = vector.load %arg6[%c224_147, %c0_148] : memref<288x20xbf16, #tpu.memory_space<vmem>>, vector<32x20xbf16>
    tpu.vector_store %arg6[%c224_147, %c0_148], %82 {strides = array<i32>} : memref<288x20xbf16, #tpu.memory_space<vmem>>, vector<32x20xbf16>,
    %c0_149 = arith.constant 0 : index
    %c2_150 = arith.constant 2 : index
    %c0_151 = arith.constant 0 : index
    %c6_152 = arith.constant 6 : index
    %84 = vector.load %arg2[%c0_149, %c2_150, %c0_151, %c6_152] : memref<1x4x32x128xbf16, #tpu.memory_space<vmem>>, vector<1x1x32x20xbf16>
    %85 = vector.shape_cast %84 : vector<1x1x32x20xbf16> to vector<32x20xbf16>
    %c256_153 = arith.constant 256 : index
    %c0_154 = arith.constant 0 : index
    %86 = vector.load %arg6[%c256_153, %c0_154] : memref<288x20xbf16, #tpu.memory_space<vmem>>, vector<32x20xbf16>
    tpu.vector_store %arg6[%c256_153, %c0_154], %85 {strides = array<i32>} : memref<288x20xbf16, #tpu.memory_space<vmem>>, vector<32x20xbf16>,
    %c0_155 = arith.constant 0 : index
    %c0_156 = arith.constant 0 : index
    %87 = vector.load %arg6[%c0_155, %c0_156] : memref<288x20xbf16, #tpu.memory_space<vmem>>, vector<288x20xbf16>
    %cst_157 = arith.constant dense<0.000000e+00> : vector<32x20xf32>
    %88 = tpu.matmul %0, %87, %cst_157 {dimension_numbers = #tpu.dot_dimension_numbers<[1], [0], [0], [1], [0, 0, 1, 1], [], []>} : vector<32x288xbf16>, vector<288x20xbf16>, vector<32x20xf32> -> vector<32x20xf32>
    %89 = arith.maximumf %59, %88 : vector<32x20xf32>
    %c0_158 = arith.constant 0 : index
    %c3_159 = arith.constant 3 : index
    %c0_160 = arith.constant 0 : index
    %c0_161 = arith.constant 0 : index
    %90 = vector.load %arg2[%c0_158, %c3_159, %c0_160, %c0_161] : memref<1x4x32x128xbf16, #tpu.memory_space<vmem>>, vector<1x1x32x20xbf16>
    %91 = vector.shape_cast %90 : vector<1x1x32x20xbf16> to vector<32x20xbf16>
    %c0_162 = arith.constant 0 : index
    %c0_163 = arith.constant 0 : index
    %92 = vector.load %arg6[%c0_162, %c0_163] : memref<288x20xbf16, #tpu.memory_space<vmem>>, vector<32x20xbf16>
    tpu.vector_store %arg6[%c0_162, %c0_163], %91 {strides = array<i32>} : memref<288x20xbf16, #tpu.memory_space<vmem>>, vector<32x20xbf16>,
    %c0_164 = arith.constant 0 : index
    %c2_165 = arith.constant 2 : index
    %c0_166 = arith.constant 0 : index
    %c1_167 = arith.constant 1 : index
    %93 = vector.load %arg2[%c0_164, %c2_165, %c0_166, %c1_167] : memref<1x4x32x128xbf16, #tpu.memory_space<vmem>>, vector<1x1x32x20xbf16>
    %94 = vector.shape_cast %93 : vector<1x1x32x20xbf16> to vector<32x20xbf16>
    %c32_168 = arith.constant 32 : index
    %c0_169 = arith.constant 0 : index
    %95 = vector.load %arg6[%c32_168, %c0_169] : memref<288x20xbf16, #tpu.memory_space<vmem>>, vector<32x20xbf16>
    tpu.vector_store %arg6[%c32_168, %c0_169], %94 {strides = array<i32>} : memref<288x20xbf16, #tpu.memory_space<vmem>>, vector<32x20xbf16>,
    %c0_170 = arith.constant 0 : index
    %c3_171 = arith.constant 3 : index
    %c0_172 = arith.constant 0 : index
    %c1_173 = arith.constant 1 : index
    %96 = vector.load %arg2[%c0_170, %c3_171, %c0_172, %c1_173] : memref<1x4x32x128xbf16, #tpu.memory_space<vmem>>, vector<1x1x32x20xbf16>
    %97 = vector.shape_cast %96 : vector<1x1x32x20xbf16> to vector<32x20xbf16>
    %c64_174 = arith.constant 64 : index
    %c0_175 = arith.constant 0 : index
    %98 = vector.load %arg6[%c64_174, %c0_175] : memref<288x20xbf16, #tpu.memory_space<vmem>>, vector<32x20xbf16>
    tpu.vector_store %arg6[%c64_174, %c0_175], %97 {strides = array<i32>} : memref<288x20xbf16, #tpu.memory_space<vmem>>, vector<32x20xbf16>,
    %c0_176 = arith.constant 0 : index
    %c1_177 = arith.constant 1 : index
    %c0_178 = arith.constant 0 : index
    %c5_179 = arith.constant 5 : index
    %99 = vector.load %arg2[%c0_176, %c1_177, %c0_178, %c5_179] : memref<1x4x32x128xbf16, #tpu.memory_space<vmem>>, vector<1x1x32x20xbf16>
    %100 = vector.shape_cast %99 : vector<1x1x32x20xbf16> to vector<32x20xbf16>
    %c96_180 = arith.constant 96 : index
    %c0_181 = arith.constant 0 : index
    %101 = vector.load %arg6[%c96_180, %c0_181] : memref<288x20xbf16, #tpu.memory_space<vmem>>, vector<32x20xbf16>
    tpu.vector_store %arg6[%c96_180, %c0_181], %100 {strides = array<i32>} : memref<288x20xbf16, #tpu.memory_space<vmem>>, vector<32x20xbf16>,
    %c0_182 = arith.constant 0 : index
    %c0_183 = arith.constant 0 : index
    %c0_184 = arith.constant 0 : index
    %c6_185 = arith.constant 6 : index
    %102 = vector.load %arg2[%c0_182, %c0_183, %c0_184, %c6_185] : memref<1x4x32x128xbf16, #tpu.memory_space<vmem>>, vector<1x1x32x20xbf16>
    %103 = vector.shape_cast %102 : vector<1x1x32x20xbf16> to vector<32x20xbf16>
    %c128_186 = arith.constant 128 : index
    %c0_187 = arith.constant 0 : index
    %104 = vector.load %arg6[%c128_186, %c0_187] : memref<288x20xbf16, #tpu.memory_space<vmem>>, vector<32x20xbf16>
    tpu.vector_store %arg6[%c128_186, %c0_187], %103 {strides = array<i32>} : memref<288x20xbf16, #tpu.memory_space<vmem>>, vector<32x20xbf16>,
    %c0_188 = arith.constant 0 : index
    %c1_189 = arith.constant 1 : index
    %c0_190 = arith.constant 0 : index
    %c6_191 = arith.constant 6 : index
    %105 = vector.load %arg2[%c0_188, %c1_189, %c0_190, %c6_191] : memref<1x4x32x128xbf16, #tpu.memory_space<vmem>>, vector<1x1x32x20xbf16>
    %106 = vector.shape_cast %105 : vector<1x1x32x20xbf16> to vector<32x20xbf16>
    %c160_192 = arith.constant 160 : index
    %c0_193 = arith.constant 0 : index
    %107 = vector.load %arg6[%c160_192, %c0_193] : memref<288x20xbf16, #tpu.memory_space<vmem>>, vector<32x20xbf16>
    tpu.vector_store %arg6[%c160_192, %c0_193], %106 {strides = array<i32>} : memref<288x20xbf16, #tpu.memory_space<vmem>>, vector<32x20xbf16>,
    %c0_194 = arith.constant 0 : index
    %c3_195 = arith.constant 3 : index
    %c0_196 = arith.constant 0 : index
    %c5_197 = arith.constant 5 : index
    %108 = vector.load %arg2[%c0_194, %c3_195, %c0_196, %c5_197] : memref<1x4x32x128xbf16, #tpu.memory_space<vmem>>, vector<1x1x32x20xbf16>
    %109 = vector.shape_cast %108 : vector<1x1x32x20xbf16> to vector<32x20xbf16>
    %c192_198 = arith.constant 192 : index
    %c0_199 = arith.constant 0 : index
    %110 = vector.load %arg6[%c192_198, %c0_199] : memref<288x20xbf16, #tpu.memory_space<vmem>>, vector<32x20xbf16>
    tpu.vector_store %arg6[%c192_198, %c0_199], %109 {strides = array<i32>} : memref<288x20xbf16, #tpu.memory_space<vmem>>, vector<32x20xbf16>,
    %c0_200 = arith.constant 0 : index
    %c2_201 = arith.constant 2 : index
    %c0_202 = arith.constant 0 : index
    %c6_203 = arith.constant 6 : index
    %111 = vector.load %arg2[%c0_200, %c2_201, %c0_202, %c6_203] : memref<1x4x32x128xbf16, #tpu.memory_space<vmem>>, vector<1x1x32x20xbf16>
    %112 = vector.shape_cast %111 : vector<1x1x32x20xbf16> to vector<32x20xbf16>
    %c224_204 = arith.constant 224 : index
    %c0_205 = arith.constant 0 : index
    %113 = vector.load %arg6[%c224_204, %c0_205] : memref<288x20xbf16, #tpu.memory_space<vmem>>, vector<32x20xbf16>
    tpu.vector_store %arg6[%c224_204, %c0_205], %112 {strides = array<i32>} : memref<288x20xbf16, #tpu.memory_space<vmem>>, vector<32x20xbf16>,
    %c0_206 = arith.constant 0 : index
    %c3_207 = arith.constant 3 : index
    %c0_208 = arith.constant 0 : index
    %c6_209 = arith.constant 6 : index
    %114 = vector.load %arg2[%c0_206, %c3_207, %c0_208, %c6_209] : memref<1x4x32x128xbf16, #tpu.memory_space<vmem>>, vector<1x1x32x20xbf16>
    %115 = vector.shape_cast %114 : vector<1x1x32x20xbf16> to vector<32x20xbf16>
    %c256_210 = arith.constant 256 : index
    %c0_211 = arith.constant 0 : index
    %116 = vector.load %arg6[%c256_210, %c0_211] : memref<288x20xbf16, #tpu.memory_space<vmem>>, vector<32x20xbf16>
    tpu.vector_store %arg6[%c256_210, %c0_211], %115 {strides = array<i32>} : memref<288x20xbf16, #tpu.memory_space<vmem>>, vector<32x20xbf16>,
    %c0_212 = arith.constant 0 : index
    %c0_213 = arith.constant 0 : index
    %117 = vector.load %arg6[%c0_212, %c0_213] : memref<288x20xbf16, #tpu.memory_space<vmem>>, vector<288x20xbf16>
    %cst_214 = arith.constant dense<0.000000e+00> : vector<32x20xf32>
    %118 = tpu.matmul %0, %117, %cst_214 {dimension_numbers = #tpu.dot_dimension_numbers<[1], [0], [0], [1], [0, 0, 1, 1], [], []>} : vector<32x288xbf16>, vector<288x20xbf16>, vector<32x20xf32> -> vector<32x20xf32>
    %119 = arith.maximumf %89, %118 : vector<32x20xf32>
    %c0_215 = arith.constant 0 : index
    %c0_216 = arith.constant 0 : index
    %120 = vector.load %arg4[%c0_215, %c0_216] : memref<32x1xf32, #tpu.memory_space<vmem>>, vector<32x1xf32>
    %121 = vector.broadcast %120 : vector<32x1xf32> to vector<32x20xf32>
    %122 = arith.addf %119, %121 : vector<32x20xf32>
    %cst_217 = arith.constant 0.000000e+00 : f32
    %123 = vector.broadcast %cst_217 : f32 to vector<32x20xf32>
    %124 = arith.maximumf %122, %123 : vector<32x20xf32>
    %125 = arith.truncf %124 : vector<32x20xf32> to vector<32x20xbf16>
    %c0_218 = arith.constant 0 : index
    %c0_219 = arith.constant 0 : index
    %c0_220 = arith.constant 0 : index
    %126 = vector.load %arg5[%c0_218, %c0_219, %c0_220] : memref<1x32x20xbf16, #tpu.memory_space<vmem>>, vector<1x32x20xbf16>
    %127 = vector.shape_cast %126 : vector<1x32x20xbf16> to vector<32x20xbf16>
    %128 = vector.shape_cast %125 : vector<32x20xbf16> to vector<1x32x20xbf16>
    tpu.vector_store %arg5[%c0_218, %c0_219, %c0_220], %128 {strides = array<i32>} : memref<1x32x20xbf16, #tpu.memory_space<vmem>>, vector<1x32x20xbf16>,
    return
  }
  func.func @transform_0(%arg0: i32, %arg1: i32) -> (i32, i32, i32, i32) {
    %c0_i32 = arith.constant 0 : i32
    %c0_i32_0 = arith.constant 0 : i32
    %c0_i32_1 = arith.constant 0 : i32
    %c0_i32_2 = arith.constant 0 : i32
    return %arg0, %c0_i32, %c0_i32_0, %c0_i32_1 : i32, i32, i32, i32
  }
  func.func @transform_1(%arg0: i32, %arg1: i32) -> (i32, i32) {
    %c0_i32 = arith.constant 0 : i32
    %c0_i32_0 = arith.constant 0 : i32
    return %arg1, %c0_i32 : i32, i32
  }
  func.func @transform_2(%arg0: i32, %arg1: i32) -> (i32, i32) {
    %c0_i32 = arith.constant 0 : i32
    %c0_i32_0 = arith.constant 0 : i32
    return %arg1, %c0_i32 : i32, i32
  }
  func.func @transform_3(%arg0: i32, %arg1: i32) -> (i32, i32, i32) {
    %c0_i32 = arith.constant 0 : i32
    %c0_i32_0 = arith.constant 0 : i32
    return %arg0, %arg1, %c0_i32 : i32, i32, i32
  }
}

module attributes {stable_mosaic.version = 11 : i64} {
  func.func @kernel(%arg0: i32, %arg1: i32, %arg2: memref<1x4x64x128xbf16, #tpu.memory_space<vmem>>, %arg3: memref<64x576xbf16, #tpu.memory_space<vmem>>, %arg4: memref<64x1xf32, #tpu.memory_space<vmem>>, %arg5: memref<1x64x6xbf16, #tpu.memory_space<vmem>>, %arg6: memref<576x6xbf16, #tpu.memory_space<vmem>>) attributes {dimension_semantics = [#tpu.dimension_semantics<parallel>, #tpu.dimension_semantics<parallel>], iteration_bounds = array<i64: 2, 2>, scalar_prefetch = 0 : i64, scratch_operands = 1 : i64, tpu.core_type = #tpu.core_type<tc>, window_params = [{transform_indices = @transform_0, window_bounds = array<i64: 1, 4, 64, 128>}, {transform_indices = @transform_1, window_bounds = array<i64: 64, 576>}, {transform_indices = @transform_2, window_bounds = array<i64: 64, 1>}, {transform_indices = @transform_3, window_bounds = array<i64: 1, 64, 6>}]} {
    %c0 = arith.constant 0 : index
    %c0_0 = arith.constant 0 : index
    %0 = vector.load %arg3[%c0, %c0_0] : memref<64x576xbf16, #tpu.memory_space<vmem>>, vector<64x576xbf16>
    %c0_1 = arith.constant 0 : index
    %c0_2 = arith.constant 0 : index
    %c0_3 = arith.constant 0 : index
    %c0_4 = arith.constant 0 : index
    %1 = vector.load %arg2[%c0_1, %c0_2, %c0_3, %c0_4] : memref<1x4x64x128xbf16, #tpu.memory_space<vmem>>, vector<1x1x64x6xbf16>
    %2 = vector.shape_cast %1 : vector<1x1x64x6xbf16> to vector<64x6xbf16>
    %c0_5 = arith.constant 0 : index
    %c0_6 = arith.constant 0 : index
    %3 = vector.load %arg6[%c0_5, %c0_6] : memref<576x6xbf16, #tpu.memory_space<vmem>>, vector<64x6xbf16>
    tpu.vector_store %arg6[%c0_5, %c0_6], %2 {strides = array<i32>} : memref<576x6xbf16, #tpu.memory_space<vmem>>, vector<64x6xbf16>,
    %c0_7 = arith.constant 0 : index
    %c1 = arith.constant 1 : index
    %c0_8 = arith.constant 0 : index
    %c0_9 = arith.constant 0 : index
    %4 = vector.load %arg2[%c0_7, %c1, %c0_8, %c0_9] : memref<1x4x64x128xbf16, #tpu.memory_space<vmem>>, vector<1x1x64x6xbf16>
    %5 = vector.shape_cast %4 : vector<1x1x64x6xbf16> to vector<64x6xbf16>
    %c64 = arith.constant 64 : index
    %c0_10 = arith.constant 0 : index
    %6 = vector.load %arg6[%c64, %c0_10] : memref<576x6xbf16, #tpu.memory_space<vmem>>, vector<64x6xbf16>
    tpu.vector_store %arg6[%c64, %c0_10], %5 {strides = array<i32>} : memref<576x6xbf16, #tpu.memory_space<vmem>>, vector<64x6xbf16>,
    %c0_11 = arith.constant 0 : index
    %c0_12 = arith.constant 0 : index
    %c0_13 = arith.constant 0 : index
    %c1_14 = arith.constant 1 : index
    %7 = vector.load %arg2[%c0_11, %c0_12, %c0_13, %c1_14] : memref<1x4x64x128xbf16, #tpu.memory_space<vmem>>, vector<1x1x64x6xbf16>
    %8 = vector.shape_cast %7 : vector<1x1x64x6xbf16> to vector<64x6xbf16>
    %c128 = arith.constant 128 : index
    %c0_15 = arith.constant 0 : index
    %9 = vector.load %arg6[%c128, %c0_15] : memref<576x6xbf16, #tpu.memory_space<vmem>>, vector<64x6xbf16>
    tpu.vector_store %arg6[%c128, %c0_15], %8 {strides = array<i32>} : memref<576x6xbf16, #tpu.memory_space<vmem>>, vector<64x6xbf16>,
    %c0_16 = arith.constant 0 : index
    %c2 = arith.constant 2 : index
    %c0_17 = arith.constant 0 : index
    %c0_18 = arith.constant 0 : index
    %10 = vector.load %arg2[%c0_16, %c2, %c0_17, %c0_18] : memref<1x4x64x128xbf16, #tpu.memory_space<vmem>>, vector<1x1x64x6xbf16>
    %11 = vector.shape_cast %10 : vector<1x1x64x6xbf16> to vector<64x6xbf16>
    %c192 = arith.constant 192 : index
    %c0_19 = arith.constant 0 : index
    %12 = vector.load %arg6[%c192, %c0_19] : memref<576x6xbf16, #tpu.memory_space<vmem>>, vector<64x6xbf16>
    tpu.vector_store %arg6[%c192, %c0_19], %11 {strides = array<i32>} : memref<576x6xbf16, #tpu.memory_space<vmem>>, vector<64x6xbf16>,
    %c0_20 = arith.constant 0 : index
    %c3 = arith.constant 3 : index
    %c0_21 = arith.constant 0 : index
    %c0_22 = arith.constant 0 : index
    %13 = vector.load %arg2[%c0_20, %c3, %c0_21, %c0_22] : memref<1x4x64x128xbf16, #tpu.memory_space<vmem>>, vector<1x1x64x6xbf16>
    %14 = vector.shape_cast %13 : vector<1x1x64x6xbf16> to vector<64x6xbf16>
    %c256 = arith.constant 256 : index
    %c0_23 = arith.constant 0 : index
    %15 = vector.load %arg6[%c256, %c0_23] : memref<576x6xbf16, #tpu.memory_space<vmem>>, vector<64x6xbf16>
    tpu.vector_store %arg6[%c256, %c0_23], %14 {strides = array<i32>} : memref<576x6xbf16, #tpu.memory_space<vmem>>, vector<64x6xbf16>,
    %c0_24 = arith.constant 0 : index
    %c2_25 = arith.constant 2 : index
    %c0_26 = arith.constant 0 : index
    %c1_27 = arith.constant 1 : index
    %16 = vector.load %arg2[%c0_24, %c2_25, %c0_26, %c1_27] : memref<1x4x64x128xbf16, #tpu.memory_space<vmem>>, vector<1x1x64x6xbf16>
    %17 = vector.shape_cast %16 : vector<1x1x64x6xbf16> to vector<64x6xbf16>
    %c320 = arith.constant 320 : index
    %c0_28 = arith.constant 0 : index
    %18 = vector.load %arg6[%c320, %c0_28] : memref<576x6xbf16, #tpu.memory_space<vmem>>, vector<64x6xbf16>
    tpu.vector_store %arg6[%c320, %c0_28], %17 {strides = array<i32>} : memref<576x6xbf16, #tpu.memory_space<vmem>>, vector<64x6xbf16>,
    %c0_29 = arith.constant 0 : index
    %c0_30 = arith.constant 0 : index
    %c0_31 = arith.constant 0 : index
    %c3_32 = arith.constant 3 : index
    %19 = vector.load %arg2[%c0_29, %c0_30, %c0_31, %c3_32] : memref<1x4x64x128xbf16, #tpu.memory_space<vmem>>, vector<1x1x64x6xbf16>
    %20 = vector.shape_cast %19 : vector<1x1x64x6xbf16> to vector<64x6xbf16>
    %c384 = arith.constant 384 : index
    %c0_33 = arith.constant 0 : index
    %21 = vector.load %arg6[%c384, %c0_33] : memref<576x6xbf16, #tpu.memory_space<vmem>>, vector<64x6xbf16>
    tpu.vector_store %arg6[%c384, %c0_33], %20 {strides = array<i32>} : memref<576x6xbf16, #tpu.memory_space<vmem>>, vector<64x6xbf16>,
    %c0_34 = arith.constant 0 : index
    %c1_35 = arith.constant 1 : index
    %c0_36 = arith.constant 0 : index
    %c3_37 = arith.constant 3 : index
    %22 = vector.load %arg2[%c0_34, %c1_35, %c0_36, %c3_37] : memref<1x4x64x128xbf16, #tpu.memory_space<vmem>>, vector<1x1x64x6xbf16>
    %23 = vector.shape_cast %22 : vector<1x1x64x6xbf16> to vector<64x6xbf16>
    %c448 = arith.constant 448 : index
    %c0_38 = arith.constant 0 : index
    %24 = vector.load %arg6[%c448, %c0_38] : memref<576x6xbf16, #tpu.memory_space<vmem>>, vector<64x6xbf16>
    tpu.vector_store %arg6[%c448, %c0_38], %23 {strides = array<i32>} : memref<576x6xbf16, #tpu.memory_space<vmem>>, vector<64x6xbf16>,
    %c0_39 = arith.constant 0 : index
    %c0_40 = arith.constant 0 : index
    %c0_41 = arith.constant 0 : index
    %c4 = arith.constant 4 : index
    %25 = vector.load %arg2[%c0_39, %c0_40, %c0_41, %c4] : memref<1x4x64x128xbf16, #tpu.memory_space<vmem>>, vector<1x1x64x6xbf16>
    %26 = vector.shape_cast %25 : vector<1x1x64x6xbf16> to vector<64x6xbf16>
    %c512 = arith.constant 512 : index
    %c0_42 = arith.constant 0 : index
    %27 = vector.load %arg6[%c512, %c0_42] : memref<576x6xbf16, #tpu.memory_space<vmem>>, vector<64x6xbf16>
    tpu.vector_store %arg6[%c512, %c0_42], %26 {strides = array<i32>} : memref<576x6xbf16, #tpu.memory_space<vmem>>, vector<64x6xbf16>,
    %c0_43 = arith.constant 0 : index
    %c0_44 = arith.constant 0 : index
    %28 = vector.load %arg6[%c0_43, %c0_44] : memref<576x6xbf16, #tpu.memory_space<vmem>>, vector<576x6xbf16>
    %cst = arith.constant dense<0.000000e+00> : vector<64x6xf32>
    %29 = tpu.matmul %0, %28, %cst {dimension_numbers = #tpu.dot_dimension_numbers<[1], [0], [0], [1], [0, 0, 1, 1], [], []>} : vector<64x576xbf16>, vector<576x6xbf16>, vector<64x6xf32> -> vector<64x6xf32>
    %c0_45 = arith.constant 0 : index
    %c1_46 = arith.constant 1 : index
    %c0_47 = arith.constant 0 : index
    %c0_48 = arith.constant 0 : index
    %30 = vector.load %arg2[%c0_45, %c1_46, %c0_47, %c0_48] : memref<1x4x64x128xbf16, #tpu.memory_space<vmem>>, vector<1x1x64x6xbf16>
    %31 = vector.shape_cast %30 : vector<1x1x64x6xbf16> to vector<64x6xbf16>
    %c0_49 = arith.constant 0 : index
    %c0_50 = arith.constant 0 : index
    %32 = vector.load %arg6[%c0_49, %c0_50] : memref<576x6xbf16, #tpu.memory_space<vmem>>, vector<64x6xbf16>
    tpu.vector_store %arg6[%c0_49, %c0_50], %31 {strides = array<i32>} : memref<576x6xbf16, #tpu.memory_space<vmem>>, vector<64x6xbf16>,
    %c0_51 = arith.constant 0 : index
    %c0_52 = arith.constant 0 : index
    %c0_53 = arith.constant 0 : index
    %c1_54 = arith.constant 1 : index
    %33 = vector.load %arg2[%c0_51, %c0_52, %c0_53, %c1_54] : memref<1x4x64x128xbf16, #tpu.memory_space<vmem>>, vector<1x1x64x6xbf16>
    %34 = vector.shape_cast %33 : vector<1x1x64x6xbf16> to vector<64x6xbf16>
    %c64_55 = arith.constant 64 : index
    %c0_56 = arith.constant 0 : index
    %35 = vector.load %arg6[%c64_55, %c0_56] : memref<576x6xbf16, #tpu.memory_space<vmem>>, vector<64x6xbf16>
    tpu.vector_store %arg6[%c64_55, %c0_56], %34 {strides = array<i32>} : memref<576x6xbf16, #tpu.memory_space<vmem>>, vector<64x6xbf16>,
    %c0_57 = arith.constant 0 : index
    %c1_58 = arith.constant 1 : index
    %c0_59 = arith.constant 0 : index
    %c1_60 = arith.constant 1 : index
    %36 = vector.load %arg2[%c0_57, %c1_58, %c0_59, %c1_60] : memref<1x4x64x128xbf16, #tpu.memory_space<vmem>>, vector<1x1x64x6xbf16>
    %37 = vector.shape_cast %36 : vector<1x1x64x6xbf16> to vector<64x6xbf16>
    %c128_61 = arith.constant 128 : index
    %c0_62 = arith.constant 0 : index
    %38 = vector.load %arg6[%c128_61, %c0_62] : memref<576x6xbf16, #tpu.memory_space<vmem>>, vector<64x6xbf16>
    tpu.vector_store %arg6[%c128_61, %c0_62], %37 {strides = array<i32>} : memref<576x6xbf16, #tpu.memory_space<vmem>>, vector<64x6xbf16>,
    %c0_63 = arith.constant 0 : index
    %c3_64 = arith.constant 3 : index
    %c0_65 = arith.constant 0 : index
    %c0_66 = arith.constant 0 : index
    %39 = vector.load %arg2[%c0_63, %c3_64, %c0_65, %c0_66] : memref<1x4x64x128xbf16, #tpu.memory_space<vmem>>, vector<1x1x64x6xbf16>
    %40 = vector.shape_cast %39 : vector<1x1x64x6xbf16> to vector<64x6xbf16>
    %c192_67 = arith.constant 192 : index
    %c0_68 = arith.constant 0 : index
    %41 = vector.load %arg6[%c192_67, %c0_68] : memref<576x6xbf16, #tpu.memory_space<vmem>>, vector<64x6xbf16>
    tpu.vector_store %arg6[%c192_67, %c0_68], %40 {strides = array<i32>} : memref<576x6xbf16, #tpu.memory_space<vmem>>, vector<64x6xbf16>,
    %c0_69 = arith.constant 0 : index
    %c2_70 = arith.constant 2 : index
    %c0_71 = arith.constant 0 : index
    %c1_72 = arith.constant 1 : index
    %42 = vector.load %arg2[%c0_69, %c2_70, %c0_71, %c1_72] : memref<1x4x64x128xbf16, #tpu.memory_space<vmem>>, vector<1x1x64x6xbf16>
    %43 = vector.shape_cast %42 : vector<1x1x64x6xbf16> to vector<64x6xbf16>
    %c256_73 = arith.constant 256 : index
    %c0_74 = arith.constant 0 : index
    %44 = vector.load %arg6[%c256_73, %c0_74] : memref<576x6xbf16, #tpu.memory_space<vmem>>, vector<64x6xbf16>
    tpu.vector_store %arg6[%c256_73, %c0_74], %43 {strides = array<i32>} : memref<576x6xbf16, #tpu.memory_space<vmem>>, vector<64x6xbf16>,
    %c0_75 = arith.constant 0 : index
    %c3_76 = arith.constant 3 : index
    %c0_77 = arith.constant 0 : index
    %c1_78 = arith.constant 1 : index
    %45 = vector.load %arg2[%c0_75, %c3_76, %c0_77, %c1_78] : memref<1x4x64x128xbf16, #tpu.memory_space<vmem>>, vector<1x1x64x6xbf16>
    %46 = vector.shape_cast %45 : vector<1x1x64x6xbf16> to vector<64x6xbf16>
    %c320_79 = arith.constant 320 : index
    %c0_80 = arith.constant 0 : index
    %47 = vector.load %arg6[%c320_79, %c0_80] : memref<576x6xbf16, #tpu.memory_space<vmem>>, vector<64x6xbf16>
    tpu.vector_store %arg6[%c320_79, %c0_80], %46 {strides = array<i32>} : memref<576x6xbf16, #tpu.memory_space<vmem>>, vector<64x6xbf16>,
    %c0_81 = arith.constant 0 : index
    %c1_82 = arith.constant 1 : index
    %c0_83 = arith.constant 0 : index
    %c3_84 = arith.constant 3 : index
    %48 = vector.load %arg2[%c0_81, %c1_82, %c0_83, %c3_84] : memref<1x4x64x128xbf16, #tpu.memory_space<vmem>>, vector<1x1x64x6xbf16>
    %49 = vector.shape_cast %48 : vector<1x1x64x6xbf16> to vector<64x6xbf16>
    %c384_85 = arith.constant 384 : index
    %c0_86 = arith.constant 0 : index
    %50 = vector.load %arg6[%c384_85, %c0_86] : memref<576x6xbf16, #tpu.memory_space<vmem>>, vector<64x6xbf16>
    tpu.vector_store %arg6[%c384_85, %c0_86], %49 {strides = array<i32>} : memref<576x6xbf16, #tpu.memory_space<vmem>>, vector<64x6xbf16>,
    %c0_87 = arith.constant 0 : index
    %c0_88 = arith.constant 0 : index
    %c0_89 = arith.constant 0 : index
    %c4_90 = arith.constant 4 : index
    %51 = vector.load %arg2[%c0_87, %c0_88, %c0_89, %c4_90] : memref<1x4x64x128xbf16, #tpu.memory_space<vmem>>, vector<1x1x64x6xbf16>
    %52 = vector.shape_cast %51 : vector<1x1x64x6xbf16> to vector<64x6xbf16>
    %c448_91 = arith.constant 448 : index
    %c0_92 = arith.constant 0 : index
    %53 = vector.load %arg6[%c448_91, %c0_92] : memref<576x6xbf16, #tpu.memory_space<vmem>>, vector<64x6xbf16>
    tpu.vector_store %arg6[%c448_91, %c0_92], %52 {strides = array<i32>} : memref<576x6xbf16, #tpu.memory_space<vmem>>, vector<64x6xbf16>,
    %c0_93 = arith.constant 0 : index
    %c1_94 = arith.constant 1 : index
    %c0_95 = arith.constant 0 : index
    %c4_96 = arith.constant 4 : index
    %54 = vector.load %arg2[%c0_93, %c1_94, %c0_95, %c4_96] : memref<1x4x64x128xbf16, #tpu.memory_space<vmem>>, vector<1x1x64x6xbf16>
    %55 = vector.shape_cast %54 : vector<1x1x64x6xbf16> to vector<64x6xbf16>
    %c512_97 = arith.constant 512 : index
    %c0_98 = arith.constant 0 : index
    %56 = vector.load %arg6[%c512_97, %c0_98] : memref<576x6xbf16, #tpu.memory_space<vmem>>, vector<64x6xbf16>
    tpu.vector_store %arg6[%c512_97, %c0_98], %55 {strides = array<i32>} : memref<576x6xbf16, #tpu.memory_space<vmem>>, vector<64x6xbf16>,
    %c0_99 = arith.constant 0 : index
    %c0_100 = arith.constant 0 : index
    %57 = vector.load %arg6[%c0_99, %c0_100] : memref<576x6xbf16, #tpu.memory_space<vmem>>, vector<576x6xbf16>
    %cst_101 = arith.constant dense<0.000000e+00> : vector<64x6xf32>
    %58 = tpu.matmul %0, %57, %cst_101 {dimension_numbers = #tpu.dot_dimension_numbers<[1], [0], [0], [1], [0, 0, 1, 1], [], []>} : vector<64x576xbf16>, vector<576x6xbf16>, vector<64x6xf32> -> vector<64x6xf32>
    %59 = arith.maximumf %29, %58 : vector<64x6xf32>
    %c0_102 = arith.constant 0 : index
    %c2_103 = arith.constant 2 : index
    %c0_104 = arith.constant 0 : index
    %c0_105 = arith.constant 0 : index
    %60 = vector.load %arg2[%c0_102, %c2_103, %c0_104, %c0_105] : memref<1x4x64x128xbf16, #tpu.memory_space<vmem>>, vector<1x1x64x6xbf16>
    %61 = vector.shape_cast %60 : vector<1x1x64x6xbf16> to vector<64x6xbf16>
    %c0_106 = arith.constant 0 : index
    %c0_107 = arith.constant 0 : index
    %62 = vector.load %arg6[%c0_106, %c0_107] : memref<576x6xbf16, #tpu.memory_space<vmem>>, vector<64x6xbf16>
    tpu.vector_store %arg6[%c0_106, %c0_107], %61 {strides = array<i32>} : memref<576x6xbf16, #tpu.memory_space<vmem>>, vector<64x6xbf16>,
    %c0_108 = arith.constant 0 : index
    %c3_109 = arith.constant 3 : index
    %c0_110 = arith.constant 0 : index
    %c0_111 = arith.constant 0 : index
    %63 = vector.load %arg2[%c0_108, %c3_109, %c0_110, %c0_111] : memref<1x4x64x128xbf16, #tpu.memory_space<vmem>>, vector<1x1x64x6xbf16>
    %64 = vector.shape_cast %63 : vector<1x1x64x6xbf16> to vector<64x6xbf16>
    %c64_112 = arith.constant 64 : index
    %c0_113 = arith.constant 0 : index
    %65 = vector.load %arg6[%c64_112, %c0_113] : memref<576x6xbf16, #tpu.memory_space<vmem>>, vector<64x6xbf16>
    tpu.vector_store %arg6[%c64_112, %c0_113], %64 {strides = array<i32>} : memref<576x6xbf16, #tpu.memory_space<vmem>>, vector<64x6xbf16>,
    %c0_114 = arith.constant 0 : index
    %c2_115 = arith.constant 2 : index
    %c0_116 = arith.constant 0 : index
    %c1_117 = arith.constant 1 : index
    %66 = vector.load %arg2[%c0_114, %c2_115, %c0_116, %c1_117] : memref<1x4x64x128xbf16, #tpu.memory_space<vmem>>, vector<1x1x64x6xbf16>
    %67 = vector.shape_cast %66 : vector<1x1x64x6xbf16> to vector<64x6xbf16>
    %c128_118 = arith.constant 128 : index
    %c0_119 = arith.constant 0 : index
    %68 = vector.load %arg6[%c128_118, %c0_119] : memref<576x6xbf16, #tpu.memory_space<vmem>>, vector<64x6xbf16>
    tpu.vector_store %arg6[%c128_118, %c0_119], %67 {strides = array<i32>} : memref<576x6xbf16, #tpu.memory_space<vmem>>, vector<64x6xbf16>,
    %c0_120 = arith.constant 0 : index
    %c0_121 = arith.constant 0 : index
    %c0_122 = arith.constant 0 : index
    %c3_123 = arith.constant 3 : index
    %69 = vector.load %arg2[%c0_120, %c0_121, %c0_122, %c3_123] : memref<1x4x64x128xbf16, #tpu.memory_space<vmem>>, vector<1x1x64x6xbf16>
    %70 = vector.shape_cast %69 : vector<1x1x64x6xbf16> to vector<64x6xbf16>
    %c192_124 = arith.constant 192 : index
    %c0_125 = arith.constant 0 : index
    %71 = vector.load %arg6[%c192_124, %c0_125] : memref<576x6xbf16, #tpu.memory_space<vmem>>, vector<64x6xbf16>
    tpu.vector_store %arg6[%c192_124, %c0_125], %70 {strides = array<i32>} : memref<576x6xbf16, #tpu.memory_space<vmem>>, vector<64x6xbf16>,
    %c0_126 = arith.constant 0 : index
    %c1_127 = arith.constant 1 : index
    %c0_128 = arith.constant 0 : index
    %c3_129 = arith.constant 3 : index
    %72 = vector.load %arg2[%c0_126, %c1_127, %c0_128, %c3_129] : memref<1x4x64x128xbf16, #tpu.memory_space<vmem>>, vector<1x1x64x6xbf16>
    %73 = vector.shape_cast %72 : vector<1x1x64x6xbf16> to vector<64x6xbf16>
    %c256_130 = arith.constant 256 : index
    %c0_131 = arith.constant 0 : index
    %74 = vector.load %arg6[%c256_130, %c0_131] : memref<576x6xbf16, #tpu.memory_space<vmem>>, vector<64x6xbf16>
    tpu.vector_store %arg6[%c256_130, %c0_131], %73 {strides = array<i32>} : memref<576x6xbf16, #tpu.memory_space<vmem>>, vector<64x6xbf16>,
    %c0_132 = arith.constant 0 : index
    %c0_133 = arith.constant 0 : index
    %c0_134 = arith.constant 0 : index
    %c4_135 = arith.constant 4 : index
    %75 = vector.load %arg2[%c0_132, %c0_133, %c0_134, %c4_135] : memref<1x4x64x128xbf16, #tpu.memory_space<vmem>>, vector<1x1x64x6xbf16>
    %76 = vector.shape_cast %75 : vector<1x1x64x6xbf16> to vector<64x6xbf16>
    %c320_136 = arith.constant 320 : index
    %c0_137 = arith.constant 0 : index
    %77 = vector.load %arg6[%c320_136, %c0_137] : memref<576x6xbf16, #tpu.memory_space<vmem>>, vector<64x6xbf16>
    tpu.vector_store %arg6[%c320_136, %c0_137], %76 {strides = array<i32>} : memref<576x6xbf16, #tpu.memory_space<vmem>>, vector<64x6xbf16>,
    %c0_138 = arith.constant 0 : index
    %c2_139 = arith.constant 2 : index
    %c0_140 = arith.constant 0 : index
    %c3_141 = arith.constant 3 : index
    %78 = vector.load %arg2[%c0_138, %c2_139, %c0_140, %c3_141] : memref<1x4x64x128xbf16, #tpu.memory_space<vmem>>, vector<1x1x64x6xbf16>
    %79 = vector.shape_cast %78 : vector<1x1x64x6xbf16> to vector<64x6xbf16>
    %c384_142 = arith.constant 384 : index
    %c0_143 = arith.constant 0 : index
    %80 = vector.load %arg6[%c384_142, %c0_143] : memref<576x6xbf16, #tpu.memory_space<vmem>>, vector<64x6xbf16>
    tpu.vector_store %arg6[%c384_142, %c0_143], %79 {strides = array<i32>} : memref<576x6xbf16, #tpu.memory_space<vmem>>, vector<64x6xbf16>,
    %c0_144 = arith.constant 0 : index
    %c3_145 = arith.constant 3 : index
    %c0_146 = arith.constant 0 : index
    %c3_147 = arith.constant 3 : index
    %81 = vector.load %arg2[%c0_144, %c3_145, %c0_146, %c3_147] : memref<1x4x64x128xbf16, #tpu.memory_space<vmem>>, vector<1x1x64x6xbf16>
    %82 = vector.shape_cast %81 : vector<1x1x64x6xbf16> to vector<64x6xbf16>
    %c448_148 = arith.constant 448 : index
    %c0_149 = arith.constant 0 : index
    %83 = vector.load %arg6[%c448_148, %c0_149] : memref<576x6xbf16, #tpu.memory_space<vmem>>, vector<64x6xbf16>
    tpu.vector_store %arg6[%c448_148, %c0_149], %82 {strides = array<i32>} : memref<576x6xbf16, #tpu.memory_space<vmem>>, vector<64x6xbf16>,
    %c0_150 = arith.constant 0 : index
    %c2_151 = arith.constant 2 : index
    %c0_152 = arith.constant 0 : index
    %c4_153 = arith.constant 4 : index
    %84 = vector.load %arg2[%c0_150, %c2_151, %c0_152, %c4_153] : memref<1x4x64x128xbf16, #tpu.memory_space<vmem>>, vector<1x1x64x6xbf16>
    %85 = vector.shape_cast %84 : vector<1x1x64x6xbf16> to vector<64x6xbf16>
    %c512_154 = arith.constant 512 : index
    %c0_155 = arith.constant 0 : index
    %86 = vector.load %arg6[%c512_154, %c0_155] : memref<576x6xbf16, #tpu.memory_space<vmem>>, vector<64x6xbf16>
    tpu.vector_store %arg6[%c512_154, %c0_155], %85 {strides = array<i32>} : memref<576x6xbf16, #tpu.memory_space<vmem>>, vector<64x6xbf16>,
    %c0_156 = arith.constant 0 : index
    %c0_157 = arith.constant 0 : index
    %87 = vector.load %arg6[%c0_156, %c0_157] : memref<576x6xbf16, #tpu.memory_space<vmem>>, vector<576x6xbf16>
    %cst_158 = arith.constant dense<0.000000e+00> : vector<64x6xf32>
    %88 = tpu.matmul %0, %87, %cst_158 {dimension_numbers = #tpu.dot_dimension_numbers<[1], [0], [0], [1], [0, 0, 1, 1], [], []>} : vector<64x576xbf16>, vector<576x6xbf16>, vector<64x6xf32> -> vector<64x6xf32>
    %89 = arith.maximumf %59, %88 : vector<64x6xf32>
    %c0_159 = arith.constant 0 : index
    %c3_160 = arith.constant 3 : index
    %c0_161 = arith.constant 0 : index
    %c0_162 = arith.constant 0 : index
    %90 = vector.load %arg2[%c0_159, %c3_160, %c0_161, %c0_162] : memref<1x4x64x128xbf16, #tpu.memory_space<vmem>>, vector<1x1x64x6xbf16>
    %91 = vector.shape_cast %90 : vector<1x1x64x6xbf16> to vector<64x6xbf16>
    %c0_163 = arith.constant 0 : index
    %c0_164 = arith.constant 0 : index
    %92 = vector.load %arg6[%c0_163, %c0_164] : memref<576x6xbf16, #tpu.memory_space<vmem>>, vector<64x6xbf16>
    tpu.vector_store %arg6[%c0_163, %c0_164], %91 {strides = array<i32>} : memref<576x6xbf16, #tpu.memory_space<vmem>>, vector<64x6xbf16>,
    %c0_165 = arith.constant 0 : index
    %c2_166 = arith.constant 2 : index
    %c0_167 = arith.constant 0 : index
    %c1_168 = arith.constant 1 : index
    %93 = vector.load %arg2[%c0_165, %c2_166, %c0_167, %c1_168] : memref<1x4x64x128xbf16, #tpu.memory_space<vmem>>, vector<1x1x64x6xbf16>
    %94 = vector.shape_cast %93 : vector<1x1x64x6xbf16> to vector<64x6xbf16>
    %c64_169 = arith.constant 64 : index
    %c0_170 = arith.constant 0 : index
    %95 = vector.load %arg6[%c64_169, %c0_170] : memref<576x6xbf16, #tpu.memory_space<vmem>>, vector<64x6xbf16>
    tpu.vector_store %arg6[%c64_169, %c0_170], %94 {strides = array<i32>} : memref<576x6xbf16, #tpu.memory_space<vmem>>, vector<64x6xbf16>,
    %c0_171 = arith.constant 0 : index
    %c3_172 = arith.constant 3 : index
    %c0_173 = arith.constant 0 : index
    %c1_174 = arith.constant 1 : index
    %96 = vector.load %arg2[%c0_171, %c3_172, %c0_173, %c1_174] : memref<1x4x64x128xbf16, #tpu.memory_space<vmem>>, vector<1x1x64x6xbf16>
    %97 = vector.shape_cast %96 : vector<1x1x64x6xbf16> to vector<64x6xbf16>
    %c128_175 = arith.constant 128 : index
    %c0_176 = arith.constant 0 : index
    %98 = vector.load %arg6[%c128_175, %c0_176] : memref<576x6xbf16, #tpu.memory_space<vmem>>, vector<64x6xbf16>
    tpu.vector_store %arg6[%c128_175, %c0_176], %97 {strides = array<i32>} : memref<576x6xbf16, #tpu.memory_space<vmem>>, vector<64x6xbf16>,
    %c0_177 = arith.constant 0 : index
    %c1_178 = arith.constant 1 : index
    %c0_179 = arith.constant 0 : index
    %c3_180 = arith.constant 3 : index
    %99 = vector.load %arg2[%c0_177, %c1_178, %c0_179, %c3_180] : memref<1x4x64x128xbf16, #tpu.memory_space<vmem>>, vector<1x1x64x6xbf16>
    %100 = vector.shape_cast %99 : vector<1x1x64x6xbf16> to vector<64x6xbf16>
    %c192_181 = arith.constant 192 : index
    %c0_182 = arith.constant 0 : index
    %101 = vector.load %arg6[%c192_181, %c0_182] : memref<576x6xbf16, #tpu.memory_space<vmem>>, vector<64x6xbf16>
    tpu.vector_store %arg6[%c192_181, %c0_182], %100 {strides = array<i32>} : memref<576x6xbf16, #tpu.memory_space<vmem>>, vector<64x6xbf16>,
    %c0_183 = arith.constant 0 : index
    %c0_184 = arith.constant 0 : index
    %c0_185 = arith.constant 0 : index
    %c4_186 = arith.constant 4 : index
    %102 = vector.load %arg2[%c0_183, %c0_184, %c0_185, %c4_186] : memref<1x4x64x128xbf16, #tpu.memory_space<vmem>>, vector<1x1x64x6xbf16>
    %103 = vector.shape_cast %102 : vector<1x1x64x6xbf16> to vector<64x6xbf16>
    %c256_187 = arith.constant 256 : index
    %c0_188 = arith.constant 0 : index
    %104 = vector.load %arg6[%c256_187, %c0_188] : memref<576x6xbf16, #tpu.memory_space<vmem>>, vector<64x6xbf16>
    tpu.vector_store %arg6[%c256_187, %c0_188], %103 {strides = array<i32>} : memref<576x6xbf16, #tpu.memory_space<vmem>>, vector<64x6xbf16>,
    %c0_189 = arith.constant 0 : index
    %c1_190 = arith.constant 1 : index
    %c0_191 = arith.constant 0 : index
    %c4_192 = arith.constant 4 : index
    %105 = vector.load %arg2[%c0_189, %c1_190, %c0_191, %c4_192] : memref<1x4x64x128xbf16, #tpu.memory_space<vmem>>, vector<1x1x64x6xbf16>
    %106 = vector.shape_cast %105 : vector<1x1x64x6xbf16> to vector<64x6xbf16>
    %c320_193 = arith.constant 320 : index
    %c0_194 = arith.constant 0 : index
    %107 = vector.load %arg6[%c320_193, %c0_194] : memref<576x6xbf16, #tpu.memory_space<vmem>>, vector<64x6xbf16>
    tpu.vector_store %arg6[%c320_193, %c0_194], %106 {strides = array<i32>} : memref<576x6xbf16, #tpu.memory_space<vmem>>, vector<64x6xbf16>,
    %c0_195 = arith.constant 0 : index
    %c3_196 = arith.constant 3 : index
    %c0_197 = arith.constant 0 : index
    %c3_198 = arith.constant 3 : index
    %108 = vector.load %arg2[%c0_195, %c3_196, %c0_197, %c3_198] : memref<1x4x64x128xbf16, #tpu.memory_space<vmem>>, vector<1x1x64x6xbf16>
    %109 = vector.shape_cast %108 : vector<1x1x64x6xbf16> to vector<64x6xbf16>
    %c384_199 = arith.constant 384 : index
    %c0_200 = arith.constant 0 : index
    %110 = vector.load %arg6[%c384_199, %c0_200] : memref<576x6xbf16, #tpu.memory_space<vmem>>, vector<64x6xbf16>
    tpu.vector_store %arg6[%c384_199, %c0_200], %109 {strides = array<i32>} : memref<576x6xbf16, #tpu.memory_space<vmem>>, vector<64x6xbf16>,
    %c0_201 = arith.constant 0 : index
    %c2_202 = arith.constant 2 : index
    %c0_203 = arith.constant 0 : index
    %c4_204 = arith.constant 4 : index
    %111 = vector.load %arg2[%c0_201, %c2_202, %c0_203, %c4_204] : memref<1x4x64x128xbf16, #tpu.memory_space<vmem>>, vector<1x1x64x6xbf16>
    %112 = vector.shape_cast %111 : vector<1x1x64x6xbf16> to vector<64x6xbf16>
    %c448_205 = arith.constant 448 : index
    %c0_206 = arith.constant 0 : index
    %113 = vector.load %arg6[%c448_205, %c0_206] : memref<576x6xbf16, #tpu.memory_space<vmem>>, vector<64x6xbf16>
    tpu.vector_store %arg6[%c448_205, %c0_206], %112 {strides = array<i32>} : memref<576x6xbf16, #tpu.memory_space<vmem>>, vector<64x6xbf16>,
    %c0_207 = arith.constant 0 : index
    %c3_208 = arith.constant 3 : index
    %c0_209 = arith.constant 0 : index
    %c4_210 = arith.constant 4 : index
    %114 = vector.load %arg2[%c0_207, %c3_208, %c0_209, %c4_210] : memref<1x4x64x128xbf16, #tpu.memory_space<vmem>>, vector<1x1x64x6xbf16>
    %115 = vector.shape_cast %114 : vector<1x1x64x6xbf16> to vector<64x6xbf16>
    %c512_211 = arith.constant 512 : index
    %c0_212 = arith.constant 0 : index
    %116 = vector.load %arg6[%c512_211, %c0_212] : memref<576x6xbf16, #tpu.memory_space<vmem>>, vector<64x6xbf16>
    tpu.vector_store %arg6[%c512_211, %c0_212], %115 {strides = array<i32>} : memref<576x6xbf16, #tpu.memory_space<vmem>>, vector<64x6xbf16>,
    %c0_213 = arith.constant 0 : index
    %c0_214 = arith.constant 0 : index
    %117 = vector.load %arg6[%c0_213, %c0_214] : memref<576x6xbf16, #tpu.memory_space<vmem>>, vector<576x6xbf16>
    %cst_215 = arith.constant dense<0.000000e+00> : vector<64x6xf32>
    %118 = tpu.matmul %0, %117, %cst_215 {dimension_numbers = #tpu.dot_dimension_numbers<[1], [0], [0], [1], [0, 0, 1, 1], [], []>} : vector<64x576xbf16>, vector<576x6xbf16>, vector<64x6xf32> -> vector<64x6xf32>
    %119 = arith.maximumf %89, %118 : vector<64x6xf32>
    %c0_216 = arith.constant 0 : index
    %c0_217 = arith.constant 0 : index
    %120 = vector.load %arg4[%c0_216, %c0_217] : memref<64x1xf32, #tpu.memory_space<vmem>>, vector<64x1xf32>
    %121 = vector.broadcast %120 : vector<64x1xf32> to vector<64x6xf32>
    %122 = arith.addf %119, %121 : vector<64x6xf32>
    %cst_218 = arith.constant 0.000000e+00 : f32
    %123 = vector.broadcast %cst_218 : f32 to vector<64x6xf32>
    %124 = arith.maximumf %122, %123 : vector<64x6xf32>
    %125 = arith.truncf %124 : vector<64x6xf32> to vector<64x6xbf16>
    %c0_219 = arith.constant 0 : index
    %c0_220 = arith.constant 0 : index
    %c0_221 = arith.constant 0 : index
    %126 = vector.load %arg5[%c0_219, %c0_220, %c0_221] : memref<1x64x6xbf16, #tpu.memory_space<vmem>>, vector<1x64x6xbf16>
    %127 = vector.shape_cast %126 : vector<1x64x6xbf16> to vector<64x6xbf16>
    %128 = vector.shape_cast %125 : vector<64x6xbf16> to vector<1x64x6xbf16>
    tpu.vector_store %arg5[%c0_219, %c0_220, %c0_221], %128 {strides = array<i32>} : memref<1x64x6xbf16, #tpu.memory_space<vmem>>, vector<1x64x6xbf16>,
    return
  }
  func.func @transform_0(%arg0: i32, %arg1: i32) -> (i32, i32, i32, i32) {
    %c0_i32 = arith.constant 0 : i32
    %c0_i32_0 = arith.constant 0 : i32
    %c0_i32_1 = arith.constant 0 : i32
    %c0_i32_2 = arith.constant 0 : i32
    return %arg0, %c0_i32, %c0_i32_0, %c0_i32_1 : i32, i32, i32, i32
  }
  func.func @transform_1(%arg0: i32, %arg1: i32) -> (i32, i32) {
    %c0_i32 = arith.constant 0 : i32
    %c0_i32_0 = arith.constant 0 : i32
    return %arg1, %c0_i32 : i32, i32
  }
  func.func @transform_2(%arg0: i32, %arg1: i32) -> (i32, i32) {
    %c0_i32 = arith.constant 0 : i32
    %c0_i32_0 = arith.constant 0 : i32
    return %arg1, %c0_i32 : i32, i32
  }
  func.func @transform_3(%arg0: i32, %arg1: i32) -> (i32, i32, i32) {
    %c0_i32 = arith.constant 0 : i32
    %c0_i32_0 = arith.constant 0 : i32
    return %arg0, %arg1, %c0_i32 : i32, i32, i32
  }
}

module attributes {stable_mosaic.version = 11 : i64} {
  func.func @head_kernel(%arg0: i32, %arg1: memref<2x768xbf16, #tpu.memory_space<vmem>>, %arg2: memref<1x768xbf16, #tpu.memory_space<vmem>>, %arg3: memref<1x1xf32, #tpu.memory_space<vmem>>, %arg4: memref<2x1xf32, #tpu.memory_space<vmem>>) attributes {dimension_semantics = [#tpu.dimension_semantics<arbitrary>], iteration_bounds = array<i64: 1>, scalar_prefetch = 0 : i64, scratch_operands = 0 : i64, tpu.core_type = #tpu.core_type<tc>, window_params = [{pipeline_mode = #tpu.pipeline_mode<synchronous>, transform_indices = @transform_0, window_bounds = array<i64: 2, 768>}, {pipeline_mode = #tpu.pipeline_mode<synchronous>, transform_indices = @transform_1, window_bounds = array<i64: 1, 768>}, {pipeline_mode = #tpu.pipeline_mode<synchronous>, transform_indices = @transform_2, window_bounds = array<i64: 1, 1>}, {pipeline_mode = #tpu.pipeline_mode<synchronous>, transform_indices = @transform_3, window_bounds = array<i64: 2, 1>}]} {
    %c0 = arith.constant 0 : index
    %c0_0 = arith.constant 0 : index
    %0 = vector.load %arg1[%c0, %c0_0] : memref<2x768xbf16, #tpu.memory_space<vmem>>, vector<2x768xbf16>
    %1 = arith.extf %0 : vector<2x768xbf16> to vector<2x768xf32>
    %c0_1 = arith.constant 0 : index
    %c0_2 = arith.constant 0 : index
    %2 = vector.load %arg2[%c0_1, %c0_2] : memref<1x768xbf16, #tpu.memory_space<vmem>>, vector<1x768xbf16>
    %3 = arith.extf %2 : vector<1x768xbf16> to vector<1x768xf32>
    %4 = vector.broadcast %3 : vector<1x768xf32> to vector<2x768xf32>
    %5 = arith.mulf %1, %4 : vector<2x768xf32>
    %cst = arith.constant dense<0.000000e+00> : vector<2xf32>
    %6 = vector.multi_reduction <add>, %5, %cst [1] : vector<2x768xf32> to vector<2xf32>
    %7 = vector.shape_cast %6 : vector<2xf32> to vector<2x1xf32>
    %c0_3 = arith.constant 0 : index
    %c0_4 = arith.constant 0 : index
    %8 = vector.load %arg3[%c0_3, %c0_4] : memref<1x1xf32, #tpu.memory_space<vmem>>, vector<1x1xf32>
    %9 = vector.broadcast %8 : vector<1x1xf32> to vector<2x1xf32>
    %10 = arith.addf %7, %9 : vector<2x1xf32>
    %cst_5 = arith.constant 0.000000e+00 : f32
    %11 = vector.broadcast %cst_5 : f32 to vector<2x1xf32>
    %12 = arith.cmpf oge, %10, %11 : vector<2x1xf32>
    %cst_6 = arith.constant 0.000000e+00 : f32
    %13 = vector.broadcast %cst_6 : f32 to vector<2x1xf32>
    %14 = arith.subf %13, %10 : vector<2x1xf32>
    %15 = arith.select %12, %14, %10 : vector<2x1xi1>, vector<2x1xf32>
    %16 = math.exp %15 : vector<2x1xf32>
    %cst_7 = arith.constant 1.000000e+00 : f32
    %17 = vector.broadcast %cst_7 : f32 to vector<2x1xf32>
    %18 = arith.addf %17, %16 : vector<2x1xf32>
    %cst_8 = arith.constant 1.000000e+00 : f32
    %19 = vector.broadcast %cst_8 : f32 to vector<2x1xf32>
    %20 = arith.divf %19, %18 : vector<2x1xf32>
    %cst_9 = arith.constant 1.000000e+00 : f32
    %21 = vector.broadcast %cst_9 : f32 to vector<2x1xf32>
    %22 = arith.addf %21, %16 : vector<2x1xf32>
    %23 = arith.divf %16, %22 : vector<2x1xf32>
    %24 = arith.select %12, %20, %23 : vector<2x1xi1>, vector<2x1xf32>
    %c0_10 = arith.constant 0 : index
    %c0_11 = arith.constant 0 : index
    %25 = vector.load %arg4[%c0_10, %c0_11] : memref<2x1xf32, #tpu.memory_space<vmem>>, vector<2x1xf32>
    tpu.vector_store %arg4[%c0_10, %c0_11], %24 {strides = array<i32>} : memref<2x1xf32, #tpu.memory_space<vmem>>, vector<2x1xf32>,
    return
  }
  func.func @transform_0(%arg0: i32) -> (i32, i32) {
    %c0_i32 = arith.constant 0 : i32
    %c0_i32_0 = arith.constant 0 : i32
    %c0_i32_1 = arith.constant 0 : i32
    return %c0_i32, %c0_i32_0 : i32, i32
  }
  func.func @transform_1(%arg0: i32) -> (i32, i32) {
    %c0_i32 = arith.constant 0 : i32
    %c0_i32_0 = arith.constant 0 : i32
    %c0_i32_1 = arith.constant 0 : i32
    return %c0_i32, %c0_i32_0 : i32, i32
  }
  func.func @transform_2(%arg0: i32) -> (i32, i32) {
    %c0_i32 = arith.constant 0 : i32
    %c0_i32_0 = arith.constant 0 : i32
    %c0_i32_1 = arith.constant 0 : i32
    return %c0_i32, %c0_i32_0 : i32, i32
  }
  func.func @transform_3(%arg0: i32) -> (i32, i32) {
    %c0_i32 = arith.constant 0 : i32
    %c0_i32_0 = arith.constant 0 : i32
    %c0_i32_1 = arith.constant 0 : i32
    return %c0_i32, %c0_i32_0 : i32, i32
  }
}

</mosaic_0001>

<llo_original>
// kernel: blur_detection_forward.4
$region0: #{blur_detection_forward.4}
  #allocation0 [shape = 'u32[]', space=smem, size = 0x4, offset = 0x4, fixed_abs, tag = 'smem constant byte address 0x4 - core index']
  #allocation1 [shape = 'u32[72,128]{1,0:T(1,128)}', space=vmem, size = 0x9000, scoped, tag = 'internal scratch']
  #allocation2 [shape = 'bf16[72,72]{1,0:T(8,128)(2,1)}', space=vmem, size = 0x4800, scoped, tag = 'scratch operand']
  %s0 = inlined_call_operand.vmem [shape: bf16[2,4,8,128], index: 0, kind: input, shape index: {}]
  %s1 = inlined_call_operand.vmem [shape: bf16[32,72], index: 1, kind: input, shape index: {}]
  %s2 = inlined_call_operand.vmem [shape: f32[32,1], index: 2, kind: input, shape index: {}]
  %s3 = inlined_call_operand.vmem [shape: bf16[2,32,72], index: 3, kind: output, shape index: {}]
  %s4 = sld [smem:[#allocation0]]
  $region45: #{blur_detection_forward.4} parent=0
    _
  %s6 = ssub.s32 1, %s4
  %s7 = scalar_select 0, %s6, %s4
  loop: start=0, step=1, limit=4
  $region2: #{blur_detection_forward.4} parent=0 // loop_pre_header
    _
  $region3: #{blur_detection_forward.4} parent=0 // loop_header
    %s9 = sphi 0, %s13
    %p10 = scmp.ge.s32.totalorder %s9, 4
    %s16 = sphi 0, %s28
    %s17 = sphi 0, %s24
    %s18 = sphi 0, %s16
    %s19 = sphi 0, %s17
    %s20 = sphi 0, %s18
    %s21 = sphi 0, %s19
    %s31 = sphi 0, %s33
    %s34 = sphi 0, %s31
    %s35 = sphi 0, %s34
    %s51 = sphi 0, %s35
    %s57 = sphi 0, %s59
    %s60 = sphi 0, %s57
    %s61 = sphi 0, %s60
    %s77 = sphi 0, %s61
    %s83 = sphi 0, %s85
    %s86 = sphi 0, %s83
    %s87 = sphi 0, %s86
    %s103 = sphi 0, %s87
    %s111 = sphi 0, %s113
    %s114 = sphi 0, %s111
    %s115 = sphi 0, %s114
    %s131 = sphi 0, %s115
  $region4: #{blur_detection_forward.4} parent=0 // loop_header_branch
    %12 = sbr.rel (%p10) target = $region8
  $region5: #{blur_detection_forward.4} parent=0 // loop_body
    %s14 = ssub.s32 %s9, 1
    %s15 = ssub.s32 %s9, 2
    %s22 = sadd.s32 1, %s17
    %p23 = scmp.ge.s32.totalorder %s22, 1
    %s24 = scalar_select %p23, 0, %s22
    %s25 = sadd.s32 1, %s16
    %s26 = scalar_select %p23, %s25, %s16
    %p27 = scmp.ge.s32.totalorder %s26, 2
    %s28 = scalar_select %p27, 0, %s26
    %s29 = ssub.s32 %s16, %s28
    %p30 = scmp.eq.s32.totalorder %s29, 0
    %s32 = sadd.s32 %s31, 1
    %s33 = scalar_select %p30, %s31, %s32
    %p36 = pneg %p30
    %p37 = scmp.eq.s32.totalorder %s9, 1
    %p38 = por %p36, %p37
    %p39 = scmp.ne.s32.totalorder %s31, %s34
    %p40 = scmp.eq.s32.totalorder %s9, 0
    %p41 = por %p39, %p40
    %p42 = scmp.ne.s32.totalorder %s31, %s34
    %p43 = scmp.eq.s32.totalorder %s14, 1
    %p44 = por %p42, %p43
    %p45 = scmp.ne.s32.totalorder %s34, %s35
    %p46 = scmp.eq.s32.totalorder %s14, 0
    %p47 = por %p45, %p46
    %p48 = scmp.ne.s32.totalorder %s34, %s35
    %p49 = scmp.eq.s32.totalorder %s15, 1
    %p50 = por %p48, %p49
    %p52 = scmp.ne.s32.totalorder %s35, %s51
    %p53 = scmp.eq.s32.totalorder %s15, 0
    %p54 = por %p52, %p53
    %s55 = ssub.s32 %s17, %s24
    %p56 = scmp.eq.s32.totalorder %s55, 0
    %s58 = sadd.s32 %s57, 1
    %s59 = scalar_select %p56, %s57, %s58
    %p62 = pneg %p56
    %p63 = scmp.eq.s32.totalorder %s9, 1
    %p64 = por %p62, %p63
    %p65 = scmp.ne.s32.totalorder %s57, %s60
    %p66 = scmp.eq.s32.totalorder %s9, 0
    %p67 = por %p65, %p66
    %p68 = scmp.ne.s32.totalorder %s57, %s60
    %p69 = scmp.eq.s32.totalorder %s14, 1
    %p70 = por %p68, %p69
    %p71 = scmp.ne.s32.totalorder %s60, %s61
    %p72 = scmp.eq.s32.totalorder %s14, 0
    %p73 = por %p71, %p72
    %p74 = scmp.ne.s32.totalorder %s60, %s61
    %p75 = scmp.eq.s32.totalorder %s15, 1
    %p76 = por %p74, %p75
    %p78 = scmp.ne.s32.totalorder %s61, %s77
    %p79 = scmp.eq.s32.totalorder %s15, 0
    %p80 = por %p78, %p79
    %s81 = ssub.s32 %s17, %s24
    %p82 = scmp.eq.s32.totalorder %s81, 0
    %s84 = sadd.s32 %s83, 1
    %s85 = scalar_select %p82, %s83, %s84
    %p88 = pneg %p82
    %p89 = scmp.eq.s32.totalorder %s9, 1
    %p90 = por %p88, %p89
    %p91 = scmp.ne.s32.totalorder %s83, %s86
    %p92 = scmp.eq.s32.totalorder %s9, 0
    %p93 = por %p91, %p92
    %p94 = scmp.ne.s32.totalorder %s83, %s86
    %p95 = scmp.eq.s32.totalorder %s14, 1
    %p96 = por %p94, %p95
    %p97 = scmp.ne.s32.totalorder %s86, %s87
    %p98 = scmp.eq.s32.totalorder %s14, 0
    %p99 = por %p97, %p98
    %p100 = scmp.ne.s32.totalorder %s86, %s87
    %p101 = scmp.eq.s32.totalorder %s15, 1
    %p102 = por %p100, %p101
    %p104 = scmp.ne.s32.totalorder %s87, %s103
    %p105 = scmp.eq.s32.totalorder %s15, 0
    %p106 = por %p104, %p105
    %s107 = ssub.s32 %s16, %s28
    %s108 = ssub.s32 %s17, %s24
    %s109 = sor.u32 %s107, %s108
    %p110 = scmp.eq.s32.totalorder %s109, 0
    %s112 = sadd.s32 %s111, 1
    %s113 = scalar_select %p110, %s111, %s112
    %p116 = pneg %p110
    %p117 = scmp.eq.s32.totalorder %s9, 1
    %p118 = por %p116, %p117
    %p119 = scmp.ne.s32.totalorder %s111, %s114
    %p120 = scmp.eq.s32.totalorder %s9, 0
    %p121 = por %p119, %p120
    %p122 = scmp.ne.s32.totalorder %s111, %s114
    %p123 = scmp.eq.s32.totalorder %s14, 1
    %p124 = por %p122, %p123
    %p125 = scmp.ne.s32.totalorder %s114, %s115
    %p126 = scmp.eq.s32.totalorder %s14, 0
    %p127 = por %p125, %p126
    %p128 = scmp.ne.s32.totalorder %s114, %s115
    %p129 = scmp.eq.s32.totalorder %s15, 1
    %p130 = por %p128, %p129
    %p132 = scmp.ne.s32.totalorder %s115, %s131
    %p133 = scmp.eq.s32.totalorder %s15, 0
    %p134 = por %p132, %p133
    %p135 = scmp.le.s32.totalorder 1, %s9
    %p136 = scmp.lt.s32.totalorder %s9, 3
    %p137 = pnand %p135, %p136
    %p138 = pneg %p137
    // Predicated region
    $region9: #{blur_detection_forward.4} parent=5 // pred_check
      _
    $region10: #{blur_detection_forward.4} parent=5 // pred_check_branch
      %140 = sbr.rel (%p137) target = $region12
    $region11: #{blur_detection_forward.4} parent=5 // pred_region
      %s141 = ssub.s32 %s9, 1
      // Predicated region
      $region13: #{blur_detection_forward.4} parent=11 // pred_check
        %p142 = pneg %p73
      $region14: #{blur_detection_forward.4} parent=11 // pred_check_branch
        %144 = sbr.rel (%p142) target = $region16
      $region15: #{blur_detection_forward.4} parent=11 // pred_region
        %s145 = smul.u32 4, %s19
        %p146 = scmp.lt.s32.totalorder %s145, 3
        %s147 = scalar_select %p146, %s145, 3
        %s148 = smul.addr %s147, 4
        %s149 = scalar_lea.vmem %s1, %s148
        %s150 = smul.u32 4, %s19
      $region16: #{blur_detection_forward.4} parent=11 // pred_fallthru
        _
      // Predicated region
      $region17: #{blur_detection_forward.4} parent=11 // pred_check
        %p151 = pneg %p99
      $region18: #{blur_detection_forward.4} parent=11 // pred_check_branch
        %153 = sbr.rel (%p151) target = $region20
      $region19: #{blur_detection_forward.4} parent=11 // pred_region
        %s154 = smul.u32 4, %s19
        %p155 = scmp.lt.s32.totalorder %s154, 3
        %s156 = scalar_select %p155, %s154, 3
        %s157 = smul.addr %s156, 8
        %s158 = scalar_lea.vmem %s2, %s157
        %s159 = smul.u32 4, %s19
      $region20: #{blur_detection_forward.4} parent=11 // pred_fallthru
        _
    $region12: #{blur_detection_forward.4} parent=5 // pred_fallthru
      _
    %p160 = scmp.lt.s32.totalorder %s9, 2
    // Predicated region
    $region21: #{blur_detection_forward.4} parent=5 // pred_check
      %p161 = pneg %p160
    $region22: #{blur_detection_forward.4} parent=5 // pred_check_branch
      %163 = sbr.rel (%p161) target = $region24
    $region23: #{blur_detection_forward.4} parent=5 // pred_region
      // Predicated region
      $region25: #{blur_detection_forward.4} parent=23 // pred_check
        %p164 = pneg %p41
      $region26: #{blur_detection_forward.4} parent=23 // pred_check_branch
        %166 = sbr.rel (%p164) target = $region28
      $region27: #{blur_detection_forward.4} parent=23 // pred_region
        %p167 = scmp.lt.s32.totalorder %s16, 1
        %s168 = scalar_select %p167, %s16, 1
        %s169 = smul.addr %s168, 4
        %s170 = smul.addr %s169, 4
        %s171 = scalar_lea.vmem %s0, %s170
      $region28: #{blur_detection_forward.4} parent=23 // pred_fallthru
        _
    $region24: #{blur_detection_forward.4} parent=5 // pred_fallthru
      _
    %p172 = scmp.le.s32.totalorder 1, %s9
    %p173 = scmp.lt.s32.totalorder %s9, 3
    %p174 = pnand %p172, %p173
    %p175 = pneg %p174
    // Predicated region
    $region29: #{blur_detection_forward.4} parent=5 // pred_check
      _
    $region30: #{blur_detection_forward.4} parent=5 // pred_check_branch
      %177 = sbr.rel (%p174) target = $region32
    $region31: #{blur_detection_forward.4} parent=5 // pred_region
      %s178 = ssub.s32 %s9, 1
      %p179 = scmp.lt.s32.totalorder %s18, 1
      %s180 = scalar_select %p179, %s18, 1
      %s181 = smul.addr %s180, 4
      %s182 = smul.addr %s181, 4
      %s183 = scalar_lea.vmem %s0, %s182
      %p184 = pneg %p47
      %p185 = pneg %p44
      %s186 = smul.u32 4, %s19
      %p187 = scmp.lt.s32.totalorder %s186, 3
      %s188 = scalar_select %p187, %s186, 3
      %s189 = smul.addr %s188, 4
      %s190 = scalar_lea.vmem %s1, %s189
      %p191 = pneg %p73
      %p192 = pneg %p70
      %s193 = smul.u32 4, %s19
      %p194 = scmp.lt.s32.totalorder %s193, 3
      %s195 = scalar_select %p194, %s193, 3
      %s196 = smul.addr %s195, 8
      %s197 = scalar_lea.vmem %s2, %s196
      %p198 = pneg %p99
      %p199 = pneg %p96
      %p200 = pneg %p127
      %p201 = pneg %p124
      %s202 = smul.u32 4, %s19
      %p203 = scmp.lt.s32.totalorder %s18, 1
      %s204 = scalar_select %p203, %s18, 1
      %p205 = scmp.lt.s32.totalorder %s202, 3
      %s206 = scalar_select %p205, %s202, 3
      %s207 = smul.addr %s204, 4
      %s208 = sadd.s32 %s206, %s207
      %s209 = smul.addr %s208, 4
      %s210 = scalar_lea.vmem %s3, %s209
      %p211 = scmp.lt.s32.totalorder %s18, 1
      %s212 = scalar_select %p211, %s18, 1
      %s213 = smul.addr %s212, 4
      %s214 = smul.addr %s213, 4
      %s215 = scalar_lea.vmem %s0, %s214
      %s216 = smul.u32 4, %s19
      %p217 = scmp.lt.s32.totalorder %s216, 3
      %s218 = scalar_select %p217, %s216, 3
      %s219 = smul.addr %s218, 4
      %s220 = scalar_lea.vmem %s1, %s219
      %s221 = smul.u32 4, %s19
      %s222 = smul.u32 4, %s19
      %p223 = scmp.lt.s32.totalorder %s222, 3
      %s224 = scalar_select %p223, %s222, 3
      %s225 = smul.addr %s224, 8
      %s226 = scalar_lea.vmem %s2, %s225
      %s227 = smul.u32 4, %s19
      %s228 = smul.u32 4, %s19
      %p229 = scmp.lt.s32.totalorder %s18, 1
      %s230 = scalar_select %p229, %s18, 1
      %p231 = scmp.lt.s32.totalorder %s228, 3
      %s232 = scalar_select %p231, %s228, 3
      %s233 = smul.addr %s230, 4
      %s234 = sadd.s32 %s232, %s233
      %s235 = smul.addr %s234, 4
      %s236 = scalar_lea.vmem %s3, %s235
      %s237 = smul.u32 4, %s19
      %v239 = vld [vmem:[%s220] sm:$0xf]
      %v240 = vld [vmem:[%s220 + $0x4] sm:$0xf]
      %v241 = vld [vmem:[%s220 + $0x8] sm:$0xf]
      %v242 = vld [vmem:[%s220 + $0xc] sm:$0xf]
      %v243 = vld [vmem:[%s215] sm:$0xf]
      %vm244 = vcmask 584704
      %245 = vst.msk [vmem:[#allocation2] sm:$0xf] %vm244, %v243
      %s246 = scalar_lea.vmem %s215, 4
      %v247 = vld [vmem:[%s246] sm:$0xf]
      %248 = vst.msk [vmem:[#allocation2 + $0x4] sm:$0xf] %vm244, %v247
      %v249 = vld [vmem:[%s215] sm:$0xf]
      %251 = vrot.lane.b32.xlu0 %v249, 127
      %v252 = vpop.permute.xlu0 %251
      %254 = vst.msk [vmem:[#allocation2 + $0x8] sm:$0xf] %vm244, %v252
      %s255 = scalar_lea.vmem %s215, 8
      %v256 = vld [vmem:[%s255] sm:$0xf]
      %257 = vst.msk [vmem:[#allocation2 + $0xc] sm:$0xf] %vm244, %v256
      %s258 = scalar_lea.vmem %s215, 12
      %v259 = vld [vmem:[%s258] sm:$0xf]
      %260 = vst.msk [vmem:[#allocation2 + $0x10] sm:$0xf] %vm244, %v259
      %v261 = vld [vmem:[%s255] sm:$0xf]
      %263 = vrot.lane.b32.xlu0 %v261, 127
      %v264 = vpop.permute.xlu0 %263
      %266 = vst.msk [vmem:[#allocation2 + $0x14] sm:$0xf] %vm244, %v264
      %v267 = vld [vmem:[%s215] sm:$0xf]
      %269 = vrot.lane.b32.xlu0 %v267, 119
      %v270 = vpop.permute.xlu0 %269
      %272 = vst.msk [vmem:[#allocation2 + $0x18] sm:$0xf] %vm244, %v270
      %v273 = vld [vmem:[%s246] sm:$0xf]
      %275 = vrot.lane.b32.xlu0 %v273, 119
      %v276 = vpop.permute.xlu0 %275
      %278 = vst.msk [vmem:[#allocation2 + $0x1c] sm:$0xf] %vm244, %v276
      %v279 = vld [vmem:[%s215] sm:$0xf]
      %281 = vrot.lane.b32.xlu0 %v279, 118
      %v282 = vpop.permute.xlu0 %281
      %284 = vst.msk [vmem:[#allocation2 + $0x20] sm:$0xf] %vm244, %v282
      %v285 = vld [vmem:[#allocation2] sm:$0xf]
      %v286 = vld [vmem:[#allocation2 + $0x4] sm:$0xf]
      %v287 = vld [vmem:[#allocation2 + $0x8] sm:$0xf]
      %v288 = vld [vmem:[#allocation2 + $0xc] sm:$0xf]
      %v289 = vld [vmem:[#allocation2 + $0x10] sm:$0xf]
      %v290 = vld [vmem:[#allocation2 + $0x14] sm:$0xf]
      %v291 = vld [vmem:[#allocation2 + $0x18] sm:$0xf]
      %v292 = vld [vmem:[#allocation2 + $0x1c] sm:$0xf]
      %v293 = vld [vmem:[#allocation2 + $0x20] sm:$0xf]
      %v298 = vunpack.c.l.b16 %v239
      %v299 = vunpack.c.l.b16 %v240
      %v300 = vunpack.c.l.b16 %v241
      %v301 = vunpack.c.l.b16 %v242
      %v302 = vpack.c.b16 %v299, %v298
      %v303 = vpack.c.b16 %v301, %v300
      %v313 = vunpack.c.l.b16 %v285
      %v314 = vunpack.c.l.b16 %v286
      %v315 = vunpack.c.l.b16 %v287
      %v316 = vunpack.c.l.b16 %v288
      %v317 = vunpack.c.l.b16 %v289
      %v318 = vunpack.c.l.b16 %v290
      %v319 = vunpack.c.l.b16 %v291
      %v320 = vunpack.c.l.b16 %v292
      %v321 = vunpack.c.l.b16 %v293
      %v322 = vpack.c.b16 %v314, %v313
      %v323 = vpack.c.b16 %v316, %v315
      %v324 = vpack.c.b16 %v318, %v317
      %v325 = vpack.c.b16 %v320, %v319
      %v326 = vpack.c.b16 %v321, %v321
      %vm331 = vcmask 588800
      %v333 = vsel %vm331, %v302, 0
      %v336 = vsel %vm331, %v303, 0
      %vm338 = vcmask 1043456
      %v340 = vsel %vm338, %v326, 0
      %342 = vmatpush.bf16.msra.mxu0 0
      %343 = vmatpush.bf16.msra.mxu0 0
      %344 = vmatpush.bf16.msra.mxu0 0
      %345 = vmatpush.bf16.msra.mxu0 %v340
      %346 = vmatpush.bf16.msra.mxu0 %v325
      %347 = vmatpush.bf16.msra.mxu0 %v324
      %348 = vmatpush.bf16.msra.mxu0 %v323
      %349 = vmatpush.bf16.msra.mxu0 %v322
      %350 = vmatmul.bf16.gmra.mxu0 %v333
      %v351 = vpop.f32.mrf.mxu0
      %v352 = vadd.f32 0.0, %v351
      %v353 = vpop.f32.mrf.mxu0
      %v354 = vadd.f32 0.0, %v353
      %355 = vmatmul.bf16.gmra.mxu0 %v336
      %v356 = vpop.f32.mrf.mxu0
      %v357 = vadd.f32 0.0, %v356
      %v358 = vpop.f32.mrf.mxu0
      %v359 = vadd.f32 0.0, %v358
      %360 = vdwg.mxu0
      %v361 = vld [vmem:[%s246] sm:$0xf]
      %362 = vst.msk [vmem:[#allocation2] sm:$0xf] %vm244, %v361
      %v363 = vld [vmem:[%s215] sm:$0xf]
      %365 = vrot.lane.b32.xlu0 %v363, 127
      %v366 = vpop.permute.xlu0 %365
      %368 = vst.msk [vmem:[#allocation2 + $0x4] sm:$0xf] %vm244, %v366
      %v369 = vld [vmem:[%s246] sm:$0xf]
      %371 = vrot.lane.b32.xlu0 %v369, 127
      %v372 = vpop.permute.xlu0 %371
      %374 = vst.msk [vmem:[#allocation2 + $0x8] sm:$0xf] %vm244, %v372
      %v375 = vld [vmem:[%s258] sm:$0xf]
      %376 = vst.msk [vmem:[#allocation2 + $0xc] sm:$0xf] %vm244, %v375
      %v377 = vld [vmem:[%s255] sm:$0xf]
      %379 = vrot.lane.b32.xlu0 %v377, 127
      %v380 = vpop.permute.xlu0 %379
      %382 = vst.msk [vmem:[#allocation2 + $0x10] sm:$0xf] %vm244, %v380
      %v383 = vld [vmem:[%s258] sm:$0xf]
      %385 = vrot.lane.b32.xlu0 %v383, 127
      %v386 = vpop.permute.xlu0 %385
      %388 = vst.msk [vmem:[#allocation2 + $0x14] sm:$0xf] %vm244, %v386
      %v389 = vld [vmem:[%s246] sm:$0xf]
      %391 = vrot.lane.b32.xlu0 %v389, 119
      %v392 = vpop.permute.xlu0 %391
      %394 = vst.msk [vmem:[#allocation2 + $0x18] sm:$0xf] %vm244, %v392
      %v395 = vld [vmem:[%s215] sm:$0xf]
      %397 = vrot.lane.b32.xlu0 %v395, 118
      %v398 = vpop.permute.xlu0 %397
      %400 = vst.msk [vmem:[#allocation2 + $0x1c] sm:$0xf] %vm244, %v398
      %v401 = vld [vmem:[%s246] sm:$0xf]
      %403 = vrot.lane.b32.xlu0 %v401, 118
      %v404 = vpop.permute.xlu0 %403
      %406 = vst.msk [vmem:[#allocation2 + $0x20] sm:$0xf] %vm244, %v404
      %v407 = vld [vmem:[#allocation2] sm:$0xf]
      %v408 = vld [vmem:[#allocation2 + $0x4] sm:$0xf]
      %v409 = vld [vmem:[#allocation2 + $0x8] sm:$0xf]
      %v410 = vld [vmem:[#allocation2 + $0xc] sm:$0xf]
      %v411 = vld [vmem:[#allocation2 + $0x10] sm:$0xf]
      %v412 = vld [vmem:[#allocation2 + $0x14] sm:$0xf]
      %v413 = vld [vmem:[#allocation2 + $0x18] sm:$0xf]
      %v414 = vld [vmem:[#allocation2 + $0x1c] sm:$0xf]
      %v415 = vld [vmem:[#allocation2 + $0x20] sm:$0xf]
      %v425 = vunpack.c.l.b16 %v407
      %v426 = vunpack.c.l.b16 %v408
      %v427 = vunpack.c.l.b16 %v409
      %v428 = vunpack.c.l.b16 %v410
      %v429 = vunpack.c.l.b16 %v411
      %v430 = vunpack.c.l.b16 %v412
      %v431 = vunpack.c.l.b16 %v413
      %v432 = vunpack.c.l.b16 %v414
      %v433 = vunpack.c.l.b16 %v415
      %v434 = vpack.c.b16 %v426, %v425
      %v435 = vpack.c.b16 %v428, %v427
      %v436 = vpack.c.b16 %v430, %v429
      %v437 = vpack.c.b16 %v432, %v431
      %v438 = vpack.c.b16 %v433, %v433
      %v444 = vsel %vm338, %v438, 0
      %446 = vmatpush.bf16.msra.mxu0 0
      %447 = vmatpush.bf16.msra.mxu0 0
      %448 = vmatpush.bf16.msra.mxu0 0
      %449 = vmatpush.bf16.msra.mxu0 %v444
      %450 = vmatpush.bf16.msra.mxu0 %v437
      %451 = vmatpush.bf16.msra.mxu0 %v436
      %452 = vmatpush.bf16.msra.mxu0 %v435
      %453 = vmatpush.bf16.msra.mxu0 %v434
      %454 = vmatmul.bf16.gmra.mxu0 %v333
      %v455 = vpop.f32.mrf.mxu0
      %v456 = vadd.f32 0.0, %v455
      %v457 = vpop.f32.mrf.mxu0
      %v458 = vadd.f32 0.0, %v457
      %459 = vmatmul.bf16.gmra.mxu0 %v336
      %v460 = vpop.f32.mrf.mxu0
      %v461 = vadd.f32 0.0, %v460
      %v462 = vpop.f32.mrf.mxu0
      %v463 = vadd.f32 0.0, %v462
      %464 = vdwg.mxu0
      %v465 = vmax.f32 %v352, %v456
      %v466 = vmax.f32 %v354, %v458
      %v467 = vmax.f32 %v357, %v461
      %v468 = vmax.f32 %v359, %v463
      %v469 = vld [vmem:[%s255] sm:$0xf]
      %470 = vst.msk [vmem:[#allocation2] sm:$0xf] %vm244, %v469
      %v471 = vld [vmem:[%s258] sm:$0xf]
      %472 = vst.msk [vmem:[#allocation2 + $0x4] sm:$0xf] %vm244, %v471
      %v473 = vld [vmem:[%s255] sm:$0xf]
      %475 = vrot.lane.b32.xlu0 %v473, 127
      %v476 = vpop.permute.xlu0 %475
      %478 = vst.msk [vmem:[#allocation2 + $0x8] sm:$0xf] %vm244, %v476
      %v479 = vld [vmem:[%s215] sm:$0xf]
      %481 = vrot.lane.b32.xlu0 %v479, 119
      %v482 = vpop.permute.xlu0 %481
      %484 = vst.msk [vmem:[#allocation2 + $0xc] sm:$0xf] %vm244, %v482
      %v485 = vld [vmem:[%s246] sm:$0xf]
      %487 = vrot.lane.b32.xlu0 %v485, 119
      %v488 = vpop.permute.xlu0 %487
      %490 = vst.msk [vmem:[#allocation2 + $0x10] sm:$0xf] %vm244, %v488
      %v491 = vld [vmem:[%s215] sm:$0xf]
      %493 = vrot.lane.b32.xlu0 %v491, 118
      %v494 = vpop.permute.xlu0 %493
      %496 = vst.msk [vmem:[#allocation2 + $0x14] sm:$0xf] %vm244, %v494
      %v497 = vld [vmem:[%s255] sm:$0xf]
      %499 = vrot.lane.b32.xlu0 %v497, 119
      %v500 = vpop.permute.xlu0 %499
      %502 = vst.msk [vmem:[#allocation2 + $0x18] sm:$0xf] %vm244, %v500
      %v503 = vld [vmem:[%s258] sm:$0xf]
      %505 = vrot.lane.b32.xlu0 %v503, 119
      %v506 = vpop.permute.xlu0 %505
      %508 = vst.msk [vmem:[#allocation2 + $0x1c] sm:$0xf] %vm244, %v506
      %v509 = vld [vmem:[%s255] sm:$0xf]
      %511 = vrot.lane.b32.xlu0 %v509, 118
      %v512 = vpop.permute.xlu0 %511
      %514 = vst.msk [vmem:[#allocation2 + $0x20] sm:$0xf] %vm244, %v512
      %v515 = vld [vmem:[#allocation2] sm:$0xf]
      %v516 = vld [vmem:[#allocation2 + $0x4] sm:$0xf]
      %v517 = vld [vmem:[#allocation2 + $0x8] sm:$0xf]
      %v518 = vld [vmem:[#allocation2 + $0xc] sm:$0xf]
      %v519 = vld [vmem:[#allocation2 + $0x10] sm:$0xf]
      %v520 = vld [vmem:[#allocation2 + $0x14] sm:$0xf]
      %v521 = vld [vmem:[#allocation2 + $0x18] sm:$0xf]
      %v522 = vld [vmem:[#allocation2 + $0x1c] sm:$0xf]
      %v523 = vld [vmem:[#allocation2 + $0x20] sm:$0xf]
      %v533 = vunpack.c.l.b16 %v515
      %v534 = vunpack.c.l.b16 %v516
      %v535 = vunpack.c.l.b16 %v517
      %v536 = vunpack.c.l.b16 %v518
      %v537 = vunpack.c.l.b16 %v519
      %v538 = vunpack.c.l.b16 %v520
      %v539 = vunpack.c.l.b16 %v521
      %v540 = vunpack.c.l.b16 %v522
      %v541 = vunpack.c.l.b16 %v523
      %v542 = vpack.c.b16 %v534, %v533
      %v543 = vpack.c.b16 %v536, %v535
      %v544 = vpack.c.b16 %v538, %v537
      %v545 = vpack.c.b16 %v540, %v539
      %v546 = vpack.c.b16 %v541, %v541
      %v552 = vsel %vm338, %v546, 0
      %554 = vmatpush.bf16.msra.mxu0 0
      %555 = vmatpush.bf16.msra.mxu0 0
      %556 = vmatpush.bf16.msra.mxu0 0
      %557 = vmatpush.bf16.msra.mxu0 %v552
      %558 = vmatpush.bf16.msra.mxu0 %v545
      %559 = vmatpush.bf16.msra.mxu0 %v544
      %560 = vmatpush.bf16.msra.mxu0 %v543
      %561 = vmatpush.bf16.msra.mxu0 %v542
      %562 = vmatmul.bf16.gmra.mxu0 %v333
      %v563 = vpop.f32.mrf.mxu0
      %v564 = vadd.f32 0.0, %v563
      %v565 = vpop.f32.mrf.mxu0
      %v566 = vadd.f32 0.0, %v565
      %567 = vmatmul.bf16.gmra.mxu0 %v336
      %v568 = vpop.f32.mrf.mxu0
      %v569 = vadd.f32 0.0, %v568
      %v570 = vpop.f32.mrf.mxu0
      %v571 = vadd.f32 0.0, %v570
      %572 = vdwg.mxu0
      %v573 = vmax.f32 %v465, %v564
      %v574 = vmax.f32 %v466, %v566
      %v575 = vmax.f32 %v467, %v569
      %v576 = vmax.f32 %v468, %v571
      %v577 = vld [vmem:[%s258] sm:$0xf]
      %578 = vst.msk [vmem:[#allocation2] sm:$0xf] %vm244, %v577
      %v579 = vld [vmem:[%s255] sm:$0xf]
      %581 = vrot.lane.b32.xlu0 %v579, 127
      %v582 = vpop.permute.xlu0 %581
      %584 = vst.msk [vmem:[#allocation2 + $0x4] sm:$0xf] %vm244, %v582
      %v585 = vld [vmem:[%s258] sm:$0xf]
      %587 = vrot.lane.b32.xlu0 %v585, 127
      %v588 = vpop.permute.xlu0 %587
      %590 = vst.msk [vmem:[#allocation2 + $0x8] sm:$0xf] %vm244, %v588
      %v591 = vld [vmem:[%s246] sm:$0xf]
      %593 = vrot.lane.b32.xlu0 %v591, 119
      %v594 = vpop.permute.xlu0 %593
      %596 = vst.msk [vmem:[#allocation2 + $0xc] sm:$0xf] %vm244, %v594
      %v597 = vld [vmem:[%s215] sm:$0xf]
      %599 = vrot.lane.b32.xlu0 %v597, 118
      %v600 = vpop.permute.xlu0 %599
      %602 = vst.msk [vmem:[#allocation2 + $0x10] sm:$0xf] %vm244, %v600
      %v603 = vld [vmem:[%s246] sm:$0xf]
      %605 = vrot.lane.b32.xlu0 %v603, 118
      %v606 = vpop.permute.xlu0 %605
      %608 = vst.msk [vmem:[#allocation2 + $0x14] sm:$0xf] %vm244, %v606
      %v609 = vld [vmem:[%s258] sm:$0xf]
      %611 = vrot.lane.b32.xlu0 %v609, 119
      %v612 = vpop.permute.xlu0 %611
      %614 = vst.msk [vmem:[#allocation2 + $0x18] sm:$0xf] %vm244, %v612
      %v615 = vld [vmem:[%s255] sm:$0xf]
      %617 = vrot.lane.b32.xlu0 %v615, 118
      %v618 = vpop.permute.xlu0 %617
      %620 = vst.msk [vmem:[#allocation2 + $0x1c] sm:$0xf] %vm244, %v618
      %v621 = vld [vmem:[%s258] sm:$0xf]
      %623 = vrot.lane.b32.xlu0 %v621, 118
      %v624 = vpop.permute.xlu0 %623
      %626 = vst.msk [vmem:[#allocation2 + $0x20] sm:$0xf] %vm244, %v624
      %v627 = vld [vmem:[#allocation2] sm:$0xf]
      %v628 = vld [vmem:[#allocation2 + $0x4] sm:$0xf]
      %v629 = vld [vmem:[#allocation2 + $0x8] sm:$0xf]
      %v630 = vld [vmem:[#allocation2 + $0xc] sm:$0xf]
      %v631 = vld [vmem:[#allocation2 + $0x10] sm:$0xf]
      %v632 = vld [vmem:[#allocation2 + $0x14] sm:$0xf]
      %v633 = vld [vmem:[#allocation2 + $0x18] sm:$0xf]
      %v634 = vld [vmem:[#allocation2 + $0x1c] sm:$0xf]
      %v635 = vld [vmem:[#allocation2 + $0x20] sm:$0xf]
      %v645 = vunpack.c.l.b16 %v627
      %v646 = vunpack.c.l.b16 %v628
      %v647 = vunpack.c.l.b16 %v629
      %v648 = vunpack.c.l.b16 %v630
      %v649 = vunpack.c.l.b16 %v631
      %v650 = vunpack.c.l.b16 %v632
      %v651 = vunpack.c.l.b16 %v633
      %v652 = vunpack.c.l.b16 %v634
      %v653 = vunpack.c.l.b16 %v635
      %v654 = vpack.c.b16 %v646, %v645
      %v655 = vpack.c.b16 %v648, %v647
      %v656 = vpack.c.b16 %v650, %v649
      %v657 = vpack.c.b16 %v652, %v651
      %v658 = vpack.c.b16 %v653, %v653
      %v664 = vsel %vm338, %v658, 0
      %666 = vmatpush.bf16.msra.mxu0 0
      %667 = vmatpush.bf16.msra.mxu0 0
      %668 = vmatpush.bf16.msra.mxu0 0
      %669 = vmatpush.bf16.msra.mxu0 %v664
      %670 = vmatpush.bf16.msra.mxu0 %v657
      %671 = vmatpush.bf16.msra.mxu0 %v656
      %672 = vmatpush.bf16.msra.mxu0 %v655
      %673 = vmatpush.bf16.msra.mxu0 %v654
      %674 = vmatmul.bf16.gmra.mxu0 %v333
      %v675 = vpop.f32.mrf.mxu0
      %v676 = vadd.f32 0.0, %v675
      %v677 = vpop.f32.mrf.mxu0
      %v678 = vadd.f32 0.0, %v677
      %679 = vmatmul.bf16.gmra.mxu0 %v336
      %v680 = vpop.f32.mrf.mxu0
      %v681 = vadd.f32 0.0, %v680
      %v682 = vpop.f32.mrf.mxu0
      %v683 = vadd.f32 0.0, %v682
      %684 = vdwg.mxu0
      %v685 = vmax.f32 %v573, %v676
      %v686 = vmax.f32 %v574, %v678
      %v687 = vmax.f32 %v575, %v681
      %v688 = vmax.f32 %v576, %v683
      %v689 = vld [vmem:[%s226] sm:$0xff]
      %v690 = vld [vmem:[%s226 + $0x8] sm:$0xff]
      %v691 = vld [vmem:[%s226 + $0x10] sm:$0xff]
      %v692 = vld [vmem:[%s226 + $0x18] sm:$0xff]
      %694 = vset.pattern.permute.xlu0 0
      %695 = vperm.xlu0 %694, %v689
      %v696 = vpop.permute.xlu0 %695
      %699 = vset.pattern.permute.xlu0 0
      %700 = vperm.xlu0 %699, %v690
      %v701 = vpop.permute.xlu0 %700
      %704 = vset.pattern.permute.xlu0 0
      %705 = vperm.xlu0 %704, %v691
      %v706 = vpop.permute.xlu0 %705
      %709 = vset.pattern.permute.xlu0 0
      %710 = vperm.xlu0 %709, %v692
      %v711 = vpop.permute.xlu0 %710
      %v713 = vadd.f32 %v685, %v696
      %v714 = vadd.f32 %v686, %v701
      %v715 = vadd.f32 %v687, %v706
      %v716 = vadd.f32 %v688, %v711
      %v717 = vmax.f32 %v713, 0.0
      %v718 = vmax.f32 %v714, 0.0
      %v719 = vmax.f32 %v715, 0.0
      %v720 = vmax.f32 %v716, 0.0
      %v721 = vpack.c.bf16 %v717, %v717
      %v722 = vpack.c.bf16 %v718, %v718
      %v723 = vpack.c.bf16 %v719, %v719
      %v724 = vpack.c.bf16 %v720, %v720
      %725 = vst.msk [vmem:[%s236] sm:$0xf] %vm244, %v721
      %726 = vst.msk [vmem:[%s236 + $0x4] sm:$0xf] %vm244, %v722
      %727 = vst.msk [vmem:[%s236 + $0x8] sm:$0xf] %vm244, %v723
      %728 = vst.msk [vmem:[%s236 + $0xc] sm:$0xf] %vm244, %v724
      %s729 = smul.u32 4, %s19
      %p730 = scmp.lt.s32.totalorder %s18, 1
      %s731 = scalar_select %p730, %s18, 1
      %p732 = scmp.lt.s32.totalorder %s729, 3
      %s733 = scalar_select %p732, %s729, 3
      %s734 = smul.addr %s731, 4
      %s735 = sadd.s32 %s733, %s734
      %s736 = smul.addr %s735, 4
      %s737 = scalar_lea.vmem %s3, %s736
      // Predicated region
      $region33: #{blur_detection_forward.4} parent=31 // pred_check
        %p738 = pneg %p124
      $region34: #{blur_detection_forward.4} parent=31 // pred_check_branch
        %740 = sbr.rel (%p738) target = $region36
      $region35: #{blur_detection_forward.4} parent=31 // pred_region
        %s741 = smul.u32 4, %s19
      $region36: #{blur_detection_forward.4} parent=31 // pred_fallthru
        _
    $region32: #{blur_detection_forward.4} parent=5 // pred_fallthru
      _
    %p742 = scmp.le.s32.totalorder 2, %s9
    // Predicated region
    $region37: #{blur_detection_forward.4} parent=5 // pred_check
      %p743 = pneg %p742
    $region38: #{blur_detection_forward.4} parent=5 // pred_check_branch
      %745 = sbr.rel (%p743) target = $region40
    $region39: #{blur_detection_forward.4} parent=5 // pred_region
      %s746 = ssub.s32 %s9, 2
      // Predicated region
      $region41: #{blur_detection_forward.4} parent=39 // pred_check
        %p747 = pneg %p130
      $region42: #{blur_detection_forward.4} parent=39 // pred_check_branch
        %749 = sbr.rel (%p747) target = $region44
      $region43: #{blur_detection_forward.4} parent=39 // pred_region
        %s750 = smul.u32 4, %s21
        %p751 = scmp.lt.s32.totalorder %s20, 1
        %s752 = scalar_select %p751, %s20, 1
        %p753 = scmp.lt.s32.totalorder %s750, 3
        %s754 = scalar_select %p753, %s750, 3
        %s755 = smul.addr %s752, 4
        %s756 = sadd.s32 %s754, %s755
        %s757 = smul.addr %s756, 4
        %s758 = scalar_lea.vmem %s3, %s757
      $region44: #{blur_detection_forward.4} parent=39 // pred_fallthru
        _
    $region40: #{blur_detection_forward.4} parent=5 // pred_fallthru
      _
  $region6: #{blur_detection_forward.4} parent=0 // loop_footer
    %s13 = sadd.s32 1, %s9
  $region7: #{blur_detection_forward.4} parent=0 // loop_footer_branch
    %8 = sbr.rel target = $region3
  $region8: #{blur_detection_forward.4} parent=0 // loop_exit
    _

// kernel: blur_detection_forward.5
$region0: #{blur_detection_forward.5}
  #allocation0 [shape = 'u32[]', space=smem, size = 0x4, offset = 0x4, fixed_abs, tag = 'smem constant byte address 0x4 - core index']
  #allocation1 [shape = 'u32[72,128]{1,0:T(1,128)}', space=vmem, size = 0x9000, scoped, tag = 'internal scratch']
  #allocation2 [shape = 'bf16[288,20]{1,0:T(8,128)(2,1)}', space=vmem, size = 0x12000, scoped, tag = 'scratch operand']
  %s0 = inlined_call_operand.vmem [shape: bf16[2,4,32,128], index: 0, kind: input, shape index: {}]
  %s1 = inlined_call_operand.vmem [shape: bf16[64,288], index: 1, kind: input, shape index: {}]
  %s2 = inlined_call_operand.vmem [shape: f32[64,1], index: 2, kind: input, shape index: {}]
  %s3 = inlined_call_operand.vmem [shape: bf16[2,64,20], index: 3, kind: output, shape index: {}]
  %s4 = sld [smem:[#allocation0]]
  $region45: #{blur_detection_forward.5} parent=0
    _
  %s6 = ssub.s32 1, %s4
  %s7 = scalar_select 0, %s6, %s4
  loop: start=0, step=1, limit=6
  $region2: #{blur_detection_forward.5} parent=0 // loop_pre_header
    _
  $region3: #{blur_detection_forward.5} parent=0 // loop_header
    %s9 = sphi 0, %s13
    %p10 = scmp.ge.s32.totalorder %s9, 6
    %s16 = sphi 0, %s28
    %s17 = sphi 0, %s24
    %s18 = sphi 0, %s16
    %s19 = sphi 0, %s17
    %s20 = sphi 0, %s18
    %s21 = sphi 0, %s19
    %s31 = sphi 0, %s33
    %s34 = sphi 0, %s31
    %s35 = sphi 0, %s34
    %s51 = sphi 0, %s35
    %s57 = sphi 0, %s59
    %s60 = sphi 0, %s57
    %s61 = sphi 0, %s60
    %s77 = sphi 0, %s61
    %s83 = sphi 0, %s85
    %s86 = sphi 0, %s83
    %s87 = sphi 0, %s86
    %s103 = sphi 0, %s87
    %s111 = sphi 0, %s113
    %s114 = sphi 0, %s111
    %s115 = sphi 0, %s114
    %s131 = sphi 0, %s115
  $region4: #{blur_detection_forward.5} parent=0 // loop_header_branch
    %12 = sbr.rel (%p10) target = $region8
  $region5: #{blur_detection_forward.5} parent=0 // loop_body
    %s14 = ssub.s32 %s9, 1
    %s15 = ssub.s32 %s9, 2
    %s22 = sadd.s32 1, %s17
    %p23 = scmp.ge.s32.totalorder %s22, 2
    %s24 = scalar_select %p23, 0, %s22
    %s25 = sadd.s32 1, %s16
    %s26 = scalar_select %p23, %s25, %s16
    %p27 = scmp.ge.s32.totalorder %s26, 2
    %s28 = scalar_select %p27, 0, %s26
    %s29 = ssub.s32 %s16, %s28
    %p30 = scmp.eq.s32.totalorder %s29, 0
    %s32 = sadd.s32 %s31, 1
    %s33 = scalar_select %p30, %s31, %s32
    %p36 = pneg %p30
    %p37 = scmp.eq.s32.totalorder %s9, 3
    %p38 = por %p36, %p37
    %p39 = scmp.ne.s32.totalorder %s31, %s34
    %p40 = scmp.eq.s32.totalorder %s9, 0
    %p41 = por %p39, %p40
    %p42 = scmp.ne.s32.totalorder %s31, %s34
    %p43 = scmp.eq.s32.totalorder %s14, 3
    %p44 = por %p42, %p43
    %p45 = scmp.ne.s32.totalorder %s34, %s35
    %p46 = scmp.eq.s32.totalorder %s14, 0
    %p47 = por %p45, %p46
    %p48 = scmp.ne.s32.totalorder %s34, %s35
    %p49 = scmp.eq.s32.totalorder %s15, 3
    %p50 = por %p48, %p49
    %p52 = scmp.ne.s32.totalorder %s35, %s51
    %p53 = scmp.eq.s32.totalorder %s15, 0
    %p54 = por %p52, %p53
    %s55 = ssub.s32 %s17, %s24
    %p56 = scmp.eq.s32.totalorder %s55, 0
    %s58 = sadd.s32 %s57, 1
    %s59 = scalar_select %p56, %s57, %s58
    %p62 = pneg %p56
    %p63 = scmp.eq.s32.totalorder %s9, 3
    %p64 = por %p62, %p63
    %p65 = scmp.ne.s32.totalorder %s57, %s60
    %p66 = scmp.eq.s32.totalorder %s9, 0
    %p67 = por %p65, %p66
    %p68 = scmp.ne.s32.totalorder %s57, %s60
    %p69 = scmp.eq.s32.totalorder %s14, 3
    %p70 = por %p68, %p69
    %p71 = scmp.ne.s32.totalorder %s60, %s61
    %p72 = scmp.eq.s32.totalorder %s14, 0
    %p73 = por %p71, %p72
    %p74 = scmp.ne.s32.totalorder %s60, %s61
    %p75 = scmp.eq.s32.totalorder %s15, 3
    %p76 = por %p74, %p75
    %p78 = scmp.ne.s32.totalorder %s61, %s77
    %p79 = scmp.eq.s32.totalorder %s15, 0
    %p80 = por %p78, %p79
    %s81 = ssub.s32 %s17, %s24
    %p82 = scmp.eq.s32.totalorder %s81, 0
    %s84 = sadd.s32 %s83, 1
    %s85 = scalar_select %p82, %s83, %s84
    %p88 = pneg %p82
    %p89 = scmp.eq.s32.totalorder %s9, 3
    %p90 = por %p88, %p89
    %p91 = scmp.ne.s32.totalorder %s83, %s86
    %p92 = scmp.eq.s32.totalorder %s9, 0
    %p93 = por %p91, %p92
    %p94 = scmp.ne.s32.totalorder %s83, %s86
    %p95 = scmp.eq.s32.totalorder %s14, 3
    %p96 = por %p94, %p95
    %p97 = scmp.ne.s32.totalorder %s86, %s87
    %p98 = scmp.eq.s32.totalorder %s14, 0
    %p99 = por %p97, %p98
    %p100 = scmp.ne.s32.totalorder %s86, %s87
    %p101 = scmp.eq.s32.totalorder %s15, 3
    %p102 = por %p100, %p101
    %p104 = scmp.ne.s32.totalorder %s87, %s103
    %p105 = scmp.eq.s32.totalorder %s15, 0
    %p106 = por %p104, %p105
    %s107 = ssub.s32 %s16, %s28
    %s108 = ssub.s32 %s17, %s24
    %s109 = sor.u32 %s107, %s108
    %p110 = scmp.eq.s32.totalorder %s109, 0
    %s112 = sadd.s32 %s111, 1
    %s113 = scalar_select %p110, %s111, %s112
    %p116 = pneg %p110
    %p117 = scmp.eq.s32.totalorder %s9, 3
    %p118 = por %p116, %p117
    %p119 = scmp.ne.s32.totalorder %s111, %s114
    %p120 = scmp.eq.s32.totalorder %s9, 0
    %p121 = por %p119, %p120
    %p122 = scmp.ne.s32.totalorder %s111, %s114
    %p123 = scmp.eq.s32.totalorder %s14, 3
    %p124 = por %p122, %p123
    %p125 = scmp.ne.s32.totalorder %s114, %s115
    %p126 = scmp.eq.s32.totalorder %s14, 0
    %p127 = por %p125, %p126
    %p128 = scmp.ne.s32.totalorder %s114, %s115
    %p129 = scmp.eq.s32.totalorder %s15, 3
    %p130 = por %p128, %p129
    %p132 = scmp.ne.s32.totalorder %s115, %s131
    %p133 = scmp.eq.s32.totalorder %s15, 0
    %p134 = por %p132, %p133
    %p135 = scmp.le.s32.totalorder 1, %s9
    %p136 = scmp.lt.s32.totalorder %s9, 5
    %p137 = pnand %p135, %p136
    %p138 = pneg %p137
    // Predicated region
    $region9: #{blur_detection_forward.5} parent=5 // pred_check
      _
    $region10: #{blur_detection_forward.5} parent=5 // pred_check_branch
      %140 = sbr.rel (%p137) target = $region12
    $region11: #{blur_detection_forward.5} parent=5 // pred_region
      %s141 = ssub.s32 %s9, 1
    $region12: #{blur_detection_forward.5} parent=5 // pred_fallthru
      _
    %p142 = scmp.lt.s32.totalorder %s9, 4
    // Predicated region
    $region13: #{blur_detection_forward.5} parent=5 // pred_check
      %p143 = pneg %p142
    $region14: #{blur_detection_forward.5} parent=5 // pred_check_branch
      %145 = sbr.rel (%p143) target = $region16
    $region15: #{blur_detection_forward.5} parent=5 // pred_region
      // Predicated region
      $region17: #{blur_detection_forward.5} parent=15 // pred_check
        %p146 = pneg %p41
      $region18: #{blur_detection_forward.5} parent=15 // pred_check_branch
        %148 = sbr.rel (%p146) target = $region20
      $region19: #{blur_detection_forward.5} parent=15 // pred_region
        %p149 = scmp.lt.s32.totalorder %s16, 1
        %s150 = scalar_select %p149, %s16, 1
        %s151 = smul.addr %s150, 16
        %s152 = smul.addr %s151, 4
        %s153 = scalar_lea.vmem %s0, %s152
      $region20: #{blur_detection_forward.5} parent=15 // pred_fallthru
        _
      // Predicated region
      $region21: #{blur_detection_forward.5} parent=15 // pred_check
        %p154 = pneg %p67
      $region22: #{blur_detection_forward.5} parent=15 // pred_check_branch
        %156 = sbr.rel (%p154) target = $region24
      $region23: #{blur_detection_forward.5} parent=15 // pred_region
        %s157 = smul.u32 4, %s17
        %p158 = scmp.lt.s32.totalorder %s157, 7
        %s159 = scalar_select %p158, %s157, 7
        %s160 = smul.addr %s159, 3
        %s161 = smul.addr %s160, 4
        %s162 = scalar_lea.vmem %s1, %s161
        %s163 = smul.u32 4, %s17
      $region24: #{blur_detection_forward.5} parent=15 // pred_fallthru
        _
      // Predicated region
      $region25: #{blur_detection_forward.5} parent=15 // pred_check
        %p164 = pneg %p93
      $region26: #{blur_detection_forward.5} parent=15 // pred_check_branch
        %166 = sbr.rel (%p164) target = $region28
      $region27: #{blur_detection_forward.5} parent=15 // pred_region
        %s167 = smul.u32 4, %s17
        %p168 = scmp.lt.s32.totalorder %s167, 7
        %s169 = scalar_select %p168, %s167, 7
        %s170 = smul.addr %s169, 8
        %s171 = scalar_lea.vmem %s2, %s170
        %s172 = smul.u32 4, %s17
      $region28: #{blur_detection_forward.5} parent=15 // pred_fallthru
        _
    $region16: #{blur_detection_forward.5} parent=5 // pred_fallthru
      _
    %p173 = scmp.le.s32.totalorder 1, %s9
    %p174 = scmp.lt.s32.totalorder %s9, 5
    %p175 = pnand %p173, %p174
    %p176 = pneg %p175
    // Predicated region
    $region29: #{blur_detection_forward.5} parent=5 // pred_check
      _
    $region30: #{blur_detection_forward.5} parent=5 // pred_check_branch
      %178 = sbr.rel (%p175) target = $region32
    $region31: #{blur_detection_forward.5} parent=5 // pred_region
      %s179 = ssub.s32 %s9, 1
      %p180 = scmp.lt.s32.totalorder %s18, 1
      %s181 = scalar_select %p180, %s18, 1
      %s182 = smul.addr %s181, 16
      %s183 = smul.addr %s182, 4
      %s184 = scalar_lea.vmem %s0, %s183
      %p185 = pneg %p47
      %p186 = pneg %p44
      %s187 = smul.u32 4, %s19
      %p188 = scmp.lt.s32.totalorder %s187, 7
      %s189 = scalar_select %p188, %s187, 7
      %s190 = smul.addr %s189, 3
      %s191 = smul.addr %s190, 4
      %s192 = scalar_lea.vmem %s1, %s191
      %p193 = pneg %p73
      %p194 = pneg %p70
      %s195 = smul.u32 4, %s19
      %p196 = scmp.lt.s32.totalorder %s195, 7
      %s197 = scalar_select %p196, %s195, 7
      %s198 = smul.addr %s197, 8
      %s199 = scalar_lea.vmem %s2, %s198
      %p200 = pneg %p99
      %p201 = pneg %p96
      %p202 = pneg %p127
      %p203 = pneg %p124
      %s204 = smul.u32 4, %s19
      %p205 = scmp.lt.s32.totalorder %s18, 1
      %s206 = scalar_select %p205, %s18, 1
      %p207 = scmp.lt.s32.totalorder %s204, 7
      %s208 = scalar_select %p207, %s204, 7
      %s209 = smul.addr %s206, 8
      %s210 = sadd.s32 %s208, %s209
      %s211 = smul.addr %s210, 4
      %s212 = scalar_lea.vmem %s3, %s211
      %p213 = scmp.lt.s32.totalorder %s18, 1
      %s214 = scalar_select %p213, %s18, 1
      %s215 = smul.addr %s214, 16
      %s216 = smul.addr %s215, 4
      %s217 = scalar_lea.vmem %s0, %s216
      %s218 = smul.u32 4, %s19
      %p219 = scmp.lt.s32.totalorder %s218, 7
      %s220 = scalar_select %p219, %s218, 7
      %s221 = smul.addr %s220, 3
      %s222 = smul.addr %s221, 4
      %s223 = scalar_lea.vmem %s1, %s222
      %s224 = smul.u32 4, %s19
      %s225 = smul.u32 4, %s19
      %p226 = scmp.lt.s32.totalorder %s225, 7
      %s227 = scalar_select %p226, %s225, 7
      %s228 = smul.addr %s227, 8
      %s229 = scalar_lea.vmem %s2, %s228
      %s230 = smul.u32 4, %s19
      %s231 = smul.u32 4, %s19
      %p232 = scmp.lt.s32.totalorder %s18, 1
      %s233 = scalar_select %p232, %s18, 1
      %p234 = scmp.lt.s32.totalorder %s231, 7
      %s235 = scalar_select %p234, %s231, 7
      %s236 = smul.addr %s233, 8
      %s237 = sadd.s32 %s235, %s236
      %s238 = smul.addr %s237, 4
      %s239 = scalar_lea.vmem %s3, %s238
      %s240 = smul.u32 4, %s19
      %v242 = vld [vmem:[%s223] sm:$0xff]
      %v243 = vld [vmem:[%s223 + $0x8] sm:$0xf]
      %v244 = vld [vmem:[%s223 + $0xc] sm:$0xff]
      %v245 = vld [vmem:[%s223 + $0x14] sm:$0xf]
      %v246 = vld [vmem:[%s223 + $0x18] sm:$0xff]
      %v247 = vld [vmem:[%s223 + $0x20] sm:$0xf]
      %v248 = vld [vmem:[%s223 + $0x24] sm:$0xff]
      %v249 = vld [vmem:[%s223 + $0x2c] sm:$0xf]
      %v250 = vld [vmem:[%s217] sm:$0xf]
      %v251 = vld [vmem:[%s217 + $0x4] sm:$0xf]
      %v252 = vld [vmem:[%s217 + $0x8] sm:$0xf]
      %v253 = vld [vmem:[%s217 + $0xc] sm:$0xf]
      %vm254 = vcmask 158720
      %255 = vst.msk [vmem:[#allocation2] sm:$0xf] %vm254, %v250
      %256 = vst.msk [vmem:[#allocation2 + $0x4] sm:$0xf] %vm254, %v251
      %257 = vst.msk [vmem:[#allocation2 + $0x8] sm:$0xf] %vm254, %v252
      %258 = vst.msk [vmem:[#allocation2 + $0xc] sm:$0xf] %vm254, %v253
      %s259 = scalar_lea.vmem %s217, 16
      %v260 = vld [vmem:[%s259] sm:$0xf]
      %v261 = vld [vmem:[%s259 + $0x4] sm:$0xf]
      %v262 = vld [vmem:[%s259 + $0x8] sm:$0xf]
      %v263 = vld [vmem:[%s259 + $0xc] sm:$0xf]
      %264 = vst.msk [vmem:[#allocation2 + $0x10] sm:$0xf] %vm254, %v260
      %265 = vst.msk [vmem:[#allocation2 + $0x14] sm:$0xf] %vm254, %v261
      %266 = vst.msk [vmem:[#allocation2 + $0x18] sm:$0xf] %vm254, %v262
      %267 = vst.msk [vmem:[#allocation2 + $0x1c] sm:$0xf] %vm254, %v263
      %v268 = vld [vmem:[%s217] sm:$0xf]
      %v269 = vld [vmem:[%s217 + $0x4] sm:$0xf]
      %v270 = vld [vmem:[%s217 + $0x8] sm:$0xf]
      %v271 = vld [vmem:[%s217 + $0xc] sm:$0xf]
      %276 = vrot.lane.b32.xlu0 %v268, 127
      %v277 = vpop.permute.xlu0 %276
      %278 = vrot.lane.b32.xlu0 %v269, 127
      %v279 = vpop.permute.xlu0 %278
      %280 = vrot.lane.b32.xlu0 %v270, 127
      %v281 = vpop.permute.xlu0 %280
      %282 = vrot.lane.b32.xlu0 %v271, 127
      %v283 = vpop.permute.xlu0 %282
      %288 = vst.msk [vmem:[#allocation2 + $0x20] sm:$0xf] %vm254, %v277
      %289 = vst.msk [vmem:[#allocation2 + $0x24] sm:$0xf] %vm254, %v279
      %290 = vst.msk [vmem:[#allocation2 + $0x28] sm:$0xf] %vm254, %v281
      %291 = vst.msk [vmem:[#allocation2 + $0x2c] sm:$0xf] %vm254, %v283
      %s292 = scalar_lea.vmem %s217, 32
      %v293 = vld [vmem:[%s292] sm:$0xf]
      %v294 = vld [vmem:[%s292 + $0x4] sm:$0xf]
      %v295 = vld [vmem:[%s292 + $0x8] sm:$0xf]
      %v296 = vld [vmem:[%s292 + $0xc] sm:$0xf]
      %297 = vst.msk [vmem:[#allocation2 + $0x30] sm:$0xf] %vm254, %v293
      %298 = vst.msk [vmem:[#allocation2 + $0x34] sm:$0xf] %vm254, %v294
      %299 = vst.msk [vmem:[#allocation2 + $0x38] sm:$0xf] %vm254, %v295
      %300 = vst.msk [vmem:[#allocation2 + $0x3c] sm:$0xf] %vm254, %v296
      %s301 = scalar_lea.vmem %s217, 48
      %v302 = vld [vmem:[%s301] sm:$0xf]
      %v303 = vld [vmem:[%s301 + $0x4] sm:$0xf]
      %v304 = vld [vmem:[%s301 + $0x8] sm:$0xf]
      %v305 = vld [vmem:[%s301 + $0xc] sm:$0xf]
      %306 = vst.msk [vmem:[#allocation2 + $0x40] sm:$0xf] %vm254, %v302
      %307 = vst.msk [vmem:[#allocation2 + $0x44] sm:$0xf] %vm254, %v303
      %308 = vst.msk [vmem:[#allocation2 + $0x48] sm:$0xf] %vm254, %v304
      %309 = vst.msk [vmem:[#allocation2 + $0x4c] sm:$0xf] %vm254, %v305
      %v310 = vld [vmem:[%s292] sm:$0xf]
      %v311 = vld [vmem:[%s292 + $0x4] sm:$0xf]
      %v312 = vld [vmem:[%s292 + $0x8] sm:$0xf]
      %v313 = vld [vmem:[%s292 + $0xc] sm:$0xf]
      %318 = vrot.lane.b32.xlu0 %v310, 127
      %v319 = vpop.permute.xlu0 %318
      %320 = vrot.lane.b32.xlu0 %v311, 127
      %v321 = vpop.permute.xlu0 %320
      %322 = vrot.lane.b32.xlu0 %v312, 127
      %v323 = vpop.permute.xlu0 %322
      %324 = vrot.lane.b32.xlu0 %v313, 127
      %v325 = vpop.permute.xlu0 %324
      %330 = vst.msk [vmem:[#allocation2 + $0x50] sm:$0xf] %vm254, %v319
      %331 = vst.msk [vmem:[#allocation2 + $0x54] sm:$0xf] %vm254, %v321
      %332 = vst.msk [vmem:[#allocation2 + $0x58] sm:$0xf] %vm254, %v323
      %333 = vst.msk [vmem:[#allocation2 + $0x5c] sm:$0xf] %vm254, %v325
      %v334 = vld [vmem:[%s217] sm:$0xf]
      %v335 = vld [vmem:[%s217 + $0x4] sm:$0xf]
      %v336 = vld [vmem:[%s217 + $0x8] sm:$0xf]
      %v337 = vld [vmem:[%s217 + $0xc] sm:$0xf]
      %342 = vrot.lane.b32.xlu0 %v334, 123
      %v343 = vpop.permute.xlu0 %342
      %344 = vrot.lane.b32.xlu0 %v335, 123
      %v345 = vpop.permute.xlu0 %344
      %346 = vrot.lane.b32.xlu0 %v336, 123
      %v347 = vpop.permute.xlu0 %346
      %348 = vrot.lane.b32.xlu0 %v337, 123
      %v349 = vpop.permute.xlu0 %348
      %354 = vst.msk [vmem:[#allocation2 + $0x60] sm:$0xf] %vm254, %v343
      %355 = vst.msk [vmem:[#allocation2 + $0x64] sm:$0xf] %vm254, %v345
      %356 = vst.msk [vmem:[#allocation2 + $0x68] sm:$0xf] %vm254, %v347
      %357 = vst.msk [vmem:[#allocation2 + $0x6c] sm:$0xf] %vm254, %v349
      %v358 = vld [vmem:[%s259] sm:$0xf]
      %v359 = vld [vmem:[%s259 + $0x4] sm:$0xf]
      %v360 = vld [vmem:[%s259 + $0x8] sm:$0xf]
      %v361 = vld [vmem:[%s259 + $0xc] sm:$0xf]
      %366 = vrot.lane.b32.xlu0 %v358, 123
      %v367 = vpop.permute.xlu0 %366
      %368 = vrot.lane.b32.xlu0 %v359, 123
      %v369 = vpop.permute.xlu0 %368
      %370 = vrot.lane.b32.xlu0 %v360, 123
      %v371 = vpop.permute.xlu0 %370
      %372 = vrot.lane.b32.xlu0 %v361, 123
      %v373 = vpop.permute.xlu0 %372
      %378 = vst.msk [vmem:[#allocation2 + $0x70] sm:$0xf] %vm254, %v367
      %379 = vst.msk [vmem:[#allocation2 + $0x74] sm:$0xf] %vm254, %v369
      %380 = vst.msk [vmem:[#allocation2 + $0x78] sm:$0xf] %vm254, %v371
      %381 = vst.msk [vmem:[#allocation2 + $0x7c] sm:$0xf] %vm254, %v373
      %v382 = vld [vmem:[%s217] sm:$0xf]
      %v383 = vld [vmem:[%s217 + $0x4] sm:$0xf]
      %v384 = vld [vmem:[%s217 + $0x8] sm:$0xf]
      %v385 = vld [vmem:[%s217 + $0xc] sm:$0xf]
      %390 = vrot.lane.b32.xlu0 %v382, 122
      %v391 = vpop.permute.xlu0 %390
      %392 = vrot.lane.b32.xlu0 %v383, 122
      %v393 = vpop.permute.xlu0 %392
      %394 = vrot.lane.b32.xlu0 %v384, 122
      %v395 = vpop.permute.xlu0 %394
      %396 = vrot.lane.b32.xlu0 %v385, 122
      %v397 = vpop.permute.xlu0 %396
      %402 = vst.msk [vmem:[#allocation2 + $0x80] sm:$0xf] %vm254, %v391
      %403 = vst.msk [vmem:[#allocation2 + $0x84] sm:$0xf] %vm254, %v393
      %404 = vst.msk [vmem:[#allocation2 + $0x88] sm:$0xf] %vm254, %v395
      %405 = vst.msk [vmem:[#allocation2 + $0x8c] sm:$0xf] %vm254, %v397
      %v406 = vld [vmem:[#allocation2] sm:$0xf]
      %v407 = vld [vmem:[#allocation2 + $0x4] sm:$0xf]
      %v408 = vld [vmem:[#allocation2 + $0x8] sm:$0xf]
      %v409 = vld [vmem:[#allocation2 + $0xc] sm:$0xf]
      %v410 = vld [vmem:[#allocation2 + $0x10] sm:$0xf]
      %v411 = vld [vmem:[#allocation2 + $0x14] sm:$0xf]
      %v412 = vld [vmem:[#allocation2 + $0x18] sm:$0xf]
      %v413 = vld [vmem:[#allocation2 + $0x1c] sm:$0xf]
      %v414 = vld [vmem:[#allocation2 + $0x20] sm:$0xf]
      %v415 = vld [vmem:[#allocation2 + $0x24] sm:$0xf]
      %v416 = vld [vmem:[#allocation2 + $0x28] sm:$0xf]
      %v417 = vld [vmem:[#allocation2 + $0x2c] sm:$0xf]
      %v418 = vld [vmem:[#allocation2 + $0x30] sm:$0xf]
      %v419 = vld [vmem:[#allocation2 + $0x34] sm:$0xf]
      %v420 = vld [vmem:[#allocation2 + $0x38] sm:$0xf]
      %v421 = vld [vmem:[#allocation2 + $0x3c] sm:$0xf]
      %v422 = vld [vmem:[#allocation2 + $0x40] sm:$0xf]
      %v423 = vld [vmem:[#allocation2 + $0x44] sm:$0xf]
      %v424 = vld [vmem:[#allocation2 + $0x48] sm:$0xf]
      %v425 = vld [vmem:[#allocation2 + $0x4c] sm:$0xf]
      %v426 = vld [vmem:[#allocation2 + $0x50] sm:$0xf]
      %v427 = vld [vmem:[#allocation2 + $0x54] sm:$0xf]
      %v428 = vld [vmem:[#allocation2 + $0x58] sm:$0xf]
      %v429 = vld [vmem:[#allocation2 + $0x5c] sm:$0xf]
      %v430 = vld [vmem:[#allocation2 + $0x60] sm:$0xf]
      %v431 = vld [vmem:[#allocation2 + $0x64] sm:$0xf]
      %v432 = vld [vmem:[#allocation2 + $0x68] sm:$0xf]
      %v433 = vld [vmem:[#allocation2 + $0x6c] sm:$0xf]
      %v434 = vld [vmem:[#allocation2 + $0x70] sm:$0xf]
      %v435 = vld [vmem:[#allocation2 + $0x74] sm:$0xf]
      %v436 = vld [vmem:[#allocation2 + $0x78] sm:$0xf]
      %v437 = vld [vmem:[#allocation2 + $0x7c] sm:$0xf]
      %v438 = vld [vmem:[#allocation2 + $0x80] sm:$0xf]
      %v439 = vld [vmem:[#allocation2 + $0x84] sm:$0xf]
      %v440 = vld [vmem:[#allocation2 + $0x88] sm:$0xf]
      %v441 = vld [vmem:[#allocation2 + $0x8c] sm:$0xf]
      %v450 = vunpack.c.l.b16 %v242
      %v451 = vunpack.c.h.b16 %v242
      %v452 = vunpack.c.l.b16 %v243
      %v453 = vunpack.c.l.b16 %v244
      %v454 = vunpack.c.h.b16 %v244
      %v455 = vunpack.c.l.b16 %v245
      %v456 = vunpack.c.l.b16 %v246
      %v457 = vunpack.c.h.b16 %v246
      %v458 = vunpack.c.l.b16 %v247
      %v459 = vunpack.c.l.b16 %v248
      %v460 = vunpack.c.h.b16 %v248
      %v461 = vunpack.c.l.b16 %v249
      %v462 = vpack.c.b16 %v453, %v450
      %v463 = vpack.c.b16 %v454, %v451
      %v464 = vpack.c.b16 %v455, %v452
      %v465 = vpack.c.b16 %v459, %v456
      %v466 = vpack.c.b16 %v460, %v457
      %v467 = vpack.c.b16 %v461, %v458
      %v508 = vunpack.c.l.b16 %v406
      %v509 = vunpack.c.l.b16 %v407
      %v510 = vunpack.c.l.b16 %v408
      %v511 = vunpack.c.l.b16 %v409
      %v512 = vunpack.c.l.b16 %v410
      %v513 = vunpack.c.l.b16 %v411
      %v514 = vunpack.c.l.b16 %v412
      %v515 = vunpack.c.l.b16 %v413
      %v516 = vunpack.c.l.b16 %v414
      %v517 = vunpack.c.l.b16 %v415
      %v518 = vunpack.c.l.b16 %v416
      %v519 = vunpack.c.l.b16 %v417
      %v520 = vunpack.c.l.b16 %v418
      %v521 = vunpack.c.l.b16 %v419
      %v522 = vunpack.c.l.b16 %v420
      %v523 = vunpack.c.l.b16 %v421
      %v524 = vunpack.c.l.b16 %v422
      %v525 = vunpack.c.l.b16 %v423
      %v526 = vunpack.c.l.b16 %v424
      %v527 = vunpack.c.l.b16 %v425
      %v528 = vunpack.c.l.b16 %v426
      %v529 = vunpack.c.l.b16 %v427
      %v530 = vunpack.c.l.b16 %v428
      %v531 = vunpack.c.l.b16 %v429
      %v532 = vunpack.c.l.b16 %v430
      %v533 = vunpack.c.l.b16 %v431
      %v534 = vunpack.c.l.b16 %v432
      %v535 = vunpack.c.l.b16 %v433
      %v536 = vunpack.c.l.b16 %v434
      %v537 = vunpack.c.l.b16 %v435
      %v538 = vunpack.c.l.b16 %v436
      %v539 = vunpack.c.l.b16 %v437
      %v540 = vunpack.c.l.b16 %v438
      %v541 = vunpack.c.l.b16 %v439
      %v542 = vunpack.c.l.b16 %v440
      %v543 = vunpack.c.l.b16 %v441
      %v544 = vpack.c.b16 %v509, %v508
      %v545 = vpack.c.b16 %v511, %v510
      %v546 = vpack.c.b16 %v513, %v512
      %v547 = vpack.c.b16 %v515, %v514
      %v548 = vpack.c.b16 %v517, %v516
      %v549 = vpack.c.b16 %v519, %v518
      %v550 = vpack.c.b16 %v521, %v520
      %v551 = vpack.c.b16 %v523, %v522
      %v552 = vpack.c.b16 %v525, %v524
      %v553 = vpack.c.b16 %v527, %v526
      %v554 = vpack.c.b16 %v529, %v528
      %v555 = vpack.c.b16 %v531, %v530
      %v556 = vpack.c.b16 %v533, %v532
      %v557 = vpack.c.b16 %v535, %v534
      %v558 = vpack.c.b16 %v537, %v536
      %v559 = vpack.c.b16 %v539, %v538
      %v560 = vpack.c.b16 %v541, %v540
      %v561 = vpack.c.b16 %v543, %v542
      %vm580 = vcmask 261120
      %v582 = vsel %vm580, %v464, 0
      %v585 = vsel %vm580, %v467, 0
      %587 = vmatpush.bf16.msra.mxu0 %v551
      %588 = vmatpush.bf16.msra.mxu0 %v550
      %589 = vmatpush.bf16.msra.mxu0 %v549
      %590 = vmatpush.bf16.msra.mxu0 %v548
      %591 = vmatpush.bf16.msra.mxu0 %v547
      %592 = vmatpush.bf16.msra.mxu0 %v546
      %593 = vmatpush.bf16.msra.mxu0 %v545
      %594 = vmatpush.bf16.msra.mxu0 %v544
      %595 = vmatmul.bf16.gmra.mxu0 %v462
      %v596 = vpop.f32.mrf.mxu0
      %v597 = vadd.f32 0.0, %v596
      %v598 = vpop.f32.mrf.mxu0
      %v599 = vadd.f32 0.0, %v598
      %600 = vmatmul.bf16.gmra.mxu0 %v465
      %v601 = vpop.f32.mrf.mxu0
      %v602 = vadd.f32 0.0, %v601
      %v603 = vpop.f32.mrf.mxu0
      %v604 = vadd.f32 0.0, %v603
      %605 = vdwg.mxu0
      %606 = vmatpush.bf16.msra.mxu0 %v559
      %607 = vmatpush.bf16.msra.mxu0 %v558
      %608 = vmatpush.bf16.msra.mxu0 %v557
      %609 = vmatpush.bf16.msra.mxu0 %v556
      %610 = vmatpush.bf16.msra.mxu0 %v555
      %611 = vmatpush.bf16.msra.mxu0 %v554
      %612 = vmatpush.bf16.msra.mxu0 %v553
      %613 = vmatpush.bf16.msra.mxu0 %v552
      %614 = vmatmul.bf16.gmra.mxu0 %v463
      %v615 = vpop.f32.mrf.mxu0
      %v616 = vadd.f32 %v597, %v615
      %v617 = vpop.f32.mrf.mxu0
      %v618 = vadd.f32 %v599, %v617
      %619 = vmatmul.bf16.gmra.mxu0 %v466
      %v620 = vpop.f32.mrf.mxu0
      %v621 = vadd.f32 %v602, %v620
      %v622 = vpop.f32.mrf.mxu0
      %v623 = vadd.f32 %v604, %v622
      %624 = vdwg.mxu0
      %625 = vmatpush.bf16.msra.mxu0 0
      %626 = vmatpush.bf16.msra.mxu0 0
      %627 = vmatpush.bf16.msra.mxu0 0
      %628 = vmatpush.bf16.msra.mxu0 0
      %629 = vmatpush.bf16.msra.mxu0 0
      %630 = vmatpush.bf16.msra.mxu0 0
      %631 = vmatpush.bf16.msra.mxu0 %v561
      %632 = vmatpush.bf16.msra.mxu0 %v560
      %633 = vmatmul.bf16.gmra.mxu0 %v582
      %v634 = vpop.f32.mrf.mxu0
      %v635 = vadd.f32 %v616, %v634
      %v636 = vpop.f32.mrf.mxu0
      %v637 = vadd.f32 %v618, %v636
      %638 = vmatmul.bf16.gmra.mxu0 %v585
      %v639 = vpop.f32.mrf.mxu0
      %v640 = vadd.f32 %v621, %v639
      %v641 = vpop.f32.mrf.mxu0
      %v642 = vadd.f32 %v623, %v641
      %643 = vdwg.mxu0
      %v644 = vld [vmem:[%s259] sm:$0xf]
      %v645 = vld [vmem:[%s259 + $0x4] sm:$0xf]
      %v646 = vld [vmem:[%s259 + $0x8] sm:$0xf]
      %v647 = vld [vmem:[%s259 + $0xc] sm:$0xf]
      %648 = vst.msk [vmem:[#allocation2] sm:$0xf] %vm254, %v644
      %649 = vst.msk [vmem:[#allocation2 + $0x4] sm:$0xf] %vm254, %v645
      %650 = vst.msk [vmem:[#allocation2 + $0x8] sm:$0xf] %vm254, %v646
      %651 = vst.msk [vmem:[#allocation2 + $0xc] sm:$0xf] %vm254, %v647
      %v652 = vld [vmem:[%s217] sm:$0xf]
      %v653 = vld [vmem:[%s217 + $0x4] sm:$0xf]
      %v654 = vld [vmem:[%s217 + $0x8] sm:$0xf]
      %v655 = vld [vmem:[%s217 + $0xc] sm:$0xf]
      %660 = vrot.lane.b32.xlu0 %v652, 127
      %v661 = vpop.permute.xlu0 %660
      %662 = vrot.lane.b32.xlu0 %v653, 127
      %v663 = vpop.permute.xlu0 %662
      %664 = vrot.lane.b32.xlu0 %v654, 127
      %v665 = vpop.permute.xlu0 %664
      %666 = vrot.lane.b32.xlu0 %v655, 127
      %v667 = vpop.permute.xlu0 %666
      %672 = vst.msk [vmem:[#allocation2 + $0x10] sm:$0xf] %vm254, %v661
      %673 = vst.msk [vmem:[#allocation2 + $0x14] sm:$0xf] %vm254, %v663
      %674 = vst.msk [vmem:[#allocation2 + $0x18] sm:$0xf] %vm254, %v665
      %675 = vst.msk [vmem:[#allocation2 + $0x1c] sm:$0xf] %vm254, %v667
      %v676 = vld [vmem:[%s259] sm:$0xf]
      %v677 = vld [vmem:[%s259 + $0x4] sm:$0xf]
      %v678 = vld [vmem:[%s259 + $0x8] sm:$0xf]
      %v679 = vld [vmem:[%s259 + $0xc] sm:$0xf]
      %684 = vrot.lane.b32.xlu0 %v676, 127
      %v685 = vpop.permute.xlu0 %684
      %686 = vrot.lane.b32.xlu0 %v677, 127
      %v687 = vpop.permute.xlu0 %686
      %688 = vrot.lane.b32.xlu0 %v678, 127
      %v689 = vpop.permute.xlu0 %688
      %690 = vrot.lane.b32.xlu0 %v679, 127
      %v691 = vpop.permute.xlu0 %690
      %696 = vst.msk [vmem:[#allocation2 + $0x20] sm:$0xf] %vm254, %v685
      %697 = vst.msk [vmem:[#allocation2 + $0x24] sm:$0xf] %vm254, %v687
      %698 = vst.msk [vmem:[#allocation2 + $0x28] sm:$0xf] %vm254, %v689
      %699 = vst.msk [vmem:[#allocation2 + $0x2c] sm:$0xf] %vm254, %v691
      %v700 = vld [vmem:[%s301] sm:$0xf]
      %v701 = vld [vmem:[%s301 + $0x4] sm:$0xf]
      %v702 = vld [vmem:[%s301 + $0x8] sm:$0xf]
      %v703 = vld [vmem:[%s301 + $0xc] sm:$0xf]
      %704 = vst.msk [vmem:[#allocation2 + $0x30] sm:$0xf] %vm254, %v700
      %705 = vst.msk [vmem:[#allocation2 + $0x34] sm:$0xf] %vm254, %v701
      %706 = vst.msk [vmem:[#allocation2 + $0x38] sm:$0xf] %vm254, %v702
      %707 = vst.msk [vmem:[#allocation2 + $0x3c] sm:$0xf] %vm254, %v703
      %v708 = vld [vmem:[%s292] sm:$0xf]
      %v709 = vld [vmem:[%s292 + $0x4] sm:$0xf]
      %v710 = vld [vmem:[%s292 + $0x8] sm:$0xf]
      %v711 = vld [vmem:[%s292 + $0xc] sm:$0xf]
      %716 = vrot.lane.b32.xlu0 %v708, 127
      %v717 = vpop.permute.xlu0 %716
      %718 = vrot.lane.b32.xlu0 %v709, 127
      %v719 = vpop.permute.xlu0 %718
      %720 = vrot.lane.b32.xlu0 %v710, 127
      %v721 = vpop.permute.xlu0 %720
      %722 = vrot.lane.b32.xlu0 %v711, 127
      %v723 = vpop.permute.xlu0 %722
      %728 = vst.msk [vmem:[#allocation2 + $0x40] sm:$0xf] %vm254, %v717
      %729 = vst.msk [vmem:[#allocation2 + $0x44] sm:$0xf] %vm254, %v719
      %730 = vst.msk [vmem:[#allocation2 + $0x48] sm:$0xf] %vm254, %v721
      %731 = vst.msk [vmem:[#allocation2 + $0x4c] sm:$0xf] %vm254, %v723
      %v732 = vld [vmem:[%s301] sm:$0xf]
      %v733 = vld [vmem:[%s301 + $0x4] sm:$0xf]
      %v734 = vld [vmem:[%s301 + $0x8] sm:$0xf]
      %v735 = vld [vmem:[%s301 + $0xc] sm:$0xf]
      %740 = vrot.lane.b32.xlu0 %v732, 127
      %v741 = vpop.permute.xlu0 %740
      %742 = vrot.lane.b32.xlu0 %v733, 127
      %v743 = vpop.permute.xlu0 %742
      %744 = vrot.lane.b32.xlu0 %v734, 127
      %v745 = vpop.permute.xlu0 %744
      %746 = vrot.lane.b32.xlu0 %v735, 127
      %v747 = vpop.permute.xlu0 %746
      %752 = vst.msk [vmem:[#allocation2 + $0x50] sm:$0xf] %vm254, %v741
      %753 = vst.msk [vmem:[#allocation2 + $0x54] sm:$0xf] %vm254, %v743
      %754 = vst.msk [vmem:[#allocation2 + $0x58] sm:$0xf] %vm254, %v745
      %755 = vst.msk [vmem:[#allocation2 + $0x5c] sm:$0xf] %vm254, %v747
      %v756 = vld [vmem:[%s259] sm:$0xf]
      %v757 = vld [vmem:[%s259 + $0x4] sm:$0xf]
      %v758 = vld [vmem:[%s259 + $0x8] sm:$0xf]
      %v759 = vld [vmem:[%s259 + $0xc] sm:$0xf]
      %764 = vrot.lane.b32.xlu0 %v756, 123
      %v765 = vpop.permute.xlu0 %764
      %766 = vrot.lane.b32.xlu0 %v757, 123
      %v767 = vpop.permute.xlu0 %766
      %768 = vrot.lane.b32.xlu0 %v758, 123
      %v769 = vpop.permute.xlu0 %768
      %770 = vrot.lane.b32.xlu0 %v759, 123
      %v771 = vpop.permute.xlu0 %770
      %776 = vst.msk [vmem:[#allocation2 + $0x60] sm:$0xf] %vm254, %v765
      %777 = vst.msk [vmem:[#allocation2 + $0x64] sm:$0xf] %vm254, %v767
      %778 = vst.msk [vmem:[#allocation2 + $0x68] sm:$0xf] %vm254, %v769
      %779 = vst.msk [vmem:[#allocation2 + $0x6c] sm:$0xf] %vm254, %v771
      %v780 = vld [vmem:[%s217] sm:$0xf]
      %v781 = vld [vmem:[%s217 + $0x4] sm:$0xf]
      %v782 = vld [vmem:[%s217 + $0x8] sm:$0xf]
      %v783 = vld [vmem:[%s217 + $0xc] sm:$0xf]
      %788 = vrot.lane.b32.xlu0 %v780, 122
      %v789 = vpop.permute.xlu0 %788
      %790 = vrot.lane.b32.xlu0 %v781, 122
      %v791 = vpop.permute.xlu0 %790
      %792 = vrot.lane.b32.xlu0 %v782, 122
      %v793 = vpop.permute.xlu0 %792
      %794 = vrot.lane.b32.xlu0 %v783, 122
      %v795 = vpop.permute.xlu0 %794
      %800 = vst.msk [vmem:[#allocation2 + $0x70] sm:$0xf] %vm254, %v789
      %801 = vst.msk [vmem:[#allocation2 + $0x74] sm:$0xf] %vm254, %v791
      %802 = vst.msk [vmem:[#allocation2 + $0x78] sm:$0xf] %vm254, %v793
      %803 = vst.msk [vmem:[#allocation2 + $0x7c] sm:$0xf] %vm254, %v795
      %v804 = vld [vmem:[%s259] sm:$0xf]
      %v805 = vld [vmem:[%s259 + $0x4] sm:$0xf]
      %v806 = vld [vmem:[%s259 + $0x8] sm:$0xf]
      %v807 = vld [vmem:[%s259 + $0xc] sm:$0xf]
      %812 = vrot.lane.b32.xlu0 %v804, 122
      %v813 = vpop.permute.xlu0 %812
      %814 = vrot.lane.b32.xlu0 %v805, 122
      %v815 = vpop.permute.xlu0 %814
      %816 = vrot.lane.b32.xlu0 %v806, 122
      %v817 = vpop.permute.xlu0 %816
      %818 = vrot.lane.b32.xlu0 %v807, 122
      %v819 = vpop.permute.xlu0 %818
      %824 = vst.msk [vmem:[#allocation2 + $0x80] sm:$0xf] %vm254, %v813
      %825 = vst.msk [vmem:[#allocation2 + $0x84] sm:$0xf] %vm254, %v815
      %826 = vst.msk [vmem:[#allocation2 + $0x88] sm:$0xf] %vm254, %v817
      %827 = vst.msk [vmem:[#allocation2 + $0x8c] sm:$0xf] %vm254, %v819
      %v828 = vld [vmem:[#allocation2] sm:$0xf]
      %v829 = vld [vmem:[#allocation2 + $0x4] sm:$0xf]
      %v830 = vld [vmem:[#allocation2 + $0x8] sm:$0xf]
      %v831 = vld [vmem:[#allocation2 + $0xc] sm:$0xf]
      %v832 = vld [vmem:[#allocation2 + $0x10] sm:$0xf]
      %v833 = vld [vmem:[#allocation2 + $0x14] sm:$0xf]
      %v834 = vld [vmem:[#allocation2 + $0x18] sm:$0xf]
      %v835 = vld [vmem:[#allocation2 + $0x1c] sm:$0xf]
      %v836 = vld [vmem:[#allocation2 + $0x20] sm:$0xf]
      %v837 = vld [vmem:[#allocation2 + $0x24] sm:$0xf]
      %v838 = vld [vmem:[#allocation2 + $0x28] sm:$0xf]
      %v839 = vld [vmem:[#allocation2 + $0x2c] sm:$0xf]
      %v840 = vld [vmem:[#allocation2 + $0x30] sm:$0xf]
      %v841 = vld [vmem:[#allocation2 + $0x34] sm:$0xf]
      %v842 = vld [vmem:[#allocation2 + $0x38] sm:$0xf]
      %v843 = vld [vmem:[#allocation2 + $0x3c] sm:$0xf]
      %v844 = vld [vmem:[#allocation2 + $0x40] sm:$0xf]
      %v845 = vld [vmem:[#allocation2 + $0x44] sm:$0xf]
      %v846 = vld [vmem:[#allocation2 + $0x48] sm:$0xf]
      %v847 = vld [vmem:[#allocation2 + $0x4c] sm:$0xf]
      %v848 = vld [vmem:[#allocation2 + $0x50] sm:$0xf]
      %v849 = vld [vmem:[#allocation2 + $0x54] sm:$0xf]
      %v850 = vld [vmem:[#allocation2 + $0x58] sm:$0xf]
      %v851 = vld [vmem:[#allocation2 + $0x5c] sm:$0xf]
      %v852 = vld [vmem:[#allocation2 + $0x60] sm:$0xf]
      %v853 = vld [vmem:[#allocation2 + $0x64] sm:$0xf]
      %v854 = vld [vmem:[#allocation2 + $0x68] sm:$0xf]
      %v855 = vld [vmem:[#allocation2 + $0x6c] sm:$0xf]
      %v856 = vld [vmem:[#allocation2 + $0x70] sm:$0xf]
      %v857 = vld [vmem:[#allocation2 + $0x74] sm:$0xf]
      %v858 = vld [vmem:[#allocation2 + $0x78] sm:$0xf]
      %v859 = vld [vmem:[#allocation2 + $0x7c] sm:$0xf]
      %v860 = vld [vmem:[#allocation2 + $0x80] sm:$0xf]
      %v861 = vld [vmem:[#allocation2 + $0x84] sm:$0xf]
      %v862 = vld [vmem:[#allocation2 + $0x88] sm:$0xf]
      %v863 = vld [vmem:[#allocation2 + $0x8c] sm:$0xf]
      %v900 = vunpack.c.l.b16 %v828
      %v901 = vunpack.c.l.b16 %v829
      %v902 = vunpack.c.l.b16 %v830
      %v903 = vunpack.c.l.b16 %v831
      %v904 = vunpack.c.l.b16 %v832
      %v905 = vunpack.c.l.b16 %v833
      %v906 = vunpack.c.l.b16 %v834
      %v907 = vunpack.c.l.b16 %v835
      %v908 = vunpack.c.l.b16 %v836
      %v909 = vunpack.c.l.b16 %v837
      %v910 = vunpack.c.l.b16 %v838
      %v911 = vunpack.c.l.b16 %v839
      %v912 = vunpack.c.l.b16 %v840
      %v913 = vunpack.c.l.b16 %v841
      %v914 = vunpack.c.l.b16 %v842
      %v915 = vunpack.c.l.b16 %v843
      %v916 = vunpack.c.l.b16 %v844
      %v917 = vunpack.c.l.b16 %v845
      %v918 = vunpack.c.l.b16 %v846
      %v919 = vunpack.c.l.b16 %v847
      %v920 = vunpack.c.l.b16 %v848
      %v921 = vunpack.c.l.b16 %v849
      %v922 = vunpack.c.l.b16 %v850
      %v923 = vunpack.c.l.b16 %v851
      %v924 = vunpack.c.l.b16 %v852
      %v925 = vunpack.c.l.b16 %v853
      %v926 = vunpack.c.l.b16 %v854
      %v927 = vunpack.c.l.b16 %v855
      %v928 = vunpack.c.l.b16 %v856
      %v929 = vunpack.c.l.b16 %v857
      %v930 = vunpack.c.l.b16 %v858
      %v931 = vunpack.c.l.b16 %v859
      %v932 = vunpack.c.l.b16 %v860
      %v933 = vunpack.c.l.b16 %v861
      %v934 = vunpack.c.l.b16 %v862
      %v935 = vunpack.c.l.b16 %v863
      %v936 = vpack.c.b16 %v901, %v900
      %v937 = vpack.c.b16 %v903, %v902
      %v938 = vpack.c.b16 %v905, %v904
      %v939 = vpack.c.b16 %v907, %v906
      %v940 = vpack.c.b16 %v909, %v908
      %v941 = vpack.c.b16 %v911, %v910
      %v942 = vpack.c.b16 %v913, %v912
      %v943 = vpack.c.b16 %v915, %v914
      %v944 = vpack.c.b16 %v917, %v916
      %v945 = vpack.c.b16 %v919, %v918
      %v946 = vpack.c.b16 %v921, %v920
      %v947 = vpack.c.b16 %v923, %v922
      %v948 = vpack.c.b16 %v925, %v924
      %v949 = vpack.c.b16 %v927, %v926
      %v950 = vpack.c.b16 %v929, %v928
      %v951 = vpack.c.b16 %v931, %v930
      %v952 = vpack.c.b16 %v933, %v932
      %v953 = vpack.c.b16 %v935, %v934
      %972 = vmatpush.bf16.msra.mxu0 %v943
      %973 = vmatpush.bf16.msra.mxu0 %v942
      %974 = vmatpush.bf16.msra.mxu0 %v941
      %975 = vmatpush.bf16.msra.mxu0 %v940
      %976 = vmatpush.bf16.msra.mxu0 %v939
      %977 = vmatpush.bf16.msra.mxu0 %v938
      %978 = vmatpush.bf16.msra.mxu0 %v937
      %979 = vmatpush.bf16.msra.mxu0 %v936
      %980 = vmatmul.bf16.gmra.mxu0 %v462
      %v981 = vpop.f32.mrf.mxu0
      %v982 = vadd.f32 0.0, %v981
      %v983 = vpop.f32.mrf.mxu0
      %v984 = vadd.f32 0.0, %v983
      %985 = vmatmul.bf16.gmra.mxu0 %v465
      %v986 = vpop.f32.mrf.mxu0
      %v987 = vadd.f32 0.0, %v986
      %v988 = vpop.f32.mrf.mxu0
      %v989 = vadd.f32 0.0, %v988
      %990 = vdwg.mxu0
      %991 = vmatpush.bf16.msra.mxu0 %v951
      %992 = vmatpush.bf16.msra.mxu0 %v950
      %993 = vmatpush.bf16.msra.mxu0 %v949
      %994 = vmatpush.bf16.msra.mxu0 %v948
      %995 = vmatpush.bf16.msra.mxu0 %v947
      %996 = vmatpush.bf16.msra.mxu0 %v946
      %997 = vmatpush.bf16.msra.mxu0 %v945
      %998 = vmatpush.bf16.msra.mxu0 %v944
      %999 = vmatmul.bf16.gmra.mxu0 %v463
      %v1000 = vpop.f32.mrf.mxu0
      %v1001 = vadd.f32 %v982, %v1000
      %v1002 = vpop.f32.mrf.mxu0
      %v1003 = vadd.f32 %v984, %v1002
      %1004 = vmatmul.bf16.gmra.mxu0 %v466
      %v1005 = vpop.f32.mrf.mxu0
      %v1006 = vadd.f32 %v987, %v1005
      %v1007 = vpop.f32.mrf.mxu0
      %v1008 = vadd.f32 %v989, %v1007
      %1009 = vdwg.mxu0
      %1010 = vmatpush.bf16.msra.mxu0 0
      %1011 = vmatpush.bf16.msra.mxu0 0
      %1012 = vmatpush.bf16.msra.mxu0 0
      %1013 = vmatpush.bf16.msra.mxu0 0
      %1014 = vmatpush.bf16.msra.mxu0 0
      %1015 = vmatpush.bf16.msra.mxu0 0
      %1016 = vmatpush.bf16.msra.mxu0 %v953
      %1017 = vmatpush.bf16.msra.mxu0 %v952
      %1018 = vmatmul.bf16.gmra.mxu0 %v582
      %v1019 = vpop.f32.mrf.mxu0
      %v1020 = vadd.f32 %v1001, %v1019
      %v1021 = vpop.f32.mrf.mxu0
      %v1022 = vadd.f32 %v1003, %v1021
      %1023 = vmatmul.bf16.gmra.mxu0 %v585
      %v1024 = vpop.f32.mrf.mxu0
      %v1025 = vadd.f32 %v1006, %v1024
      %v1026 = vpop.f32.mrf.mxu0
      %v1027 = vadd.f32 %v1008, %v1026
      %1028 = vdwg.mxu0
      %v1029 = vmax.f32 %v635, %v1020
      %v1030 = vmax.f32 %v637, %v1022
      %v1031 = vmax.f32 %v640, %v1025
      %v1032 = vmax.f32 %v642, %v1027
      %v1033 = vld [vmem:[%s292] sm:$0xf]
      %v1034 = vld [vmem:[%s292 + $0x4] sm:$0xf]
      %v1035 = vld [vmem:[%s292 + $0x8] sm:$0xf]
      %v1036 = vld [vmem:[%s292 + $0xc] sm:$0xf]
      %1037 = vst.msk [vmem:[#allocation2] sm:$0xf] %vm254, %v1033
      %1038 = vst.msk [vmem:[#allocation2 + $0x4] sm:$0xf] %vm254, %v1034
      %1039 = vst.msk [vmem:[#allocation2 + $0x8] sm:$0xf] %vm254, %v1035
      %1040 = vst.msk [vmem:[#allocation2 + $0xc] sm:$0xf] %vm254, %v1036
      %v1041 = vld [vmem:[%s301] sm:$0xf]
      %v1042 = vld [vmem:[%s301 + $0x4] sm:$0xf]
      %v1043 = vld [vmem:[%s301 + $0x8] sm:$0xf]
      %v1044 = vld [vmem:[%s301 + $0xc] sm:$0xf]
      %1045 = vst.msk [vmem:[#allocation2 + $0x10] sm:$0xf] %vm254, %v1041
      %1046 = vst.msk [vmem:[#allocation2 + $0x14] sm:$0xf] %vm254, %v1042
      %1047 = vst.msk [vmem:[#allocation2 + $0x18] sm:$0xf] %vm254, %v1043
      %1048 = vst.msk [vmem:[#allocation2 + $0x1c] sm:$0xf] %vm254, %v1044
      %v1049 = vld [vmem:[%s292] sm:$0xf]
      %v1050 = vld [vmem:[%s292 + $0x4] sm:$0xf]
      %v1051 = vld [vmem:[%s292 + $0x8] sm:$0xf]
      %v1052 = vld [vmem:[%s292 + $0xc] sm:$0xf]
      %1057 = vrot.lane.b32.xlu0 %v1049, 127
      %v1058 = vpop.permute.xlu0 %1057
      %1059 = vrot.lane.b32.xlu0 %v1050, 127
      %v1060 = vpop.permute.xlu0 %1059
      %1061 = vrot.lane.b32.xlu0 %v1051, 127
      %v1062 = vpop.permute.xlu0 %1061
      %1063 = vrot.lane.b32.xlu0 %v1052, 127
      %v1064 = vpop.permute.xlu0 %1063
      %1069 = vst.msk [vmem:[#allocation2 + $0x20] sm:$0xf] %vm254, %v1058
      %1070 = vst.msk [vmem:[#allocation2 + $0x24] sm:$0xf] %vm254, %v1060
      %1071 = vst.msk [vmem:[#allocation2 + $0x28] sm:$0xf] %vm254, %v1062
      %1072 = vst.msk [vmem:[#allocation2 + $0x2c] sm:$0xf] %vm254, %v1064
      %v1073 = vld [vmem:[%s217] sm:$0xf]
      %v1074 = vld [vmem:[%s217 + $0x4] sm:$0xf]
      %v1075 = vld [vmem:[%s217 + $0x8] sm:$0xf]
      %v1076 = vld [vmem:[%s217 + $0xc] sm:$0xf]
      %1081 = vrot.lane.b32.xlu0 %v1073, 123
      %v1082 = vpop.permute.xlu0 %1081
      %1083 = vrot.lane.b32.xlu0 %v1074, 123
      %v1084 = vpop.permute.xlu0 %1083
      %1085 = vrot.lane.b32.xlu0 %v1075, 123
      %v1086 = vpop.permute.xlu0 %1085
      %1087 = vrot.lane.b32.xlu0 %v1076, 123
      %v1088 = vpop.permute.xlu0 %1087
      %1093 = vst.msk [vmem:[#allocation2 + $0x30] sm:$0xf] %vm254, %v1082
      %1094 = vst.msk [vmem:[#allocation2 + $0x34] sm:$0xf] %vm254, %v1084
      %1095 = vst.msk [vmem:[#allocation2 + $0x38] sm:$0xf] %vm254, %v1086
      %1096 = vst.msk [vmem:[#allocation2 + $0x3c] sm:$0xf] %vm254, %v1088
      %v1097 = vld [vmem:[%s259] sm:$0xf]
      %v1098 = vld [vmem:[%s259 + $0x4] sm:$0xf]
      %v1099 = vld [vmem:[%s259 + $0x8] sm:$0xf]
      %v1100 = vld [vmem:[%s259 + $0xc] sm:$0xf]
      %1105 = vrot.lane.b32.xlu0 %v1097, 123
      %v1106 = vpop.permute.xlu0 %1105
      %1107 = vrot.lane.b32.xlu0 %v1098, 123
      %v1108 = vpop.permute.xlu0 %1107
      %1109 = vrot.lane.b32.xlu0 %v1099, 123
      %v1110 = vpop.permute.xlu0 %1109
      %1111 = vrot.lane.b32.xlu0 %v1100, 123
      %v1112 = vpop.permute.xlu0 %1111
      %1117 = vst.msk [vmem:[#allocation2 + $0x40] sm:$0xf] %vm254, %v1106
      %1118 = vst.msk [vmem:[#allocation2 + $0x44] sm:$0xf] %vm254, %v1108
      %1119 = vst.msk [vmem:[#allocation2 + $0x48] sm:$0xf] %vm254, %v1110
      %1120 = vst.msk [vmem:[#allocation2 + $0x4c] sm:$0xf] %vm254, %v1112
      %v1121 = vld [vmem:[%s217] sm:$0xf]
      %v1122 = vld [vmem:[%s217 + $0x4] sm:$0xf]
      %v1123 = vld [vmem:[%s217 + $0x8] sm:$0xf]
      %v1124 = vld [vmem:[%s217 + $0xc] sm:$0xf]
      %1129 = vrot.lane.b32.xlu0 %v1121, 122
      %v1130 = vpop.permute.xlu0 %1129
      %1131 = vrot.lane.b32.xlu0 %v1122, 122
      %v1132 = vpop.permute.xlu0 %1131
      %1133 = vrot.lane.b32.xlu0 %v1123, 122
      %v1134 = vpop.permute.xlu0 %1133
      %1135 = vrot.lane.b32.xlu0 %v1124, 122
      %v1136 = vpop.permute.xlu0 %1135
      %1141 = vst.msk [vmem:[#allocation2 + $0x50] sm:$0xf] %vm254, %v1130
      %1142 = vst.msk [vmem:[#allocation2 + $0x54] sm:$0xf] %vm254, %v1132
      %1143 = vst.msk [vmem:[#allocation2 + $0x58] sm:$0xf] %vm254, %v1134
      %1144 = vst.msk [vmem:[#allocation2 + $0x5c] sm:$0xf] %vm254, %v1136
      %v1145 = vld [vmem:[%s292] sm:$0xf]
      %v1146 = vld [vmem:[%s292 + $0x4] sm:$0xf]
      %v1147 = vld [vmem:[%s292 + $0x8] sm:$0xf]
      %v1148 = vld [vmem:[%s292 + $0xc] sm:$0xf]
      %1153 = vrot.lane.b32.xlu0 %v1145, 123
      %v1154 = vpop.permute.xlu0 %1153
      %1155 = vrot.lane.b32.xlu0 %v1146, 123
      %v1156 = vpop.permute.xlu0 %1155
      %1157 = vrot.lane.b32.xlu0 %v1147, 123
      %v1158 = vpop.permute.xlu0 %1157
      %1159 = vrot.lane.b32.xlu0 %v1148, 123
      %v1160 = vpop.permute.xlu0 %1159
      %1165 = vst.msk [vmem:[#allocation2 + $0x60] sm:$0xf] %vm254, %v1154
      %1166 = vst.msk [vmem:[#allocation2 + $0x64] sm:$0xf] %vm254, %v1156
      %1167 = vst.msk [vmem:[#allocation2 + $0x68] sm:$0xf] %vm254, %v1158
      %1168 = vst.msk [vmem:[#allocation2 + $0x6c] sm:$0xf] %vm254, %v1160
      %v1169 = vld [vmem:[%s301] sm:$0xf]
      %v1170 = vld [vmem:[%s301 + $0x4] sm:$0xf]
      %v1171 = vld [vmem:[%s301 + $0x8] sm:$0xf]
      %v1172 = vld [vmem:[%s301 + $0xc] sm:$0xf]
      %1177 = vrot.lane.b32.xlu0 %v1169, 123
      %v1178 = vpop.permute.xlu0 %1177
      %1179 = vrot.lane.b32.xlu0 %v1170, 123
      %v1180 = vpop.permute.xlu0 %1179
      %1181 = vrot.lane.b32.xlu0 %v1171, 123
      %v1182 = vpop.permute.xlu0 %1181
      %1183 = vrot.lane.b32.xlu0 %v1172, 123
      %v1184 = vpop.permute.xlu0 %1183
      %1189 = vst.msk [vmem:[#allocation2 + $0x70] sm:$0xf] %vm254, %v1178
      %1190 = vst.msk [vmem:[#allocation2 + $0x74] sm:$0xf] %vm254, %v1180
      %1191 = vst.msk [vmem:[#allocation2 + $0x78] sm:$0xf] %vm254, %v1182
      %1192 = vst.msk [vmem:[#allocation2 + $0x7c] sm:$0xf] %vm254, %v1184
      %v1193 = vld [vmem:[%s292] sm:$0xf]
      %v1194 = vld [vmem:[%s292 + $0x4] sm:$0xf]
      %v1195 = vld [vmem:[%s292 + $0x8] sm:$0xf]
      %v1196 = vld [vmem:[%s292 + $0xc] sm:$0xf]
      %1201 = vrot.lane.b32.xlu0 %v1193, 122
      %v1202 = vpop.permute.xlu0 %1201
      %1203 = vrot.lane.b32.xlu0 %v1194, 122
      %v1204 = vpop.permute.xlu0 %1203
      %1205 = vrot.lane.b32.xlu0 %v1195, 122
      %v1206 = vpop.permute.xlu0 %1205
      %1207 = vrot.lane.b32.xlu0 %v1196, 122
      %v1208 = vpop.permute.xlu0 %1207
      %1213 = vst.msk [vmem:[#allocation2 + $0x80] sm:$0xf] %vm254, %v1202
      %1214 = vst.msk [vmem:[#allocation2 + $0x84] sm:$0xf] %vm254, %v1204
      %1215 = vst.msk [vmem:[#allocation2 + $0x88] sm:$0xf] %vm254, %v1206
      %1216 = vst.msk [vmem:[#allocation2 + $0x8c] sm:$0xf] %vm254, %v1208
      %v1217 = vld [vmem:[#allocation2] sm:$0xf]
      %v1218 = vld [vmem:[#allocation2 + $0x4] sm:$0xf]
      %v1219 = vld [vmem:[#allocation2 + $0x8] sm:$0xf]
      %v1220 = vld [vmem:[#allocation2 + $0xc] sm:$0xf]
      %v1221 = vld [vmem:[#allocation2 + $0x10] sm:$0xf]
      %v1222 = vld [vmem:[#allocation2 + $0x14] sm:$0xf]
      %v1223 = vld [vmem:[#allocation2 + $0x18] sm:$0xf]
      %v1224 = vld [vmem:[#allocation2 + $0x1c] sm:$0xf]
      %v1225 = vld [vmem:[#allocation2 + $0x20] sm:$0xf]
      %v1226 = vld [vmem:[#allocation2 + $0x24] sm:$0xf]
      %v1227 = vld [vmem:[#allocation2 + $0x28] sm:$0xf]
      %v1228 = vld [vmem:[#allocation2 + $0x2c] sm:$0xf]
      %v1229 = vld [vmem:[#allocation2 + $0x30] sm:$0xf]
      %v1230 = vld [vmem:[#allocation2 + $0x34] sm:$0xf]
      %v1231 = vld [vmem:[#allocation2 + $0x38] sm:$0xf]
      %v1232 = vld [vmem:[#allocation2 + $0x3c] sm:$0xf]
      %v1233 = vld [vmem:[#allocation2 + $0x40] sm:$0xf]
      %v1234 = vld [vmem:[#allocation2 + $0x44] sm:$0xf]
      %v1235 = vld [vmem:[#allocation2 + $0x48] sm:$0xf]
      %v1236 = vld [vmem:[#allocation2 + $0x4c] sm:$0xf]
      %v1237 = vld [vmem:[#allocation2 + $0x50] sm:$0xf]
      %v1238 = vld [vmem:[#allocation2 + $0x54] sm:$0xf]
      %v1239 = vld [vmem:[#allocation2 + $0x58] sm:$0xf]
      %v1240 = vld [vmem:[#allocation2 + $0x5c] sm:$0xf]
      %v1241 = vld [vmem:[#allocation2 + $0x60] sm:$0xf]
      %v1242 = vld [vmem:[#allocation2 + $0x64] sm:$0xf]
      %v1243 = vld [vmem:[#allocation2 + $0x68] sm:$0xf]
      %v1244 = vld [vmem:[#allocation2 + $0x6c] sm:$0xf]
      %v1245 = vld [vmem:[#allocation2 + $0x70] sm:$0xf]
      %v1246 = vld [vmem:[#allocation2 + $0x74] sm:$0xf]
      %v1247 = vld [vmem:[#allocation2 + $0x78] sm:$0xf]
      %v1248 = vld [vmem:[#allocation2 + $0x7c] sm:$0xf]
      %v1249 = vld [vmem:[#allocation2 + $0x80] sm:$0xf]
      %v1250 = vld [vmem:[#allocation2 + $0x84] sm:$0xf]
      %v1251 = vld [vmem:[#allocation2 + $0x88] sm:$0xf]
      %v1252 = vld [vmem:[#allocation2 + $0x8c] sm:$0xf]
      %v1289 = vunpack.c.l.b16 %v1217
      %v1290 = vunpack.c.l.b16 %v1218
      %v1291 = vunpack.c.l.b16 %v1219
      %v1292 = vunpack.c.l.b16 %v1220
      %v1293 = vunpack.c.l.b16 %v1221
      %v1294 = vunpack.c.l.b16 %v1222
      %v1295 = vunpack.c.l.b16 %v1223
      %v1296 = vunpack.c.l.b16 %v1224
      %v1297 = vunpack.c.l.b16 %v1225
      %v1298 = vunpack.c.l.b16 %v1226
      %v1299 = vunpack.c.l.b16 %v1227
      %v1300 = vunpack.c.l.b16 %v1228
      %v1301 = vunpack.c.l.b16 %v1229
      %v1302 = vunpack.c.l.b16 %v1230
      %v1303 = vunpack.c.l.b16 %v1231
      %v1304 = vunpack.c.l.b16 %v1232
      %v1305 = vunpack.c.l.b16 %v1233
      %v1306 = vunpack.c.l.b16 %v1234
      %v1307 = vunpack.c.l.b16 %v1235
      %v1308 = vunpack.c.l.b16 %v1236
      %v1309 = vunpack.c.l.b16 %v1237
      %v1310 = vunpack.c.l.b16 %v1238
      %v1311 = vunpack.c.l.b16 %v1239
      %v1312 = vunpack.c.l.b16 %v1240
      %v1313 = vunpack.c.l.b16 %v1241
      %v1314 = vunpack.c.l.b16 %v1242
      %v1315 = vunpack.c.l.b16 %v1243
      %v1316 = vunpack.c.l.b16 %v1244
      %v1317 = vunpack.c.l.b16 %v1245
      %v1318 = vunpack.c.l.b16 %v1246
      %v1319 = vunpack.c.l.b16 %v1247
      %v1320 = vunpack.c.l.b16 %v1248
      %v1321 = vunpack.c.l.b16 %v1249
      %v1322 = vunpack.c.l.b16 %v1250
      %v1323 = vunpack.c.l.b16 %v1251
      %v1324 = vunpack.c.l.b16 %v1252
      %v1325 = vpack.c.b16 %v1290, %v1289
      %v1326 = vpack.c.b16 %v1292, %v1291
      %v1327 = vpack.c.b16 %v1294, %v1293
      %v1328 = vpack.c.b16 %v1296, %v1295
      %v1329 = vpack.c.b16 %v1298, %v1297
      %v1330 = vpack.c.b16 %v1300, %v1299
      %v1331 = vpack.c.b16 %v1302, %v1301
      %v1332 = vpack.c.b16 %v1304, %v1303
      %v1333 = vpack.c.b16 %v1306, %v1305
      %v1334 = vpack.c.b16 %v1308, %v1307
      %v1335 = vpack.c.b16 %v1310, %v1309
      %v1336 = vpack.c.b16 %v1312, %v1311
      %v1337 = vpack.c.b16 %v1314, %v1313
      %v1338 = vpack.c.b16 %v1316, %v1315
      %v1339 = vpack.c.b16 %v1318, %v1317
      %v1340 = vpack.c.b16 %v1320, %v1319
      %v1341 = vpack.c.b16 %v1322, %v1321
      %v1342 = vpack.c.b16 %v1324, %v1323
      %1361 = vmatpush.bf16.msra.mxu0 %v1332
      %1362 = vmatpush.bf16.msra.mxu0 %v1331
      %1363 = vmatpush.bf16.msra.mxu0 %v1330
      %1364 = vmatpush.bf16.msra.mxu0 %v1329
      %1365 = vmatpush.bf16.msra.mxu0 %v1328
      %1366 = vmatpush.bf16.msra.mxu0 %v1327
      %1367 = vmatpush.bf16.msra.mxu0 %v1326
      %1368 = vmatpush.bf16.msra.mxu0 %v1325
      %1369 = vmatmul.bf16.gmra.mxu0 %v462
      %v1370 = vpop.f32.mrf.mxu0
      %v1371 = vadd.f32 0.0, %v1370
      %v1372 = vpop.f32.mrf.mxu0
      %v1373 = vadd.f32 0.0, %v1372
      %1374 = vmatmul.bf16.gmra.mxu0 %v465
      %v1375 = vpop.f32.mrf.mxu0
      %v1376 = vadd.f32 0.0, %v1375
      %v1377 = vpop.f32.mrf.mxu0
      %v1378 = vadd.f32 0.0, %v1377
      %1379 = vdwg.mxu0
      %1380 = vmatpush.bf16.msra.mxu0 %v1340
      %1381 = vmatpush.bf16.msra.mxu0 %v1339
      %1382 = vmatpush.bf16.msra.mxu0 %v1338
      %1383 = vmatpush.bf16.msra.mxu0 %v1337
      %1384 = vmatpush.bf16.msra.mxu0 %v1336
      %1385 = vmatpush.bf16.msra.mxu0 %v1335
      %1386 = vmatpush.bf16.msra.mxu0 %v1334
      %1387 = vmatpush.bf16.msra.mxu0 %v1333
      %1388 = vmatmul.bf16.gmra.mxu0 %v463
      %v1389 = vpop.f32.mrf.mxu0
      %v1390 = vadd.f32 %v1371, %v1389
      %v1391 = vpop.f32.mrf.mxu0
      %v1392 = vadd.f32 %v1373, %v1391
      %1393 = vmatmul.bf16.gmra.mxu0 %v466
      %v1394 = vpop.f32.mrf.mxu0
      %v1395 = vadd.f32 %v1376, %v1394
      %v1396 = vpop.f32.mrf.mxu0
      %v1397 = vadd.f32 %v1378, %v1396
      %1398 = vdwg.mxu0
      %1399 = vmatpush.bf16.msra.mxu0 0
      %1400 = vmatpush.bf16.msra.mxu0 0
      %1401 = vmatpush.bf16.msra.mxu0 0
      %1402 = vmatpush.bf16.msra.mxu0 0
      %1403 = vmatpush.bf16.msra.mxu0 0
      %1404 = vmatpush.bf16.msra.mxu0 0
      %1405 = vmatpush.bf16.msra.mxu0 %v1342
      %1406 = vmatpush.bf16.msra.mxu0 %v1341
      %1407 = vmatmul.bf16.gmra.mxu0 %v582
      %v1408 = vpop.f32.mrf.mxu0
      %v1409 = vadd.f32 %v1390, %v1408
      %v1410 = vpop.f32.mrf.mxu0
      %v1411 = vadd.f32 %v1392, %v1410
      %1412 = vmatmul.bf16.gmra.mxu0 %v585
      %v1413 = vpop.f32.mrf.mxu0
      %v1414 = vadd.f32 %v1395, %v1413
      %v1415 = vpop.f32.mrf.mxu0
      %v1416 = vadd.f32 %v1397, %v1415
      %1417 = vdwg.mxu0
      %v1418 = vmax.f32 %v1029, %v1409
      %v1419 = vmax.f32 %v1030, %v1411
      %v1420 = vmax.f32 %v1031, %v1414
      %v1421 = vmax.f32 %v1032, %v1416
      %v1422 = vld [vmem:[%s301] sm:$0xf]
      %v1423 = vld [vmem:[%s301 + $0x4] sm:$0xf]
      %v1424 = vld [vmem:[%s301 + $0x8] sm:$0xf]
      %v1425 = vld [vmem:[%s301 + $0xc] sm:$0xf]
      %1426 = vst.msk [vmem:[#allocation2] sm:$0xf] %vm254, %v1422
      %1427 = vst.msk [vmem:[#allocation2 + $0x4] sm:$0xf] %vm254, %v1423
      %1428 = vst.msk [vmem:[#allocation2 + $0x8] sm:$0xf] %vm254, %v1424
      %1429 = vst.msk [vmem:[#allocation2 + $0xc] sm:$0xf] %vm254, %v1425
      %v1430 = vld [vmem:[%s292] sm:$0xf]
      %v1431 = vld [vmem:[%s292 + $0x4] sm:$0xf]
      %v1432 = vld [vmem:[%s292 + $0x8] sm:$0xf]
      %v1433 = vld [vmem:[%s292 + $0xc] sm:$0xf]
      %1438 = vrot.lane.b32.xlu0 %v1430, 127
      %v1439 = vpop.permute.xlu0 %1438
      %1440 = vrot.lane.b32.xlu0 %v1431, 127
      %v1441 = vpop.permute.xlu0 %1440
      %1442 = vrot.lane.b32.xlu0 %v1432, 127
      %v1443 = vpop.permute.xlu0 %1442
      %1444 = vrot.lane.b32.xlu0 %v1433, 127
      %v1445 = vpop.permute.xlu0 %1444
      %1450 = vst.msk [vmem:[#allocation2 + $0x10] sm:$0xf] %vm254, %v1439
      %1451 = vst.msk [vmem:[#allocation2 + $0x14] sm:$0xf] %vm254, %v1441
      %1452 = vst.msk [vmem:[#allocation2 + $0x18] sm:$0xf] %vm254, %v1443
      %1453 = vst.msk [vmem:[#allocation2 + $0x1c] sm:$0xf] %vm254, %v1445
      %v1454 = vld [vmem:[%s301] sm:$0xf]
      %v1455 = vld [vmem:[%s301 + $0x4] sm:$0xf]
      %v1456 = vld [vmem:[%s301 + $0x8] sm:$0xf]
      %v1457 = vld [vmem:[%s301 + $0xc] sm:$0xf]
      %1462 = vrot.lane.b32.xlu0 %v1454, 127
      %v1463 = vpop.permute.xlu0 %1462
      %1464 = vrot.lane.b32.xlu0 %v1455, 127
      %v1465 = vpop.permute.xlu0 %1464
      %1466 = vrot.lane.b32.xlu0 %v1456, 127
      %v1467 = vpop.permute.xlu0 %1466
      %1468 = vrot.lane.b32.xlu0 %v1457, 127
      %v1469 = vpop.permute.xlu0 %1468
      %1474 = vst.msk [vmem:[#allocation2 + $0x20] sm:$0xf] %vm254, %v1463
      %1475 = vst.msk [vmem:[#allocation2 + $0x24] sm:$0xf] %vm254, %v1465
      %1476 = vst.msk [vmem:[#allocation2 + $0x28] sm:$0xf] %vm254, %v1467
      %1477 = vst.msk [vmem:[#allocation2 + $0x2c] sm:$0xf] %vm254, %v1469
      %v1478 = vld [vmem:[%s259] sm:$0xf]
      %v1479 = vld [vmem:[%s259 + $0x4] sm:$0xf]
      %v1480 = vld [vmem:[%s259 + $0x8] sm:$0xf]
      %v1481 = vld [vmem:[%s259 + $0xc] sm:$0xf]
      %1486 = vrot.lane.b32.xlu0 %v1478, 123
      %v1487 = vpop.permute.xlu0 %1486
      %1488 = vrot.lane.b32.xlu0 %v1479, 123
      %v1489 = vpop.permute.xlu0 %1488
      %1490 = vrot.lane.b32.xlu0 %v1480, 123
      %v1491 = vpop.permute.xlu0 %1490
      %1492 = vrot.lane.b32.xlu0 %v1481, 123
      %v1493 = vpop.permute.xlu0 %1492
      %1498 = vst.msk [vmem:[#allocation2 + $0x30] sm:$0xf] %vm254, %v1487
      %1499 = vst.msk [vmem:[#allocation2 + $0x34] sm:$0xf] %vm254, %v1489
      %1500 = vst.msk [vmem:[#allocation2 + $0x38] sm:$0xf] %vm254, %v1491
      %1501 = vst.msk [vmem:[#allocation2 + $0x3c] sm:$0xf] %vm254, %v1493
      %v1502 = vld [vmem:[%s217] sm:$0xf]
      %v1503 = vld [vmem:[%s217 + $0x4] sm:$0xf]
      %v1504 = vld [vmem:[%s217 + $0x8] sm:$0xf]
      %v1505 = vld [vmem:[%s217 + $0xc] sm:$0xf]
      %1510 = vrot.lane.b32.xlu0 %v1502, 122
      %v1511 = vpop.permute.xlu0 %1510
      %1512 = vrot.lane.b32.xlu0 %v1503, 122
      %v1513 = vpop.permute.xlu0 %1512
      %1514 = vrot.lane.b32.xlu0 %v1504, 122
      %v1515 = vpop.permute.xlu0 %1514
      %1516 = vrot.lane.b32.xlu0 %v1505, 122
      %v1517 = vpop.permute.xlu0 %1516
      %1522 = vst.msk [vmem:[#allocation2 + $0x40] sm:$0xf] %vm254, %v1511
      %1523 = vst.msk [vmem:[#allocation2 + $0x44] sm:$0xf] %vm254, %v1513
      %1524 = vst.msk [vmem:[#allocation2 + $0x48] sm:$0xf] %vm254, %v1515
      %1525 = vst.msk [vmem:[#allocation2 + $0x4c] sm:$0xf] %vm254, %v1517
      %v1526 = vld [vmem:[%s259] sm:$0xf]
      %v1527 = vld [vmem:[%s259 + $0x4] sm:$0xf]
      %v1528 = vld [vmem:[%s259 + $0x8] sm:$0xf]
      %v1529 = vld [vmem:[%s259 + $0xc] sm:$0xf]
      %1534 = vrot.lane.b32.xlu0 %v1526, 122
      %v1535 = vpop.permute.xlu0 %1534
      %1536 = vrot.lane.b32.xlu0 %v1527, 122
      %v1537 = vpop.permute.xlu0 %1536
      %1538 = vrot.lane.b32.xlu0 %v1528, 122
      %v1539 = vpop.permute.xlu0 %1538
      %1540 = vrot.lane.b32.xlu0 %v1529, 122
      %v1541 = vpop.permute.xlu0 %1540
      %1546 = vst.msk [vmem:[#allocation2 + $0x50] sm:$0xf] %vm254, %v1535
      %1547 = vst.msk [vmem:[#allocation2 + $0x54] sm:$0xf] %vm254, %v1537
      %1548 = vst.msk [vmem:[#allocation2 + $0x58] sm:$0xf] %vm254, %v1539
      %1549 = vst.msk [vmem:[#allocation2 + $0x5c] sm:$0xf] %vm254, %v1541
      %v1550 = vld [vmem:[%s301] sm:$0xf]
      %v1551 = vld [vmem:[%s301 + $0x4] sm:$0xf]
      %v1552 = vld [vmem:[%s301 + $0x8] sm:$0xf]
      %v1553 = vld [vmem:[%s301 + $0xc] sm:$0xf]
      %1558 = vrot.lane.b32.xlu0 %v1550, 123
      %v1559 = vpop.permute.xlu0 %1558
      %1560 = vrot.lane.b32.xlu0 %v1551, 123
      %v1561 = vpop.permute.xlu0 %1560
      %1562 = vrot.lane.b32.xlu0 %v1552, 123
      %v1563 = vpop.permute.xlu0 %1562
      %1564 = vrot.lane.b32.xlu0 %v1553, 123
      %v1565 = vpop.permute.xlu0 %1564
      %1570 = vst.msk [vmem:[#allocation2 + $0x60] sm:$0xf] %vm254, %v1559
      %1571 = vst.msk [vmem:[#allocation2 + $0x64] sm:$0xf] %vm254, %v1561
      %1572 = vst.msk [vmem:[#allocation2 + $0x68] sm:$0xf] %vm254, %v1563
      %1573 = vst.msk [vmem:[#allocation2 + $0x6c] sm:$0xf] %vm254, %v1565
      %v1574 = vld [vmem:[%s292] sm:$0xf]
      %v1575 = vld [vmem:[%s292 + $0x4] sm:$0xf]
      %v1576 = vld [vmem:[%s292 + $0x8] sm:$0xf]
      %v1577 = vld [vmem:[%s292 + $0xc] sm:$0xf]
      %1582 = vrot.lane.b32.xlu0 %v1574, 122
      %v1583 = vpop.permute.xlu0 %1582
      %1584 = vrot.lane.b32.xlu0 %v1575, 122
      %v1585 = vpop.permute.xlu0 %1584
      %1586 = vrot.lane.b32.xlu0 %v1576, 122
      %v1587 = vpop.permute.xlu0 %1586
      %1588 = vrot.lane.b32.xlu0 %v1577, 122
      %v1589 = vpop.permute.xlu0 %1588
      %1594 = vst.msk [vmem:[#allocation2 + $0x70] sm:$0xf] %vm254, %v1583
      %1595 = vst.msk [vmem:[#allocation2 + $0x74] sm:$0xf] %vm254, %v1585
      %1596 = vst.msk [vmem:[#allocation2 + $0x78] sm:$0xf] %vm254, %v1587
      %1597 = vst.msk [vmem:[#allocation2 + $0x7c] sm:$0xf] %vm254, %v1589
      %v1598 = vld [vmem:[%s301] sm:$0xf]
      %v1599 = vld [vmem:[%s301 + $0x4] sm:$0xf]
      %v1600 = vld [vmem:[%s301 + $0x8] sm:$0xf]
      %v1601 = vld [vmem:[%s301 + $0xc] sm:$0xf]
      %1606 = vrot.lane.b32.xlu0 %v1598, 122
      %v1607 = vpop.permute.xlu0 %1606
      %1608 = vrot.lane.b32.xlu0 %v1599, 122
      %v1609 = vpop.permute.xlu0 %1608
      %1610 = vrot.lane.b32.xlu0 %v1600, 122
      %v1611 = vpop.permute.xlu0 %1610
      %1612 = vrot.lane.b32.xlu0 %v1601, 122
      %v1613 = vpop.permute.xlu0 %1612
      %1618 = vst.msk [vmem:[#allocation2 + $0x80] sm:$0xf] %vm254, %v1607
      %1619 = vst.msk [vmem:[#allocation2 + $0x84] sm:$0xf] %vm254, %v1609
      %1620 = vst.msk [vmem:[#allocation2 + $0x88] sm:$0xf] %vm254, %v1611
      %1621 = vst.msk [vmem:[#allocation2 + $0x8c] sm:$0xf] %vm254, %v1613
      %v1622 = vld [vmem:[#allocation2] sm:$0xf]
      %v1623 = vld [vmem:[#allocation2 + $0x4] sm:$0xf]
      %v1624 = vld [vmem:[#allocation2 + $0x8] sm:$0xf]
      %v1625 = vld [vmem:[#allocation2 + $0xc] sm:$0xf]
      %v1626 = vld [vmem:[#allocation2 + $0x10] sm:$0xf]
      %v1627 = vld [vmem:[#allocation2 + $0x14] sm:$0xf]
      %v1628 = vld [vmem:[#allocation2 + $0x18] sm:$0xf]
      %v1629 = vld [vmem:[#allocation2 + $0x1c] sm:$0xf]
      %v1630 = vld [vmem:[#allocation2 + $0x20] sm:$0xf]
      %v1631 = vld [vmem:[#allocation2 + $0x24] sm:$0xf]
      %v1632 = vld [vmem:[#allocation2 + $0x28] sm:$0xf]
      %v1633 = vld [vmem:[#allocation2 + $0x2c] sm:$0xf]
      %v1634 = vld [vmem:[#allocation2 + $0x30] sm:$0xf]
      %v1635 = vld [vmem:[#allocation2 + $0x34] sm:$0xf]
      %v1636 = vld [vmem:[#allocation2 + $0x38] sm:$0xf]
      %v1637 = vld [vmem:[#allocation2 + $0x3c] sm:$0xf]
      %v1638 = vld [vmem:[#allocation2 + $0x40] sm:$0xf]
      %v1639 = vld [vmem:[#allocation2 + $0x44] sm:$0xf]
      %v1640 = vld [vmem:[#allocation2 + $0x48] sm:$0xf]
      %v1641 = vld [vmem:[#allocation2 + $0x4c] sm:$0xf]
      %v1642 = vld [vmem:[#allocation2 + $0x50] sm:$0xf]
      %v1643 = vld [vmem:[#allocation2 + $0x54] sm:$0xf]
      %v1644 = vld [vmem:[#allocation2 + $0x58] sm:$0xf]
      %v1645 = vld [vmem:[#allocation2 + $0x5c] sm:$0xf]
      %v1646 = vld [vmem:[#allocation2 + $0x60] sm:$0xf]
      %v1647 = vld [vmem:[#allocation2 + $0x64] sm:$0xf]
      %v1648 = vld [vmem:[#allocation2 + $0x68] sm:$0xf]
      %v1649 = vld [vmem:[#allocation2 + $0x6c] sm:$0xf]
      %v1650 = vld [vmem:[#allocation2 + $0x70] sm:$0xf]
      %v1651 = vld [vmem:[#allocation2 + $0x74] sm:$0xf]
      %v1652 = vld [vmem:[#allocation2 + $0x78] sm:$0xf]
      %v1653 = vld [vmem:[#allocation2 + $0x7c] sm:$0xf]
      %v1654 = vld [vmem:[#allocation2 + $0x80] sm:$0xf]
      %v1655 = vld [vmem:[#allocation2 + $0x84] sm:$0xf]
      %v1656 = vld [vmem:[#allocation2 + $0x88] sm:$0xf]
      %v1657 = vld [vmem:[#allocation2 + $0x8c] sm:$0xf]
      %v1694 = vunpack.c.l.b16 %v1622
      %v1695 = vunpack.c.l.b16 %v1623
      %v1696 = vunpack.c.l.b16 %v1624
      %v1697 = vunpack.c.l.b16 %v1625
      %v1698 = vunpack.c.l.b16 %v1626
      %v1699 = vunpack.c.l.b16 %v1627
      %v1700 = vunpack.c.l.b16 %v1628
      %v1701 = vunpack.c.l.b16 %v1629
      %v1702 = vunpack.c.l.b16 %v1630
      %v1703 = vunpack.c.l.b16 %v1631
      %v1704 = vunpack.c.l.b16 %v1632
      %v1705 = vunpack.c.l.b16 %v1633
      %v1706 = vunpack.c.l.b16 %v1634
      %v1707 = vunpack.c.l.b16 %v1635
      %v1708 = vunpack.c.l.b16 %v1636
      %v1709 = vunpack.c.l.b16 %v1637
      %v1710 = vunpack.c.l.b16 %v1638
      %v1711 = vunpack.c.l.b16 %v1639
      %v1712 = vunpack.c.l.b16 %v1640
      %v1713 = vunpack.c.l.b16 %v1641
      %v1714 = vunpack.c.l.b16 %v1642
      %v1715 = vunpack.c.l.b16 %v1643
      %v1716 = vunpack.c.l.b16 %v1644
      %v1717 = vunpack.c.l.b16 %v1645
      %v1718 = vunpack.c.l.b16 %v1646
      %v1719 = vunpack.c.l.b16 %v1647
      %v1720 = vunpack.c.l.b16 %v1648
      %v1721 = vunpack.c.l.b16 %v1649
      %v1722 = vunpack.c.l.b16 %v1650
      %v1723 = vunpack.c.l.b16 %v1651
      %v1724 = vunpack.c.l.b16 %v1652
      %v1725 = vunpack.c.l.b16 %v1653
      %v1726 = vunpack.c.l.b16 %v1654
      %v1727 = vunpack.c.l.b16 %v1655
      %v1728 = vunpack.c.l.b16 %v1656
      %v1729 = vunpack.c.l.b16 %v1657
      %v1730 = vpack.c.b16 %v1695, %v1694
      %v1731 = vpack.c.b16 %v1697, %v1696
      %v1732 = vpack.c.b16 %v1699, %v1698
      %v1733 = vpack.c.b16 %v1701, %v1700
      %v1734 = vpack.c.b16 %v1703, %v1702
      %v1735 = vpack.c.b16 %v1705, %v1704
      %v1736 = vpack.c.b16 %v1707, %v1706
      %v1737 = vpack.c.b16 %v1709, %v1708
      %v1738 = vpack.c.b16 %v1711, %v1710
      %v1739 = vpack.c.b16 %v1713, %v1712
      %v1740 = vpack.c.b16 %v1715, %v1714
      %v1741 = vpack.c.b16 %v1717, %v1716
      %v1742 = vpack.c.b16 %v1719, %v1718
      %v1743 = vpack.c.b16 %v1721, %v1720
      %v1744 = vpack.c.b16 %v1723, %v1722
      %v1745 = vpack.c.b16 %v1725, %v1724
      %v1746 = vpack.c.b16 %v1727, %v1726
      %v1747 = vpack.c.b16 %v1729, %v1728
      %1766 = vmatpush.bf16.msra.mxu0 %v1737
      %1767 = vmatpush.bf16.msra.mxu0 %v1736
      %1768 = vmatpush.bf16.msra.mxu0 %v1735
      %1769 = vmatpush.bf16.msra.mxu0 %v1734
      %1770 = vmatpush.bf16.msra.mxu0 %v1733
      %1771 = vmatpush.bf16.msra.mxu0 %v1732
      %1772 = vmatpush.bf16.msra.mxu0 %v1731
      %1773 = vmatpush.bf16.msra.mxu0 %v1730
      %1774 = vmatmul.bf16.gmra.mxu0 %v462
      %v1775 = vpop.f32.mrf.mxu0
      %v1776 = vadd.f32 0.0, %v1775
      %v1777 = vpop.f32.mrf.mxu0
      %v1778 = vadd.f32 0.0, %v1777
      %1779 = vmatmul.bf16.gmra.mxu0 %v465
      %v1780 = vpop.f32.mrf.mxu0
      %v1781 = vadd.f32 0.0, %v1780
      %v1782 = vpop.f32.mrf.mxu0
      %v1783 = vadd.f32 0.0, %v1782
      %1784 = vdwg.mxu0
      %1785 = vmatpush.bf16.msra.mxu0 %v1745
      %1786 = vmatpush.bf16.msra.mxu0 %v1744
      %1787 = vmatpush.bf16.msra.mxu0 %v1743
      %1788 = vmatpush.bf16.msra.mxu0 %v1742
      %1789 = vmatpush.bf16.msra.mxu0 %v1741
      %1790 = vmatpush.bf16.msra.mxu0 %v1740
      %1791 = vmatpush.bf16.msra.mxu0 %v1739
      %1792 = vmatpush.bf16.msra.mxu0 %v1738
      %1793 = vmatmul.bf16.gmra.mxu0 %v463
      %v1794 = vpop.f32.mrf.mxu0
      %v1795 = vadd.f32 %v1776, %v1794
      %v1796 = vpop.f32.mrf.mxu0
      %v1797 = vadd.f32 %v1778, %v1796
      %1798 = vmatmul.bf16.gmra.mxu0 %v466
      %v1799 = vpop.f32.mrf.mxu0
      %v1800 = vadd.f32 %v1781, %v1799
      %v1801 = vpop.f32.mrf.mxu0
      %v1802 = vadd.f32 %v1783, %v1801
      %1803 = vdwg.mxu0
      %1804 = vmatpush.bf16.msra.mxu0 0
      %1805 = vmatpush.bf16.msra.mxu0 0
      %1806 = vmatpush.bf16.msra.mxu0 0
      %1807 = vmatpush.bf16.msra.mxu0 0
      %1808 = vmatpush.bf16.msra.mxu0 0
      %1809 = vmatpush.bf16.msra.mxu0 0
      %1810 = vmatpush.bf16.msra.mxu0 %v1747
      %1811 = vmatpush.bf16.msra.mxu0 %v1746
      %1812 = vmatmul.bf16.gmra.mxu0 %v582
      %v1813 = vpop.f32.mrf.mxu0
      %v1814 = vadd.f32 %v1795, %v1813
      %v1815 = vpop.f32.mrf.mxu0
      %v1816 = vadd.f32 %v1797, %v1815
      %1817 = vmatmul.bf16.gmra.mxu0 %v585
      %v1818 = vpop.f32.mrf.mxu0
      %v1819 = vadd.f32 %v1800, %v1818
      %v1820 = vpop.f32.mrf.mxu0
      %v1821 = vadd.f32 %v1802, %v1820
      %1822 = vdwg.mxu0
      %v1823 = vmax.f32 %v1418, %v1814
      %v1824 = vmax.f32 %v1419, %v1816
      %v1825 = vmax.f32 %v1420, %v1819
      %v1826 = vmax.f32 %v1421, %v1821
      %v1827 = vld [vmem:[%s229] sm:$0xff]
      %v1828 = vld [vmem:[%s229 + $0x8] sm:$0xff]
      %v1829 = vld [vmem:[%s229 + $0x10] sm:$0xff]
      %v1830 = vld [vmem:[%s229 + $0x18] sm:$0xff]
      %1832 = vset.pattern.permute.xlu0 0
      %1833 = vperm.xlu0 %1832, %v1827
      %v1834 = vpop.permute.xlu0 %1833
      %1837 = vset.pattern.permute.xlu0 0
      %1838 = vperm.xlu0 %1837, %v1828
      %v1839 = vpop.permute.xlu0 %1838
      %1842 = vset.pattern.permute.xlu0 0
      %1843 = vperm.xlu0 %1842, %v1829
      %v1844 = vpop.permute.xlu0 %1843
      %1847 = vset.pattern.permute.xlu0 0
      %1848 = vperm.xlu0 %1847, %v1830
      %v1849 = vpop.permute.xlu0 %1848
      %v1851 = vadd.f32 %v1823, %v1834
      %v1852 = vadd.f32 %v1824, %v1839
      %v1853 = vadd.f32 %v1825, %v1844
      %v1854 = vadd.f32 %v1826, %v1849
      %v1855 = vmax.f32 %v1851, 0.0
      %v1856 = vmax.f32 %v1852, 0.0
      %v1857 = vmax.f32 %v1853, 0.0
      %v1858 = vmax.f32 %v1854, 0.0
      %v1859 = vpack.c.bf16 %v1855, %v1855
      %v1860 = vpack.c.bf16 %v1856, %v1856
      %v1861 = vpack.c.bf16 %v1857, %v1857
      %v1862 = vpack.c.bf16 %v1858, %v1858
      %1863 = vst.msk [vmem:[%s239] sm:$0xf] %vm254, %v1859
      %1864 = vst.msk [vmem:[%s239 + $0x4] sm:$0xf] %vm254, %v1860
      %1865 = vst.msk [vmem:[%s239 + $0x8] sm:$0xf] %vm254, %v1861
      %1866 = vst.msk [vmem:[%s239 + $0xc] sm:$0xf] %vm254, %v1862
      %s1867 = smul.u32 4, %s19
      %p1868 = scmp.lt.s32.totalorder %s18, 1
      %s1869 = scalar_select %p1868, %s18, 1
      %p1870 = scmp.lt.s32.totalorder %s1867, 7
      %s1871 = scalar_select %p1870, %s1867, 7
      %s1872 = smul.addr %s1869, 8
      %s1873 = sadd.s32 %s1871, %s1872
      %s1874 = smul.addr %s1873, 4
      %s1875 = scalar_lea.vmem %s3, %s1874
      // Predicated region
      $region33: #{blur_detection_forward.5} parent=31 // pred_check
        %p1876 = pneg %p124
      $region34: #{blur_detection_forward.5} parent=31 // pred_check_branch
        %1878 = sbr.rel (%p1876) target = $region36
      $region35: #{blur_detection_forward.5} parent=31 // pred_region
        %s1879 = smul.u32 4, %s19
      $region36: #{blur_detection_forward.5} parent=31 // pred_fallthru
        _
    $region32: #{blur_detection_forward.5} parent=5 // pred_fallthru
      _
    %p1880 = scmp.le.s32.totalorder 2, %s9
    // Predicated region
    $region37: #{blur_detection_forward.5} parent=5 // pred_check
      %p1881 = pneg %p1880
    $region38: #{blur_detection_forward.5} parent=5 // pred_check_branch
      %1883 = sbr.rel (%p1881) target = $region40
    $region39: #{blur_detection_forward.5} parent=5 // pred_region
      %s1884 = ssub.s32 %s9, 2
      // Predicated region
      $region41: #{blur_detection_forward.5} parent=39 // pred_check
        %p1885 = pneg %p130
      $region42: #{blur_detection_forward.5} parent=39 // pred_check_branch
        %1887 = sbr.rel (%p1885) target = $region44
      $region43: #{blur_detection_forward.5} parent=39 // pred_region
        %s1888 = smul.u32 4, %s21
        %p1889 = scmp.lt.s32.totalorder %s20, 1
        %s1890 = scalar_select %p1889, %s20, 1
        %p1891 = scmp.lt.s32.totalorder %s1888, 7
        %s1892 = scalar_select %p1891, %s1888, 7
        %s1893 = smul.addr %s1890, 8
        %s1894 = sadd.s32 %s1892, %s1893
        %s1895 = smul.addr %s1894, 4
        %s1896 = scalar_lea.vmem %s3, %s1895
      $region44: #{blur_detection_forward.5} parent=39 // pred_fallthru
        _
    $region40: #{blur_detection_forward.5} parent=5 // pred_fallthru
      _
  $region6: #{blur_detection_forward.5} parent=0 // loop_footer
    %s13 = sadd.s32 1, %s9
  $region7: #{blur_detection_forward.5} parent=0 // loop_footer_branch
    %8 = sbr.rel target = $region3
  $region8: #{blur_detection_forward.5} parent=0 // loop_exit
    _

// kernel: blur_detection_forward.7
$region0: #{blur_detection_forward.7}
  #allocation0 [shape = 'u32[]', space=smem, size = 0x4, offset = 0x4, fixed_abs, tag = 'smem constant byte address 0x4 - core index']
  #allocation1 [shape = 'u32[72,128]{1,0:T(1,128)}', space=vmem, size = 0x9000, scoped, tag = 'internal scratch']
  #allocation2 [shape = 'f32[1,1]{1,0:T(1,128)S(1)}', space=vmem, size = 0x200, scoped, tag = 'scoped memory for blur_detection_forward.7']
  %s0 = inlined_call_operand.vmem [shape: bf16[2,768], index: 0, kind: input, shape index: {}]
  %s1 = inlined_call_operand.vmem [shape: bf16[1,768], index: 1, kind: input, shape index: {}]
  %s2 = inlined_call_operand.<no memory space> [shape: f32[1,1], index: 2, kind: input, shape index: {}]
  %s3 = inlined_call_operand.vmem [shape: f32[2,1], index: 3, kind: output, shape index: {}]
  %s4 = sld [smem:[#allocation0]]
  $region22: #{blur_detection_forward.7} parent=0
    _
  %s6 = ssub.s32 1, %s4
  %s7 = scalar_select 0, %s6, %s4
  %v8 = vstv %s2
  %9 = vst [vmem:[#allocation2] sm:$0x1] %v8
  // Predicated region
  $region2: #{blur_detection_forward.7} parent=0 // pred_check
    _
  $region3: #{blur_detection_forward.7} parent=0 // pred_check_branch
    %11 = sbr.rel (0) target = $region5
  $region4: #{blur_detection_forward.7} parent=0 // pred_region
    _
  $region5: #{blur_detection_forward.7} parent=0 // pred_fallthru
    _
  // Predicated region
  $region6: #{blur_detection_forward.7} parent=0 // pred_check
    _
  $region7: #{blur_detection_forward.7} parent=0 // pred_check_branch
    %13 = sbr.rel (0) target = $region9
  $region8: #{blur_detection_forward.7} parent=0 // pred_region
    _
  $region9: #{blur_detection_forward.7} parent=0 // pred_fallthru
    _
  // Predicated region
  $region10: #{blur_detection_forward.7} parent=0 // pred_check
    _
  $region11: #{blur_detection_forward.7} parent=0 // pred_check_branch
    %15 = sbr.rel (0) target = $region13
  $region12: #{blur_detection_forward.7} parent=0 // pred_region
    _
  $region13: #{blur_detection_forward.7} parent=0 // pred_fallthru
    _
  %v16 = vld [vmem:[%s0] sm:$0x3f]
  %v17 = vunpack.c.l.bf16 %v16
  %v18 = vunpack.c.h.bf16 %v16
  %v19 = vld [vmem:[%s1] sm:$0x3f]
  %v20 = vunpack.c.l.bf16 %v19
  %v21 = vunpack.c.h.bf16 %v19
  %v24 = vperm.slane %v20, 0
  %v25 = vperm.slane %v20, 2
  %v26 = vperm.slane %v20, 4
  %v27 = vperm.slane %v20, 6
  %v28 = vperm.slane %v21, 0
  %v29 = vperm.slane %v21, 2
  %v36 = vperm.slane %v24, 0
  %v37 = vperm.slane %v25, 0
  %v38 = vperm.slane %v26, 0
  %v39 = vperm.slane %v27, 0
  %v40 = vperm.slane %v28, 0
  %v41 = vperm.slane %v29, 0
  %v48 = vrot.slane %v37, 6
  %v49 = vrot.slane %v38, 4
  %v50 = vrot.slane %v39, 2
  %v51 = vrot.slane %v41, 6
  %vm52 = vcmask 1041408
  %v53 = vsel %vm52, %v36, %v48
  %vm54 = vcmask 1045508
  %v55 = vsel %vm54, %v49, %v50
  %vm56 = vcmask 1043456
  %v57 = vsel %vm56, %v53, %v55
  %v58 = vsel %vm52, %v40, %v51
  %v61 = vmul.f32 %v17, %v57
  %v62 = vmul.f32 %v18, %v58
  %65 = vst [vmem:[#allocation1] ss:$4 sm:$0xff] %v61
  %s66 = scalar_lea.vmem [#allocation1], 32
  %67 = vst [vmem:[%s66] ss:$4 sm:$0xff] %v62
  %v68 = vld.sshfl [vmem:[#allocation1] sm:$0xff pattern:$0x73625140]
  %v69 = vld.sshfl [vmem:[#allocation1 + $0x8] sm:$0xff pattern:$0x73625140]
  %v70 = vld.sshfl [vmem:[#allocation1 + $0x10] sm:$0xff pattern:$0x73625140]
  %v71 = vld.sshfl [vmem:[#allocation1 + $0x18] sm:$0xff pattern:$0x73625140]
  %v72 = vld.sshfl [vmem:[#allocation1 + $0x20] sm:$0xff pattern:$0x73625140]
  %v73 = vld.sshfl [vmem:[#allocation1 + $0x28] sm:$0xff pattern:$0x73625140]
  %v80 = vsel %vm52, %v68, 0.0
  %v81 = vsel %vm52, %v69, 0.0
  %v82 = vadd.f32 %v80, %v81
  %v83 = vsel %vm52, %v70, 0.0
  %v84 = vadd.f32 %v82, %v83
  %v85 = vsel %vm52, %v71, 0.0
  %v86 = vadd.f32 %v84, %v85
  %v87 = vsel %vm52, %v72, 0.0
  %v88 = vadd.f32 %v86, %v87
  %v89 = vsel %vm52, %v73, 0.0
  %v90 = vadd.f32 %v88, %v89
  %91 = vadd.xlane.f32.xlu0 %v90
  %v92 = vpop.xlane.xlu0 %91
  %v93 = vld [vmem:[#allocation2] sm:$0x1]
  %v95 = vperm.slane %v93, 0
  %v97 = vadd.f32 %v92, %v95
  %vm98 = vcmp.ge.f32.partialorder %v97, 0.0
  %v99 = vsub.f32 0.0, %v97
  %v100 = vsel %vm98, %v99, %v97
  %v101 = vmul.f32 %v100, 1.442695
  %v102 = vpow.pop %v101
  %v103 = vadd.f32 %v102, 1.0
  %v104 = vrcp.pop %v103
  %v105 = vmul.f32 %v103, %v104
  %v106 = vsub.f32 1.0, %v105
  %v107 = vmul.f32 %v104, %v106
  %v108 = vadd.f32 %v104, %v107
  %vm109 = vweird.f32 %v103
  %vm110 = vweird.f32 %v104
  %vm111 = vmor %vm109, %vm110
  %v112 = vsel %vm111, %v104, %v108
  %v113 = vand.u32 2147483647, %v103
  %vm114 = vcmp.eq.f32.partialorder %v113, 8.507059e+37
  %v115 = vand.u32 %v103, 2147483648
  %v116 = vor.u32 1.1754944e-38, %v115
  %v117 = vsel %vm114, %v116, %v112
  %v118 = vmul.f32 1.0, %v117
  %v119 = vmul.f32 %v102, %v117
  %v120 = vsel %vm98, %v118, %v119
  %vm121 = vcmask 1024
  %122 = vst.msk [vmem:[%s3] sm:$0x3] %vm121, %v120
  // Predicated region
  $region14: #{blur_detection_forward.7} parent=0 // pred_check
    _
  $region15: #{blur_detection_forward.7} parent=0 // pred_check_branch
    %124 = sbr.rel (0) target = $region17
  $region16: #{blur_detection_forward.7} parent=0 // pred_region
    _
  $region17: #{blur_detection_forward.7} parent=0 // pred_fallthru
    _
  // Predicated region
  $region18: #{blur_detection_forward.7} parent=0 // pred_check
    _
  $region19: #{blur_detection_forward.7} parent=0 // pred_check_branch
    %126 = sbr.rel (0) target = $region21
  $region20: #{blur_detection_forward.7} parent=0 // pred_region
    _
  $region21: #{blur_detection_forward.7} parent=0 // pred_fallthru
    _

// kernel: blur_detection_forward.6
$region0: #{blur_detection_forward.6}
  #allocation0 [shape = 'u32[]', space=smem, size = 0x4, offset = 0x4, fixed_abs, tag = 'smem constant byte address 0x4 - core index']
  #allocation1 [shape = 'u32[72,128]{1,0:T(1,128)}', space=vmem, size = 0x9000, scoped, tag = 'internal scratch']
  #allocation2 [shape = 'bf16[576,6]{1,0:T(8,128)(2,1)}', space=vmem, size = 0x24000, scoped, tag = 'scratch operand']
  %s0 = inlined_call_operand.vmem [shape: bf16[2,4,64,128], index: 0, kind: input, shape index: {}]
  %s1 = inlined_call_operand.vmem [shape: bf16[128,576], index: 1, kind: input, shape index: {}]
  %s2 = inlined_call_operand.vmem [shape: f32[128,1], index: 2, kind: input, shape index: {}]
  %s3 = inlined_call_operand.vmem [shape: bf16[2,128,6], index: 3, kind: output, shape index: {}]
  %s4 = sld [smem:[#allocation0]]
  $region45: #{blur_detection_forward.6} parent=0
    _
  %s6 = ssub.s32 1, %s4
  %s7 = scalar_select 0, %s6, %s4
  loop: start=0, step=1, limit=6
  $region2: #{blur_detection_forward.6} parent=0 // loop_pre_header
    _
  $region3: #{blur_detection_forward.6} parent=0 // loop_header
    %s9 = sphi 0, %s13
    %p10 = scmp.ge.s32.totalorder %s9, 6
    %s16 = sphi 0, %s28
    %s17 = sphi 0, %s24
    %s18 = sphi 0, %s16
    %s19 = sphi 0, %s17
    %s20 = sphi 0, %s18
    %s21 = sphi 0, %s19
    %s31 = sphi 0, %s33
    %s34 = sphi 0, %s31
    %s35 = sphi 0, %s34
    %s51 = sphi 0, %s35
    %s57 = sphi 0, %s59
    %s60 = sphi 0, %s57
    %s61 = sphi 0, %s60
    %s77 = sphi 0, %s61
    %s83 = sphi 0, %s85
    %s86 = sphi 0, %s83
    %s87 = sphi 0, %s86
    %s103 = sphi 0, %s87
    %s111 = sphi 0, %s113
    %s114 = sphi 0, %s111
    %s115 = sphi 0, %s114
    %s131 = sphi 0, %s115
  $region4: #{blur_detection_forward.6} parent=0 // loop_header_branch
    %12 = sbr.rel (%p10) target = $region8
  $region5: #{blur_detection_forward.6} parent=0 // loop_body
    %s14 = ssub.s32 %s9, 1
    %s15 = ssub.s32 %s9, 2
    %s22 = sadd.s32 1, %s17
    %p23 = scmp.ge.s32.totalorder %s22, 2
    %s24 = scalar_select %p23, 0, %s22
    %s25 = sadd.s32 1, %s16
    %s26 = scalar_select %p23, %s25, %s16
    %p27 = scmp.ge.s32.totalorder %s26, 2
    %s28 = scalar_select %p27, 0, %s26
    %s29 = ssub.s32 %s16, %s28
    %p30 = scmp.eq.s32.totalorder %s29, 0
    %s32 = sadd.s32 %s31, 1
    %s33 = scalar_select %p30, %s31, %s32
    %p36 = pneg %p30
    %p37 = scmp.eq.s32.totalorder %s9, 3
    %p38 = por %p36, %p37
    %p39 = scmp.ne.s32.totalorder %s31, %s34
    %p40 = scmp.eq.s32.totalorder %s9, 0
    %p41 = por %p39, %p40
    %p42 = scmp.ne.s32.totalorder %s31, %s34
    %p43 = scmp.eq.s32.totalorder %s14, 3
    %p44 = por %p42, %p43
    %p45 = scmp.ne.s32.totalorder %s34, %s35
    %p46 = scmp.eq.s32.totalorder %s14, 0
    %p47 = por %p45, %p46
    %p48 = scmp.ne.s32.totalorder %s34, %s35
    %p49 = scmp.eq.s32.totalorder %s15, 3
    %p50 = por %p48, %p49
    %p52 = scmp.ne.s32.totalorder %s35, %s51
    %p53 = scmp.eq.s32.totalorder %s15, 0
    %p54 = por %p52, %p53
    %s55 = ssub.s32 %s17, %s24
    %p56 = scmp.eq.s32.totalorder %s55, 0
    %s58 = sadd.s32 %s57, 1
    %s59 = scalar_select %p56, %s57, %s58
    %p62 = pneg %p56
    %p63 = scmp.eq.s32.totalorder %s9, 3
    %p64 = por %p62, %p63
    %p65 = scmp.ne.s32.totalorder %s57, %s60
    %p66 = scmp.eq.s32.totalorder %s9, 0
    %p67 = por %p65, %p66
    %p68 = scmp.ne.s32.totalorder %s57, %s60
    %p69 = scmp.eq.s32.totalorder %s14, 3
    %p70 = por %p68, %p69
    %p71 = scmp.ne.s32.totalorder %s60, %s61
    %p72 = scmp.eq.s32.totalorder %s14, 0
    %p73 = por %p71, %p72
    %p74 = scmp.ne.s32.totalorder %s60, %s61
    %p75 = scmp.eq.s32.totalorder %s15, 3
    %p76 = por %p74, %p75
    %p78 = scmp.ne.s32.totalorder %s61, %s77
    %p79 = scmp.eq.s32.totalorder %s15, 0
    %p80 = por %p78, %p79
    %s81 = ssub.s32 %s17, %s24
    %p82 = scmp.eq.s32.totalorder %s81, 0
    %s84 = sadd.s32 %s83, 1
    %s85 = scalar_select %p82, %s83, %s84
    %p88 = pneg %p82
    %p89 = scmp.eq.s32.totalorder %s9, 3
    %p90 = por %p88, %p89
    %p91 = scmp.ne.s32.totalorder %s83, %s86
    %p92 = scmp.eq.s32.totalorder %s9, 0
    %p93 = por %p91, %p92
    %p94 = scmp.ne.s32.totalorder %s83, %s86
    %p95 = scmp.eq.s32.totalorder %s14, 3
    %p96 = por %p94, %p95
    %p97 = scmp.ne.s32.totalorder %s86, %s87
    %p98 = scmp.eq.s32.totalorder %s14, 0
    %p99 = por %p97, %p98
    %p100 = scmp.ne.s32.totalorder %s86, %s87
    %p101 = scmp.eq.s32.totalorder %s15, 3
    %p102 = por %p100, %p101
    %p104 = scmp.ne.s32.totalorder %s87, %s103
    %p105 = scmp.eq.s32.totalorder %s15, 0
    %p106 = por %p104, %p105
    %s107 = ssub.s32 %s16, %s28
    %s108 = ssub.s32 %s17, %s24
    %s109 = sor.u32 %s107, %s108
    %p110 = scmp.eq.s32.totalorder %s109, 0
    %s112 = sadd.s32 %s111, 1
    %s113 = scalar_select %p110, %s111, %s112
    %p116 = pneg %p110
    %p117 = scmp.eq.s32.totalorder %s9, 3
    %p118 = por %p116, %p117
    %p119 = scmp.ne.s32.totalorder %s111, %s114
    %p120 = scmp.eq.s32.totalorder %s9, 0
    %p121 = por %p119, %p120
    %p122 = scmp.ne.s32.totalorder %s111, %s114
    %p123 = scmp.eq.s32.totalorder %s14, 3
    %p124 = por %p122, %p123
    %p125 = scmp.ne.s32.totalorder %s114, %s115
    %p126 = scmp.eq.s32.totalorder %s14, 0
    %p127 = por %p125, %p126
    %p128 = scmp.ne.s32.totalorder %s114, %s115
    %p129 = scmp.eq.s32.totalorder %s15, 3
    %p130 = por %p128, %p129
    %p132 = scmp.ne.s32.totalorder %s115, %s131
    %p133 = scmp.eq.s32.totalorder %s15, 0
    %p134 = por %p132, %p133
    %p135 = scmp.le.s32.totalorder 1, %s9
    %p136 = scmp.lt.s32.totalorder %s9, 5
    %p137 = pnand %p135, %p136
    %p138 = pneg %p137
    // Predicated region
    $region9: #{blur_detection_forward.6} parent=5 // pred_check
      _
    $region10: #{blur_detection_forward.6} parent=5 // pred_check_branch
      %140 = sbr.rel (%p137) target = $region12
    $region11: #{blur_detection_forward.6} parent=5 // pred_region
      %s141 = ssub.s32 %s9, 1
    $region12: #{blur_detection_forward.6} parent=5 // pred_fallthru
      _
    %p142 = scmp.lt.s32.totalorder %s9, 4
    // Predicated region
    $region13: #{blur_detection_forward.6} parent=5 // pred_check
      %p143 = pneg %p142
    $region14: #{blur_detection_forward.6} parent=5 // pred_check_branch
      %145 = sbr.rel (%p143) target = $region16
    $region15: #{blur_detection_forward.6} parent=5 // pred_region
      // Predicated region
      $region17: #{blur_detection_forward.6} parent=15 // pred_check
        %p146 = pneg %p41
      $region18: #{blur_detection_forward.6} parent=15 // pred_check_branch
        %148 = sbr.rel (%p146) target = $region20
      $region19: #{blur_detection_forward.6} parent=15 // pred_region
        %p149 = scmp.lt.s32.totalorder %s16, 1
        %s150 = scalar_select %p149, %s16, 1
        %s151 = smul.addr %s150, 32
        %s152 = smul.addr %s151, 4
        %s153 = scalar_lea.vmem %s0, %s152
      $region20: #{blur_detection_forward.6} parent=15 // pred_fallthru
        _
      // Predicated region
      $region21: #{blur_detection_forward.6} parent=15 // pred_check
        %p154 = pneg %p67
      $region22: #{blur_detection_forward.6} parent=15 // pred_check_branch
        %156 = sbr.rel (%p154) target = $region24
      $region23: #{blur_detection_forward.6} parent=15 // pred_region
        %s157 = smul.u32 8, %s17
        %p158 = scmp.lt.s32.totalorder %s157, 15
        %s159 = scalar_select %p158, %s157, 15
        %s160 = smul.addr %s159, 5
        %s161 = smul.addr %s160, 4
        %s162 = scalar_lea.vmem %s1, %s161
        %s163 = smul.u32 8, %s17
      $region24: #{blur_detection_forward.6} parent=15 // pred_fallthru
        _
      // Predicated region
      $region25: #{blur_detection_forward.6} parent=15 // pred_check
        %p164 = pneg %p93
      $region26: #{blur_detection_forward.6} parent=15 // pred_check_branch
        %166 = sbr.rel (%p164) target = $region28
      $region27: #{blur_detection_forward.6} parent=15 // pred_region
        %s167 = smul.u32 8, %s17
        %p168 = scmp.lt.s32.totalorder %s167, 15
        %s169 = scalar_select %p168, %s167, 15
        %s170 = smul.addr %s169, 8
        %s171 = scalar_lea.vmem %s2, %s170
        %s172 = smul.u32 8, %s17
      $region28: #{blur_detection_forward.6} parent=15 // pred_fallthru
        _
    $region16: #{blur_detection_forward.6} parent=5 // pred_fallthru
      _
    %p173 = scmp.le.s32.totalorder 1, %s9
    %p174 = scmp.lt.s32.totalorder %s9, 5
    %p175 = pnand %p173, %p174
    %p176 = pneg %p175
    // Predicated region
    $region29: #{blur_detection_forward.6} parent=5 // pred_check
      _
    $region30: #{blur_detection_forward.6} parent=5 // pred_check_branch
      %178 = sbr.rel (%p175) target = $region32
    $region31: #{blur_detection_forward.6} parent=5 // pred_region
      %s179 = ssub.s32 %s9, 1
      %p180 = scmp.lt.s32.totalorder %s18, 1
      %s181 = scalar_select %p180, %s18, 1
      %s182 = smul.addr %s181, 32
      %s183 = smul.addr %s182, 4
      %s184 = scalar_lea.vmem %s0, %s183
      %p185 = pneg %p47
      %p186 = pneg %p44
      %s187 = smul.u32 8, %s19
      %p188 = scmp.lt.s32.totalorder %s187, 15
      %s189 = scalar_select %p188, %s187, 15
      %s190 = smul.addr %s189, 5
      %s191 = smul.addr %s190, 4
      %s192 = scalar_lea.vmem %s1, %s191
      %p193 = pneg %p73
      %p194 = pneg %p70
      %s195 = smul.u32 8, %s19
      %p196 = scmp.lt.s32.totalorder %s195, 15
      %s197 = scalar_select %p196, %s195, 15
      %s198 = smul.addr %s197, 8
      %s199 = scalar_lea.vmem %s2, %s198
      %p200 = pneg %p99
      %p201 = pneg %p96
      %p202 = pneg %p127
      %p203 = pneg %p124
      %s204 = smul.u32 8, %s19
      %p205 = scmp.lt.s32.totalorder %s18, 1
      %s206 = scalar_select %p205, %s18, 1
      %p207 = scmp.lt.s32.totalorder %s204, 15
      %s208 = scalar_select %p207, %s204, 15
      %s209 = smul.addr %s206, 16
      %s210 = sadd.s32 %s208, %s209
      %s211 = smul.addr %s210, 4
      %s212 = scalar_lea.vmem %s3, %s211
      %p213 = scmp.lt.s32.totalorder %s18, 1
      %s214 = scalar_select %p213, %s18, 1
      %s215 = smul.addr %s214, 32
      %s216 = smul.addr %s215, 4
      %s217 = scalar_lea.vmem %s0, %s216
      %s218 = smul.u32 8, %s19
      %p219 = scmp.lt.s32.totalorder %s218, 15
      %s220 = scalar_select %p219, %s218, 15
      %s221 = smul.addr %s220, 5
      %s222 = smul.addr %s221, 4
      %s223 = scalar_lea.vmem %s1, %s222
      %s224 = smul.u32 8, %s19
      %s225 = smul.u32 8, %s19
      %p226 = scmp.lt.s32.totalorder %s225, 15
      %s227 = scalar_select %p226, %s225, 15
      %s228 = smul.addr %s227, 8
      %s229 = scalar_lea.vmem %s2, %s228
      %s230 = smul.u32 8, %s19
      %s231 = smul.u32 8, %s19
      %p232 = scmp.lt.s32.totalorder %s18, 1
      %s233 = scalar_select %p232, %s18, 1
      %p234 = scmp.lt.s32.totalorder %s231, 15
      %s235 = scalar_select %p234, %s231, 15
      %s236 = smul.addr %s233, 16
      %s237 = sadd.s32 %s235, %s236
      %s238 = smul.addr %s237, 4
      %s239 = scalar_lea.vmem %s3, %s238
      %s240 = smul.u32 8, %s19
      %v242 = vld [vmem:[%s223] sm:$0xff]
      %v243 = vld [vmem:[%s223 + $0x8] sm:$0xff]
      %v244 = vld [vmem:[%s223 + $0x10] sm:$0xf]
      %v245 = vld [vmem:[%s223 + $0x14] sm:$0xff]
      %v246 = vld [vmem:[%s223 + $0x1c] sm:$0xff]
      %v247 = vld [vmem:[%s223 + $0x24] sm:$0xf]
      %v248 = vld [vmem:[%s223 + $0x28] sm:$0xff]
      %v249 = vld [vmem:[%s223 + $0x30] sm:$0xff]
      %v250 = vld [vmem:[%s223 + $0x38] sm:$0xf]
      %v251 = vld [vmem:[%s223 + $0x3c] sm:$0xff]
      %v252 = vld [vmem:[%s223 + $0x44] sm:$0xff]
      %v253 = vld [vmem:[%s223 + $0x4c] sm:$0xf]
      %v254 = vld [vmem:[%s223 + $0x50] sm:$0xff]
      %v255 = vld [vmem:[%s223 + $0x58] sm:$0xff]
      %v256 = vld [vmem:[%s223 + $0x60] sm:$0xf]
      %v257 = vld [vmem:[%s223 + $0x64] sm:$0xff]
      %v258 = vld [vmem:[%s223 + $0x6c] sm:$0xff]
      %v259 = vld [vmem:[%s223 + $0x74] sm:$0xf]
      %v260 = vld [vmem:[%s223 + $0x78] sm:$0xff]
      %v261 = vld [vmem:[%s223 + $0x80] sm:$0xff]
      %v262 = vld [vmem:[%s223 + $0x88] sm:$0xf]
      %v263 = vld [vmem:[%s223 + $0x8c] sm:$0xff]
      %v264 = vld [vmem:[%s223 + $0x94] sm:$0xff]
      %v265 = vld [vmem:[%s223 + $0x9c] sm:$0xf]
      %v266 = vld [vmem:[%s217] sm:$0xf]
      %v267 = vld [vmem:[%s217 + $0x4] sm:$0xf]
      %v268 = vld [vmem:[%s217 + $0x8] sm:$0xf]
      %v269 = vld [vmem:[%s217 + $0xc] sm:$0xf]
      %v270 = vld [vmem:[%s217 + $0x10] sm:$0xf]
      %v271 = vld [vmem:[%s217 + $0x14] sm:$0xf]
      %v272 = vld [vmem:[%s217 + $0x18] sm:$0xf]
      %v273 = vld [vmem:[%s217 + $0x1c] sm:$0xf]
      %vm274 = vcmask 44032
      %275 = vst.msk [vmem:[#allocation2] sm:$0xf] %vm274, %v266
      %276 = vst.msk [vmem:[#allocation2 + $0x4] sm:$0xf] %vm274, %v267
      %277 = vst.msk [vmem:[#allocation2 + $0x8] sm:$0xf] %vm274, %v268
      %278 = vst.msk [vmem:[#allocation2 + $0xc] sm:$0xf] %vm274, %v269
      %279 = vst.msk [vmem:[#allocation2 + $0x10] sm:$0xf] %vm274, %v270
      %280 = vst.msk [vmem:[#allocation2 + $0x14] sm:$0xf] %vm274, %v271
      %281 = vst.msk [vmem:[#allocation2 + $0x18] sm:$0xf] %vm274, %v272
      %282 = vst.msk [vmem:[#allocation2 + $0x1c] sm:$0xf] %vm274, %v273
      %s283 = scalar_lea.vmem %s217, 32
      %v284 = vld [vmem:[%s283] sm:$0xf]
      %v285 = vld [vmem:[%s283 + $0x4] sm:$0xf]
      %v286 = vld [vmem:[%s283 + $0x8] sm:$0xf]
      %v287 = vld [vmem:[%s283 + $0xc] sm:$0xf]
      %v288 = vld [vmem:[%s283 + $0x10] sm:$0xf]
      %v289 = vld [vmem:[%s283 + $0x14] sm:$0xf]
      %v290 = vld [vmem:[%s283 + $0x18] sm:$0xf]
      %v291 = vld [vmem:[%s283 + $0x1c] sm:$0xf]
      %292 = vst.msk [vmem:[#allocation2 + $0x20] sm:$0xf] %vm274, %v284
      %293 = vst.msk [vmem:[#allocation2 + $0x24] sm:$0xf] %vm274, %v285
      %294 = vst.msk [vmem:[#allocation2 + $0x28] sm:$0xf] %vm274, %v286
      %295 = vst.msk [vmem:[#allocation2 + $0x2c] sm:$0xf] %vm274, %v287
      %296 = vst.msk [vmem:[#allocation2 + $0x30] sm:$0xf] %vm274, %v288
      %297 = vst.msk [vmem:[#allocation2 + $0x34] sm:$0xf] %vm274, %v289
      %298 = vst.msk [vmem:[#allocation2 + $0x38] sm:$0xf] %vm274, %v290
      %299 = vst.msk [vmem:[#allocation2 + $0x3c] sm:$0xf] %vm274, %v291
      %v300 = vld [vmem:[%s217] sm:$0xf]
      %v301 = vld [vmem:[%s217 + $0x4] sm:$0xf]
      %v302 = vld [vmem:[%s217 + $0x8] sm:$0xf]
      %v303 = vld [vmem:[%s217 + $0xc] sm:$0xf]
      %v304 = vld [vmem:[%s217 + $0x10] sm:$0xf]
      %v305 = vld [vmem:[%s217 + $0x14] sm:$0xf]
      %v306 = vld [vmem:[%s217 + $0x18] sm:$0xf]
      %v307 = vld [vmem:[%s217 + $0x1c] sm:$0xf]
      %316 = vrot.lane.b32.xlu0 %v300, 127
      %v317 = vpop.permute.xlu0 %316
      %318 = vrot.lane.b32.xlu0 %v301, 127
      %v319 = vpop.permute.xlu0 %318
      %320 = vrot.lane.b32.xlu0 %v302, 127
      %v321 = vpop.permute.xlu0 %320
      %322 = vrot.lane.b32.xlu0 %v303, 127
      %v323 = vpop.permute.xlu0 %322
      %324 = vrot.lane.b32.xlu0 %v304, 127
      %v325 = vpop.permute.xlu0 %324
      %326 = vrot.lane.b32.xlu0 %v305, 127
      %v327 = vpop.permute.xlu0 %326
      %328 = vrot.lane.b32.xlu0 %v306, 127
      %v329 = vpop.permute.xlu0 %328
      %330 = vrot.lane.b32.xlu0 %v307, 127
      %v331 = vpop.permute.xlu0 %330
      %340 = vst.msk [vmem:[#allocation2 + $0x40] sm:$0xf] %vm274, %v317
      %341 = vst.msk [vmem:[#allocation2 + $0x44] sm:$0xf] %vm274, %v319
      %342 = vst.msk [vmem:[#allocation2 + $0x48] sm:$0xf] %vm274, %v321
      %343 = vst.msk [vmem:[#allocation2 + $0x4c] sm:$0xf] %vm274, %v323
      %344 = vst.msk [vmem:[#allocation2 + $0x50] sm:$0xf] %vm274, %v325
      %345 = vst.msk [vmem:[#allocation2 + $0x54] sm:$0xf] %vm274, %v327
      %346 = vst.msk [vmem:[#allocation2 + $0x58] sm:$0xf] %vm274, %v329
      %347 = vst.msk [vmem:[#allocation2 + $0x5c] sm:$0xf] %vm274, %v331
      %s348 = scalar_lea.vmem %s217, 64
      %v349 = vld [vmem:[%s348] sm:$0xf]
      %v350 = vld [vmem:[%s348 + $0x4] sm:$0xf]
      %v351 = vld [vmem:[%s348 + $0x8] sm:$0xf]
      %v352 = vld [vmem:[%s348 + $0xc] sm:$0xf]
      %v353 = vld [vmem:[%s348 + $0x10] sm:$0xf]
      %v354 = vld [vmem:[%s348 + $0x14] sm:$0xf]
      %v355 = vld [vmem:[%s348 + $0x18] sm:$0xf]
      %v356 = vld [vmem:[%s348 + $0x1c] sm:$0xf]
      %357 = vst.msk [vmem:[#allocation2 + $0x60] sm:$0xf] %vm274, %v349
      %358 = vst.msk [vmem:[#allocation2 + $0x64] sm:$0xf] %vm274, %v350
      %359 = vst.msk [vmem:[#allocation2 + $0x68] sm:$0xf] %vm274, %v351
      %360 = vst.msk [vmem:[#allocation2 + $0x6c] sm:$0xf] %vm274, %v352
      %361 = vst.msk [vmem:[#allocation2 + $0x70] sm:$0xf] %vm274, %v353
      %362 = vst.msk [vmem:[#allocation2 + $0x74] sm:$0xf] %vm274, %v354
      %363 = vst.msk [vmem:[#allocation2 + $0x78] sm:$0xf] %vm274, %v355
      %364 = vst.msk [vmem:[#allocation2 + $0x7c] sm:$0xf] %vm274, %v356
      %s365 = scalar_lea.vmem %s217, 96
      %v366 = vld [vmem:[%s365] sm:$0xf]
      %v367 = vld [vmem:[%s365 + $0x4] sm:$0xf]
      %v368 = vld [vmem:[%s365 + $0x8] sm:$0xf]
      %v369 = vld [vmem:[%s365 + $0xc] sm:$0xf]
      %v370 = vld [vmem:[%s365 + $0x10] sm:$0xf]
      %v371 = vld [vmem:[%s365 + $0x14] sm:$0xf]
      %v372 = vld [vmem:[%s365 + $0x18] sm:$0xf]
      %v373 = vld [vmem:[%s365 + $0x1c] sm:$0xf]
      %374 = vst.msk [vmem:[#allocation2 + $0x80] sm:$0xf] %vm274, %v366
      %375 = vst.msk [vmem:[#allocation2 + $0x84] sm:$0xf] %vm274, %v367
      %376 = vst.msk [vmem:[#allocation2 + $0x88] sm:$0xf] %vm274, %v368
      %377 = vst.msk [vmem:[#allocation2 + $0x8c] sm:$0xf] %vm274, %v369
      %378 = vst.msk [vmem:[#allocation2 + $0x90] sm:$0xf] %vm274, %v370
      %379 = vst.msk [vmem:[#allocation2 + $0x94] sm:$0xf] %vm274, %v371
      %380 = vst.msk [vmem:[#allocation2 + $0x98] sm:$0xf] %vm274, %v372
      %381 = vst.msk [vmem:[#allocation2 + $0x9c] sm:$0xf] %vm274, %v373
      %v382 = vld [vmem:[%s348] sm:$0xf]
      %v383 = vld [vmem:[%s348 + $0x4] sm:$0xf]
      %v384 = vld [vmem:[%s348 + $0x8] sm:$0xf]
      %v385 = vld [vmem:[%s348 + $0xc] sm:$0xf]
      %v386 = vld [vmem:[%s348 + $0x10] sm:$0xf]
      %v387 = vld [vmem:[%s348 + $0x14] sm:$0xf]
      %v388 = vld [vmem:[%s348 + $0x18] sm:$0xf]
      %v389 = vld [vmem:[%s348 + $0x1c] sm:$0xf]
      %398 = vrot.lane.b32.xlu0 %v382, 127
      %v399 = vpop.permute.xlu0 %398
      %400 = vrot.lane.b32.xlu0 %v383, 127
      %v401 = vpop.permute.xlu0 %400
      %402 = vrot.lane.b32.xlu0 %v384, 127
      %v403 = vpop.permute.xlu0 %402
      %404 = vrot.lane.b32.xlu0 %v385, 127
      %v405 = vpop.permute.xlu0 %404
      %406 = vrot.lane.b32.xlu0 %v386, 127
      %v407 = vpop.permute.xlu0 %406
      %408 = vrot.lane.b32.xlu0 %v387, 127
      %v409 = vpop.permute.xlu0 %408
      %410 = vrot.lane.b32.xlu0 %v388, 127
      %v411 = vpop.permute.xlu0 %410
      %412 = vrot.lane.b32.xlu0 %v389, 127
      %v413 = vpop.permute.xlu0 %412
      %422 = vst.msk [vmem:[#allocation2 + $0xa0] sm:$0xf] %vm274, %v399
      %423 = vst.msk [vmem:[#allocation2 + $0xa4] sm:$0xf] %vm274, %v401
      %424 = vst.msk [vmem:[#allocation2 + $0xa8] sm:$0xf] %vm274, %v403
      %425 = vst.msk [vmem:[#allocation2 + $0xac] sm:$0xf] %vm274, %v405
      %426 = vst.msk [vmem:[#allocation2 + $0xb0] sm:$0xf] %vm274, %v407
      %427 = vst.msk [vmem:[#allocation2 + $0xb4] sm:$0xf] %vm274, %v409
      %428 = vst.msk [vmem:[#allocation2 + $0xb8] sm:$0xf] %vm274, %v411
      %429 = vst.msk [vmem:[#allocation2 + $0xbc] sm:$0xf] %vm274, %v413
      %v430 = vld [vmem:[%s217] sm:$0xf]
      %v431 = vld [vmem:[%s217 + $0x4] sm:$0xf]
      %v432 = vld [vmem:[%s217 + $0x8] sm:$0xf]
      %v433 = vld [vmem:[%s217 + $0xc] sm:$0xf]
      %v434 = vld [vmem:[%s217 + $0x10] sm:$0xf]
      %v435 = vld [vmem:[%s217 + $0x14] sm:$0xf]
      %v436 = vld [vmem:[%s217 + $0x18] sm:$0xf]
      %v437 = vld [vmem:[%s217 + $0x1c] sm:$0xf]
      %446 = vrot.lane.b32.xlu0 %v430, 125
      %v447 = vpop.permute.xlu0 %446
      %448 = vrot.lane.b32.xlu0 %v431, 125
      %v449 = vpop.permute.xlu0 %448
      %450 = vrot.lane.b32.xlu0 %v432, 125
      %v451 = vpop.permute.xlu0 %450
      %452 = vrot.lane.b32.xlu0 %v433, 125
      %v453 = vpop.permute.xlu0 %452
      %454 = vrot.lane.b32.xlu0 %v434, 125
      %v455 = vpop.permute.xlu0 %454
      %456 = vrot.lane.b32.xlu0 %v435, 125
      %v457 = vpop.permute.xlu0 %456
      %458 = vrot.lane.b32.xlu0 %v436, 125
      %v459 = vpop.permute.xlu0 %458
      %460 = vrot.lane.b32.xlu0 %v437, 125
      %v461 = vpop.permute.xlu0 %460
      %470 = vst.msk [vmem:[#allocation2 + $0xc0] sm:$0xf] %vm274, %v447
      %471 = vst.msk [vmem:[#allocation2 + $0xc4] sm:$0xf] %vm274, %v449
      %472 = vst.msk [vmem:[#allocation2 + $0xc8] sm:$0xf] %vm274, %v451
      %473 = vst.msk [vmem:[#allocation2 + $0xcc] sm:$0xf] %vm274, %v453
      %474 = vst.msk [vmem:[#allocation2 + $0xd0] sm:$0xf] %vm274, %v455
      %475 = vst.msk [vmem:[#allocation2 + $0xd4] sm:$0xf] %vm274, %v457
      %476 = vst.msk [vmem:[#allocation2 + $0xd8] sm:$0xf] %vm274, %v459
      %477 = vst.msk [vmem:[#allocation2 + $0xdc] sm:$0xf] %vm274, %v461
      %v478 = vld [vmem:[%s283] sm:$0xf]
      %v479 = vld [vmem:[%s283 + $0x4] sm:$0xf]
      %v480 = vld [vmem:[%s283 + $0x8] sm:$0xf]
      %v481 = vld [vmem:[%s283 + $0xc] sm:$0xf]
      %v482 = vld [vmem:[%s283 + $0x10] sm:$0xf]
      %v483 = vld [vmem:[%s283 + $0x14] sm:$0xf]
      %v484 = vld [vmem:[%s283 + $0x18] sm:$0xf]
      %v485 = vld [vmem:[%s283 + $0x1c] sm:$0xf]
      %494 = vrot.lane.b32.xlu0 %v478, 125
      %v495 = vpop.permute.xlu0 %494
      %496 = vrot.lane.b32.xlu0 %v479, 125
      %v497 = vpop.permute.xlu0 %496
      %498 = vrot.lane.b32.xlu0 %v480, 125
      %v499 = vpop.permute.xlu0 %498
      %500 = vrot.lane.b32.xlu0 %v481, 125
      %v501 = vpop.permute.xlu0 %500
      %502 = vrot.lane.b32.xlu0 %v482, 125
      %v503 = vpop.permute.xlu0 %502
      %504 = vrot.lane.b32.xlu0 %v483, 125
      %v505 = vpop.permute.xlu0 %504
      %506 = vrot.lane.b32.xlu0 %v484, 125
      %v507 = vpop.permute.xlu0 %506
      %508 = vrot.lane.b32.xlu0 %v485, 125
      %v509 = vpop.permute.xlu0 %508
      %518 = vst.msk [vmem:[#allocation2 + $0xe0] sm:$0xf] %vm274, %v495
      %519 = vst.msk [vmem:[#allocation2 + $0xe4] sm:$0xf] %vm274, %v497
      %520 = vst.msk [vmem:[#allocation2 + $0xe8] sm:$0xf] %vm274, %v499
      %521 = vst.msk [vmem:[#allocation2 + $0xec] sm:$0xf] %vm274, %v501
      %522 = vst.msk [vmem:[#allocation2 + $0xf0] sm:$0xf] %vm274, %v503
      %523 = vst.msk [vmem:[#allocation2 + $0xf4] sm:$0xf] %vm274, %v505
      %524 = vst.msk [vmem:[#allocation2 + $0xf8] sm:$0xf] %vm274, %v507
      %525 = vst.msk [vmem:[#allocation2 + $0xfc] sm:$0xf] %vm274, %v509
      %v526 = vld [vmem:[%s217] sm:$0xf]
      %v527 = vld [vmem:[%s217 + $0x4] sm:$0xf]
      %v528 = vld [vmem:[%s217 + $0x8] sm:$0xf]
      %v529 = vld [vmem:[%s217 + $0xc] sm:$0xf]
      %v530 = vld [vmem:[%s217 + $0x10] sm:$0xf]
      %v531 = vld [vmem:[%s217 + $0x14] sm:$0xf]
      %v532 = vld [vmem:[%s217 + $0x18] sm:$0xf]
      %v533 = vld [vmem:[%s217 + $0x1c] sm:$0xf]
      %542 = vrot.lane.b32.xlu0 %v526, 124
      %v543 = vpop.permute.xlu0 %542
      %544 = vrot.lane.b32.xlu0 %v527, 124
      %v545 = vpop.permute.xlu0 %544
      %546 = vrot.lane.b32.xlu0 %v528, 124
      %v547 = vpop.permute.xlu0 %546
      %548 = vrot.lane.b32.xlu0 %v529, 124
      %v549 = vpop.permute.xlu0 %548
      %550 = vrot.lane.b32.xlu0 %v530, 124
      %v551 = vpop.permute.xlu0 %550
      %552 = vrot.lane.b32.xlu0 %v531, 124
      %v553 = vpop.permute.xlu0 %552
      %554 = vrot.lane.b32.xlu0 %v532, 124
      %v555 = vpop.permute.xlu0 %554
      %556 = vrot.lane.b32.xlu0 %v533, 124
      %v557 = vpop.permute.xlu0 %556
      %566 = vst.msk [vmem:[#allocation2 + $0x100] sm:$0xf] %vm274, %v543
      %567 = vst.msk [vmem:[#allocation2 + $0x104] sm:$0xf] %vm274, %v545
      %568 = vst.msk [vmem:[#allocation2 + $0x108] sm:$0xf] %vm274, %v547
      %569 = vst.msk [vmem:[#allocation2 + $0x10c] sm:$0xf] %vm274, %v549
      %570 = vst.msk [vmem:[#allocation2 + $0x110] sm:$0xf] %vm274, %v551
      %571 = vst.msk [vmem:[#allocation2 + $0x114] sm:$0xf] %vm274, %v553
      %572 = vst.msk [vmem:[#allocation2 + $0x118] sm:$0xf] %vm274, %v555
      %573 = vst.msk [vmem:[#allocation2 + $0x11c] sm:$0xf] %vm274, %v557
      %v574 = vld [vmem:[#allocation2] sm:$0xf]
      %v575 = vld [vmem:[#allocation2 + $0x4] sm:$0xf]
      %v576 = vld [vmem:[#allocation2 + $0x8] sm:$0xf]
      %v577 = vld [vmem:[#allocation2 + $0xc] sm:$0xf]
      %v578 = vld [vmem:[#allocation2 + $0x10] sm:$0xf]
      %v579 = vld [vmem:[#allocation2 + $0x14] sm:$0xf]
      %v580 = vld [vmem:[#allocation2 + $0x18] sm:$0xf]
      %v581 = vld [vmem:[#allocation2 + $0x1c] sm:$0xf]
      %v582 = vld [vmem:[#allocation2 + $0x20] sm:$0xf]
      %v583 = vld [vmem:[#allocation2 + $0x24] sm:$0xf]
      %v584 = vld [vmem:[#allocation2 + $0x28] sm:$0xf]
      %v585 = vld [vmem:[#allocation2 + $0x2c] sm:$0xf]
      %v586 = vld [vmem:[#allocation2 + $0x30] sm:$0xf]
      %v587 = vld [vmem:[#allocation2 + $0x34] sm:$0xf]
      %v588 = vld [vmem:[#allocation2 + $0x38] sm:$0xf]
      %v589 = vld [vmem:[#allocation2 + $0x3c] sm:$0xf]
      %v590 = vld [vmem:[#allocation2 + $0x40] sm:$0xf]
      %v591 = vld [vmem:[#allocation2 + $0x44] sm:$0xf]
      %v592 = vld [vmem:[#allocation2 + $0x48] sm:$0xf]
      %v593 = vld [vmem:[#allocation2 + $0x4c] sm:$0xf]
      %v594 = vld [vmem:[#allocation2 + $0x50] sm:$0xf]
      %v595 = vld [vmem:[#allocation2 + $0x54] sm:$0xf]
      %v596 = vld [vmem:[#allocation2 + $0x58] sm:$0xf]
      %v597 = vld [vmem:[#allocation2 + $0x5c] sm:$0xf]
      %v598 = vld [vmem:[#allocation2 + $0x60] sm:$0xf]
      %v599 = vld [vmem:[#allocation2 + $0x64] sm:$0xf]
      %v600 = vld [vmem:[#allocation2 + $0x68] sm:$0xf]
      %v601 = vld [vmem:[#allocation2 + $0x6c] sm:$0xf]
      %v602 = vld [vmem:[#allocation2 + $0x70] sm:$0xf]
      %v603 = vld [vmem:[#allocation2 + $0x74] sm:$0xf]
      %v604 = vld [vmem:[#allocation2 + $0x78] sm:$0xf]
      %v605 = vld [vmem:[#allocation2 + $0x7c] sm:$0xf]
      %v606 = vld [vmem:[#allocation2 + $0x80] sm:$0xf]
      %v607 = vld [vmem:[#allocation2 + $0x84] sm:$0xf]
      %v608 = vld [vmem:[#allocation2 + $0x88] sm:$0xf]
      %v609 = vld [vmem:[#allocation2 + $0x8c] sm:$0xf]
      %v610 = vld [vmem:[#allocation2 + $0x90] sm:$0xf]
      %v611 = vld [vmem:[#allocation2 + $0x94] sm:$0xf]
      %v612 = vld [vmem:[#allocation2 + $0x98] sm:$0xf]
      %v613 = vld [vmem:[#allocation2 + $0x9c] sm:$0xf]
      %v614 = vld [vmem:[#allocation2 + $0xa0] sm:$0xf]
      %v615 = vld [vmem:[#allocation2 + $0xa4] sm:$0xf]
      %v616 = vld [vmem:[#allocation2 + $0xa8] sm:$0xf]
      %v617 = vld [vmem:[#allocation2 + $0xac] sm:$0xf]
      %v618 = vld [vmem:[#allocation2 + $0xb0] sm:$0xf]
      %v619 = vld [vmem:[#allocation2 + $0xb4] sm:$0xf]
      %v620 = vld [vmem:[#allocation2 + $0xb8] sm:$0xf]
      %v621 = vld [vmem:[#allocation2 + $0xbc] sm:$0xf]
      %v622 = vld [vmem:[#allocation2 + $0xc0] sm:$0xf]
      %v623 = vld [vmem:[#allocation2 + $0xc4] sm:$0xf]
      %v624 = vld [vmem:[#allocation2 + $0xc8] sm:$0xf]
      %v625 = vld [vmem:[#allocation2 + $0xcc] sm:$0xf]
      %v626 = vld [vmem:[#allocation2 + $0xd0] sm:$0xf]
      %v627 = vld [vmem:[#allocation2 + $0xd4] sm:$0xf]
      %v628 = vld [vmem:[#allocation2 + $0xd8] sm:$0xf]
      %v629 = vld [vmem:[#allocation2 + $0xdc] sm:$0xf]
      %v630 = vld [vmem:[#allocation2 + $0xe0] sm:$0xf]
      %v631 = vld [vmem:[#allocation2 + $0xe4] sm:$0xf]
      %v632 = vld [vmem:[#allocation2 + $0xe8] sm:$0xf]
      %v633 = vld [vmem:[#allocation2 + $0xec] sm:$0xf]
      %v634 = vld [vmem:[#allocation2 + $0xf0] sm:$0xf]
      %v635 = vld [vmem:[#allocation2 + $0xf4] sm:$0xf]
      %v636 = vld [vmem:[#allocation2 + $0xf8] sm:$0xf]
      %v637 = vld [vmem:[#allocation2 + $0xfc] sm:$0xf]
      %v638 = vld [vmem:[#allocation2 + $0x100] sm:$0xf]
      %v639 = vld [vmem:[#allocation2 + $0x104] sm:$0xf]
      %v640 = vld [vmem:[#allocation2 + $0x108] sm:$0xf]
      %v641 = vld [vmem:[#allocation2 + $0x10c] sm:$0xf]
      %v642 = vld [vmem:[#allocation2 + $0x110] sm:$0xf]
      %v643 = vld [vmem:[#allocation2 + $0x114] sm:$0xf]
      %v644 = vld [vmem:[#allocation2 + $0x118] sm:$0xf]
      %v645 = vld [vmem:[#allocation2 + $0x11c] sm:$0xf]
      %v670 = vunpack.c.l.b16 %v242
      %v671 = vunpack.c.h.b16 %v242
      %v672 = vunpack.c.l.b16 %v243
      %v673 = vunpack.c.h.b16 %v243
      %v674 = vunpack.c.l.b16 %v244
      %v675 = vunpack.c.l.b16 %v245
      %v676 = vunpack.c.h.b16 %v245
      %v677 = vunpack.c.l.b16 %v246
      %v678 = vunpack.c.h.b16 %v246
      %v679 = vunpack.c.l.b16 %v247
      %v680 = vunpack.c.l.b16 %v248
      %v681 = vunpack.c.h.b16 %v248
      %v682 = vunpack.c.l.b16 %v249
      %v683 = vunpack.c.h.b16 %v249
      %v684 = vunpack.c.l.b16 %v250
      %v685 = vunpack.c.l.b16 %v251
      %v686 = vunpack.c.h.b16 %v251
      %v687 = vunpack.c.l.b16 %v252
      %v688 = vunpack.c.h.b16 %v252
      %v689 = vunpack.c.l.b16 %v253
      %v690 = vunpack.c.l.b16 %v254
      %v691 = vunpack.c.h.b16 %v254
      %v692 = vunpack.c.l.b16 %v255
      %v693 = vunpack.c.h.b16 %v255
      %v694 = vunpack.c.l.b16 %v256
      %v695 = vunpack.c.l.b16 %v257
      %v696 = vunpack.c.h.b16 %v257
      %v697 = vunpack.c.l.b16 %v258
      %v698 = vunpack.c.h.b16 %v258
      %v699 = vunpack.c.l.b16 %v259
      %v700 = vunpack.c.l.b16 %v260
      %v701 = vunpack.c.h.b16 %v260
      %v702 = vunpack.c.l.b16 %v261
      %v703 = vunpack.c.h.b16 %v261
      %v704 = vunpack.c.l.b16 %v262
      %v705 = vunpack.c.l.b16 %v263
      %v706 = vunpack.c.h.b16 %v263
      %v707 = vunpack.c.l.b16 %v264
      %v708 = vunpack.c.h.b16 %v264
      %v709 = vunpack.c.l.b16 %v265
      %v710 = vpack.c.b16 %v675, %v670
      %v711 = vpack.c.b16 %v676, %v671
      %v712 = vpack.c.b16 %v677, %v672
      %v713 = vpack.c.b16 %v678, %v673
      %v714 = vpack.c.b16 %v679, %v674
      %v715 = vpack.c.b16 %v685, %v680
      %v716 = vpack.c.b16 %v686, %v681
      %v717 = vpack.c.b16 %v687, %v682
      %v718 = vpack.c.b16 %v688, %v683
      %v719 = vpack.c.b16 %v689, %v684
      %v720 = vpack.c.b16 %v695, %v690
      %v721 = vpack.c.b16 %v696, %v691
      %v722 = vpack.c.b16 %v697, %v692
      %v723 = vpack.c.b16 %v698, %v693
      %v724 = vpack.c.b16 %v699, %v694
      %v725 = vpack.c.b16 %v705, %v700
      %v726 = vpack.c.b16 %v706, %v701
      %v727 = vpack.c.b16 %v707, %v702
      %v728 = vpack.c.b16 %v708, %v703
      %v729 = vpack.c.b16 %v709, %v704
      %v818 = vunpack.c.l.b16 %v574
      %v819 = vunpack.c.l.b16 %v575
      %v820 = vunpack.c.l.b16 %v576
      %v821 = vunpack.c.l.b16 %v577
      %v822 = vunpack.c.l.b16 %v578
      %v823 = vunpack.c.l.b16 %v579
      %v824 = vunpack.c.l.b16 %v580
      %v825 = vunpack.c.l.b16 %v581
      %v826 = vunpack.c.l.b16 %v582
      %v827 = vunpack.c.l.b16 %v583
      %v828 = vunpack.c.l.b16 %v584
      %v829 = vunpack.c.l.b16 %v585
      %v830 = vunpack.c.l.b16 %v586
      %v831 = vunpack.c.l.b16 %v587
      %v832 = vunpack.c.l.b16 %v588
      %v833 = vunpack.c.l.b16 %v589
      %v834 = vunpack.c.l.b16 %v590
      %v835 = vunpack.c.l.b16 %v591
      %v836 = vunpack.c.l.b16 %v592
      %v837 = vunpack.c.l.b16 %v593
      %v838 = vunpack.c.l.b16 %v594
      %v839 = vunpack.c.l.b16 %v595
      %v840 = vunpack.c.l.b16 %v596
      %v841 = vunpack.c.l.b16 %v597
      %v842 = vunpack.c.l.b16 %v598
      %v843 = vunpack.c.l.b16 %v599
      %v844 = vunpack.c.l.b16 %v600
      %v845 = vunpack.c.l.b16 %v601
      %v846 = vunpack.c.l.b16 %v602
      %v847 = vunpack.c.l.b16 %v603
      %v848 = vunpack.c.l.b16 %v604
      %v849 = vunpack.c.l.b16 %v605
      %v850 = vunpack.c.l.b16 %v606
      %v851 = vunpack.c.l.b16 %v607
      %v852 = vunpack.c.l.b16 %v608
      %v853 = vunpack.c.l.b16 %v609
      %v854 = vunpack.c.l.b16 %v610
      %v855 = vunpack.c.l.b16 %v611
      %v856 = vunpack.c.l.b16 %v612
      %v857 = vunpack.c.l.b16 %v613
      %v858 = vunpack.c.l.b16 %v614
      %v859 = vunpack.c.l.b16 %v615
      %v860 = vunpack.c.l.b16 %v616
      %v861 = vunpack.c.l.b16 %v617
      %v862 = vunpack.c.l.b16 %v618
      %v863 = vunpack.c.l.b16 %v619
      %v864 = vunpack.c.l.b16 %v620
      %v865 = vunpack.c.l.b16 %v621
      %v866 = vunpack.c.l.b16 %v622
      %v867 = vunpack.c.l.b16 %v623
      %v868 = vunpack.c.l.b16 %v624
      %v869 = vunpack.c.l.b16 %v625
      %v870 = vunpack.c.l.b16 %v626
      %v871 = vunpack.c.l.b16 %v627
      %v872 = vunpack.c.l.b16 %v628
      %v873 = vunpack.c.l.b16 %v629
      %v874 = vunpack.c.l.b16 %v630
      %v875 = vunpack.c.l.b16 %v631
      %v876 = vunpack.c.l.b16 %v632
      %v877 = vunpack.c.l.b16 %v633
      %v878 = vunpack.c.l.b16 %v634
      %v879 = vunpack.c.l.b16 %v635
      %v880 = vunpack.c.l.b16 %v636
      %v881 = vunpack.c.l.b16 %v637
      %v882 = vunpack.c.l.b16 %v638
      %v883 = vunpack.c.l.b16 %v639
      %v884 = vunpack.c.l.b16 %v640
      %v885 = vunpack.c.l.b16 %v641
      %v886 = vunpack.c.l.b16 %v642
      %v887 = vunpack.c.l.b16 %v643
      %v888 = vunpack.c.l.b16 %v644
      %v889 = vunpack.c.l.b16 %v645
      %v890 = vpack.c.b16 %v819, %v818
      %v891 = vpack.c.b16 %v821, %v820
      %v892 = vpack.c.b16 %v823, %v822
      %v893 = vpack.c.b16 %v825, %v824
      %v894 = vpack.c.b16 %v827, %v826
      %v895 = vpack.c.b16 %v829, %v828
      %v896 = vpack.c.b16 %v831, %v830
      %v897 = vpack.c.b16 %v833, %v832
      %v898 = vpack.c.b16 %v835, %v834
      %v899 = vpack.c.b16 %v837, %v836
      %v900 = vpack.c.b16 %v839, %v838
      %v901 = vpack.c.b16 %v841, %v840
      %v902 = vpack.c.b16 %v843, %v842
      %v903 = vpack.c.b16 %v845, %v844
      %v904 = vpack.c.b16 %v847, %v846
      %v905 = vpack.c.b16 %v849, %v848
      %v906 = vpack.c.b16 %v851, %v850
      %v907 = vpack.c.b16 %v853, %v852
      %v908 = vpack.c.b16 %v855, %v854
      %v909 = vpack.c.b16 %v857, %v856
      %v910 = vpack.c.b16 %v859, %v858
      %v911 = vpack.c.b16 %v861, %v860
      %v912 = vpack.c.b16 %v863, %v862
      %v913 = vpack.c.b16 %v865, %v864
      %v914 = vpack.c.b16 %v867, %v866
      %v915 = vpack.c.b16 %v869, %v868
      %v916 = vpack.c.b16 %v871, %v870
      %v917 = vpack.c.b16 %v873, %v872
      %v918 = vpack.c.b16 %v875, %v874
      %v919 = vpack.c.b16 %v877, %v876
      %v920 = vpack.c.b16 %v879, %v878
      %v921 = vpack.c.b16 %v881, %v880
      %v922 = vpack.c.b16 %v883, %v882
      %v923 = vpack.c.b16 %v885, %v884
      %v924 = vpack.c.b16 %v887, %v886
      %v925 = vpack.c.b16 %v889, %v888
      %vm962 = vcmask 523264
      %v964 = vsel %vm962, %v714, 0
      %v967 = vsel %vm962, %v719, 0
      %v970 = vsel %vm962, %v724, 0
      %v973 = vsel %vm962, %v729, 0
      %975 = vmatpush.bf16.msra.mxu0 %v897
      %976 = vmatpush.bf16.msra.mxu0 %v896
      %977 = vmatpush.bf16.msra.mxu0 %v895
      %978 = vmatpush.bf16.msra.mxu0 %v894
      %979 = vmatpush.bf16.msra.mxu0 %v893
      %980 = vmatpush.bf16.msra.mxu0 %v892
      %981 = vmatpush.bf16.msra.mxu0 %v891
      %982 = vmatpush.bf16.msra.mxu0 %v890
      %983 = vmatmul.bf16.gmra.mxu0 %v710
      %v984 = vpop.f32.mrf.mxu0
      %v985 = vadd.f32 0.0, %v984
      %v986 = vpop.f32.mrf.mxu0
      %v987 = vadd.f32 0.0, %v986
      %988 = vmatmul.bf16.gmra.mxu0 %v715
      %v989 = vpop.f32.mrf.mxu0
      %v990 = vadd.f32 0.0, %v989
      %v991 = vpop.f32.mrf.mxu0
      %v992 = vadd.f32 0.0, %v991
      %993 = vmatmul.bf16.gmra.mxu0 %v720
      %v994 = vpop.f32.mrf.mxu0
      %v995 = vadd.f32 0.0, %v994
      %v996 = vpop.f32.mrf.mxu0
      %v997 = vadd.f32 0.0, %v996
      %998 = vmatmul.bf16.gmra.mxu0 %v725
      %v999 = vpop.f32.mrf.mxu0
      %v1000 = vadd.f32 0.0, %v999
      %v1001 = vpop.f32.mrf.mxu0
      %v1002 = vadd.f32 0.0, %v1001
      %1003 = vdwg.mxu0
      %1004 = vmatpush.bf16.msra.mxu0 %v905
      %1005 = vmatpush.bf16.msra.mxu0 %v904
      %1006 = vmatpush.bf16.msra.mxu0 %v903
      %1007 = vmatpush.bf16.msra.mxu0 %v902
      %1008 = vmatpush.bf16.msra.mxu0 %v901
      %1009 = vmatpush.bf16.msra.mxu0 %v900
      %1010 = vmatpush.bf16.msra.mxu0 %v899
      %1011 = vmatpush.bf16.msra.mxu0 %v898
      %1012 = vmatmul.bf16.gmra.mxu0 %v711
      %v1013 = vpop.f32.mrf.mxu0
      %v1014 = vadd.f32 %v985, %v1013
      %v1015 = vpop.f32.mrf.mxu0
      %v1016 = vadd.f32 %v987, %v1015
      %1017 = vmatmul.bf16.gmra.mxu0 %v716
      %v1018 = vpop.f32.mrf.mxu0
      %v1019 = vadd.f32 %v990, %v1018
      %v1020 = vpop.f32.mrf.mxu0
      %v1021 = vadd.f32 %v992, %v1020
      %1022 = vmatmul.bf16.gmra.mxu0 %v721
      %v1023 = vpop.f32.mrf.mxu0
      %v1024 = vadd.f32 %v995, %v1023
      %v1025 = vpop.f32.mrf.mxu0
      %v1026 = vadd.f32 %v997, %v1025
      %1027 = vmatmul.bf16.gmra.mxu0 %v726
      %v1028 = vpop.f32.mrf.mxu0
      %v1029 = vadd.f32 %v1000, %v1028
      %v1030 = vpop.f32.mrf.mxu0
      %v1031 = vadd.f32 %v1002, %v1030
      %1032 = vdwg.mxu0
      %1033 = vmatpush.bf16.msra.mxu0 %v913
      %1034 = vmatpush.bf16.msra.mxu0 %v912
      %1035 = vmatpush.bf16.msra.mxu0 %v911
      %1036 = vmatpush.bf16.msra.mxu0 %v910
      %1037 = vmatpush.bf16.msra.mxu0 %v909
      %1038 = vmatpush.bf16.msra.mxu0 %v908
      %1039 = vmatpush.bf16.msra.mxu0 %v907
      %1040 = vmatpush.bf16.msra.mxu0 %v906
      %1041 = vmatmul.bf16.gmra.mxu0 %v712
      %v1042 = vpop.f32.mrf.mxu0
      %v1043 = vadd.f32 %v1014, %v1042
      %v1044 = vpop.f32.mrf.mxu0
      %v1045 = vadd.f32 %v1016, %v1044
      %1046 = vmatmul.bf16.gmra.mxu0 %v717
      %v1047 = vpop.f32.mrf.mxu0
      %v1048 = vadd.f32 %v1019, %v1047
      %v1049 = vpop.f32.mrf.mxu0
      %v1050 = vadd.f32 %v1021, %v1049
      %1051 = vmatmul.bf16.gmra.mxu0 %v722
      %v1052 = vpop.f32.mrf.mxu0
      %v1053 = vadd.f32 %v1024, %v1052
      %v1054 = vpop.f32.mrf.mxu0
      %v1055 = vadd.f32 %v1026, %v1054
      %1056 = vmatmul.bf16.gmra.mxu0 %v727
      %v1057 = vpop.f32.mrf.mxu0
      %v1058 = vadd.f32 %v1029, %v1057
      %v1059 = vpop.f32.mrf.mxu0
      %v1060 = vadd.f32 %v1031, %v1059
      %1061 = vdwg.mxu0
      %1062 = vmatpush.bf16.msra.mxu0 %v921
      %1063 = vmatpush.bf16.msra.mxu0 %v920
      %1064 = vmatpush.bf16.msra.mxu0 %v919
      %1065 = vmatpush.bf16.msra.mxu0 %v918
      %1066 = vmatpush.bf16.msra.mxu0 %v917
      %1067 = vmatpush.bf16.msra.mxu0 %v916
      %1068 = vmatpush.bf16.msra.mxu0 %v915
      %1069 = vmatpush.bf16.msra.mxu0 %v914
      %1070 = vmatmul.bf16.gmra.mxu0 %v713
      %v1071 = vpop.f32.mrf.mxu0
      %v1072 = vadd.f32 %v1043, %v1071
      %v1073 = vpop.f32.mrf.mxu0
      %v1074 = vadd.f32 %v1045, %v1073
      %1075 = vmatmul.bf16.gmra.mxu0 %v718
      %v1076 = vpop.f32.mrf.mxu0
      %v1077 = vadd.f32 %v1048, %v1076
      %v1078 = vpop.f32.mrf.mxu0
      %v1079 = vadd.f32 %v1050, %v1078
      %1080 = vmatmul.bf16.gmra.mxu0 %v723
      %v1081 = vpop.f32.mrf.mxu0
      %v1082 = vadd.f32 %v1053, %v1081
      %v1083 = vpop.f32.mrf.mxu0
      %v1084 = vadd.f32 %v1055, %v1083
      %1085 = vmatmul.bf16.gmra.mxu0 %v728
      %v1086 = vpop.f32.mrf.mxu0
      %v1087 = vadd.f32 %v1058, %v1086
      %v1088 = vpop.f32.mrf.mxu0
      %v1089 = vadd.f32 %v1060, %v1088
      %1090 = vdwg.mxu0
      %1091 = vmatpush.bf16.msra.mxu0 0
      %1092 = vmatpush.bf16.msra.mxu0 0
      %1093 = vmatpush.bf16.msra.mxu0 0
      %1094 = vmatpush.bf16.msra.mxu0 0
      %1095 = vmatpush.bf16.msra.mxu0 %v925
      %1096 = vmatpush.bf16.msra.mxu0 %v924
      %1097 = vmatpush.bf16.msra.mxu0 %v923
      %1098 = vmatpush.bf16.msra.mxu0 %v922
      %1099 = vmatmul.bf16.gmra.mxu0 %v964
      %v1100 = vpop.f32.mrf.mxu0
      %v1101 = vadd.f32 %v1072, %v1100
      %v1102 = vpop.f32.mrf.mxu0
      %v1103 = vadd.f32 %v1074, %v1102
      %1104 = vmatmul.bf16.gmra.mxu0 %v967
      %v1105 = vpop.f32.mrf.mxu0
      %v1106 = vadd.f32 %v1077, %v1105
      %v1107 = vpop.f32.mrf.mxu0
      %v1108 = vadd.f32 %v1079, %v1107
      %1109 = vmatmul.bf16.gmra.mxu0 %v970
      %v1110 = vpop.f32.mrf.mxu0
      %v1111 = vadd.f32 %v1082, %v1110
      %v1112 = vpop.f32.mrf.mxu0
      %v1113 = vadd.f32 %v1084, %v1112
      %1114 = vmatmul.bf16.gmra.mxu0 %v973
      %v1115 = vpop.f32.mrf.mxu0
      %v1116 = vadd.f32 %v1087, %v1115
      %v1117 = vpop.f32.mrf.mxu0
      %v1118 = vadd.f32 %v1089, %v1117
      %1119 = vdwg.mxu0
      %v1120 = vld [vmem:[%s283] sm:$0xf]
      %v1121 = vld [vmem:[%s283 + $0x4] sm:$0xf]
      %v1122 = vld [vmem:[%s283 + $0x8] sm:$0xf]
      %v1123 = vld [vmem:[%s283 + $0xc] sm:$0xf]
      %v1124 = vld [vmem:[%s283 + $0x10] sm:$0xf]
      %v1125 = vld [vmem:[%s283 + $0x14] sm:$0xf]
      %v1126 = vld [vmem:[%s283 + $0x18] sm:$0xf]
      %v1127 = vld [vmem:[%s283 + $0x1c] sm:$0xf]
      %1128 = vst.msk [vmem:[#allocation2] sm:$0xf] %vm274, %v1120
      %1129 = vst.msk [vmem:[#allocation2 + $0x4] sm:$0xf] %vm274, %v1121
      %1130 = vst.msk [vmem:[#allocation2 + $0x8] sm:$0xf] %vm274, %v1122
      %1131 = vst.msk [vmem:[#allocation2 + $0xc] sm:$0xf] %vm274, %v1123
      %1132 = vst.msk [vmem:[#allocation2 + $0x10] sm:$0xf] %vm274, %v1124
      %1133 = vst.msk [vmem:[#allocation2 + $0x14] sm:$0xf] %vm274, %v1125
      %1134 = vst.msk [vmem:[#allocation2 + $0x18] sm:$0xf] %vm274, %v1126
      %1135 = vst.msk [vmem:[#allocation2 + $0x1c] sm:$0xf] %vm274, %v1127
      %v1136 = vld [vmem:[%s217] sm:$0xf]
      %v1137 = vld [vmem:[%s217 + $0x4] sm:$0xf]
      %v1138 = vld [vmem:[%s217 + $0x8] sm:$0xf]
      %v1139 = vld [vmem:[%s217 + $0xc] sm:$0xf]
      %v1140 = vld [vmem:[%s217 + $0x10] sm:$0xf]
      %v1141 = vld [vmem:[%s217 + $0x14] sm:$0xf]
      %v1142 = vld [vmem:[%s217 + $0x18] sm:$0xf]
      %v1143 = vld [vmem:[%s217 + $0x1c] sm:$0xf]
      %1152 = vrot.lane.b32.xlu0 %v1136, 127
      %v1153 = vpop.permute.xlu0 %1152
      %1154 = vrot.lane.b32.xlu0 %v1137, 127
      %v1155 = vpop.permute.xlu0 %1154
      %1156 = vrot.lane.b32.xlu0 %v1138, 127
      %v1157 = vpop.permute.xlu0 %1156
      %1158 = vrot.lane.b32.xlu0 %v1139, 127
      %v1159 = vpop.permute.xlu0 %1158
      %1160 = vrot.lane.b32.xlu0 %v1140, 127
      %v1161 = vpop.permute.xlu0 %1160
      %1162 = vrot.lane.b32.xlu0 %v1141, 127
      %v1163 = vpop.permute.xlu0 %1162
      %1164 = vrot.lane.b32.xlu0 %v1142, 127
      %v1165 = vpop.permute.xlu0 %1164
      %1166 = vrot.lane.b32.xlu0 %v1143, 127
      %v1167 = vpop.permute.xlu0 %1166
      %1176 = vst.msk [vmem:[#allocation2 + $0x20] sm:$0xf] %vm274, %v1153
      %1177 = vst.msk [vmem:[#allocation2 + $0x24] sm:$0xf] %vm274, %v1155
      %1178 = vst.msk [vmem:[#allocation2 + $0x28] sm:$0xf] %vm274, %v1157
      %1179 = vst.msk [vmem:[#allocation2 + $0x2c] sm:$0xf] %vm274, %v1159
      %1180 = vst.msk [vmem:[#allocation2 + $0x30] sm:$0xf] %vm274, %v1161
      %1181 = vst.msk [vmem:[#allocation2 + $0x34] sm:$0xf] %vm274, %v1163
      %1182 = vst.msk [vmem:[#allocation2 + $0x38] sm:$0xf] %vm274, %v1165
      %1183 = vst.msk [vmem:[#allocation2 + $0x3c] sm:$0xf] %vm274, %v1167
      %v1184 = vld [vmem:[%s283] sm:$0xf]
      %v1185 = vld [vmem:[%s283 + $0x4] sm:$0xf]
      %v1186 = vld [vmem:[%s283 + $0x8] sm:$0xf]
      %v1187 = vld [vmem:[%s283 + $0xc] sm:$0xf]
      %v1188 = vld [vmem:[%s283 + $0x10] sm:$0xf]
      %v1189 = vld [vmem:[%s283 + $0x14] sm:$0xf]
      %v1190 = vld [vmem:[%s283 + $0x18] sm:$0xf]
      %v1191 = vld [vmem:[%s283 + $0x1c] sm:$0xf]
      %1200 = vrot.lane.b32.xlu0 %v1184, 127
      %v1201 = vpop.permute.xlu0 %1200
      %1202 = vrot.lane.b32.xlu0 %v1185, 127
      %v1203 = vpop.permute.xlu0 %1202
      %1204 = vrot.lane.b32.xlu0 %v1186, 127
      %v1205 = vpop.permute.xlu0 %1204
      %1206 = vrot.lane.b32.xlu0 %v1187, 127
      %v1207 = vpop.permute.xlu0 %1206
      %1208 = vrot.lane.b32.xlu0 %v1188, 127
      %v1209 = vpop.permute.xlu0 %1208
      %1210 = vrot.lane.b32.xlu0 %v1189, 127
      %v1211 = vpop.permute.xlu0 %1210
      %1212 = vrot.lane.b32.xlu0 %v1190, 127
      %v1213 = vpop.permute.xlu0 %1212
      %1214 = vrot.lane.b32.xlu0 %v1191, 127
      %v1215 = vpop.permute.xlu0 %1214
      %1224 = vst.msk [vmem:[#allocation2 + $0x40] sm:$0xf] %vm274, %v1201
      %1225 = vst.msk [vmem:[#allocation2 + $0x44] sm:$0xf] %vm274, %v1203
      %1226 = vst.msk [vmem:[#allocation2 + $0x48] sm:$0xf] %vm274, %v1205
      %1227 = vst.msk [vmem:[#allocation2 + $0x4c] sm:$0xf] %vm274, %v1207
      %1228 = vst.msk [vmem:[#allocation2 + $0x50] sm:$0xf] %vm274, %v1209
      %1229 = vst.msk [vmem:[#allocation2 + $0x54] sm:$0xf] %vm274, %v1211
      %1230 = vst.msk [vmem:[#allocation2 + $0x58] sm:$0xf] %vm274, %v1213
      %1231 = vst.msk [vmem:[#allocation2 + $0x5c] sm:$0xf] %vm274, %v1215
      %v1232 = vld [vmem:[%s365] sm:$0xf]
      %v1233 = vld [vmem:[%s365 + $0x4] sm:$0xf]
      %v1234 = vld [vmem:[%s365 + $0x8] sm:$0xf]
      %v1235 = vld [vmem:[%s365 + $0xc] sm:$0xf]
      %v1236 = vld [vmem:[%s365 + $0x10] sm:$0xf]
      %v1237 = vld [vmem:[%s365 + $0x14] sm:$0xf]
      %v1238 = vld [vmem:[%s365 + $0x18] sm:$0xf]
      %v1239 = vld [vmem:[%s365 + $0x1c] sm:$0xf]
      %1240 = vst.msk [vmem:[#allocation2 + $0x60] sm:$0xf] %vm274, %v1232
      %1241 = vst.msk [vmem:[#allocation2 + $0x64] sm:$0xf] %vm274, %v1233
      %1242 = vst.msk [vmem:[#allocation2 + $0x68] sm:$0xf] %vm274, %v1234
      %1243 = vst.msk [vmem:[#allocation2 + $0x6c] sm:$0xf] %vm274, %v1235
      %1244 = vst.msk [vmem:[#allocation2 + $0x70] sm:$0xf] %vm274, %v1236
      %1245 = vst.msk [vmem:[#allocation2 + $0x74] sm:$0xf] %vm274, %v1237
      %1246 = vst.msk [vmem:[#allocation2 + $0x78] sm:$0xf] %vm274, %v1238
      %1247 = vst.msk [vmem:[#allocation2 + $0x7c] sm:$0xf] %vm274, %v1239
      %v1248 = vld [vmem:[%s348] sm:$0xf]
      %v1249 = vld [vmem:[%s348 + $0x4] sm:$0xf]
      %v1250 = vld [vmem:[%s348 + $0x8] sm:$0xf]
      %v1251 = vld [vmem:[%s348 + $0xc] sm:$0xf]
      %v1252 = vld [vmem:[%s348 + $0x10] sm:$0xf]
      %v1253 = vld [vmem:[%s348 + $0x14] sm:$0xf]
      %v1254 = vld [vmem:[%s348 + $0x18] sm:$0xf]
      %v1255 = vld [vmem:[%s348 + $0x1c] sm:$0xf]
      %1264 = vrot.lane.b32.xlu0 %v1248, 127
      %v1265 = vpop.permute.xlu0 %1264
      %1266 = vrot.lane.b32.xlu0 %v1249, 127
      %v1267 = vpop.permute.xlu0 %1266
      %1268 = vrot.lane.b32.xlu0 %v1250, 127
      %v1269 = vpop.permute.xlu0 %1268
      %1270 = vrot.lane.b32.xlu0 %v1251, 127
      %v1271 = vpop.permute.xlu0 %1270
      %1272 = vrot.lane.b32.xlu0 %v1252, 127
      %v1273 = vpop.permute.xlu0 %1272
      %1274 = vrot.lane.b32.xlu0 %v1253, 127
      %v1275 = vpop.permute.xlu0 %1274
      %1276 = vrot.lane.b32.xlu0 %v1254, 127
      %v1277 = vpop.permute.xlu0 %1276
      %1278 = vrot.lane.b32.xlu0 %v1255, 127
      %v1279 = vpop.permute.xlu0 %1278
      %1288 = vst.msk [vmem:[#allocation2 + $0x80] sm:$0xf] %vm274, %v1265
      %1289 = vst.msk [vmem:[#allocation2 + $0x84] sm:$0xf] %vm274, %v1267
      %1290 = vst.msk [vmem:[#allocation2 + $0x88] sm:$0xf] %vm274, %v1269
      %1291 = vst.msk [vmem:[#allocation2 + $0x8c] sm:$0xf] %vm274, %v1271
      %1292 = vst.msk [vmem:[#allocation2 + $0x90] sm:$0xf] %vm274, %v1273
      %1293 = vst.msk [vmem:[#allocation2 + $0x94] sm:$0xf] %vm274, %v1275
      %1294 = vst.msk [vmem:[#allocation2 + $0x98] sm:$0xf] %vm274, %v1277
      %1295 = vst.msk [vmem:[#allocation2 + $0x9c] sm:$0xf] %vm274, %v1279
      %v1296 = vld [vmem:[%s365] sm:$0xf]
      %v1297 = vld [vmem:[%s365 + $0x4] sm:$0xf]
      %v1298 = vld [vmem:[%s365 + $0x8] sm:$0xf]
      %v1299 = vld [vmem:[%s365 + $0xc] sm:$0xf]
      %v1300 = vld [vmem:[%s365 + $0x10] sm:$0xf]
      %v1301 = vld [vmem:[%s365 + $0x14] sm:$0xf]
      %v1302 = vld [vmem:[%s365 + $0x18] sm:$0xf]
      %v1303 = vld [vmem:[%s365 + $0x1c] sm:$0xf]
      %1312 = vrot.lane.b32.xlu0 %v1296, 127
      %v1313 = vpop.permute.xlu0 %1312
      %1314 = vrot.lane.b32.xlu0 %v1297, 127
      %v1315 = vpop.permute.xlu0 %1314
      %1316 = vrot.lane.b32.xlu0 %v1298, 127
      %v1317 = vpop.permute.xlu0 %1316
      %1318 = vrot.lane.b32.xlu0 %v1299, 127
      %v1319 = vpop.permute.xlu0 %1318
      %1320 = vrot.lane.b32.xlu0 %v1300, 127
      %v1321 = vpop.permute.xlu0 %1320
      %1322 = vrot.lane.b32.xlu0 %v1301, 127
      %v1323 = vpop.permute.xlu0 %1322
      %1324 = vrot.lane.b32.xlu0 %v1302, 127
      %v1325 = vpop.permute.xlu0 %1324
      %1326 = vrot.lane.b32.xlu0 %v1303, 127
      %v1327 = vpop.permute.xlu0 %1326
      %1336 = vst.msk [vmem:[#allocation2 + $0xa0] sm:$0xf] %vm274, %v1313
      %1337 = vst.msk [vmem:[#allocation2 + $0xa4] sm:$0xf] %vm274, %v1315
      %1338 = vst.msk [vmem:[#allocation2 + $0xa8] sm:$0xf] %vm274, %v1317
      %1339 = vst.msk [vmem:[#allocation2 + $0xac] sm:$0xf] %vm274, %v1319
      %1340 = vst.msk [vmem:[#allocation2 + $0xb0] sm:$0xf] %vm274, %v1321
      %1341 = vst.msk [vmem:[#allocation2 + $0xb4] sm:$0xf] %vm274, %v1323
      %1342 = vst.msk [vmem:[#allocation2 + $0xb8] sm:$0xf] %vm274, %v1325
      %1343 = vst.msk [vmem:[#allocation2 + $0xbc] sm:$0xf] %vm274, %v1327
      %v1344 = vld [vmem:[%s283] sm:$0xf]
      %v1345 = vld [vmem:[%s283 + $0x4] sm:$0xf]
      %v1346 = vld [vmem:[%s283 + $0x8] sm:$0xf]
      %v1347 = vld [vmem:[%s283 + $0xc] sm:$0xf]
      %v1348 = vld [vmem:[%s283 + $0x10] sm:$0xf]
      %v1349 = vld [vmem:[%s283 + $0x14] sm:$0xf]
      %v1350 = vld [vmem:[%s283 + $0x18] sm:$0xf]
      %v1351 = vld [vmem:[%s283 + $0x1c] sm:$0xf]
      %1360 = vrot.lane.b32.xlu0 %v1344, 125
      %v1361 = vpop.permute.xlu0 %1360
      %1362 = vrot.lane.b32.xlu0 %v1345, 125
      %v1363 = vpop.permute.xlu0 %1362
      %1364 = vrot.lane.b32.xlu0 %v1346, 125
      %v1365 = vpop.permute.xlu0 %1364
      %1366 = vrot.lane.b32.xlu0 %v1347, 125
      %v1367 = vpop.permute.xlu0 %1366
      %1368 = vrot.lane.b32.xlu0 %v1348, 125
      %v1369 = vpop.permute.xlu0 %1368
      %1370 = vrot.lane.b32.xlu0 %v1349, 125
      %v1371 = vpop.permute.xlu0 %1370
      %1372 = vrot.lane.b32.xlu0 %v1350, 125
      %v1373 = vpop.permute.xlu0 %1372
      %1374 = vrot.lane.b32.xlu0 %v1351, 125
      %v1375 = vpop.permute.xlu0 %1374
      %1384 = vst.msk [vmem:[#allocation2 + $0xc0] sm:$0xf] %vm274, %v1361
      %1385 = vst.msk [vmem:[#allocation2 + $0xc4] sm:$0xf] %vm274, %v1363
      %1386 = vst.msk [vmem:[#allocation2 + $0xc8] sm:$0xf] %vm274, %v1365
      %1387 = vst.msk [vmem:[#allocation2 + $0xcc] sm:$0xf] %vm274, %v1367
      %1388 = vst.msk [vmem:[#allocation2 + $0xd0] sm:$0xf] %vm274, %v1369
      %1389 = vst.msk [vmem:[#allocation2 + $0xd4] sm:$0xf] %vm274, %v1371
      %1390 = vst.msk [vmem:[#allocation2 + $0xd8] sm:$0xf] %vm274, %v1373
      %1391 = vst.msk [vmem:[#allocation2 + $0xdc] sm:$0xf] %vm274, %v1375
      %v1392 = vld [vmem:[%s217] sm:$0xf]
      %v1393 = vld [vmem:[%s217 + $0x4] sm:$0xf]
      %v1394 = vld [vmem:[%s217 + $0x8] sm:$0xf]
      %v1395 = vld [vmem:[%s217 + $0xc] sm:$0xf]
      %v1396 = vld [vmem:[%s217 + $0x10] sm:$0xf]
      %v1397 = vld [vmem:[%s217 + $0x14] sm:$0xf]
      %v1398 = vld [vmem:[%s217 + $0x18] sm:$0xf]
      %v1399 = vld [vmem:[%s217 + $0x1c] sm:$0xf]
      %1408 = vrot.lane.b32.xlu0 %v1392, 124
      %v1409 = vpop.permute.xlu0 %1408
      %1410 = vrot.lane.b32.xlu0 %v1393, 124
      %v1411 = vpop.permute.xlu0 %1410
      %1412 = vrot.lane.b32.xlu0 %v1394, 124
      %v1413 = vpop.permute.xlu0 %1412
      %1414 = vrot.lane.b32.xlu0 %v1395, 124
      %v1415 = vpop.permute.xlu0 %1414
      %1416 = vrot.lane.b32.xlu0 %v1396, 124
      %v1417 = vpop.permute.xlu0 %1416
      %1418 = vrot.lane.b32.xlu0 %v1397, 124
      %v1419 = vpop.permute.xlu0 %1418
      %1420 = vrot.lane.b32.xlu0 %v1398, 124
      %v1421 = vpop.permute.xlu0 %1420
      %1422 = vrot.lane.b32.xlu0 %v1399, 124
      %v1423 = vpop.permute.xlu0 %1422
      %1432 = vst.msk [vmem:[#allocation2 + $0xe0] sm:$0xf] %vm274, %v1409
      %1433 = vst.msk [vmem:[#allocation2 + $0xe4] sm:$0xf] %vm274, %v1411
      %1434 = vst.msk [vmem:[#allocation2 + $0xe8] sm:$0xf] %vm274, %v1413
      %1435 = vst.msk [vmem:[#allocation2 + $0xec] sm:$0xf] %vm274, %v1415
      %1436 = vst.msk [vmem:[#allocation2 + $0xf0] sm:$0xf] %vm274, %v1417
      %1437 = vst.msk [vmem:[#allocation2 + $0xf4] sm:$0xf] %vm274, %v1419
      %1438 = vst.msk [vmem:[#allocation2 + $0xf8] sm:$0xf] %vm274, %v1421
      %1439 = vst.msk [vmem:[#allocation2 + $0xfc] sm:$0xf] %vm274, %v1423
      %v1440 = vld [vmem:[%s283] sm:$0xf]
      %v1441 = vld [vmem:[%s283 + $0x4] sm:$0xf]
      %v1442 = vld [vmem:[%s283 + $0x8] sm:$0xf]
      %v1443 = vld [vmem:[%s283 + $0xc] sm:$0xf]
      %v1444 = vld [vmem:[%s283 + $0x10] sm:$0xf]
      %v1445 = vld [vmem:[%s283 + $0x14] sm:$0xf]
      %v1446 = vld [vmem:[%s283 + $0x18] sm:$0xf]
      %v1447 = vld [vmem:[%s283 + $0x1c] sm:$0xf]
      %1456 = vrot.lane.b32.xlu0 %v1440, 124
      %v1457 = vpop.permute.xlu0 %1456
      %1458 = vrot.lane.b32.xlu0 %v1441, 124
      %v1459 = vpop.permute.xlu0 %1458
      %1460 = vrot.lane.b32.xlu0 %v1442, 124
      %v1461 = vpop.permute.xlu0 %1460
      %1462 = vrot.lane.b32.xlu0 %v1443, 124
      %v1463 = vpop.permute.xlu0 %1462
      %1464 = vrot.lane.b32.xlu0 %v1444, 124
      %v1465 = vpop.permute.xlu0 %1464
      %1466 = vrot.lane.b32.xlu0 %v1445, 124
      %v1467 = vpop.permute.xlu0 %1466
      %1468 = vrot.lane.b32.xlu0 %v1446, 124
      %v1469 = vpop.permute.xlu0 %1468
      %1470 = vrot.lane.b32.xlu0 %v1447, 124
      %v1471 = vpop.permute.xlu0 %1470
      %1480 = vst.msk [vmem:[#allocation2 + $0x100] sm:$0xf] %vm274, %v1457
      %1481 = vst.msk [vmem:[#allocation2 + $0x104] sm:$0xf] %vm274, %v1459
      %1482 = vst.msk [vmem:[#allocation2 + $0x108] sm:$0xf] %vm274, %v1461
      %1483 = vst.msk [vmem:[#allocation2 + $0x10c] sm:$0xf] %vm274, %v1463
      %1484 = vst.msk [vmem:[#allocation2 + $0x110] sm:$0xf] %vm274, %v1465
      %1485 = vst.msk [vmem:[#allocation2 + $0x114] sm:$0xf] %vm274, %v1467
      %1486 = vst.msk [vmem:[#allocation2 + $0x118] sm:$0xf] %vm274, %v1469
      %1487 = vst.msk [vmem:[#allocation2 + $0x11c] sm:$0xf] %vm274, %v1471
      %v1488 = vld [vmem:[#allocation2] sm:$0xf]
      %v1489 = vld [vmem:[#allocation2 + $0x4] sm:$0xf]
      %v1490 = vld [vmem:[#allocation2 + $0x8] sm:$0xf]
      %v1491 = vld [vmem:[#allocation2 + $0xc] sm:$0xf]
      %v1492 = vld [vmem:[#allocation2 + $0x10] sm:$0xf]
      %v1493 = vld [vmem:[#allocation2 + $0x14] sm:$0xf]
      %v1494 = vld [vmem:[#allocation2 + $0x18] sm:$0xf]
      %v1495 = vld [vmem:[#allocation2 + $0x1c] sm:$0xf]
      %v1496 = vld [vmem:[#allocation2 + $0x20] sm:$0xf]
      %v1497 = vld [vmem:[#allocation2 + $0x24] sm:$0xf]
      %v1498 = vld [vmem:[#allocation2 + $0x28] sm:$0xf]
      %v1499 = vld [vmem:[#allocation2 + $0x2c] sm:$0xf]
      %v1500 = vld [vmem:[#allocation2 + $0x30] sm:$0xf]
      %v1501 = vld [vmem:[#allocation2 + $0x34] sm:$0xf]
      %v1502 = vld [vmem:[#allocation2 + $0x38] sm:$0xf]
      %v1503 = vld [vmem:[#allocation2 + $0x3c] sm:$0xf]
      %v1504 = vld [vmem:[#allocation2 + $0x40] sm:$0xf]
      %v1505 = vld [vmem:[#allocation2 + $0x44] sm:$0xf]
      %v1506 = vld [vmem:[#allocation2 + $0x48] sm:$0xf]
      %v1507 = vld [vmem:[#allocation2 + $0x4c] sm:$0xf]
      %v1508 = vld [vmem:[#allocation2 + $0x50] sm:$0xf]
      %v1509 = vld [vmem:[#allocation2 + $0x54] sm:$0xf]
      %v1510 = vld [vmem:[#allocation2 + $0x58] sm:$0xf]
      %v1511 = vld [vmem:[#allocation2 + $0x5c] sm:$0xf]
      %v1512 = vld [vmem:[#allocation2 + $0x60] sm:$0xf]
      %v1513 = vld [vmem:[#allocation2 + $0x64] sm:$0xf]
      %v1514 = vld [vmem:[#allocation2 + $0x68] sm:$0xf]
      %v1515 = vld [vmem:[#allocation2 + $0x6c] sm:$0xf]
      %v1516 = vld [vmem:[#allocation2 + $0x70] sm:$0xf]
      %v1517 = vld [vmem:[#allocation2 + $0x74] sm:$0xf]
      %v1518 = vld [vmem:[#allocation2 + $0x78] sm:$0xf]
      %v1519 = vld [vmem:[#allocation2 + $0x7c] sm:$0xf]
      %v1520 = vld [vmem:[#allocation2 + $0x80] sm:$0xf]
      %v1521 = vld [vmem:[#allocation2 + $0x84] sm:$0xf]
      %v1522 = vld [vmem:[#allocation2 + $0x88] sm:$0xf]
      %v1523 = vld [vmem:[#allocation2 + $0x8c] sm:$0xf]
      %v1524 = vld [vmem:[#allocation2 + $0x90] sm:$0xf]
      %v1525 = vld [vmem:[#allocation2 + $0x94] sm:$0xf]
      %v1526 = vld [vmem:[#allocation2 + $0x98] sm:$0xf]
      %v1527 = vld [vmem:[#allocation2 + $0x9c] sm:$0xf]
      %v1528 = vld [vmem:[#allocation2 + $0xa0] sm:$0xf]
      %v1529 = vld [vmem:[#allocation2 + $0xa4] sm:$0xf]
      %v1530 = vld [vmem:[#allocation2 + $0xa8] sm:$0xf]
      %v1531 = vld [vmem:[#allocation2 + $0xac] sm:$0xf]
      %v1532 = vld [vmem:[#allocation2 + $0xb0] sm:$0xf]
      %v1533 = vld [vmem:[#allocation2 + $0xb4] sm:$0xf]
      %v1534 = vld [vmem:[#allocation2 + $0xb8] sm:$0xf]
      %v1535 = vld [vmem:[#allocation2 + $0xbc] sm:$0xf]
      %v1536 = vld [vmem:[#allocation2 + $0xc0] sm:$0xf]
      %v1537 = vld [vmem:[#allocation2 + $0xc4] sm:$0xf]
      %v1538 = vld [vmem:[#allocation2 + $0xc8] sm:$0xf]
      %v1539 = vld [vmem:[#allocation2 + $0xcc] sm:$0xf]
      %v1540 = vld [vmem:[#allocation2 + $0xd0] sm:$0xf]
      %v1541 = vld [vmem:[#allocation2 + $0xd4] sm:$0xf]
      %v1542 = vld [vmem:[#allocation2 + $0xd8] sm:$0xf]
      %v1543 = vld [vmem:[#allocation2 + $0xdc] sm:$0xf]
      %v1544 = vld [vmem:[#allocation2 + $0xe0] sm:$0xf]
      %v1545 = vld [vmem:[#allocation2 + $0xe4] sm:$0xf]
      %v1546 = vld [vmem:[#allocation2 + $0xe8] sm:$0xf]
      %v1547 = vld [vmem:[#allocation2 + $0xec] sm:$0xf]
      %v1548 = vld [vmem:[#allocation2 + $0xf0] sm:$0xf]
      %v1549 = vld [vmem:[#allocation2 + $0xf4] sm:$0xf]
      %v1550 = vld [vmem:[#allocation2 + $0xf8] sm:$0xf]
      %v1551 = vld [vmem:[#allocation2 + $0xfc] sm:$0xf]
      %v1552 = vld [vmem:[#allocation2 + $0x100] sm:$0xf]
      %v1553 = vld [vmem:[#allocation2 + $0x104] sm:$0xf]
      %v1554 = vld [vmem:[#allocation2 + $0x108] sm:$0xf]
      %v1555 = vld [vmem:[#allocation2 + $0x10c] sm:$0xf]
      %v1556 = vld [vmem:[#allocation2 + $0x110] sm:$0xf]
      %v1557 = vld [vmem:[#allocation2 + $0x114] sm:$0xf]
      %v1558 = vld [vmem:[#allocation2 + $0x118] sm:$0xf]
      %v1559 = vld [vmem:[#allocation2 + $0x11c] sm:$0xf]
      %v1632 = vunpack.c.l.b16 %v1488
      %v1633 = vunpack.c.l.b16 %v1489
      %v1634 = vunpack.c.l.b16 %v1490
      %v1635 = vunpack.c.l.b16 %v1491
      %v1636 = vunpack.c.l.b16 %v1492
      %v1637 = vunpack.c.l.b16 %v1493
      %v1638 = vunpack.c.l.b16 %v1494
      %v1639 = vunpack.c.l.b16 %v1495
      %v1640 = vunpack.c.l.b16 %v1496
      %v1641 = vunpack.c.l.b16 %v1497
      %v1642 = vunpack.c.l.b16 %v1498
      %v1643 = vunpack.c.l.b16 %v1499
      %v1644 = vunpack.c.l.b16 %v1500
      %v1645 = vunpack.c.l.b16 %v1501
      %v1646 = vunpack.c.l.b16 %v1502
      %v1647 = vunpack.c.l.b16 %v1503
      %v1648 = vunpack.c.l.b16 %v1504
      %v1649 = vunpack.c.l.b16 %v1505
      %v1650 = vunpack.c.l.b16 %v1506
      %v1651 = vunpack.c.l.b16 %v1507
      %v1652 = vunpack.c.l.b16 %v1508
      %v1653 = vunpack.c.l.b16 %v1509
      %v1654 = vunpack.c.l.b16 %v1510
      %v1655 = vunpack.c.l.b16 %v1511
      %v1656 = vunpack.c.l.b16 %v1512
      %v1657 = vunpack.c.l.b16 %v1513
      %v1658 = vunpack.c.l.b16 %v1514
      %v1659 = vunpack.c.l.b16 %v1515
      %v1660 = vunpack.c.l.b16 %v1516
      %v1661 = vunpack.c.l.b16 %v1517
      %v1662 = vunpack.c.l.b16 %v1518
      %v1663 = vunpack.c.l.b16 %v1519
      %v1664 = vunpack.c.l.b16 %v1520
      %v1665 = vunpack.c.l.b16 %v1521
      %v1666 = vunpack.c.l.b16 %v1522
      %v1667 = vunpack.c.l.b16 %v1523
      %v1668 = vunpack.c.l.b16 %v1524
      %v1669 = vunpack.c.l.b16 %v1525
      %v1670 = vunpack.c.l.b16 %v1526
      %v1671 = vunpack.c.l.b16 %v1527
      %v1672 = vunpack.c.l.b16 %v1528
      %v1673 = vunpack.c.l.b16 %v1529
      %v1674 = vunpack.c.l.b16 %v1530
      %v1675 = vunpack.c.l.b16 %v1531
      %v1676 = vunpack.c.l.b16 %v1532
      %v1677 = vunpack.c.l.b16 %v1533
      %v1678 = vunpack.c.l.b16 %v1534
      %v1679 = vunpack.c.l.b16 %v1535
      %v1680 = vunpack.c.l.b16 %v1536
      %v1681 = vunpack.c.l.b16 %v1537
      %v1682 = vunpack.c.l.b16 %v1538
      %v1683 = vunpack.c.l.b16 %v1539
      %v1684 = vunpack.c.l.b16 %v1540
      %v1685 = vunpack.c.l.b16 %v1541
      %v1686 = vunpack.c.l.b16 %v1542
      %v1687 = vunpack.c.l.b16 %v1543
      %v1688 = vunpack.c.l.b16 %v1544
      %v1689 = vunpack.c.l.b16 %v1545
      %v1690 = vunpack.c.l.b16 %v1546
      %v1691 = vunpack.c.l.b16 %v1547
      %v1692 = vunpack.c.l.b16 %v1548
      %v1693 = vunpack.c.l.b16 %v1549
      %v1694 = vunpack.c.l.b16 %v1550
      %v1695 = vunpack.c.l.b16 %v1551
      %v1696 = vunpack.c.l.b16 %v1552
      %v1697 = vunpack.c.l.b16 %v1553
      %v1698 = vunpack.c.l.b16 %v1554
      %v1699 = vunpack.c.l.b16 %v1555
      %v1700 = vunpack.c.l.b16 %v1556
      %v1701 = vunpack.c.l.b16 %v1557
      %v1702 = vunpack.c.l.b16 %v1558
      %v1703 = vunpack.c.l.b16 %v1559
      %v1704 = vpack.c.b16 %v1633, %v1632
      %v1705 = vpack.c.b16 %v1635, %v1634
      %v1706 = vpack.c.b16 %v1637, %v1636
      %v1707 = vpack.c.b16 %v1639, %v1638
      %v1708 = vpack.c.b16 %v1641, %v1640
      %v1709 = vpack.c.b16 %v1643, %v1642
      %v1710 = vpack.c.b16 %v1645, %v1644
      %v1711 = vpack.c.b16 %v1647, %v1646
      %v1712 = vpack.c.b16 %v1649, %v1648
      %v1713 = vpack.c.b16 %v1651, %v1650
      %v1714 = vpack.c.b16 %v1653, %v1652
      %v1715 = vpack.c.b16 %v1655, %v1654
      %v1716 = vpack.c.b16 %v1657, %v1656
      %v1717 = vpack.c.b16 %v1659, %v1658
      %v1718 = vpack.c.b16 %v1661, %v1660
      %v1719 = vpack.c.b16 %v1663, %v1662
      %v1720 = vpack.c.b16 %v1665, %v1664
      %v1721 = vpack.c.b16 %v1667, %v1666
      %v1722 = vpack.c.b16 %v1669, %v1668
      %v1723 = vpack.c.b16 %v1671, %v1670
      %v1724 = vpack.c.b16 %v1673, %v1672
      %v1725 = vpack.c.b16 %v1675, %v1674
      %v1726 = vpack.c.b16 %v1677, %v1676
      %v1727 = vpack.c.b16 %v1679, %v1678
      %v1728 = vpack.c.b16 %v1681, %v1680
      %v1729 = vpack.c.b16 %v1683, %v1682
      %v1730 = vpack.c.b16 %v1685, %v1684
      %v1731 = vpack.c.b16 %v1687, %v1686
      %v1732 = vpack.c.b16 %v1689, %v1688
      %v1733 = vpack.c.b16 %v1691, %v1690
      %v1734 = vpack.c.b16 %v1693, %v1692
      %v1735 = vpack.c.b16 %v1695, %v1694
      %v1736 = vpack.c.b16 %v1697, %v1696
      %v1737 = vpack.c.b16 %v1699, %v1698
      %v1738 = vpack.c.b16 %v1701, %v1700
      %v1739 = vpack.c.b16 %v1703, %v1702
      %1776 = vmatpush.bf16.msra.mxu0 %v1711
      %1777 = vmatpush.bf16.msra.mxu0 %v1710
      %1778 = vmatpush.bf16.msra.mxu0 %v1709
      %1779 = vmatpush.bf16.msra.mxu0 %v1708
      %1780 = vmatpush.bf16.msra.mxu0 %v1707
      %1781 = vmatpush.bf16.msra.mxu0 %v1706
      %1782 = vmatpush.bf16.msra.mxu0 %v1705
      %1783 = vmatpush.bf16.msra.mxu0 %v1704
      %1784 = vmatmul.bf16.gmra.mxu0 %v710
      %v1785 = vpop.f32.mrf.mxu0
      %v1786 = vadd.f32 0.0, %v1785
      %v1787 = vpop.f32.mrf.mxu0
      %v1788 = vadd.f32 0.0, %v1787
      %1789 = vmatmul.bf16.gmra.mxu0 %v715
      %v1790 = vpop.f32.mrf.mxu0
      %v1791 = vadd.f32 0.0, %v1790
      %v1792 = vpop.f32.mrf.mxu0
      %v1793 = vadd.f32 0.0, %v1792
      %1794 = vmatmul.bf16.gmra.mxu0 %v720
      %v1795 = vpop.f32.mrf.mxu0
      %v1796 = vadd.f32 0.0, %v1795
      %v1797 = vpop.f32.mrf.mxu0
      %v1798 = vadd.f32 0.0, %v1797
      %1799 = vmatmul.bf16.gmra.mxu0 %v725
      %v1800 = vpop.f32.mrf.mxu0
      %v1801 = vadd.f32 0.0, %v1800
      %v1802 = vpop.f32.mrf.mxu0
      %v1803 = vadd.f32 0.0, %v1802
      %1804 = vdwg.mxu0
      %1805 = vmatpush.bf16.msra.mxu0 %v1719
      %1806 = vmatpush.bf16.msra.mxu0 %v1718
      %1807 = vmatpush.bf16.msra.mxu0 %v1717
      %1808 = vmatpush.bf16.msra.mxu0 %v1716
      %1809 = vmatpush.bf16.msra.mxu0 %v1715
      %1810 = vmatpush.bf16.msra.mxu0 %v1714
      %1811 = vmatpush.bf16.msra.mxu0 %v1713
      %1812 = vmatpush.bf16.msra.mxu0 %v1712
      %1813 = vmatmul.bf16.gmra.mxu0 %v711
      %v1814 = vpop.f32.mrf.mxu0
      %v1815 = vadd.f32 %v1786, %v1814
      %v1816 = vpop.f32.mrf.mxu0
      %v1817 = vadd.f32 %v1788, %v1816
      %1818 = vmatmul.bf16.gmra.mxu0 %v716
      %v1819 = vpop.f32.mrf.mxu0
      %v1820 = vadd.f32 %v1791, %v1819
      %v1821 = vpop.f32.mrf.mxu0
      %v1822 = vadd.f32 %v1793, %v1821
      %1823 = vmatmul.bf16.gmra.mxu0 %v721
      %v1824 = vpop.f32.mrf.mxu0
      %v1825 = vadd.f32 %v1796, %v1824
      %v1826 = vpop.f32.mrf.mxu0
      %v1827 = vadd.f32 %v1798, %v1826
      %1828 = vmatmul.bf16.gmra.mxu0 %v726
      %v1829 = vpop.f32.mrf.mxu0
      %v1830 = vadd.f32 %v1801, %v1829
      %v1831 = vpop.f32.mrf.mxu0
      %v1832 = vadd.f32 %v1803, %v1831
      %1833 = vdwg.mxu0
      %1834 = vmatpush.bf16.msra.mxu0 %v1727
      %1835 = vmatpush.bf16.msra.mxu0 %v1726
      %1836 = vmatpush.bf16.msra.mxu0 %v1725
      %1837 = vmatpush.bf16.msra.mxu0 %v1724
      %1838 = vmatpush.bf16.msra.mxu0 %v1723
      %1839 = vmatpush.bf16.msra.mxu0 %v1722
      %1840 = vmatpush.bf16.msra.mxu0 %v1721
      %1841 = vmatpush.bf16.msra.mxu0 %v1720
      %1842 = vmatmul.bf16.gmra.mxu0 %v712
      %v1843 = vpop.f32.mrf.mxu0
      %v1844 = vadd.f32 %v1815, %v1843
      %v1845 = vpop.f32.mrf.mxu0
      %v1846 = vadd.f32 %v1817, %v1845
      %1847 = vmatmul.bf16.gmra.mxu0 %v717
      %v1848 = vpop.f32.mrf.mxu0
      %v1849 = vadd.f32 %v1820, %v1848
      %v1850 = vpop.f32.mrf.mxu0
      %v1851 = vadd.f32 %v1822, %v1850
      %1852 = vmatmul.bf16.gmra.mxu0 %v722
      %v1853 = vpop.f32.mrf.mxu0
      %v1854 = vadd.f32 %v1825, %v1853
      %v1855 = vpop.f32.mrf.mxu0
      %v1856 = vadd.f32 %v1827, %v1855
      %1857 = vmatmul.bf16.gmra.mxu0 %v727
      %v1858 = vpop.f32.mrf.mxu0
      %v1859 = vadd.f32 %v1830, %v1858
      %v1860 = vpop.f32.mrf.mxu0
      %v1861 = vadd.f32 %v1832, %v1860
      %1862 = vdwg.mxu0
      %1863 = vmatpush.bf16.msra.mxu0 %v1735
      %1864 = vmatpush.bf16.msra.mxu0 %v1734
      %1865 = vmatpush.bf16.msra.mxu0 %v1733
      %1866 = vmatpush.bf16.msra.mxu0 %v1732
      %1867 = vmatpush.bf16.msra.mxu0 %v1731
      %1868 = vmatpush.bf16.msra.mxu0 %v1730
      %1869 = vmatpush.bf16.msra.mxu0 %v1729
      %1870 = vmatpush.bf16.msra.mxu0 %v1728
      %1871 = vmatmul.bf16.gmra.mxu0 %v713
      %v1872 = vpop.f32.mrf.mxu0
      %v1873 = vadd.f32 %v1844, %v1872
      %v1874 = vpop.f32.mrf.mxu0
      %v1875 = vadd.f32 %v1846, %v1874
      %1876 = vmatmul.bf16.gmra.mxu0 %v718
      %v1877 = vpop.f32.mrf.mxu0
      %v1878 = vadd.f32 %v1849, %v1877
      %v1879 = vpop.f32.mrf.mxu0
      %v1880 = vadd.f32 %v1851, %v1879
      %1881 = vmatmul.bf16.gmra.mxu0 %v723
      %v1882 = vpop.f32.mrf.mxu0
      %v1883 = vadd.f32 %v1854, %v1882
      %v1884 = vpop.f32.mrf.mxu0
      %v1885 = vadd.f32 %v1856, %v1884
      %1886 = vmatmul.bf16.gmra.mxu0 %v728
      %v1887 = vpop.f32.mrf.mxu0
      %v1888 = vadd.f32 %v1859, %v1887
      %v1889 = vpop.f32.mrf.mxu0
      %v1890 = vadd.f32 %v1861, %v1889
      %1891 = vdwg.mxu0
      %1892 = vmatpush.bf16.msra.mxu0 0
      %1893 = vmatpush.bf16.msra.mxu0 0
      %1894 = vmatpush.bf16.msra.mxu0 0
      %1895 = vmatpush.bf16.msra.mxu0 0
      %1896 = vmatpush.bf16.msra.mxu0 %v1739
      %1897 = vmatpush.bf16.msra.mxu0 %v1738
      %1898 = vmatpush.bf16.msra.mxu0 %v1737
      %1899 = vmatpush.bf16.msra.mxu0 %v1736
      %1900 = vmatmul.bf16.gmra.mxu0 %v964
      %v1901 = vpop.f32.mrf.mxu0
      %v1902 = vadd.f32 %v1873, %v1901
      %v1903 = vpop.f32.mrf.mxu0
      %v1904 = vadd.f32 %v1875, %v1903
      %1905 = vmatmul.bf16.gmra.mxu0 %v967
      %v1906 = vpop.f32.mrf.mxu0
      %v1907 = vadd.f32 %v1878, %v1906
      %v1908 = vpop.f32.mrf.mxu0
      %v1909 = vadd.f32 %v1880, %v1908
      %1910 = vmatmul.bf16.gmra.mxu0 %v970
      %v1911 = vpop.f32.mrf.mxu0
      %v1912 = vadd.f32 %v1883, %v1911
      %v1913 = vpop.f32.mrf.mxu0
      %v1914 = vadd.f32 %v1885, %v1913
      %1915 = vmatmul.bf16.gmra.mxu0 %v973
      %v1916 = vpop.f32.mrf.mxu0
      %v1917 = vadd.f32 %v1888, %v1916
      %v1918 = vpop.f32.mrf.mxu0
      %v1919 = vadd.f32 %v1890, %v1918
      %1920 = vdwg.mxu0
      %v1921 = vmax.f32 %v1101, %v1902
      %v1922 = vmax.f32 %v1103, %v1904
      %v1923 = vmax.f32 %v1106, %v1907
      %v1924 = vmax.f32 %v1108, %v1909
      %v1925 = vmax.f32 %v1111, %v1912
      %v1926 = vmax.f32 %v1113, %v1914
      %v1927 = vmax.f32 %v1116, %v1917
      %v1928 = vmax.f32 %v1118, %v1919
      %v1929 = vld [vmem:[%s348] sm:$0xf]
      %v1930 = vld [vmem:[%s348 + $0x4] sm:$0xf]
      %v1931 = vld [vmem:[%s348 + $0x8] sm:$0xf]
      %v1932 = vld [vmem:[%s348 + $0xc] sm:$0xf]
      %v1933 = vld [vmem:[%s348 + $0x10] sm:$0xf]
      %v1934 = vld [vmem:[%s348 + $0x14] sm:$0xf]
      %v1935 = vld [vmem:[%s348 + $0x18] sm:$0xf]
      %v1936 = vld [vmem:[%s348 + $0x1c] sm:$0xf]
      %1937 = vst.msk [vmem:[#allocation2] sm:$0xf] %vm274, %v1929
      %1938 = vst.msk [vmem:[#allocation2 + $0x4] sm:$0xf] %vm274, %v1930
      %1939 = vst.msk [vmem:[#allocation2 + $0x8] sm:$0xf] %vm274, %v1931
      %1940 = vst.msk [vmem:[#allocation2 + $0xc] sm:$0xf] %vm274, %v1932
      %1941 = vst.msk [vmem:[#allocation2 + $0x10] sm:$0xf] %vm274, %v1933
      %1942 = vst.msk [vmem:[#allocation2 + $0x14] sm:$0xf] %vm274, %v1934
      %1943 = vst.msk [vmem:[#allocation2 + $0x18] sm:$0xf] %vm274, %v1935
      %1944 = vst.msk [vmem:[#allocation2 + $0x1c] sm:$0xf] %vm274, %v1936
      %v1945 = vld [vmem:[%s365] sm:$0xf]
      %v1946 = vld [vmem:[%s365 + $0x4] sm:$0xf]
      %v1947 = vld [vmem:[%s365 + $0x8] sm:$0xf]
      %v1948 = vld [vmem:[%s365 + $0xc] sm:$0xf]
      %v1949 = vld [vmem:[%s365 + $0x10] sm:$0xf]
      %v1950 = vld [vmem:[%s365 + $0x14] sm:$0xf]
      %v1951 = vld [vmem:[%s365 + $0x18] sm:$0xf]
      %v1952 = vld [vmem:[%s365 + $0x1c] sm:$0xf]
      %1953 = vst.msk [vmem:[#allocation2 + $0x20] sm:$0xf] %vm274, %v1945
      %1954 = vst.msk [vmem:[#allocation2 + $0x24] sm:$0xf] %vm274, %v1946
      %1955 = vst.msk [vmem:[#allocation2 + $0x28] sm:$0xf] %vm274, %v1947
      %1956 = vst.msk [vmem:[#allocation2 + $0x2c] sm:$0xf] %vm274, %v1948
      %1957 = vst.msk [vmem:[#allocation2 + $0x30] sm:$0xf] %vm274, %v1949
      %1958 = vst.msk [vmem:[#allocation2 + $0x34] sm:$0xf] %vm274, %v1950
      %1959 = vst.msk [vmem:[#allocation2 + $0x38] sm:$0xf] %vm274, %v1951
      %1960 = vst.msk [vmem:[#allocation2 + $0x3c] sm:$0xf] %vm274, %v1952
      %v1961 = vld [vmem:[%s348] sm:$0xf]
      %v1962 = vld [vmem:[%s348 + $0x4] sm:$0xf]
      %v1963 = vld [vmem:[%s348 + $0x8] sm:$0xf]
      %v1964 = vld [vmem:[%s348 + $0xc] sm:$0xf]
      %v1965 = vld [vmem:[%s348 + $0x10] sm:$0xf]
      %v1966 = vld [vmem:[%s348 + $0x14] sm:$0xf]
      %v1967 = vld [vmem:[%s348 + $0x18] sm:$0xf]
      %v1968 = vld [vmem:[%s348 + $0x1c] sm:$0xf]
      %1977 = vrot.lane.b32.xlu0 %v1961, 127
      %v1978 = vpop.permute.xlu0 %1977
      %1979 = vrot.lane.b32.xlu0 %v1962, 127
      %v1980 = vpop.permute.xlu0 %1979
      %1981 = vrot.lane.b32.xlu0 %v1963, 127
      %v1982 = vpop.permute.xlu0 %1981
      %1983 = vrot.lane.b32.xlu0 %v1964, 127
      %v1984 = vpop.permute.xlu0 %1983
      %1985 = vrot.lane.b32.xlu0 %v1965, 127
      %v1986 = vpop.permute.xlu0 %1985
      %1987 = vrot.lane.b32.xlu0 %v1966, 127
      %v1988 = vpop.permute.xlu0 %1987
      %1989 = vrot.lane.b32.xlu0 %v1967, 127
      %v1990 = vpop.permute.xlu0 %1989
      %1991 = vrot.lane.b32.xlu0 %v1968, 127
      %v1992 = vpop.permute.xlu0 %1991
      %2001 = vst.msk [vmem:[#allocation2 + $0x40] sm:$0xf] %vm274, %v1978
      %2002 = vst.msk [vmem:[#allocation2 + $0x44] sm:$0xf] %vm274, %v1980
      %2003 = vst.msk [vmem:[#allocation2 + $0x48] sm:$0xf] %vm274, %v1982
      %2004 = vst.msk [vmem:[#allocation2 + $0x4c] sm:$0xf] %vm274, %v1984
      %2005 = vst.msk [vmem:[#allocation2 + $0x50] sm:$0xf] %vm274, %v1986
      %2006 = vst.msk [vmem:[#allocation2 + $0x54] sm:$0xf] %vm274, %v1988
      %2007 = vst.msk [vmem:[#allocation2 + $0x58] sm:$0xf] %vm274, %v1990
      %2008 = vst.msk [vmem:[#allocation2 + $0x5c] sm:$0xf] %vm274, %v1992
      %v2009 = vld [vmem:[%s217] sm:$0xf]
      %v2010 = vld [vmem:[%s217 + $0x4] sm:$0xf]
      %v2011 = vld [vmem:[%s217 + $0x8] sm:$0xf]
      %v2012 = vld [vmem:[%s217 + $0xc] sm:$0xf]
      %v2013 = vld [vmem:[%s217 + $0x10] sm:$0xf]
      %v2014 = vld [vmem:[%s217 + $0x14] sm:$0xf]
      %v2015 = vld [vmem:[%s217 + $0x18] sm:$0xf]
      %v2016 = vld [vmem:[%s217 + $0x1c] sm:$0xf]
      %2025 = vrot.lane.b32.xlu0 %v2009, 125
      %v2026 = vpop.permute.xlu0 %2025
      %2027 = vrot.lane.b32.xlu0 %v2010, 125
      %v2028 = vpop.permute.xlu0 %2027
      %2029 = vrot.lane.b32.xlu0 %v2011, 125
      %v2030 = vpop.permute.xlu0 %2029
      %2031 = vrot.lane.b32.xlu0 %v2012, 125
      %v2032 = vpop.permute.xlu0 %2031
      %2033 = vrot.lane.b32.xlu0 %v2013, 125
      %v2034 = vpop.permute.xlu0 %2033
      %2035 = vrot.lane.b32.xlu0 %v2014, 125
      %v2036 = vpop.permute.xlu0 %2035
      %2037 = vrot.lane.b32.xlu0 %v2015, 125
      %v2038 = vpop.permute.xlu0 %2037
      %2039 = vrot.lane.b32.xlu0 %v2016, 125
      %v2040 = vpop.permute.xlu0 %2039
      %2049 = vst.msk [vmem:[#allocation2 + $0x60] sm:$0xf] %vm274, %v2026
      %2050 = vst.msk [vmem:[#allocation2 + $0x64] sm:$0xf] %vm274, %v2028
      %2051 = vst.msk [vmem:[#allocation2 + $0x68] sm:$0xf] %vm274, %v2030
      %2052 = vst.msk [vmem:[#allocation2 + $0x6c] sm:$0xf] %vm274, %v2032
      %2053 = vst.msk [vmem:[#allocation2 + $0x70] sm:$0xf] %vm274, %v2034
      %2054 = vst.msk [vmem:[#allocation2 + $0x74] sm:$0xf] %vm274, %v2036
      %2055 = vst.msk [vmem:[#allocation2 + $0x78] sm:$0xf] %vm274, %v2038
      %2056 = vst.msk [vmem:[#allocation2 + $0x7c] sm:$0xf] %vm274, %v2040
      %v2057 = vld [vmem:[%s283] sm:$0xf]
      %v2058 = vld [vmem:[%s283 + $0x4] sm:$0xf]
      %v2059 = vld [vmem:[%s283 + $0x8] sm:$0xf]
      %v2060 = vld [vmem:[%s283 + $0xc] sm:$0xf]
      %v2061 = vld [vmem:[%s283 + $0x10] sm:$0xf]
      %v2062 = vld [vmem:[%s283 + $0x14] sm:$0xf]
      %v2063 = vld [vmem:[%s283 + $0x18] sm:$0xf]
      %v2064 = vld [vmem:[%s283 + $0x1c] sm:$0xf]
      %2073 = vrot.lane.b32.xlu0 %v2057, 125
      %v2074 = vpop.permute.xlu0 %2073
      %2075 = vrot.lane.b32.xlu0 %v2058, 125
      %v2076 = vpop.permute.xlu0 %2075
      %2077 = vrot.lane.b32.xlu0 %v2059, 125
      %v2078 = vpop.permute.xlu0 %2077
      %2079 = vrot.lane.b32.xlu0 %v2060, 125
      %v2080 = vpop.permute.xlu0 %2079
      %2081 = vrot.lane.b32.xlu0 %v2061, 125
      %v2082 = vpop.permute.xlu0 %2081
      %2083 = vrot.lane.b32.xlu0 %v2062, 125
      %v2084 = vpop.permute.xlu0 %2083
      %2085 = vrot.lane.b32.xlu0 %v2063, 125
      %v2086 = vpop.permute.xlu0 %2085
      %2087 = vrot.lane.b32.xlu0 %v2064, 125
      %v2088 = vpop.permute.xlu0 %2087
      %2097 = vst.msk [vmem:[#allocation2 + $0x80] sm:$0xf] %vm274, %v2074
      %2098 = vst.msk [vmem:[#allocation2 + $0x84] sm:$0xf] %vm274, %v2076
      %2099 = vst.msk [vmem:[#allocation2 + $0x88] sm:$0xf] %vm274, %v2078
      %2100 = vst.msk [vmem:[#allocation2 + $0x8c] sm:$0xf] %vm274, %v2080
      %2101 = vst.msk [vmem:[#allocation2 + $0x90] sm:$0xf] %vm274, %v2082
      %2102 = vst.msk [vmem:[#allocation2 + $0x94] sm:$0xf] %vm274, %v2084
      %2103 = vst.msk [vmem:[#allocation2 + $0x98] sm:$0xf] %vm274, %v2086
      %2104 = vst.msk [vmem:[#allocation2 + $0x9c] sm:$0xf] %vm274, %v2088
      %v2105 = vld [vmem:[%s217] sm:$0xf]
      %v2106 = vld [vmem:[%s217 + $0x4] sm:$0xf]
      %v2107 = vld [vmem:[%s217 + $0x8] sm:$0xf]
      %v2108 = vld [vmem:[%s217 + $0xc] sm:$0xf]
      %v2109 = vld [vmem:[%s217 + $0x10] sm:$0xf]
      %v2110 = vld [vmem:[%s217 + $0x14] sm:$0xf]
      %v2111 = vld [vmem:[%s217 + $0x18] sm:$0xf]
      %v2112 = vld [vmem:[%s217 + $0x1c] sm:$0xf]
      %2121 = vrot.lane.b32.xlu0 %v2105, 124
      %v2122 = vpop.permute.xlu0 %2121
      %2123 = vrot.lane.b32.xlu0 %v2106, 124
      %v2124 = vpop.permute.xlu0 %2123
      %2125 = vrot.lane.b32.xlu0 %v2107, 124
      %v2126 = vpop.permute.xlu0 %2125
      %2127 = vrot.lane.b32.xlu0 %v2108, 124
      %v2128 = vpop.permute.xlu0 %2127
      %2129 = vrot.lane.b32.xlu0 %v2109, 124
      %v2130 = vpop.permute.xlu0 %2129
      %2131 = vrot.lane.b32.xlu0 %v2110, 124
      %v2132 = vpop.permute.xlu0 %2131
      %2133 = vrot.lane.b32.xlu0 %v2111, 124
      %v2134 = vpop.permute.xlu0 %2133
      %2135 = vrot.lane.b32.xlu0 %v2112, 124
      %v2136 = vpop.permute.xlu0 %2135
      %2145 = vst.msk [vmem:[#allocation2 + $0xa0] sm:$0xf] %vm274, %v2122
      %2146 = vst.msk [vmem:[#allocation2 + $0xa4] sm:$0xf] %vm274, %v2124
      %2147 = vst.msk [vmem:[#allocation2 + $0xa8] sm:$0xf] %vm274, %v2126
      %2148 = vst.msk [vmem:[#allocation2 + $0xac] sm:$0xf] %vm274, %v2128
      %2149 = vst.msk [vmem:[#allocation2 + $0xb0] sm:$0xf] %vm274, %v2130
      %2150 = vst.msk [vmem:[#allocation2 + $0xb4] sm:$0xf] %vm274, %v2132
      %2151 = vst.msk [vmem:[#allocation2 + $0xb8] sm:$0xf] %vm274, %v2134
      %2152 = vst.msk [vmem:[#allocation2 + $0xbc] sm:$0xf] %vm274, %v2136
      %v2153 = vld [vmem:[%s348] sm:$0xf]
      %v2154 = vld [vmem:[%s348 + $0x4] sm:$0xf]
      %v2155 = vld [vmem:[%s348 + $0x8] sm:$0xf]
      %v2156 = vld [vmem:[%s348 + $0xc] sm:$0xf]
      %v2157 = vld [vmem:[%s348 + $0x10] sm:$0xf]
      %v2158 = vld [vmem:[%s348 + $0x14] sm:$0xf]
      %v2159 = vld [vmem:[%s348 + $0x18] sm:$0xf]
      %v2160 = vld [vmem:[%s348 + $0x1c] sm:$0xf]
      %2169 = vrot.lane.b32.xlu0 %v2153, 125
      %v2170 = vpop.permute.xlu0 %2169
      %2171 = vrot.lane.b32.xlu0 %v2154, 125
      %v2172 = vpop.permute.xlu0 %2171
      %2173 = vrot.lane.b32.xlu0 %v2155, 125
      %v2174 = vpop.permute.xlu0 %2173
      %2175 = vrot.lane.b32.xlu0 %v2156, 125
      %v2176 = vpop.permute.xlu0 %2175
      %2177 = vrot.lane.b32.xlu0 %v2157, 125
      %v2178 = vpop.permute.xlu0 %2177
      %2179 = vrot.lane.b32.xlu0 %v2158, 125
      %v2180 = vpop.permute.xlu0 %2179
      %2181 = vrot.lane.b32.xlu0 %v2159, 125
      %v2182 = vpop.permute.xlu0 %2181
      %2183 = vrot.lane.b32.xlu0 %v2160, 125
      %v2184 = vpop.permute.xlu0 %2183
      %2193 = vst.msk [vmem:[#allocation2 + $0xc0] sm:$0xf] %vm274, %v2170
      %2194 = vst.msk [vmem:[#allocation2 + $0xc4] sm:$0xf] %vm274, %v2172
      %2195 = vst.msk [vmem:[#allocation2 + $0xc8] sm:$0xf] %vm274, %v2174
      %2196 = vst.msk [vmem:[#allocation2 + $0xcc] sm:$0xf] %vm274, %v2176
      %2197 = vst.msk [vmem:[#allocation2 + $0xd0] sm:$0xf] %vm274, %v2178
      %2198 = vst.msk [vmem:[#allocation2 + $0xd4] sm:$0xf] %vm274, %v2180
      %2199 = vst.msk [vmem:[#allocation2 + $0xd8] sm:$0xf] %vm274, %v2182
      %2200 = vst.msk [vmem:[#allocation2 + $0xdc] sm:$0xf] %vm274, %v2184
      %v2201 = vld [vmem:[%s365] sm:$0xf]
      %v2202 = vld [vmem:[%s365 + $0x4] sm:$0xf]
      %v2203 = vld [vmem:[%s365 + $0x8] sm:$0xf]
      %v2204 = vld [vmem:[%s365 + $0xc] sm:$0xf]
      %v2205 = vld [vmem:[%s365 + $0x10] sm:$0xf]
      %v2206 = vld [vmem:[%s365 + $0x14] sm:$0xf]
      %v2207 = vld [vmem:[%s365 + $0x18] sm:$0xf]
      %v2208 = vld [vmem:[%s365 + $0x1c] sm:$0xf]
      %2217 = vrot.lane.b32.xlu0 %v2201, 125
      %v2218 = vpop.permute.xlu0 %2217
      %2219 = vrot.lane.b32.xlu0 %v2202, 125
      %v2220 = vpop.permute.xlu0 %2219
      %2221 = vrot.lane.b32.xlu0 %v2203, 125
      %v2222 = vpop.permute.xlu0 %2221
      %2223 = vrot.lane.b32.xlu0 %v2204, 125
      %v2224 = vpop.permute.xlu0 %2223
      %2225 = vrot.lane.b32.xlu0 %v2205, 125
      %v2226 = vpop.permute.xlu0 %2225
      %2227 = vrot.lane.b32.xlu0 %v2206, 125
      %v2228 = vpop.permute.xlu0 %2227
      %2229 = vrot.lane.b32.xlu0 %v2207, 125
      %v2230 = vpop.permute.xlu0 %2229
      %2231 = vrot.lane.b32.xlu0 %v2208, 125
      %v2232 = vpop.permute.xlu0 %2231
      %2241 = vst.msk [vmem:[#allocation2 + $0xe0] sm:$0xf] %vm274, %v2218
      %2242 = vst.msk [vmem:[#allocation2 + $0xe4] sm:$0xf] %vm274, %v2220
      %2243 = vst.msk [vmem:[#allocation2 + $0xe8] sm:$0xf] %vm274, %v2222
      %2244 = vst.msk [vmem:[#allocation2 + $0xec] sm:$0xf] %vm274, %v2224
      %2245 = vst.msk [vmem:[#allocation2 + $0xf0] sm:$0xf] %vm274, %v2226
      %2246 = vst.msk [vmem:[#allocation2 + $0xf4] sm:$0xf] %vm274, %v2228
      %2247 = vst.msk [vmem:[#allocation2 + $0xf8] sm:$0xf] %vm274, %v2230
      %2248 = vst.msk [vmem:[#allocation2 + $0xfc] sm:$0xf] %vm274, %v2232
      %v2249 = vld [vmem:[%s348] sm:$0xf]
      %v2250 = vld [vmem:[%s348 + $0x4] sm:$0xf]
      %v2251 = vld [vmem:[%s348 + $0x8] sm:$0xf]
      %v2252 = vld [vmem:[%s348 + $0xc] sm:$0xf]
      %v2253 = vld [vmem:[%s348 + $0x10] sm:$0xf]
      %v2254 = vld [vmem:[%s348 + $0x14] sm:$0xf]
      %v2255 = vld [vmem:[%s348 + $0x18] sm:$0xf]
      %v2256 = vld [vmem:[%s348 + $0x1c] sm:$0xf]
      %2265 = vrot.lane.b32.xlu0 %v2249, 124
      %v2266 = vpop.permute.xlu0 %2265
      %2267 = vrot.lane.b32.xlu0 %v2250, 124
      %v2268 = vpop.permute.xlu0 %2267
      %2269 = vrot.lane.b32.xlu0 %v2251, 124
      %v2270 = vpop.permute.xlu0 %2269
      %2271 = vrot.lane.b32.xlu0 %v2252, 124
      %v2272 = vpop.permute.xlu0 %2271
      %2273 = vrot.lane.b32.xlu0 %v2253, 124
      %v2274 = vpop.permute.xlu0 %2273
      %2275 = vrot.lane.b32.xlu0 %v2254, 124
      %v2276 = vpop.permute.xlu0 %2275
      %2277 = vrot.lane.b32.xlu0 %v2255, 124
      %v2278 = vpop.permute.xlu0 %2277
      %2279 = vrot.lane.b32.xlu0 %v2256, 124
      %v2280 = vpop.permute.xlu0 %2279
      %2289 = vst.msk [vmem:[#allocation2 + $0x100] sm:$0xf] %vm274, %v2266
      %2290 = vst.msk [vmem:[#allocation2 + $0x104] sm:$0xf] %vm274, %v2268
      %2291 = vst.msk [vmem:[#allocation2 + $0x108] sm:$0xf] %vm274, %v2270
      %2292 = vst.msk [vmem:[#allocation2 + $0x10c] sm:$0xf] %vm274, %v2272
      %2293 = vst.msk [vmem:[#allocation2 + $0x110] sm:$0xf] %vm274, %v2274
      %2294 = vst.msk [vmem:[#allocation2 + $0x114] sm:$0xf] %vm274, %v2276
      %2295 = vst.msk [vmem:[#allocation2 + $0x118] sm:$0xf] %vm274, %v2278
      %2296 = vst.msk [vmem:[#allocation2 + $0x11c] sm:$0xf] %vm274, %v2280
      %v2297 = vld [vmem:[#allocation2] sm:$0xf]
      %v2298 = vld [vmem:[#allocation2 + $0x4] sm:$0xf]
      %v2299 = vld [vmem:[#allocation2 + $0x8] sm:$0xf]
      %v2300 = vld [vmem:[#allocation2 + $0xc] sm:$0xf]
      %v2301 = vld [vmem:[#allocation2 + $0x10] sm:$0xf]
      %v2302 = vld [vmem:[#allocation2 + $0x14] sm:$0xf]
      %v2303 = vld [vmem:[#allocation2 + $0x18] sm:$0xf]
      %v2304 = vld [vmem:[#allocation2 + $0x1c] sm:$0xf]
      %v2305 = vld [vmem:[#allocation2 + $0x20] sm:$0xf]
      %v2306 = vld [vmem:[#allocation2 + $0x24] sm:$0xf]
      %v2307 = vld [vmem:[#allocation2 + $0x28] sm:$0xf]
      %v2308 = vld [vmem:[#allocation2 + $0x2c] sm:$0xf]
      %v2309 = vld [vmem:[#allocation2 + $0x30] sm:$0xf]
      %v2310 = vld [vmem:[#allocation2 + $0x34] sm:$0xf]
      %v2311 = vld [vmem:[#allocation2 + $0x38] sm:$0xf]
      %v2312 = vld [vmem:[#allocation2 + $0x3c] sm:$0xf]
      %v2313 = vld [vmem:[#allocation2 + $0x40] sm:$0xf]
      %v2314 = vld [vmem:[#allocation2 + $0x44] sm:$0xf]
      %v2315 = vld [vmem:[#allocation2 + $0x48] sm:$0xf]
      %v2316 = vld [vmem:[#allocation2 + $0x4c] sm:$0xf]
      %v2317 = vld [vmem:[#allocation2 + $0x50] sm:$0xf]
      %v2318 = vld [vmem:[#allocation2 + $0x54] sm:$0xf]
      %v2319 = vld [vmem:[#allocation2 + $0x58] sm:$0xf]
      %v2320 = vld [vmem:[#allocation2 + $0x5c] sm:$0xf]
      %v2321 = vld [vmem:[#allocation2 + $0x60] sm:$0xf]
      %v2322 = vld [vmem:[#allocation2 + $0x64] sm:$0xf]
      %v2323 = vld [vmem:[#allocation2 + $0x68] sm:$0xf]
      %v2324 = vld [vmem:[#allocation2 + $0x6c] sm:$0xf]
      %v2325 = vld [vmem:[#allocation2 + $0x70] sm:$0xf]
      %v2326 = vld [vmem:[#allocation2 + $0x74] sm:$0xf]
      %v2327 = vld [vmem:[#allocation2 + $0x78] sm:$0xf]
      %v2328 = vld [vmem:[#allocation2 + $0x7c] sm:$0xf]
      %v2329 = vld [vmem:[#allocation2 + $0x80] sm:$0xf]
      %v2330 = vld [vmem:[#allocation2 + $0x84] sm:$0xf]
      %v2331 = vld [vmem:[#allocation2 + $0x88] sm:$0xf]
      %v2332 = vld [vmem:[#allocation2 + $0x8c] sm:$0xf]
      %v2333 = vld [vmem:[#allocation2 + $0x90] sm:$0xf]
      %v2334 = vld [vmem:[#allocation2 + $0x94] sm:$0xf]
      %v2335 = vld [vmem:[#allocation2 + $0x98] sm:$0xf]
      %v2336 = vld [vmem:[#allocation2 + $0x9c] sm:$0xf]
      %v2337 = vld [vmem:[#allocation2 + $0xa0] sm:$0xf]
      %v2338 = vld [vmem:[#allocation2 + $0xa4] sm:$0xf]
      %v2339 = vld [vmem:[#allocation2 + $0xa8] sm:$0xf]
      %v2340 = vld [vmem:[#allocation2 + $0xac] sm:$0xf]
      %v2341 = vld [vmem:[#allocation2 + $0xb0] sm:$0xf]
      %v2342 = vld [vmem:[#allocation2 + $0xb4] sm:$0xf]
      %v2343 = vld [vmem:[#allocation2 + $0xb8] sm:$0xf]
      %v2344 = vld [vmem:[#allocation2 + $0xbc] sm:$0xf]
      %v2345 = vld [vmem:[#allocation2 + $0xc0] sm:$0xf]
      %v2346 = vld [vmem:[#allocation2 + $0xc4] sm:$0xf]
      %v2347 = vld [vmem:[#allocation2 + $0xc8] sm:$0xf]
      %v2348 = vld [vmem:[#allocation2 + $0xcc] sm:$0xf]
      %v2349 = vld [vmem:[#allocation2 + $0xd0] sm:$0xf]
      %v2350 = vld [vmem:[#allocation2 + $0xd4] sm:$0xf]
      %v2351 = vld [vmem:[#allocation2 + $0xd8] sm:$0xf]
      %v2352 = vld [vmem:[#allocation2 + $0xdc] sm:$0xf]
      %v2353 = vld [vmem:[#allocation2 + $0xe0] sm:$0xf]
      %v2354 = vld [vmem:[#allocation2 + $0xe4] sm:$0xf]
      %v2355 = vld [vmem:[#allocation2 + $0xe8] sm:$0xf]
      %v2356 = vld [vmem:[#allocation2 + $0xec] sm:$0xf]
      %v2357 = vld [vmem:[#allocation2 + $0xf0] sm:$0xf]
      %v2358 = vld [vmem:[#allocation2 + $0xf4] sm:$0xf]
      %v2359 = vld [vmem:[#allocation2 + $0xf8] sm:$0xf]
      %v2360 = vld [vmem:[#allocation2 + $0xfc] sm:$0xf]
      %v2361 = vld [vmem:[#allocation2 + $0x100] sm:$0xf]
      %v2362 = vld [vmem:[#allocation2 + $0x104] sm:$0xf]
      %v2363 = vld [vmem:[#allocation2 + $0x108] sm:$0xf]
      %v2364 = vld [vmem:[#allocation2 + $0x10c] sm:$0xf]
      %v2365 = vld [vmem:[#allocation2 + $0x110] sm:$0xf]
      %v2366 = vld [vmem:[#allocation2 + $0x114] sm:$0xf]
      %v2367 = vld [vmem:[#allocation2 + $0x118] sm:$0xf]
      %v2368 = vld [vmem:[#allocation2 + $0x11c] sm:$0xf]
      %v2441 = vunpack.c.l.b16 %v2297
      %v2442 = vunpack.c.l.b16 %v2298
      %v2443 = vunpack.c.l.b16 %v2299
      %v2444 = vunpack.c.l.b16 %v2300
      %v2445 = vunpack.c.l.b16 %v2301
      %v2446 = vunpack.c.l.b16 %v2302
      %v2447 = vunpack.c.l.b16 %v2303
      %v2448 = vunpack.c.l.b16 %v2304
      %v2449 = vunpack.c.l.b16 %v2305
      %v2450 = vunpack.c.l.b16 %v2306
      %v2451 = vunpack.c.l.b16 %v2307
      %v2452 = vunpack.c.l.b16 %v2308
      %v2453 = vunpack.c.l.b16 %v2309
      %v2454 = vunpack.c.l.b16 %v2310
      %v2455 = vunpack.c.l.b16 %v2311
      %v2456 = vunpack.c.l.b16 %v2312
      %v2457 = vunpack.c.l.b16 %v2313
      %v2458 = vunpack.c.l.b16 %v2314
      %v2459 = vunpack.c.l.b16 %v2315
      %v2460 = vunpack.c.l.b16 %v2316
      %v2461 = vunpack.c.l.b16 %v2317
      %v2462 = vunpack.c.l.b16 %v2318
      %v2463 = vunpack.c.l.b16 %v2319
      %v2464 = vunpack.c.l.b16 %v2320
      %v2465 = vunpack.c.l.b16 %v2321
      %v2466 = vunpack.c.l.b16 %v2322
      %v2467 = vunpack.c.l.b16 %v2323
      %v2468 = vunpack.c.l.b16 %v2324
      %v2469 = vunpack.c.l.b16 %v2325
      %v2470 = vunpack.c.l.b16 %v2326
      %v2471 = vunpack.c.l.b16 %v2327
      %v2472 = vunpack.c.l.b16 %v2328
      %v2473 = vunpack.c.l.b16 %v2329
      %v2474 = vunpack.c.l.b16 %v2330
      %v2475 = vunpack.c.l.b16 %v2331
      %v2476 = vunpack.c.l.b16 %v2332
      %v2477 = vunpack.c.l.b16 %v2333
      %v2478 = vunpack.c.l.b16 %v2334
      %v2479 = vunpack.c.l.b16 %v2335
      %v2480 = vunpack.c.l.b16 %v2336
      %v2481 = vunpack.c.l.b16 %v2337
      %v2482 = vunpack.c.l.b16 %v2338
      %v2483 = vunpack.c.l.b16 %v2339
      %v2484 = vunpack.c.l.b16 %v2340
      %v2485 = vunpack.c.l.b16 %v2341
      %v2486 = vunpack.c.l.b16 %v2342
      %v2487 = vunpack.c.l.b16 %v2343
      %v2488 = vunpack.c.l.b16 %v2344
      %v2489 = vunpack.c.l.b16 %v2345
      %v2490 = vunpack.c.l.b16 %v2346
      %v2491 = vunpack.c.l.b16 %v2347
      %v2492 = vunpack.c.l.b16 %v2348
      %v2493 = vunpack.c.l.b16 %v2349
      %v2494 = vunpack.c.l.b16 %v2350
      %v2495 = vunpack.c.l.b16 %v2351
      %v2496 = vunpack.c.l.b16 %v2352
      %v2497 = vunpack.c.l.b16 %v2353
      %v2498 = vunpack.c.l.b16 %v2354
      %v2499 = vunpack.c.l.b16 %v2355
      %v2500 = vunpack.c.l.b16 %v2356
      %v2501 = vunpack.c.l.b16 %v2357
      %v2502 = vunpack.c.l.b16 %v2358
      %v2503 = vunpack.c.l.b16 %v2359
      %v2504 = vunpack.c.l.b16 %v2360
      %v2505 = vunpack.c.l.b16 %v2361
      %v2506 = vunpack.c.l.b16 %v2362
      %v2507 = vunpack.c.l.b16 %v2363
      %v2508 = vunpack.c.l.b16 %v2364
      %v2509 = vunpack.c.l.b16 %v2365
      %v2510 = vunpack.c.l.b16 %v2366
      %v2511 = vunpack.c.l.b16 %v2367
      %v2512 = vunpack.c.l.b16 %v2368
      %v2513 = vpack.c.b16 %v2442, %v2441
      %v2514 = vpack.c.b16 %v2444, %v2443
      %v2515 = vpack.c.b16 %v2446, %v2445
      %v2516 = vpack.c.b16 %v2448, %v2447
      %v2517 = vpack.c.b16 %v2450, %v2449
      %v2518 = vpack.c.b16 %v2452, %v2451
      %v2519 = vpack.c.b16 %v2454, %v2453
      %v2520 = vpack.c.b16 %v2456, %v2455
      %v2521 = vpack.c.b16 %v2458, %v2457
      %v2522 = vpack.c.b16 %v2460, %v2459
      %v2523 = vpack.c.b16 %v2462, %v2461
      %v2524 = vpack.c.b16 %v2464, %v2463
      %v2525 = vpack.c.b16 %v2466, %v2465
      %v2526 = vpack.c.b16 %v2468, %v2467
      %v2527 = vpack.c.b16 %v2470, %v2469
      %v2528 = vpack.c.b16 %v2472, %v2471
      %v2529 = vpack.c.b16 %v2474, %v2473
      %v2530 = vpack.c.b16 %v2476, %v2475
      %v2531 = vpack.c.b16 %v2478, %v2477
      %v2532 = vpack.c.b16 %v2480, %v2479
      %v2533 = vpack.c.b16 %v2482, %v2481
      %v2534 = vpack.c.b16 %v2484, %v2483
      %v2535 = vpack.c.b16 %v2486, %v2485
      %v2536 = vpack.c.b16 %v2488, %v2487
      %v2537 = vpack.c.b16 %v2490, %v2489
      %v2538 = vpack.c.b16 %v2492, %v2491
      %v2539 = vpack.c.b16 %v2494, %v2493
      %v2540 = vpack.c.b16 %v2496, %v2495
      %v2541 = vpack.c.b16 %v2498, %v2497
      %v2542 = vpack.c.b16 %v2500, %v2499
      %v2543 = vpack.c.b16 %v2502, %v2501
      %v2544 = vpack.c.b16 %v2504, %v2503
      %v2545 = vpack.c.b16 %v2506, %v2505
      %v2546 = vpack.c.b16 %v2508, %v2507
      %v2547 = vpack.c.b16 %v2510, %v2509
      %v2548 = vpack.c.b16 %v2512, %v2511
      %2585 = vmatpush.bf16.msra.mxu0 %v2520
      %2586 = vmatpush.bf16.msra.mxu0 %v2519
      %2587 = vmatpush.bf16.msra.mxu0 %v2518
      %2588 = vmatpush.bf16.msra.mxu0 %v2517
      %2589 = vmatpush.bf16.msra.mxu0 %v2516
      %2590 = vmatpush.bf16.msra.mxu0 %v2515
      %2591 = vmatpush.bf16.msra.mxu0 %v2514
      %2592 = vmatpush.bf16.msra.mxu0 %v2513
      %2593 = vmatmul.bf16.gmra.mxu0 %v710
      %v2594 = vpop.f32.mrf.mxu0
      %v2595 = vadd.f32 0.0, %v2594
      %v2596 = vpop.f32.mrf.mxu0
      %v2597 = vadd.f32 0.0, %v2596
      %2598 = vmatmul.bf16.gmra.mxu0 %v715
      %v2599 = vpop.f32.mrf.mxu0
      %v2600 = vadd.f32 0.0, %v2599
      %v2601 = vpop.f32.mrf.mxu0
      %v2602 = vadd.f32 0.0, %v2601
      %2603 = vmatmul.bf16.gmra.mxu0 %v720
      %v2604 = vpop.f32.mrf.mxu0
      %v2605 = vadd.f32 0.0, %v2604
      %v2606 = vpop.f32.mrf.mxu0
      %v2607 = vadd.f32 0.0, %v2606
      %2608 = vmatmul.bf16.gmra.mxu0 %v725
      %v2609 = vpop.f32.mrf.mxu0
      %v2610 = vadd.f32 0.0, %v2609
      %v2611 = vpop.f32.mrf.mxu0
      %v2612 = vadd.f32 0.0, %v2611
      %2613 = vdwg.mxu0
      %2614 = vmatpush.bf16.msra.mxu0 %v2528
      %2615 = vmatpush.bf16.msra.mxu0 %v2527
      %2616 = vmatpush.bf16.msra.mxu0 %v2526
      %2617 = vmatpush.bf16.msra.mxu0 %v2525
      %2618 = vmatpush.bf16.msra.mxu0 %v2524
      %2619 = vmatpush.bf16.msra.mxu0 %v2523
      %2620 = vmatpush.bf16.msra.mxu0 %v2522
      %2621 = vmatpush.bf16.msra.mxu0 %v2521
      %2622 = vmatmul.bf16.gmra.mxu0 %v711
      %v2623 = vpop.f32.mrf.mxu0
      %v2624 = vadd.f32 %v2595, %v2623
      %v2625 = vpop.f32.mrf.mxu0
      %v2626 = vadd.f32 %v2597, %v2625
      %2627 = vmatmul.bf16.gmra.mxu0 %v716
      %v2628 = vpop.f32.mrf.mxu0
      %v2629 = vadd.f32 %v2600, %v2628
      %v2630 = vpop.f32.mrf.mxu0
      %v2631 = vadd.f32 %v2602, %v2630
      %2632 = vmatmul.bf16.gmra.mxu0 %v721
      %v2633 = vpop.f32.mrf.mxu0
      %v2634 = vadd.f32 %v2605, %v2633
      %v2635 = vpop.f32.mrf.mxu0
      %v2636 = vadd.f32 %v2607, %v2635
      %2637 = vmatmul.bf16.gmra.mxu0 %v726
      %v2638 = vpop.f32.mrf.mxu0
      %v2639 = vadd.f32 %v2610, %v2638
      %v2640 = vpop.f32.mrf.mxu0
      %v2641 = vadd.f32 %v2612, %v2640
      %2642 = vdwg.mxu0
      %2643 = vmatpush.bf16.msra.mxu0 %v2536
      %2644 = vmatpush.bf16.msra.mxu0 %v2535
      %2645 = vmatpush.bf16.msra.mxu0 %v2534
      %2646 = vmatpush.bf16.msra.mxu0 %v2533
      %2647 = vmatpush.bf16.msra.mxu0 %v2532
      %2648 = vmatpush.bf16.msra.mxu0 %v2531
      %2649 = vmatpush.bf16.msra.mxu0 %v2530
      %2650 = vmatpush.bf16.msra.mxu0 %v2529
      %2651 = vmatmul.bf16.gmra.mxu0 %v712
      %v2652 = vpop.f32.mrf.mxu0
      %v2653 = vadd.f32 %v2624, %v2652
      %v2654 = vpop.f32.mrf.mxu0
      %v2655 = vadd.f32 %v2626, %v2654
      %2656 = vmatmul.bf16.gmra.mxu0 %v717
      %v2657 = vpop.f32.mrf.mxu0
      %v2658 = vadd.f32 %v2629, %v2657
      %v2659 = vpop.f32.mrf.mxu0
      %v2660 = vadd.f32 %v2631, %v2659
      %2661 = vmatmul.bf16.gmra.mxu0 %v722
      %v2662 = vpop.f32.mrf.mxu0
      %v2663 = vadd.f32 %v2634, %v2662
      %v2664 = vpop.f32.mrf.mxu0
      %v2665 = vadd.f32 %v2636, %v2664
      %2666 = vmatmul.bf16.gmra.mxu0 %v727
      %v2667 = vpop.f32.mrf.mxu0
      %v2668 = vadd.f32 %v2639, %v2667
      %v2669 = vpop.f32.mrf.mxu0
      %v2670 = vadd.f32 %v2641, %v2669
      %2671 = vdwg.mxu0
      %2672 = vmatpush.bf16.msra.mxu0 %v2544
      %2673 = vmatpush.bf16.msra.mxu0 %v2543
      %2674 = vmatpush.bf16.msra.mxu0 %v2542
      %2675 = vmatpush.bf16.msra.mxu0 %v2541
      %2676 = vmatpush.bf16.msra.mxu0 %v2540
      %2677 = vmatpush.bf16.msra.mxu0 %v2539
      %2678 = vmatpush.bf16.msra.mxu0 %v2538
      %2679 = vmatpush.bf16.msra.mxu0 %v2537
      %2680 = vmatmul.bf16.gmra.mxu0 %v713
      %v2681 = vpop.f32.mrf.mxu0
      %v2682 = vadd.f32 %v2653, %v2681
      %v2683 = vpop.f32.mrf.mxu0
      %v2684 = vadd.f32 %v2655, %v2683
      %2685 = vmatmul.bf16.gmra.mxu0 %v718
      %v2686 = vpop.f32.mrf.mxu0
      %v2687 = vadd.f32 %v2658, %v2686
      %v2688 = vpop.f32.mrf.mxu0
      %v2689 = vadd.f32 %v2660, %v2688
      %2690 = vmatmul.bf16.gmra.mxu0 %v723
      %v2691 = vpop.f32.mrf.mxu0
      %v2692 = vadd.f32 %v2663, %v2691
      %v2693 = vpop.f32.mrf.mxu0
      %v2694 = vadd.f32 %v2665, %v2693
      %2695 = vmatmul.bf16.gmra.mxu0 %v728
      %v2696 = vpop.f32.mrf.mxu0
      %v2697 = vadd.f32 %v2668, %v2696
      %v2698 = vpop.f32.mrf.mxu0
      %v2699 = vadd.f32 %v2670, %v2698
      %2700 = vdwg.mxu0
      %2701 = vmatpush.bf16.msra.mxu0 0
      %2702 = vmatpush.bf16.msra.mxu0 0
      %2703 = vmatpush.bf16.msra.mxu0 0
      %2704 = vmatpush.bf16.msra.mxu0 0
      %2705 = vmatpush.bf16.msra.mxu0 %v2548
      %2706 = vmatpush.bf16.msra.mxu0 %v2547
      %2707 = vmatpush.bf16.msra.mxu0 %v2546
      %2708 = vmatpush.bf16.msra.mxu0 %v2545
      %2709 = vmatmul.bf16.gmra.mxu0 %v964
      %v2710 = vpop.f32.mrf.mxu0
      %v2711 = vadd.f32 %v2682, %v2710
      %v2712 = vpop.f32.mrf.mxu0
      %v2713 = vadd.f32 %v2684, %v2712
      %2714 = vmatmul.bf16.gmra.mxu0 %v967
      %v2715 = vpop.f32.mrf.mxu0
      %v2716 = vadd.f32 %v2687, %v2715
      %v2717 = vpop.f32.mrf.mxu0
      %v2718 = vadd.f32 %v2689, %v2717
      %2719 = vmatmul.bf16.gmra.mxu0 %v970
      %v2720 = vpop.f32.mrf.mxu0
      %v2721 = vadd.f32 %v2692, %v2720
      %v2722 = vpop.f32.mrf.mxu0
      %v2723 = vadd.f32 %v2694, %v2722
      %2724 = vmatmul.bf16.gmra.mxu0 %v973
      %v2725 = vpop.f32.mrf.mxu0
      %v2726 = vadd.f32 %v2697, %v2725
      %v2727 = vpop.f32.mrf.mxu0
      %v2728 = vadd.f32 %v2699, %v2727
      %2729 = vdwg.mxu0
      %v2730 = vmax.f32 %v1921, %v2711
      %v2731 = vmax.f32 %v1922, %v2713
      %v2732 = vmax.f32 %v1923, %v2716
      %v2733 = vmax.f32 %v1924, %v2718
      %v2734 = vmax.f32 %v1925, %v2721
      %v2735 = vmax.f32 %v1926, %v2723
      %v2736 = vmax.f32 %v1927, %v2726
      %v2737 = vmax.f32 %v1928, %v2728
      %v2738 = vld [vmem:[%s365] sm:$0xf]
      %v2739 = vld [vmem:[%s365 + $0x4] sm:$0xf]
      %v2740 = vld [vmem:[%s365 + $0x8] sm:$0xf]
      %v2741 = vld [vmem:[%s365 + $0xc] sm:$0xf]
      %v2742 = vld [vmem:[%s365 + $0x10] sm:$0xf]
      %v2743 = vld [vmem:[%s365 + $0x14] sm:$0xf]
      %v2744 = vld [vmem:[%s365 + $0x18] sm:$0xf]
      %v2745 = vld [vmem:[%s365 + $0x1c] sm:$0xf]
      %2746 = vst.msk [vmem:[#allocation2] sm:$0xf] %vm274, %v2738
      %2747 = vst.msk [vmem:[#allocation2 + $0x4] sm:$0xf] %vm274, %v2739
      %2748 = vst.msk [vmem:[#allocation2 + $0x8] sm:$0xf] %vm274, %v2740
      %2749 = vst.msk [vmem:[#allocation2 + $0xc] sm:$0xf] %vm274, %v2741
      %2750 = vst.msk [vmem:[#allocation2 + $0x10] sm:$0xf] %vm274, %v2742
      %2751 = vst.msk [vmem:[#allocation2 + $0x14] sm:$0xf] %vm274, %v2743
      %2752 = vst.msk [vmem:[#allocation2 + $0x18] sm:$0xf] %vm274, %v2744
      %2753 = vst.msk [vmem:[#allocation2 + $0x1c] sm:$0xf] %vm274, %v2745
      %v2754 = vld [vmem:[%s348] sm:$0xf]
      %v2755 = vld [vmem:[%s348 + $0x4] sm:$0xf]
      %v2756 = vld [vmem:[%s348 + $0x8] sm:$0xf]
      %v2757 = vld [vmem:[%s348 + $0xc] sm:$0xf]
      %v2758 = vld [vmem:[%s348 + $0x10] sm:$0xf]
      %v2759 = vld [vmem:[%s348 + $0x14] sm:$0xf]
      %v2760 = vld [vmem:[%s348 + $0x18] sm:$0xf]
      %v2761 = vld [vmem:[%s348 + $0x1c] sm:$0xf]
      %2770 = vrot.lane.b32.xlu0 %v2754, 127
      %v2771 = vpop.permute.xlu0 %2770
      %2772 = vrot.lane.b32.xlu0 %v2755, 127
      %v2773 = vpop.permute.xlu0 %2772
      %2774 = vrot.lane.b32.xlu0 %v2756, 127
      %v2775 = vpop.permute.xlu0 %2774
      %2776 = vrot.lane.b32.xlu0 %v2757, 127
      %v2777 = vpop.permute.xlu0 %2776
      %2778 = vrot.lane.b32.xlu0 %v2758, 127
      %v2779 = vpop.permute.xlu0 %2778
      %2780 = vrot.lane.b32.xlu0 %v2759, 127
      %v2781 = vpop.permute.xlu0 %2780
      %2782 = vrot.lane.b32.xlu0 %v2760, 127
      %v2783 = vpop.permute.xlu0 %2782
      %2784 = vrot.lane.b32.xlu0 %v2761, 127
      %v2785 = vpop.permute.xlu0 %2784
      %2794 = vst.msk [vmem:[#allocation2 + $0x20] sm:$0xf] %vm274, %v2771
      %2795 = vst.msk [vmem:[#allocation2 + $0x24] sm:$0xf] %vm274, %v2773
      %2796 = vst.msk [vmem:[#allocation2 + $0x28] sm:$0xf] %vm274, %v2775
      %2797 = vst.msk [vmem:[#allocation2 + $0x2c] sm:$0xf] %vm274, %v2777
      %2798 = vst.msk [vmem:[#allocation2 + $0x30] sm:$0xf] %vm274, %v2779
      %2799 = vst.msk [vmem:[#allocation2 + $0x34] sm:$0xf] %vm274, %v2781
      %2800 = vst.msk [vmem:[#allocation2 + $0x38] sm:$0xf] %vm274, %v2783
      %2801 = vst.msk [vmem:[#allocation2 + $0x3c] sm:$0xf] %vm274, %v2785
      %v2802 = vld [vmem:[%s365] sm:$0xf]
      %v2803 = vld [vmem:[%s365 + $0x4] sm:$0xf]
      %v2804 = vld [vmem:[%s365 + $0x8] sm:$0xf]
      %v2805 = vld [vmem:[%s365 + $0xc] sm:$0xf]
      %v2806 = vld [vmem:[%s365 + $0x10] sm:$0xf]
      %v2807 = vld [vmem:[%s365 + $0x14] sm:$0xf]
      %v2808 = vld [vmem:[%s365 + $0x18] sm:$0xf]
      %v2809 = vld [vmem:[%s365 + $0x1c] sm:$0xf]
      %2818 = vrot.lane.b32.xlu0 %v2802, 127
      %v2819 = vpop.permute.xlu0 %2818
      %2820 = vrot.lane.b32.xlu0 %v2803, 127
      %v2821 = vpop.permute.xlu0 %2820
      %2822 = vrot.lane.b32.xlu0 %v2804, 127
      %v2823 = vpop.permute.xlu0 %2822
      %2824 = vrot.lane.b32.xlu0 %v2805, 127
      %v2825 = vpop.permute.xlu0 %2824
      %2826 = vrot.lane.b32.xlu0 %v2806, 127
      %v2827 = vpop.permute.xlu0 %2826
      %2828 = vrot.lane.b32.xlu0 %v2807, 127
      %v2829 = vpop.permute.xlu0 %2828
      %2830 = vrot.lane.b32.xlu0 %v2808, 127
      %v2831 = vpop.permute.xlu0 %2830
      %2832 = vrot.lane.b32.xlu0 %v2809, 127
      %v2833 = vpop.permute.xlu0 %2832
      %2842 = vst.msk [vmem:[#allocation2 + $0x40] sm:$0xf] %vm274, %v2819
      %2843 = vst.msk [vmem:[#allocation2 + $0x44] sm:$0xf] %vm274, %v2821
      %2844 = vst.msk [vmem:[#allocation2 + $0x48] sm:$0xf] %vm274, %v2823
      %2845 = vst.msk [vmem:[#allocation2 + $0x4c] sm:$0xf] %vm274, %v2825
      %2846 = vst.msk [vmem:[#allocation2 + $0x50] sm:$0xf] %vm274, %v2827
      %2847 = vst.msk [vmem:[#allocation2 + $0x54] sm:$0xf] %vm274, %v2829
      %2848 = vst.msk [vmem:[#allocation2 + $0x58] sm:$0xf] %vm274, %v2831
      %2849 = vst.msk [vmem:[#allocation2 + $0x5c] sm:$0xf] %vm274, %v2833
      %v2850 = vld [vmem:[%s283] sm:$0xf]
      %v2851 = vld [vmem:[%s283 + $0x4] sm:$0xf]
      %v2852 = vld [vmem:[%s283 + $0x8] sm:$0xf]
      %v2853 = vld [vmem:[%s283 + $0xc] sm:$0xf]
      %v2854 = vld [vmem:[%s283 + $0x10] sm:$0xf]
      %v2855 = vld [vmem:[%s283 + $0x14] sm:$0xf]
      %v2856 = vld [vmem:[%s283 + $0x18] sm:$0xf]
      %v2857 = vld [vmem:[%s283 + $0x1c] sm:$0xf]
      %2866 = vrot.lane.b32.xlu0 %v2850, 125
      %v2867 = vpop.permute.xlu0 %2866
      %2868 = vrot.lane.b32.xlu0 %v2851, 125
      %v2869 = vpop.permute.xlu0 %2868
      %2870 = vrot.lane.b32.xlu0 %v2852, 125
      %v2871 = vpop.permute.xlu0 %2870
      %2872 = vrot.lane.b32.xlu0 %v2853, 125
      %v2873 = vpop.permute.xlu0 %2872
      %2874 = vrot.lane.b32.xlu0 %v2854, 125
      %v2875 = vpop.permute.xlu0 %2874
      %2876 = vrot.lane.b32.xlu0 %v2855, 125
      %v2877 = vpop.permute.xlu0 %2876
      %2878 = vrot.lane.b32.xlu0 %v2856, 125
      %v2879 = vpop.permute.xlu0 %2878
      %2880 = vrot.lane.b32.xlu0 %v2857, 125
      %v2881 = vpop.permute.xlu0 %2880
      %2890 = vst.msk [vmem:[#allocation2 + $0x60] sm:$0xf] %vm274, %v2867
      %2891 = vst.msk [vmem:[#allocation2 + $0x64] sm:$0xf] %vm274, %v2869
      %2892 = vst.msk [vmem:[#allocation2 + $0x68] sm:$0xf] %vm274, %v2871
      %2893 = vst.msk [vmem:[#allocation2 + $0x6c] sm:$0xf] %vm274, %v2873
      %2894 = vst.msk [vmem:[#allocation2 + $0x70] sm:$0xf] %vm274, %v2875
      %2895 = vst.msk [vmem:[#allocation2 + $0x74] sm:$0xf] %vm274, %v2877
      %2896 = vst.msk [vmem:[#allocation2 + $0x78] sm:$0xf] %vm274, %v2879
      %2897 = vst.msk [vmem:[#allocation2 + $0x7c] sm:$0xf] %vm274, %v2881
      %v2898 = vld [vmem:[%s217] sm:$0xf]
      %v2899 = vld [vmem:[%s217 + $0x4] sm:$0xf]
      %v2900 = vld [vmem:[%s217 + $0x8] sm:$0xf]
      %v2901 = vld [vmem:[%s217 + $0xc] sm:$0xf]
      %v2902 = vld [vmem:[%s217 + $0x10] sm:$0xf]
      %v2903 = vld [vmem:[%s217 + $0x14] sm:$0xf]
      %v2904 = vld [vmem:[%s217 + $0x18] sm:$0xf]
      %v2905 = vld [vmem:[%s217 + $0x1c] sm:$0xf]
      %2914 = vrot.lane.b32.xlu0 %v2898, 124
      %v2915 = vpop.permute.xlu0 %2914
      %2916 = vrot.lane.b32.xlu0 %v2899, 124
      %v2917 = vpop.permute.xlu0 %2916
      %2918 = vrot.lane.b32.xlu0 %v2900, 124
      %v2919 = vpop.permute.xlu0 %2918
      %2920 = vrot.lane.b32.xlu0 %v2901, 124
      %v2921 = vpop.permute.xlu0 %2920
      %2922 = vrot.lane.b32.xlu0 %v2902, 124
      %v2923 = vpop.permute.xlu0 %2922
      %2924 = vrot.lane.b32.xlu0 %v2903, 124
      %v2925 = vpop.permute.xlu0 %2924
      %2926 = vrot.lane.b32.xlu0 %v2904, 124
      %v2927 = vpop.permute.xlu0 %2926
      %2928 = vrot.lane.b32.xlu0 %v2905, 124
      %v2929 = vpop.permute.xlu0 %2928
      %2938 = vst.msk [vmem:[#allocation2 + $0x80] sm:$0xf] %vm274, %v2915
      %2939 = vst.msk [vmem:[#allocation2 + $0x84] sm:$0xf] %vm274, %v2917
      %2940 = vst.msk [vmem:[#allocation2 + $0x88] sm:$0xf] %vm274, %v2919
      %2941 = vst.msk [vmem:[#allocation2 + $0x8c] sm:$0xf] %vm274, %v2921
      %2942 = vst.msk [vmem:[#allocation2 + $0x90] sm:$0xf] %vm274, %v2923
      %2943 = vst.msk [vmem:[#allocation2 + $0x94] sm:$0xf] %vm274, %v2925
      %2944 = vst.msk [vmem:[#allocation2 + $0x98] sm:$0xf] %vm274, %v2927
      %2945 = vst.msk [vmem:[#allocation2 + $0x9c] sm:$0xf] %vm274, %v2929
      %v2946 = vld [vmem:[%s283] sm:$0xf]
      %v2947 = vld [vmem:[%s283 + $0x4] sm:$0xf]
      %v2948 = vld [vmem:[%s283 + $0x8] sm:$0xf]
      %v2949 = vld [vmem:[%s283 + $0xc] sm:$0xf]
      %v2950 = vld [vmem:[%s283 + $0x10] sm:$0xf]
      %v2951 = vld [vmem:[%s283 + $0x14] sm:$0xf]
      %v2952 = vld [vmem:[%s283 + $0x18] sm:$0xf]
      %v2953 = vld [vmem:[%s283 + $0x1c] sm:$0xf]
      %2962 = vrot.lane.b32.xlu0 %v2946, 124
      %v2963 = vpop.permute.xlu0 %2962
      %2964 = vrot.lane.b32.xlu0 %v2947, 124
      %v2965 = vpop.permute.xlu0 %2964
      %2966 = vrot.lane.b32.xlu0 %v2948, 124
      %v2967 = vpop.permute.xlu0 %2966
      %2968 = vrot.lane.b32.xlu0 %v2949, 124
      %v2969 = vpop.permute.xlu0 %2968
      %2970 = vrot.lane.b32.xlu0 %v2950, 124
      %v2971 = vpop.permute.xlu0 %2970
      %2972 = vrot.lane.b32.xlu0 %v2951, 124
      %v2973 = vpop.permute.xlu0 %2972
      %2974 = vrot.lane.b32.xlu0 %v2952, 124
      %v2975 = vpop.permute.xlu0 %2974
      %2976 = vrot.lane.b32.xlu0 %v2953, 124
      %v2977 = vpop.permute.xlu0 %2976
      %2986 = vst.msk [vmem:[#allocation2 + $0xa0] sm:$0xf] %vm274, %v2963
      %2987 = vst.msk [vmem:[#allocation2 + $0xa4] sm:$0xf] %vm274, %v2965
      %2988 = vst.msk [vmem:[#allocation2 + $0xa8] sm:$0xf] %vm274, %v2967
      %2989 = vst.msk [vmem:[#allocation2 + $0xac] sm:$0xf] %vm274, %v2969
      %2990 = vst.msk [vmem:[#allocation2 + $0xb0] sm:$0xf] %vm274, %v2971
      %2991 = vst.msk [vmem:[#allocation2 + $0xb4] sm:$0xf] %vm274, %v2973
      %2992 = vst.msk [vmem:[#allocation2 + $0xb8] sm:$0xf] %vm274, %v2975
      %2993 = vst.msk [vmem:[#allocation2 + $0xbc] sm:$0xf] %vm274, %v2977
      %v2994 = vld [vmem:[%s365] sm:$0xf]
      %v2995 = vld [vmem:[%s365 + $0x4] sm:$0xf]
      %v2996 = vld [vmem:[%s365 + $0x8] sm:$0xf]
      %v2997 = vld [vmem:[%s365 + $0xc] sm:$0xf]
      %v2998 = vld [vmem:[%s365 + $0x10] sm:$0xf]
      %v2999 = vld [vmem:[%s365 + $0x14] sm:$0xf]
      %v3000 = vld [vmem:[%s365 + $0x18] sm:$0xf]
      %v3001 = vld [vmem:[%s365 + $0x1c] sm:$0xf]
      %3010 = vrot.lane.b32.xlu0 %v2994, 125
      %v3011 = vpop.permute.xlu0 %3010
      %3012 = vrot.lane.b32.xlu0 %v2995, 125
      %v3013 = vpop.permute.xlu0 %3012
      %3014 = vrot.lane.b32.xlu0 %v2996, 125
      %v3015 = vpop.permute.xlu0 %3014
      %3016 = vrot.lane.b32.xlu0 %v2997, 125
      %v3017 = vpop.permute.xlu0 %3016
      %3018 = vrot.lane.b32.xlu0 %v2998, 125
      %v3019 = vpop.permute.xlu0 %3018
      %3020 = vrot.lane.b32.xlu0 %v2999, 125
      %v3021 = vpop.permute.xlu0 %3020
      %3022 = vrot.lane.b32.xlu0 %v3000, 125
      %v3023 = vpop.permute.xlu0 %3022
      %3024 = vrot.lane.b32.xlu0 %v3001, 125
      %v3025 = vpop.permute.xlu0 %3024
      %3034 = vst.msk [vmem:[#allocation2 + $0xc0] sm:$0xf] %vm274, %v3011
      %3035 = vst.msk [vmem:[#allocation2 + $0xc4] sm:$0xf] %vm274, %v3013
      %3036 = vst.msk [vmem:[#allocation2 + $0xc8] sm:$0xf] %vm274, %v3015
      %3037 = vst.msk [vmem:[#allocation2 + $0xcc] sm:$0xf] %vm274, %v3017
      %3038 = vst.msk [vmem:[#allocation2 + $0xd0] sm:$0xf] %vm274, %v3019
      %3039 = vst.msk [vmem:[#allocation2 + $0xd4] sm:$0xf] %vm274, %v3021
      %3040 = vst.msk [vmem:[#allocation2 + $0xd8] sm:$0xf] %vm274, %v3023
      %3041 = vst.msk [vmem:[#allocation2 + $0xdc] sm:$0xf] %vm274, %v3025
      %v3042 = vld [vmem:[%s348] sm:$0xf]
      %v3043 = vld [vmem:[%s348 + $0x4] sm:$0xf]
      %v3044 = vld [vmem:[%s348 + $0x8] sm:$0xf]
      %v3045 = vld [vmem:[%s348 + $0xc] sm:$0xf]
      %v3046 = vld [vmem:[%s348 + $0x10] sm:$0xf]
      %v3047 = vld [vmem:[%s348 + $0x14] sm:$0xf]
      %v3048 = vld [vmem:[%s348 + $0x18] sm:$0xf]
      %v3049 = vld [vmem:[%s348 + $0x1c] sm:$0xf]
      %3058 = vrot.lane.b32.xlu0 %v3042, 124
      %v3059 = vpop.permute.xlu0 %3058
      %3060 = vrot.lane.b32.xlu0 %v3043, 124
      %v3061 = vpop.permute.xlu0 %3060
      %3062 = vrot.lane.b32.xlu0 %v3044, 124
      %v3063 = vpop.permute.xlu0 %3062
      %3064 = vrot.lane.b32.xlu0 %v3045, 124
      %v3065 = vpop.permute.xlu0 %3064
      %3066 = vrot.lane.b32.xlu0 %v3046, 124
      %v3067 = vpop.permute.xlu0 %3066
      %3068 = vrot.lane.b32.xlu0 %v3047, 124
      %v3069 = vpop.permute.xlu0 %3068
      %3070 = vrot.lane.b32.xlu0 %v3048, 124
      %v3071 = vpop.permute.xlu0 %3070
      %3072 = vrot.lane.b32.xlu0 %v3049, 124
      %v3073 = vpop.permute.xlu0 %3072
      %3082 = vst.msk [vmem:[#allocation2 + $0xe0] sm:$0xf] %vm274, %v3059
      %3083 = vst.msk [vmem:[#allocation2 + $0xe4] sm:$0xf] %vm274, %v3061
      %3084 = vst.msk [vmem:[#allocation2 + $0xe8] sm:$0xf] %vm274, %v3063
      %3085 = vst.msk [vmem:[#allocation2 + $0xec] sm:$0xf] %vm274, %v3065
      %3086 = vst.msk [vmem:[#allocation2 + $0xf0] sm:$0xf] %vm274, %v3067
      %3087 = vst.msk [vmem:[#allocation2 + $0xf4] sm:$0xf] %vm274, %v3069
      %3088 = vst.msk [vmem:[#allocation2 + $0xf8] sm:$0xf] %vm274, %v3071
      %3089 = vst.msk [vmem:[#allocation2 + $0xfc] sm:$0xf] %vm274, %v3073
      %v3090 = vld [vmem:[%s365] sm:$0xf]
      %v3091 = vld [vmem:[%s365 + $0x4] sm:$0xf]
      %v3092 = vld [vmem:[%s365 + $0x8] sm:$0xf]
      %v3093 = vld [vmem:[%s365 + $0xc] sm:$0xf]
      %v3094 = vld [vmem:[%s365 + $0x10] sm:$0xf]
      %v3095 = vld [vmem:[%s365 + $0x14] sm:$0xf]
      %v3096 = vld [vmem:[%s365 + $0x18] sm:$0xf]
      %v3097 = vld [vmem:[%s365 + $0x1c] sm:$0xf]
      %3106 = vrot.lane.b32.xlu0 %v3090, 124
      %v3107 = vpop.permute.xlu0 %3106
      %3108 = vrot.lane.b32.xlu0 %v3091, 124
      %v3109 = vpop.permute.xlu0 %3108
      %3110 = vrot.lane.b32.xlu0 %v3092, 124
      %v3111 = vpop.permute.xlu0 %3110
      %3112 = vrot.lane.b32.xlu0 %v3093, 124
      %v3113 = vpop.permute.xlu0 %3112
      %3114 = vrot.lane.b32.xlu0 %v3094, 124
      %v3115 = vpop.permute.xlu0 %3114
      %3116 = vrot.lane.b32.xlu0 %v3095, 124
      %v3117 = vpop.permute.xlu0 %3116
      %3118 = vrot.lane.b32.xlu0 %v3096, 124
      %v3119 = vpop.permute.xlu0 %3118
      %3120 = vrot.lane.b32.xlu0 %v3097, 124
      %v3121 = vpop.permute.xlu0 %3120
      %3130 = vst.msk [vmem:[#allocation2 + $0x100] sm:$0xf] %vm274, %v3107
      %3131 = vst.msk [vmem:[#allocation2 + $0x104] sm:$0xf] %vm274, %v3109
      %3132 = vst.msk [vmem:[#allocation2 + $0x108] sm:$0xf] %vm274, %v3111
      %3133 = vst.msk [vmem:[#allocation2 + $0x10c] sm:$0xf] %vm274, %v3113
      %3134 = vst.msk [vmem:[#allocation2 + $0x110] sm:$0xf] %vm274, %v3115
      %3135 = vst.msk [vmem:[#allocation2 + $0x114] sm:$0xf] %vm274, %v3117
      %3136 = vst.msk [vmem:[#allocation2 + $0x118] sm:$0xf] %vm274, %v3119
      %3137 = vst.msk [vmem:[#allocation2 + $0x11c] sm:$0xf] %vm274, %v3121
      %v3138 = vld [vmem:[#allocation2] sm:$0xf]
      %v3139 = vld [vmem:[#allocation2 + $0x4] sm:$0xf]
      %v3140 = vld [vmem:[#allocation2 + $0x8] sm:$0xf]
      %v3141 = vld [vmem:[#allocation2 + $0xc] sm:$0xf]
      %v3142 = vld [vmem:[#allocation2 + $0x10] sm:$0xf]
      %v3143 = vld [vmem:[#allocation2 + $0x14] sm:$0xf]
      %v3144 = vld [vmem:[#allocation2 + $0x18] sm:$0xf]
      %v3145 = vld [vmem:[#allocation2 + $0x1c] sm:$0xf]
      %v3146 = vld [vmem:[#allocation2 + $0x20] sm:$0xf]
      %v3147 = vld [vmem:[#allocation2 + $0x24] sm:$0xf]
      %v3148 = vld [vmem:[#allocation2 + $0x28] sm:$0xf]
      %v3149 = vld [vmem:[#allocation2 + $0x2c] sm:$0xf]
      %v3150 = vld [vmem:[#allocation2 + $0x30] sm:$0xf]
      %v3151 = vld [vmem:[#allocation2 + $0x34] sm:$0xf]
      %v3152 = vld [vmem:[#allocation2 + $0x38] sm:$0xf]
      %v3153 = vld [vmem:[#allocation2 + $0x3c] sm:$0xf]
      %v3154 = vld [vmem:[#allocation2 + $0x40] sm:$0xf]
      %v3155 = vld [vmem:[#allocation2 + $0x44] sm:$0xf]
      %v3156 = vld [vmem:[#allocation2 + $0x48] sm:$0xf]
      %v3157 = vld [vmem:[#allocation2 + $0x4c] sm:$0xf]
      %v3158 = vld [vmem:[#allocation2 + $0x50] sm:$0xf]
      %v3159 = vld [vmem:[#allocation2 + $0x54] sm:$0xf]
      %v3160 = vld [vmem:[#allocation2 + $0x58] sm:$0xf]
      %v3161 = vld [vmem:[#allocation2 + $0x5c] sm:$0xf]
      %v3162 = vld [vmem:[#allocation2 + $0x60] sm:$0xf]
      %v3163 = vld [vmem:[#allocation2 + $0x64] sm:$0xf]
      %v3164 = vld [vmem:[#allocation2 + $0x68] sm:$0xf]
      %v3165 = vld [vmem:[#allocation2 + $0x6c] sm:$0xf]
      %v3166 = vld [vmem:[#allocation2 + $0x70] sm:$0xf]
      %v3167 = vld [vmem:[#allocation2 + $0x74] sm:$0xf]
      %v3168 = vld [vmem:[#allocation2 + $0x78] sm:$0xf]
      %v3169 = vld [vmem:[#allocation2 + $0x7c] sm:$0xf]
      %v3170 = vld [vmem:[#allocation2 + $0x80] sm:$0xf]
      %v3171 = vld [vmem:[#allocation2 + $0x84] sm:$0xf]
      %v3172 = vld [vmem:[#allocation2 + $0x88] sm:$0xf]
      %v3173 = vld [vmem:[#allocation2 + $0x8c] sm:$0xf]
      %v3174 = vld [vmem:[#allocation2 + $0x90] sm:$0xf]
      %v3175 = vld [vmem:[#allocation2 + $0x94] sm:$0xf]
      %v3176 = vld [vmem:[#allocation2 + $0x98] sm:$0xf]
      %v3177 = vld [vmem:[#allocation2 + $0x9c] sm:$0xf]
      %v3178 = vld [vmem:[#allocation2 + $0xa0] sm:$0xf]
      %v3179 = vld [vmem:[#allocation2 + $0xa4] sm:$0xf]
      %v3180 = vld [vmem:[#allocation2 + $0xa8] sm:$0xf]
      %v3181 = vld [vmem:[#allocation2 + $0xac] sm:$0xf]
      %v3182 = vld [vmem:[#allocation2 + $0xb0] sm:$0xf]
      %v3183 = vld [vmem:[#allocation2 + $0xb4] sm:$0xf]
      %v3184 = vld [vmem:[#allocation2 + $0xb8] sm:$0xf]
      %v3185 = vld [vmem:[#allocation2 + $0xbc] sm:$0xf]
      %v3186 = vld [vmem:[#allocation2 + $0xc0] sm:$0xf]
      %v3187 = vld [vmem:[#allocation2 + $0xc4] sm:$0xf]
      %v3188 = vld [vmem:[#allocation2 + $0xc8] sm:$0xf]
      %v3189 = vld [vmem:[#allocation2 + $0xcc] sm:$0xf]
      %v3190 = vld [vmem:[#allocation2 + $0xd0] sm:$0xf]
      %v3191 = vld [vmem:[#allocation2 + $0xd4] sm:$0xf]
      %v3192 = vld [vmem:[#allocation2 + $0xd8] sm:$0xf]
      %v3193 = vld [vmem:[#allocation2 + $0xdc] sm:$0xf]
      %v3194 = vld [vmem:[#allocation2 + $0xe0] sm:$0xf]
      %v3195 = vld [vmem:[#allocation2 + $0xe4] sm:$0xf]
      %v3196 = vld [vmem:[#allocation2 + $0xe8] sm:$0xf]
      %v3197 = vld [vmem:[#allocation2 + $0xec] sm:$0xf]
      %v3198 = vld [vmem:[#allocation2 + $0xf0] sm:$0xf]
      %v3199 = vld [vmem:[#allocation2 + $0xf4] sm:$0xf]
      %v3200 = vld [vmem:[#allocation2 + $0xf8] sm:$0xf]
      %v3201 = vld [vmem:[#allocation2 + $0xfc] sm:$0xf]
      %v3202 = vld [vmem:[#allocation2 + $0x100] sm:$0xf]
      %v3203 = vld [vmem:[#allocation2 + $0x104] sm:$0xf]
      %v3204 = vld [vmem:[#allocation2 + $0x108] sm:$0xf]
      %v3205 = vld [vmem:[#allocation2 + $0x10c] sm:$0xf]
      %v3206 = vld [vmem:[#allocation2 + $0x110] sm:$0xf]
      %v3207 = vld [vmem:[#allocation2 + $0x114] sm:$0xf]
      %v3208 = vld [vmem:[#allocation2 + $0x118] sm:$0xf]
      %v3209 = vld [vmem:[#allocation2 + $0x11c] sm:$0xf]
      %v3282 = vunpack.c.l.b16 %v3138
      %v3283 = vunpack.c.l.b16 %v3139
      %v3284 = vunpack.c.l.b16 %v3140
      %v3285 = vunpack.c.l.b16 %v3141
      %v3286 = vunpack.c.l.b16 %v3142
      %v3287 = vunpack.c.l.b16 %v3143
      %v3288 = vunpack.c.l.b16 %v3144
      %v3289 = vunpack.c.l.b16 %v3145
      %v3290 = vunpack.c.l.b16 %v3146
      %v3291 = vunpack.c.l.b16 %v3147
      %v3292 = vunpack.c.l.b16 %v3148
      %v3293 = vunpack.c.l.b16 %v3149
      %v3294 = vunpack.c.l.b16 %v3150
      %v3295 = vunpack.c.l.b16 %v3151
      %v3296 = vunpack.c.l.b16 %v3152
      %v3297 = vunpack.c.l.b16 %v3153
      %v3298 = vunpack.c.l.b16 %v3154
      %v3299 = vunpack.c.l.b16 %v3155
      %v3300 = vunpack.c.l.b16 %v3156
      %v3301 = vunpack.c.l.b16 %v3157
      %v3302 = vunpack.c.l.b16 %v3158
      %v3303 = vunpack.c.l.b16 %v3159
      %v3304 = vunpack.c.l.b16 %v3160
      %v3305 = vunpack.c.l.b16 %v3161
      %v3306 = vunpack.c.l.b16 %v3162
      %v3307 = vunpack.c.l.b16 %v3163
      %v3308 = vunpack.c.l.b16 %v3164
      %v3309 = vunpack.c.l.b16 %v3165
      %v3310 = vunpack.c.l.b16 %v3166
      %v3311 = vunpack.c.l.b16 %v3167
      %v3312 = vunpack.c.l.b16 %v3168
      %v3313 = vunpack.c.l.b16 %v3169
      %v3314 = vunpack.c.l.b16 %v3170
      %v3315 = vunpack.c.l.b16 %v3171
      %v3316 = vunpack.c.l.b16 %v3172
      %v3317 = vunpack.c.l.b16 %v3173
      %v3318 = vunpack.c.l.b16 %v3174
      %v3319 = vunpack.c.l.b16 %v3175
      %v3320 = vunpack.c.l.b16 %v3176
      %v3321 = vunpack.c.l.b16 %v3177
      %v3322 = vunpack.c.l.b16 %v3178
      %v3323 = vunpack.c.l.b16 %v3179
      %v3324 = vunpack.c.l.b16 %v3180
      %v3325 = vunpack.c.l.b16 %v3181
      %v3326 = vunpack.c.l.b16 %v3182
      %v3327 = vunpack.c.l.b16 %v3183
      %v3328 = vunpack.c.l.b16 %v3184
      %v3329 = vunpack.c.l.b16 %v3185
      %v3330 = vunpack.c.l.b16 %v3186
      %v3331 = vunpack.c.l.b16 %v3187
      %v3332 = vunpack.c.l.b16 %v3188
      %v3333 = vunpack.c.l.b16 %v3189
      %v3334 = vunpack.c.l.b16 %v3190
      %v3335 = vunpack.c.l.b16 %v3191
      %v3336 = vunpack.c.l.b16 %v3192
      %v3337 = vunpack.c.l.b16 %v3193
      %v3338 = vunpack.c.l.b16 %v3194
      %v3339 = vunpack.c.l.b16 %v3195
      %v3340 = vunpack.c.l.b16 %v3196
      %v3341 = vunpack.c.l.b16 %v3197
      %v3342 = vunpack.c.l.b16 %v3198
      %v3343 = vunpack.c.l.b16 %v3199
      %v3344 = vunpack.c.l.b16 %v3200
      %v3345 = vunpack.c.l.b16 %v3201
      %v3346 = vunpack.c.l.b16 %v3202
      %v3347 = vunpack.c.l.b16 %v3203
      %v3348 = vunpack.c.l.b16 %v3204
      %v3349 = vunpack.c.l.b16 %v3205
      %v3350 = vunpack.c.l.b16 %v3206
      %v3351 = vunpack.c.l.b16 %v3207
      %v3352 = vunpack.c.l.b16 %v3208
      %v3353 = vunpack.c.l.b16 %v3209
      %v3354 = vpack.c.b16 %v3283, %v3282
      %v3355 = vpack.c.b16 %v3285, %v3284
      %v3356 = vpack.c.b16 %v3287, %v3286
      %v3357 = vpack.c.b16 %v3289, %v3288
      %v3358 = vpack.c.b16 %v3291, %v3290
      %v3359 = vpack.c.b16 %v3293, %v3292
      %v3360 = vpack.c.b16 %v3295, %v3294
      %v3361 = vpack.c.b16 %v3297, %v3296
      %v3362 = vpack.c.b16 %v3299, %v3298
      %v3363 = vpack.c.b16 %v3301, %v3300
      %v3364 = vpack.c.b16 %v3303, %v3302
      %v3365 = vpack.c.b16 %v3305, %v3304
      %v3366 = vpack.c.b16 %v3307, %v3306
      %v3367 = vpack.c.b16 %v3309, %v3308
      %v3368 = vpack.c.b16 %v3311, %v3310
      %v3369 = vpack.c.b16 %v3313, %v3312
      %v3370 = vpack.c.b16 %v3315, %v3314
      %v3371 = vpack.c.b16 %v3317, %v3316
      %v3372 = vpack.c.b16 %v3319, %v3318
      %v3373 = vpack.c.b16 %v3321, %v3320
      %v3374 = vpack.c.b16 %v3323, %v3322
      %v3375 = vpack.c.b16 %v3325, %v3324
      %v3376 = vpack.c.b16 %v3327, %v3326
      %v3377 = vpack.c.b16 %v3329, %v3328
      %v3378 = vpack.c.b16 %v3331, %v3330
      %v3379 = vpack.c.b16 %v3333, %v3332
      %v3380 = vpack.c.b16 %v3335, %v3334
      %v3381 = vpack.c.b16 %v3337, %v3336
      %v3382 = vpack.c.b16 %v3339, %v3338
      %v3383 = vpack.c.b16 %v3341, %v3340
      %v3384 = vpack.c.b16 %v3343, %v3342
      %v3385 = vpack.c.b16 %v3345, %v3344
      %v3386 = vpack.c.b16 %v3347, %v3346
      %v3387 = vpack.c.b16 %v3349, %v3348
      %v3388 = vpack.c.b16 %v3351, %v3350
      %v3389 = vpack.c.b16 %v3353, %v3352
      %3426 = vmatpush.bf16.msra.mxu0 %v3361
      %3427 = vmatpush.bf16.msra.mxu0 %v3360
      %3428 = vmatpush.bf16.msra.mxu0 %v3359
      %3429 = vmatpush.bf16.msra.mxu0 %v3358
      %3430 = vmatpush.bf16.msra.mxu0 %v3357
      %3431 = vmatpush.bf16.msra.mxu0 %v3356
      %3432 = vmatpush.bf16.msra.mxu0 %v3355
      %3433 = vmatpush.bf16.msra.mxu0 %v3354
      %3434 = vmatmul.bf16.gmra.mxu0 %v710
      %v3435 = vpop.f32.mrf.mxu0
      %v3436 = vadd.f32 0.0, %v3435
      %v3437 = vpop.f32.mrf.mxu0
      %v3438 = vadd.f32 0.0, %v3437
      %3439 = vmatmul.bf16.gmra.mxu0 %v715
      %v3440 = vpop.f32.mrf.mxu0
      %v3441 = vadd.f32 0.0, %v3440
      %v3442 = vpop.f32.mrf.mxu0
      %v3443 = vadd.f32 0.0, %v3442
      %3444 = vmatmul.bf16.gmra.mxu0 %v720
      %v3445 = vpop.f32.mrf.mxu0
      %v3446 = vadd.f32 0.0, %v3445
      %v3447 = vpop.f32.mrf.mxu0
      %v3448 = vadd.f32 0.0, %v3447
      %3449 = vmatmul.bf16.gmra.mxu0 %v725
      %v3450 = vpop.f32.mrf.mxu0
      %v3451 = vadd.f32 0.0, %v3450
      %v3452 = vpop.f32.mrf.mxu0
      %v3453 = vadd.f32 0.0, %v3452
      %3454 = vdwg.mxu0
      %3455 = vmatpush.bf16.msra.mxu0 %v3369
      %3456 = vmatpush.bf16.msra.mxu0 %v3368
      %3457 = vmatpush.bf16.msra.mxu0 %v3367
      %3458 = vmatpush.bf16.msra.mxu0 %v3366
      %3459 = vmatpush.bf16.msra.mxu0 %v3365
      %3460 = vmatpush.bf16.msra.mxu0 %v3364
      %3461 = vmatpush.bf16.msra.mxu0 %v3363
      %3462 = vmatpush.bf16.msra.mxu0 %v3362
      %3463 = vmatmul.bf16.gmra.mxu0 %v711
      %v3464 = vpop.f32.mrf.mxu0
      %v3465 = vadd.f32 %v3436, %v3464
      %v3466 = vpop.f32.mrf.mxu0
      %v3467 = vadd.f32 %v3438, %v3466
      %3468 = vmatmul.bf16.gmra.mxu0 %v716
      %v3469 = vpop.f32.mrf.mxu0
      %v3470 = vadd.f32 %v3441, %v3469
      %v3471 = vpop.f32.mrf.mxu0
      %v3472 = vadd.f32 %v3443, %v3471
      %3473 = vmatmul.bf16.gmra.mxu0 %v721
      %v3474 = vpop.f32.mrf.mxu0
      %v3475 = vadd.f32 %v3446, %v3474
      %v3476 = vpop.f32.mrf.mxu0
      %v3477 = vadd.f32 %v3448, %v3476
      %3478 = vmatmul.bf16.gmra.mxu0 %v726
      %v3479 = vpop.f32.mrf.mxu0
      %v3480 = vadd.f32 %v3451, %v3479
      %v3481 = vpop.f32.mrf.mxu0
      %v3482 = vadd.f32 %v3453, %v3481
      %3483 = vdwg.mxu0
      %3484 = vmatpush.bf16.msra.mxu0 %v3377
      %3485 = vmatpush.bf16.msra.mxu0 %v3376
      %3486 = vmatpush.bf16.msra.mxu0 %v3375
      %3487 = vmatpush.bf16.msra.mxu0 %v3374
      %3488 = vmatpush.bf16.msra.mxu0 %v3373
      %3489 = vmatpush.bf16.msra.mxu0 %v3372
      %3490 = vmatpush.bf16.msra.mxu0 %v3371
      %3491 = vmatpush.bf16.msra.mxu0 %v3370
      %3492 = vmatmul.bf16.gmra.mxu0 %v712
      %v3493 = vpop.f32.mrf.mxu0
      %v3494 = vadd.f32 %v3465, %v3493
      %v3495 = vpop.f32.mrf.mxu0
      %v3496 = vadd.f32 %v3467, %v3495
      %3497 = vmatmul.bf16.gmra.mxu0 %v717
      %v3498 = vpop.f32.mrf.mxu0
      %v3499 = vadd.f32 %v3470, %v3498
      %v3500 = vpop.f32.mrf.mxu0
      %v3501 = vadd.f32 %v3472, %v3500
      %3502 = vmatmul.bf16.gmra.mxu0 %v722
      %v3503 = vpop.f32.mrf.mxu0
      %v3504 = vadd.f32 %v3475, %v3503
      %v3505 = vpop.f32.mrf.mxu0
      %v3506 = vadd.f32 %v3477, %v3505
      %3507 = vmatmul.bf16.gmra.mxu0 %v727
      %v3508 = vpop.f32.mrf.mxu0
      %v3509 = vadd.f32 %v3480, %v3508
      %v3510 = vpop.f32.mrf.mxu0
      %v3511 = vadd.f32 %v3482, %v3510
      %3512 = vdwg.mxu0
      %3513 = vmatpush.bf16.msra.mxu0 %v3385
      %3514 = vmatpush.bf16.msra.mxu0 %v3384
      %3515 = vmatpush.bf16.msra.mxu0 %v3383
      %3516 = vmatpush.bf16.msra.mxu0 %v3382
      %3517 = vmatpush.bf16.msra.mxu0 %v3381
      %3518 = vmatpush.bf16.msra.mxu0 %v3380
      %3519 = vmatpush.bf16.msra.mxu0 %v3379
      %3520 = vmatpush.bf16.msra.mxu0 %v3378
      %3521 = vmatmul.bf16.gmra.mxu0 %v713
      %v3522 = vpop.f32.mrf.mxu0
      %v3523 = vadd.f32 %v3494, %v3522
      %v3524 = vpop.f32.mrf.mxu0
      %v3525 = vadd.f32 %v3496, %v3524
      %3526 = vmatmul.bf16.gmra.mxu0 %v718
      %v3527 = vpop.f32.mrf.mxu0
      %v3528 = vadd.f32 %v3499, %v3527
      %v3529 = vpop.f32.mrf.mxu0
      %v3530 = vadd.f32 %v3501, %v3529
      %3531 = vmatmul.bf16.gmra.mxu0 %v723
      %v3532 = vpop.f32.mrf.mxu0
      %v3533 = vadd.f32 %v3504, %v3532
      %v3534 = vpop.f32.mrf.mxu0
      %v3535 = vadd.f32 %v3506, %v3534
      %3536 = vmatmul.bf16.gmra.mxu0 %v728
      %v3537 = vpop.f32.mrf.mxu0
      %v3538 = vadd.f32 %v3509, %v3537
      %v3539 = vpop.f32.mrf.mxu0
      %v3540 = vadd.f32 %v3511, %v3539
      %3541 = vdwg.mxu0
      %3542 = vmatpush.bf16.msra.mxu0 0
      %3543 = vmatpush.bf16.msra.mxu0 0
      %3544 = vmatpush.bf16.msra.mxu0 0
      %3545 = vmatpush.bf16.msra.mxu0 0
      %3546 = vmatpush.bf16.msra.mxu0 %v3389
      %3547 = vmatpush.bf16.msra.mxu0 %v3388
      %3548 = vmatpush.bf16.msra.mxu0 %v3387
      %3549 = vmatpush.bf16.msra.mxu0 %v3386
      %3550 = vmatmul.bf16.gmra.mxu0 %v964
      %v3551 = vpop.f32.mrf.mxu0
      %v3552 = vadd.f32 %v3523, %v3551
      %v3553 = vpop.f32.mrf.mxu0
      %v3554 = vadd.f32 %v3525, %v3553
      %3555 = vmatmul.bf16.gmra.mxu0 %v967
      %v3556 = vpop.f32.mrf.mxu0
      %v3557 = vadd.f32 %v3528, %v3556
      %v3558 = vpop.f32.mrf.mxu0
      %v3559 = vadd.f32 %v3530, %v3558
      %3560 = vmatmul.bf16.gmra.mxu0 %v970
      %v3561 = vpop.f32.mrf.mxu0
      %v3562 = vadd.f32 %v3533, %v3561
      %v3563 = vpop.f32.mrf.mxu0
      %v3564 = vadd.f32 %v3535, %v3563
      %3565 = vmatmul.bf16.gmra.mxu0 %v973
      %v3566 = vpop.f32.mrf.mxu0
      %v3567 = vadd.f32 %v3538, %v3566
      %v3568 = vpop.f32.mrf.mxu0
      %v3569 = vadd.f32 %v3540, %v3568
      %3570 = vdwg.mxu0
      %v3571 = vmax.f32 %v2730, %v3552
      %v3572 = vmax.f32 %v2731, %v3554
      %v3573 = vmax.f32 %v2732, %v3557
      %v3574 = vmax.f32 %v2733, %v3559
      %v3575 = vmax.f32 %v2734, %v3562
      %v3576 = vmax.f32 %v2735, %v3564
      %v3577 = vmax.f32 %v2736, %v3567
      %v3578 = vmax.f32 %v2737, %v3569
      %v3579 = vld [vmem:[%s229] sm:$0xff]
      %v3580 = vld [vmem:[%s229 + $0x8] sm:$0xff]
      %v3581 = vld [vmem:[%s229 + $0x10] sm:$0xff]
      %v3582 = vld [vmem:[%s229 + $0x18] sm:$0xff]
      %v3583 = vld [vmem:[%s229 + $0x20] sm:$0xff]
      %v3584 = vld [vmem:[%s229 + $0x28] sm:$0xff]
      %v3585 = vld [vmem:[%s229 + $0x30] sm:$0xff]
      %v3586 = vld [vmem:[%s229 + $0x38] sm:$0xff]
      %3588 = vset.pattern.permute.xlu0 0
      %3589 = vperm.xlu0 %3588, %v3579
      %v3590 = vpop.permute.xlu0 %3589
      %3593 = vset.pattern.permute.xlu0 0
      %3594 = vperm.xlu0 %3593, %v3580
      %v3595 = vpop.permute.xlu0 %3594
      %3598 = vset.pattern.permute.xlu0 0
      %3599 = vperm.xlu0 %3598, %v3581
      %v3600 = vpop.permute.xlu0 %3599
      %3603 = vset.pattern.permute.xlu0 0
      %3604 = vperm.xlu0 %3603, %v3582
      %v3605 = vpop.permute.xlu0 %3604
      %3608 = vset.pattern.permute.xlu0 0
      %3609 = vperm.xlu0 %3608, %v3583
      %v3610 = vpop.permute.xlu0 %3609
      %3613 = vset.pattern.permute.xlu0 0
      %3614 = vperm.xlu0 %3613, %v3584
      %v3615 = vpop.permute.xlu0 %3614
      %3618 = vset.pattern.permute.xlu0 0
      %3619 = vperm.xlu0 %3618, %v3585
      %v3620 = vpop.permute.xlu0 %3619
      %3623 = vset.pattern.permute.xlu0 0
      %3624 = vperm.xlu0 %3623, %v3586
      %v3625 = vpop.permute.xlu0 %3624
      %v3627 = vadd.f32 %v3571, %v3590
      %v3628 = vadd.f32 %v3572, %v3595
      %v3629 = vadd.f32 %v3573, %v3600
      %v3630 = vadd.f32 %v3574, %v3605
      %v3631 = vadd.f32 %v3575, %v3610
      %v3632 = vadd.f32 %v3576, %v3615
      %v3633 = vadd.f32 %v3577, %v3620
      %v3634 = vadd.f32 %v3578, %v3625
      %v3635 = vmax.f32 %v3627, 0.0
      %v3636 = vmax.f32 %v3628, 0.0
      %v3637 = vmax.f32 %v3629, 0.0
      %v3638 = vmax.f32 %v3630, 0.0
      %v3639 = vmax.f32 %v3631, 0.0
      %v3640 = vmax.f32 %v3632, 0.0
      %v3641 = vmax.f32 %v3633, 0.0
      %v3642 = vmax.f32 %v3634, 0.0
      %v3643 = vpack.c.bf16 %v3635, %v3635
      %v3644 = vpack.c.bf16 %v3636, %v3636
      %v3645 = vpack.c.bf16 %v3637, %v3637
      %v3646 = vpack.c.bf16 %v3638, %v3638
      %v3647 = vpack.c.bf16 %v3639, %v3639
      %v3648 = vpack.c.bf16 %v3640, %v3640
      %v3649 = vpack.c.bf16 %v3641, %v3641
      %v3650 = vpack.c.bf16 %v3642, %v3642
      %3651 = vst.msk [vmem:[%s239] sm:$0xf] %vm274, %v3643
      %3652 = vst.msk [vmem:[%s239 + $0x4] sm:$0xf] %vm274, %v3644
      %3653 = vst.msk [vmem:[%s239 + $0x8] sm:$0xf] %vm274, %v3645
      %3654 = vst.msk [vmem:[%s239 + $0xc] sm:$0xf] %vm274, %v3646
      %3655 = vst.msk [vmem:[%s239 + $0x10] sm:$0xf] %vm274, %v3647
      %3656 = vst.msk [vmem:[%s239 + $0x14] sm:$0xf] %vm274, %v3648
      %3657 = vst.msk [vmem:[%s239 + $0x18] sm:$0xf] %vm274, %v3649
      %3658 = vst.msk [vmem:[%s239 + $0x1c] sm:$0xf] %vm274, %v3650
      %s3659 = smul.u32 8, %s19
      %p3660 = scmp.lt.s32.totalorder %s18, 1
      %s3661 = scalar_select %p3660, %s18, 1
      %p3662 = scmp.lt.s32.totalorder %s3659, 15
      %s3663 = scalar_select %p3662, %s3659, 15
      %s3664 = smul.addr %s3661, 16
      %s3665 = sadd.s32 %s3663, %s3664
      %s3666 = smul.addr %s3665, 4
      %s3667 = scalar_lea.vmem %s3, %s3666
      // Predicated region
      $region33: #{blur_detection_forward.6} parent=31 // pred_check
        %p3668 = pneg %p124
      $region34: #{blur_detection_forward.6} parent=31 // pred_check_branch
        %3670 = sbr.rel (%p3668) target = $region36
      $region35: #{blur_detection_forward.6} parent=31 // pred_region
        %s3671 = smul.u32 8, %s19
      $region36: #{blur_detection_forward.6} parent=31 // pred_fallthru
        _
    $region32: #{blur_detection_forward.6} parent=5 // pred_fallthru
      _
    %p3672 = scmp.le.s32.totalorder 2, %s9
    // Predicated region
    $region37: #{blur_detection_forward.6} parent=5 // pred_check
      %p3673 = pneg %p3672
    $region38: #{blur_detection_forward.6} parent=5 // pred_check_branch
      %3675 = sbr.rel (%p3673) target = $region40
    $region39: #{blur_detection_forward.6} parent=5 // pred_region
      %s3676 = ssub.s32 %s9, 2
      // Predicated region
      $region41: #{blur_detection_forward.6} parent=39 // pred_check
        %p3677 = pneg %p130
      $region42: #{blur_detection_forward.6} parent=39 // pred_check_branch
        %3679 = sbr.rel (%p3677) target = $region44
      $region43: #{blur_detection_forward.6} parent=39 // pred_region
        %s3680 = smul.u32 8, %s21
        %p3681 = scmp.lt.s32.totalorder %s20, 1
        %s3682 = scalar_select %p3681, %s20, 1
        %p3683 = scmp.lt.s32.totalorder %s3680, 15
        %s3684 = scalar_select %p3683, %s3680, 15
        %s3685 = smul.addr %s3682, 16
        %s3686 = sadd.s32 %s3684, %s3685
        %s3687 = smul.addr %s3686, 4
        %s3688 = scalar_lea.vmem %s3, %s3687
      $region44: #{blur_detection_forward.6} parent=39 // pred_fallthru
        _
    $region40: #{blur_detection_forward.6} parent=5 // pred_fallthru
      _
  $region6: #{blur_detection_forward.6} parent=0 // loop_footer
    %s13 = sadd.s32 1, %s9
  $region7: #{blur_detection_forward.6} parent=0 // loop_footer_branch
    %8 = sbr.rel target = $region3
  $region8: #{blur_detection_forward.6} parent=0 // loop_exit
    _

</llo_original>
